<compile_context>
chip_gen: v7x
topology: tpu7x:2x2x1
jax: 0.10.0
libtpu: 0.0.40
codegen_flags: <defaults>
</compile_context>

<pallas_src>
import functools
import numpy as np

import jax
import jax.numpy as jnp
from jax import lax
from jax.experimental import pallas as pl
from jax.experimental.pallas import tpu as pltpu

EPS = 1e-5
BN_SCALE = float(1.0 / np.sqrt(1.0 + EPS))   # eval-mode BatchNorm, default stats


def _round_up(x, m):
    return ((x + m - 1) // m) * m


# ---------------------------------------------------------------------------
# Pallas kernel 1: tiled matmul + bias + optional fused residual + activation
# ---------------------------------------------------------------------------

def _mm_kernel(*refs, act, has_res):
    if has_res:
        x_ref, w_ref, b_ref, r_ref, o_ref, acc_ref = refs
    else:
        x_ref, w_ref, b_ref, o_ref, acc_ref = refs
        r_ref = None
    k = pl.program_id(2)

    @pl.when(k == 0)
    def _():
        acc_ref[...] = jnp.zeros_like(acc_ref)

    acc_ref[...] += jnp.dot(x_ref[...], w_ref[...],
                            preferred_element_type=jnp.float32)

    @pl.when(k == pl.num_programs(2) - 1)
    def _():
        y = acc_ref[...] + b_ref[...]
        if has_res:
            y = y + r_ref[...]
        if act == "relu":
            y = jnp.maximum(y, 0.0)
        elif act == "sigmoid":
            y = jax.nn.sigmoid(y)
        o_ref[...] = y.astype(o_ref.dtype)


def matmul_fused(x, prep, residual=None, act="none"):
    """y = act(x @ W + b [+ residual]).  W/b are pre-padded bf16/f32."""
    M, K = x.shape
    assert K == prep["K"]
    N = prep["N"]
    wp, bp = prep["w"], prep["b"]
    Kp, Np = wp.shape

    tm = min(256, _round_up(M, 16))                 # bf16 sublane granularity
    tn = 256 if Np % 256 == 0 else 128
    if Kp % 1024 == 0:
        tk = 1024
    elif Kp % 512 == 0:
        tk = 512
    elif Kp % 256 == 0:
        tk = 256
    else:
        tk = 128
    tn, tk = min(tn, Np), min(tk, Kp)
    Mp = _round_up(M, tm)

    xp = jnp.pad(x, ((0, Mp - M), (0, Kp - K))).astype(jnp.bfloat16)
    args = [xp, wp, bp]
    in_specs = [pl.BlockSpec((tm, tk), lambda i, j, k: (i, k)),
                pl.BlockSpec((tk, tn), lambda i, j, k: (k, j)),
                pl.BlockSpec((1, tn), lambda i, j, k: (0, j))]
    if residual is not None:
        rp = jnp.pad(residual.astype(jnp.float32),
                     ((0, Mp - M), (0, Np - N)))
        args.append(rp)
        in_specs.append(pl.BlockSpec((tm, tn), lambda i, j, k: (i, j)))

    out = pl.pallas_call(
        functools.partial(_mm_kernel, act=act, has_res=residual is not None),
        out_shape=jax.ShapeDtypeStruct((Mp, Np), jnp.float32),
        grid_spec=pltpu.PrefetchScalarGridSpec(
            num_scalar_prefetch=0,
            grid=(Mp // tm, Np // tn, Kp // tk),
            in_specs=in_specs,
            out_specs=pl.BlockSpec((tm, tn), lambda i, j, k: (i, j)),
            scratch_shapes=[pltpu.VMEM((tm, tn), jnp.float32)]),
        compiler_params=pltpu.CompilerParams(
            dimension_semantics=("parallel", "parallel", "arbitrary")),
    )(*args)
    return out[:M, :N]


# ---------------------------------------------------------------------------
# Pallas kernel 2: KxK conv (stride 1, "same") with row taps folded into the
# kernel accumulation + fused bias / residual / activation.
# Input layout per image: ((H + KH - 1) * W, KW * C) — the KH row taps are
# row-shifted slices of the SAME VMEM block, the KW column taps live in K.
# ---------------------------------------------------------------------------

def _conv_kernel(*refs, KH, W, HW, act, has_res):
    if has_res:
        x_ref, w_ref, b_ref, r_ref, o_ref = refs
    else:
        x_ref, w_ref, b_ref, o_ref = refs
        r_ref = None
    acc = jnp.zeros((HW, o_ref.shape[-1]), jnp.float32)
    for dy in range(KH):                      # unrolled MXU accumulation steps
        acc = acc + jnp.dot(x_ref[dy * W: dy * W + HW, :], w_ref[dy],
                            preferred_element_type=jnp.float32)
    y = acc + b_ref[...]
    if has_res:
        y = y + r_ref[...]
    if act == "relu":
        y = jnp.maximum(y, 0.0)
    elif act == "sigmoid":
        y = jax.nn.sigmoid(y)
    o_ref[...] = y.astype(o_ref.dtype)


def conv_kxk(x, prep, residual=None, act="none"):
    """KxK 'same' conv on NHWC input, fused BN/bias + residual + activation."""
    N, H, W, C = x.shape
    KH, KW = prep["kh"], prep["kw"]
    ph, pw = (KH - 1) // 2, (KW - 1) // 2
    O = prep["w"].shape[-1]

    xp = jnp.pad(x, ((0, 0), (0, 0), (pw, pw), (0, 0)))
    xcol = jnp.concatenate([xp[:, :, dx:dx + W, :] for dx in range(KW)],
                           axis=-1)                       # (N, H, W, KW*C)
    xcol = jnp.pad(xcol, ((0, 0), (ph, ph), (0, 0), (0, 0)))
    xflat = xcol.reshape(N, (H + 2 * ph) * W, KW * C).astype(jnp.bfloat16)

    args = [xflat, prep["w"], prep["b"]]
    in_specs = [
        pl.BlockSpec((None, (H + 2 * ph) * W, KW * C), lambda n: (n, 0, 0)),
        pl.BlockSpec((KH, KW * C, O), lambda n: (0, 0, 0)),
        pl.BlockSpec((1, O), lambda n: (0, 0)),
    ]
    if residual is not None:
        args.append(residual.reshape(N, H * W, O).astype(jnp.float32))
        in_specs.append(pl.BlockSpec((None, H * W, O), lambda n: (n, 0, 0)))

    out = pl.pallas_call(
        functools.partial(_conv_kernel, KH=KH, W=W, HW=H * W, act=act,
                          has_res=residual is not None),
        out_shape=jax.ShapeDtypeStruct((N, H * W, O), jnp.float32),
        grid_spec=pltpu.PrefetchScalarGridSpec(
            num_scalar_prefetch=0,
            grid=(N,),
            in_specs=in_specs,
            out_specs=pl.BlockSpec((None, H * W, O), lambda n: (n, 0, 0))),
        compiler_params=pltpu.CompilerParams(
            dimension_semantics=("parallel",)),
    )(*args)
    return out.reshape(N, H, W, O)


# ---------------------------------------------------------------------------
# Parameter build: fold BN scale into weights, pre-transpose / pre-pad (bf16)
# ---------------------------------------------------------------------------

def _init_conv_w(key, out_c, in_c, k):
    fan_in = in_c * k * k
    return jax.random.normal(key, (out_c, in_c, k, k),
                             jnp.float32) / np.sqrt(fan_in)


def prep_matmul(w_oc_ic, scale, shift):
    O, Cin = w_oc_ic.shape
    wm = (jnp.transpose(w_oc_ic) * scale[None, :]).astype(jnp.bfloat16)
    Kp, Np = _round_up(Cin, 128), _round_up(O, 128)
    wp = jnp.zeros((Kp, Np), jnp.bfloat16).at[:Cin, :O].set(wm)
    bp = jnp.zeros((1, Np), jnp.float32).at[0, :O].set(shift.astype(jnp.float32))
    return {"w": wp, "b": bp, "K": Cin, "N": O}


def prep_conv(w_ochw, scale, shift):
    O, C, KH, KW = w_ochw.shape
    wt = jnp.transpose(w_ochw, (2, 3, 1, 0)) * scale[None, None, None, :]
    wt = wt.reshape(KH, KW * C, O).astype(jnp.bfloat16)
    return {"w": wt, "b": shift.reshape(1, O).astype(jnp.float32),
            "kh": KH, "kw": KW}


def make_params(key, in_c, out_c):
    ks = jax.random.split(key, 7)
    hidden = max(out_c // 16, 1)
    bn_s = jnp.full((out_c,), BN_SCALE, jnp.float32)
    zero = jnp.zeros((out_c,), jnp.float32)
    return {
        "c1": prep_matmul(_init_conv_w(ks[0], out_c, in_c + out_c, 1)[:, :, 0, 0],
                          bn_s, zero),
        "c2": prep_conv(_init_conv_w(ks[1], out_c, out_c, 3), bn_s, zero),
        "c3": prep_conv(_init_conv_w(ks[2], out_c, out_c, 3), bn_s, zero),
        "c4": prep_matmul(_init_conv_w(ks[3], out_c, out_c, 1)[:, :, 0, 0],
                          bn_s, zero),
        "fc1": prep_matmul(_init_conv_w(ks[4], hidden, out_c, 1)[:, :, 0, 0],
                           jnp.ones((hidden,), jnp.float32),
                           jnp.zeros((hidden,), jnp.float32)),
        "fc2": prep_matmul(_init_conv_w(ks[5], out_c, hidden, 1)[:, :, 0, 0],
                           jnp.ones((out_c,), jnp.float32), zero),
        "sa": prep_conv(_init_conv_w(ks[6], 1, 2, 7),
                        jnp.ones((1,), jnp.float32),
                        jnp.zeros((1,), jnp.float32)),
    }


# ---------------------------------------------------------------------------
# Bilinear upsample (align_corners=True) via static interpolation matrices
# ---------------------------------------------------------------------------

def _interp_matrix(n_in, n_out):
    m = np.zeros((n_out, n_in), np.float32)
    if n_in == 1:
        m[:, 0] = 1.0
        return jnp.asarray(m)
    src = np.arange(n_out, dtype=np.float64) * (n_in - 1) / max(n_out - 1, 1)
    lo = np.clip(np.floor(src).astype(np.int64), 0, n_in - 2)
    frac = src - lo
    for o in range(n_out):
        m[o, lo[o]] += 1.0 - frac[o]
        m[o, lo[o] + 1] += frac[o]
    return jnp.asarray(m)


def upsample_bilinear_nhwc(x, scale):
    N, H, W, C = x.shape
    Wy, Wx = _interp_matrix(H, H * scale), _interp_matrix(W, W * scale)
    t = jnp.einsum("oh,nhwc->nowc", Wy, x)
    return jnp.einsum("pw,nowc->nopc", Wx, t)


# ---------------------------------------------------------------------------
# decoder_block forward (kernel path, NHWC internally)
# ---------------------------------------------------------------------------

def decoder_block_forward(prep, x_nchw, skip_nchw, scale=2):
    x = jnp.transpose(x_nchw, (0, 2, 3, 1))
    skip = jnp.transpose(skip_nchw, (0, 2, 3, 1))
    x = upsample_bilinear_nhwc(x, scale)
    x = jnp.concatenate([x, skip], axis=-1)
    N, H, W, Cin = x.shape
    out_c = prep["c1"]["N"]

    # c1: 1x1 conv + BN + ReLU
    s1 = matmul_fused(x.reshape(N * H * W, Cin), prep["c1"],
                      act="relu").reshape(N, H, W, out_c)
    # c2: 3x3 conv + BN, residual + ReLU fused in epilogue
    s2 = conv_kxk(s1, prep["c2"], residual=s1, act="relu")
    s12 = s1 + s2
    # c3: 3x3 conv + BN, residual (s1+s2) + ReLU fused
    s3 = conv_kxk(s2, prep["c3"], residual=s12, act="relu")
    s123 = s12 + s3
    # c4: 1x1 conv + BN, residual (s1+s2+s3) + ReLU fused
    y = matmul_fused(s3.reshape(N * H * W, out_c), prep["c4"],
                     residual=s123.reshape(N * H * W, out_c),
                     act="relu").reshape(N, H, W, out_c)

    # channel attention: avg & max pooled rows batched into one M=2N matmul
    avg = jnp.mean(y, axis=(1, 2))
    mx = jnp.max(y, axis=(1, 2))
    pooled = jnp.concatenate([avg, mx], axis=0)
    h = matmul_fused(pooled, prep["fc1"], act="relu")
    o = matmul_fused(h, prep["fc2"], act="none")
    gate_c = jax.nn.sigmoid(o[:N] + o[N:])
    y = y * gate_c[:, None, None, :]

    # spatial attention: 7x7 conv on [mean, max] channel maps, sigmoid fused
    a = jnp.mean(y, axis=-1, keepdims=True)
    m = jnp.max(y, axis=-1, keepdims=True)
    gate_s = conv_kxk(jnp.concatenate([a, m], axis=-1), prep["sa"],
                      act="sigmoid")
    y = y * gate_s
    return jnp.transpose(y, (0, 3, 1, 2))


# ---------------------------------------------------------------------------
# Pure-JAX reference (same effective bf16-rounded, BN-folded weights)
# ---------------------------------------------------------------------------

def _unprep_matmul(p):
    K, N = p["K"], p["N"]
    w = p["w"][:K, :N].astype(jnp.float32)
    return jnp.transpose(w)[:, :, None, None], p["b"][0, :N]


def _unprep_conv(p):
    KH, KW = p["kh"], p["kw"]
    T, KWC, O = p["w"].shape
    C = KWC // KW
    w = p["w"].astype(jnp.float32).reshape(KH, KW, C, O)
    return jnp.transpose(w, (3, 2, 0, 1)), p["b"][0]


def _conv_nchw(x, w, b, padding=0):
    y = lax.conv_general_dilated(x, w, (1, 1), [(padding, padding)] * 2,
                                 dimension_numbers=("NCHW", "OIHW", "NCHW"))
    return y + b.reshape(1, -1, 1, 1)


def reference_decoder(prep, x, skip, scale=2):
    c1w, c1b = _unprep_matmul(prep["c1"]); c2w, c2b = _unprep_conv(prep["c2"])
    c3w, c3b = _unprep_conv(prep["c3"]); c4w, c4b = _unprep_matmul(prep["c4"])
    f1w, _ = _unprep_matmul(prep["fc1"]); f2w, _ = _unprep_matmul(prep["fc2"])
    saw, _ = _unprep_conv(prep["sa"])
    Wy = _interp_matrix(x.shape[2], x.shape[2] * scale)
    Wx = _interp_matrix(x.shape[3], x.shape[3] * scale)
    x = jnp.einsum("pw,ncow->ncop", Wx, jnp.einsum("oh,nchw->ncow", Wy, x))
    x = jnp.concatenate([x, skip], axis=1)
    x = jax.nn.relu(_conv_nchw(x, c1w, c1b)); s1 = x
    x = jax.nn.relu(_conv_nchw(x, c2w, c2b, 1) + s1); s2 = x
    x = jax.nn.relu(_conv_nchw(x, c3w, c3b, 1) + s2 + s1); s3 = x
    x = jax.nn.relu(_conv_nchw(x, c4w, c4b) + s3 + s2 + s1)
    avg = jnp.mean(x, axis=(2, 3), keepdims=True)
    mx = jnp.max(x, axis=(2, 3), keepdims=True)
    zh = jnp.zeros((f1w.shape[0],), jnp.float32)
    zo = jnp.zeros((f2w.shape[0],), jnp.float32)
    mlp = lambda v: _conv_nchw(jax.nn.relu(_conv_nchw(v, f1w, zh)), f2w, zo)
    x = x * jax.nn.sigmoid(mlp(avg) + mlp(mx))
    a = jnp.mean(x, axis=1, keepdims=True)
    m = jnp.max(x, axis=1, keepdims=True)
    g = jax.nn.sigmoid(_conv_nchw(jnp.concatenate([a, m], axis=1), saw,
                                  jnp.zeros((1,), jnp.float32), 3))
    return x * g


# ---------------------------------------------------------------------------

if __name__ == "__main__":
    B, in_c, out_c, Hx, Wx = 2, 32, 32, 8, 8
    root = jax.random.PRNGKey(0)
    kp, kx, ks = jax.random.split(root, 3)
    params = make_params(kp, in_c, out_c)
    x = jax.random.normal(kx, (B, in_c, Hx, Wx), jnp.float32)
    skip = jax.random.normal(ks, (B, out_c, 2 * Hx, 2 * Wx), jnp.float32)

    fwd = jax.jit(lambda a, b: decoder_block_forward(params, a, b))
    y = fwd(x, skip)
    jax.block_until_ready(y)

    assert y.shape == (B, out_c, 2 * Hx, 2 * Wx)
    assert bool(jnp.all(jnp.isfinite(y)))

    y_ref = reference_decoder(params, x, skip)
    err = float(jnp.max(jnp.abs(y - y_ref) / (jnp.abs(y_ref) + 1.0)))
    assert err < 0.08, f"kernel/reference mismatch: {err}"
    print("KERNEL_OK")
</pallas_src>

<mosaic_0001>
module attributes {stable_mosaic.version = 11 : i64} {
  func.func @_mm_kernel(%arg0: i32, %arg1: i32, %arg2: i32, %arg3: memref<256x128xbf16, #tpu.memory_space<vmem>>, %arg4: memref<128x128xbf16, #tpu.memory_space<vmem>>, %arg5: memref<1x128xf32, #tpu.memory_space<vmem>>, %arg6: memref<256x128xf32, #tpu.memory_space<vmem>>, %arg7: memref<256x128xf32, #tpu.memory_space<vmem>>) attributes {dimension_semantics = [#tpu.dimension_semantics<parallel>, #tpu.dimension_semantics<parallel>, #tpu.dimension_semantics<arbitrary>], iteration_bounds = array<i64: 2, 1, 1>, scalar_prefetch = 0 : i64, scratch_operands = 1 : i64, tpu.core_type = #tpu.core_type<tc>, window_params = [{transform_indices = @transform_0, window_bounds = array<i64: 256, 128>}, {transform_indices = @transform_1, window_bounds = array<i64: 128, 128>}, {transform_indices = @transform_2, window_bounds = array<i64: 1, 128>}, {transform_indices = @transform_3, window_bounds = array<i64: 256, 128>}]} {
    %c0_i32 = arith.constant 0 : i32
    %0 = arith.cmpi eq, %arg2, %c0_i32 : i32
    %1 = arith.extui %0 : i1 to i32
    %c0_i32_0 = arith.constant 0 : i32
    %2 = arith.cmpi ne, %1, %c0_i32_0 : i32
    scf.if %2 {
      %cst_10 = arith.constant 0.000000e+00 : f32
      %12 = vector.broadcast %cst_10 : f32 to vector<256x128xf32>
      %c0_11 = arith.constant 0 : index
      %c0_12 = arith.constant 0 : index
      %13 = vector.load %arg7[%c0_11, %c0_12] : memref<256x128xf32, #tpu.memory_space<vmem>>, vector<256x128xf32>
      tpu.vector_store %arg7[%c0_11, %c0_12], %12 {strides = array<i32>} : memref<256x128xf32, #tpu.memory_space<vmem>>, vector<256x128xf32>,
    } else {
    }
    %c0 = arith.constant 0 : index
    %c0_1 = arith.constant 0 : index
    %3 = vector.load %arg7[%c0, %c0_1] : memref<256x128xf32, #tpu.memory_space<vmem>>, vector<256x128xf32>
    %c0_2 = arith.constant 0 : index
    %c0_3 = arith.constant 0 : index
    %4 = vector.load %arg3[%c0_2, %c0_3] : memref<256x128xbf16, #tpu.memory_space<vmem>>, vector<256x128xbf16>
    %c0_4 = arith.constant 0 : index
    %c0_5 = arith.constant 0 : index
    %5 = vector.load %arg4[%c0_4, %c0_5] : memref<128x128xbf16, #tpu.memory_space<vmem>>, vector<128x128xbf16>
    %cst = arith.constant dense<0.000000e+00> : vector<256x128xf32>
    %6 = tpu.matmul %4, %5, %cst {dimension_numbers = #tpu.dot_dimension_numbers<[1], [0], [0], [1], [0, 0, 1, 1], [], []>} : vector<256x128xbf16>, vector<128x128xbf16>, vector<256x128xf32> -> vector<256x128xf32>
    %7 = arith.addf %3, %6 : vector<256x128xf32>
    %c0_6 = arith.constant 0 : index
    %c0_7 = arith.constant 0 : index
    %8 = vector.load %arg7[%c0_6, %c0_7] : memref<256x128xf32, #tpu.memory_space<vmem>>, vector<256x128xf32>
    tpu.vector_store %arg7[%c0_6, %c0_7], %7 {strides = array<i32>} : memref<256x128xf32, #tpu.memory_space<vmem>>, vector<256x128xf32>,
    %c0_i32_8 = arith.constant 0 : i32
    %9 = arith.cmpi eq, %arg2, %c0_i32_8 : i32
    %10 = arith.extui %9 : i1 to i32
    %c0_i32_9 = arith.constant 0 : i32
    %11 = arith.cmpi ne, %10, %c0_i32_9 : i32
    scf.if %11 {
      %c0_10 = arith.constant 0 : index
      %c0_11 = arith.constant 0 : index
      %12 = vector.load %arg7[%c0_10, %c0_11] : memref<256x128xf32, #tpu.memory_space<vmem>>, vector<256x128xf32>
      %c0_12 = arith.constant 0 : index
      %c0_13 = arith.constant 0 : index
      %13 = vector.load %arg5[%c0_12, %c0_13] : memref<1x128xf32, #tpu.memory_space<vmem>>, vector<1x128xf32>
      %14 = vector.broadcast %13 : vector<1x128xf32> to vector<256x128xf32>
      %15 = arith.addf %12, %14 : vector<256x128xf32>
      %cst_14 = arith.constant 0.000000e+00 : f32
      %16 = vector.broadcast %cst_14 : f32 to vector<256x128xf32>
      %17 = arith.maximumf %15, %16 : vector<256x128xf32>
      %c0_15 = arith.constant 0 : index
      %c0_16 = arith.constant 0 : index
      %18 = vector.load %arg6[%c0_15, %c0_16] : memref<256x128xf32, #tpu.memory_space<vmem>>, vector<256x128xf32>
      tpu.vector_store %arg6[%c0_15, %c0_16], %17 {strides = array<i32>} : memref<256x128xf32, #tpu.memory_space<vmem>>, vector<256x128xf32>,
    } else {
    }
    return
  }
  func.func @transform_0(%arg0: i32, %arg1: i32, %arg2: i32) -> (i32, i32) {
    %c0_i32 = arith.constant 0 : i32
    return %arg0, %arg2 : i32, i32
  }
  func.func @transform_1(%arg0: i32, %arg1: i32, %arg2: i32) -> (i32, i32) {
    %c0_i32 = arith.constant 0 : i32
    return %arg2, %arg1 : i32, i32
  }
  func.func @transform_2(%arg0: i32, %arg1: i32, %arg2: i32) -> (i32, i32) {
    %c0_i32 = arith.constant 0 : i32
    %c0_i32_0 = arith.constant 0 : i32
    return %c0_i32, %arg1 : i32, i32
  }
  func.func @transform_3(%arg0: i32, %arg1: i32, %arg2: i32) -> (i32, i32) {
    %c0_i32 = arith.constant 0 : i32
    return %arg0, %arg1 : i32, i32
  }
}

module attributes {stable_mosaic.version = 11 : i64} {
  func.func @_conv_kernel(%arg0: i32, %arg1: memref<1x288x96xbf16, #tpu.memory_space<vmem>>, %arg2: memref<3x96x32xbf16, #tpu.memory_space<vmem>>, %arg3: memref<1x32xf32, #tpu.memory_space<vmem>>, %arg4: memref<1x256x32xf32, #tpu.memory_space<vmem>>, %arg5: memref<1x256x32xf32, #tpu.memory_space<vmem>>) attributes {dimension_semantics = [#tpu.dimension_semantics<parallel>], iteration_bounds = array<i64: 2>, scalar_prefetch = 0 : i64, scratch_operands = 0 : i64, tpu.core_type = #tpu.core_type<tc>, window_params = [{transform_indices = @transform_0, window_bounds = array<i64: 1, 288, 96>}, {pipeline_mode = #tpu.pipeline_mode<synchronous>, transform_indices = @transform_1, window_bounds = array<i64: 3, 96, 32>}, {pipeline_mode = #tpu.pipeline_mode<synchronous>, transform_indices = @transform_2, window_bounds = array<i64: 1, 32>}, {transform_indices = @transform_3, window_bounds = array<i64: 1, 256, 32>}, {transform_indices = @transform_4, window_bounds = array<i64: 1, 256, 32>}]} {
    %cst = arith.constant 0.000000e+00 : f32
    %0 = vector.broadcast %cst : f32 to vector<256x32xf32>
    %c0 = arith.constant 0 : index
    %c0_0 = arith.constant 0 : index
    %c0_1 = arith.constant 0 : index
    %1 = vector.load %arg1[%c0, %c0_0, %c0_1] : memref<1x288x96xbf16, #tpu.memory_space<vmem>>, vector<1x256x96xbf16>
    %2 = vector.shape_cast %1 : vector<1x256x96xbf16> to vector<256x96xbf16>
    %c0_2 = arith.constant 0 : index
    %c0_3 = arith.constant 0 : index
    %c0_4 = arith.constant 0 : index
    %3 = vector.load %arg2[%c0_2, %c0_3, %c0_4] : memref<3x96x32xbf16, #tpu.memory_space<vmem>>, vector<1x96x32xbf16>
    %4 = vector.shape_cast %3 : vector<1x96x32xbf16> to vector<96x32xbf16>
    %cst_5 = arith.constant dense<0.000000e+00> : vector<256x32xf32>
    %5 = tpu.matmul %2, %4, %cst_5 {dimension_numbers = #tpu.dot_dimension_numbers<[1], [0], [0], [1], [0, 0, 1, 1], [], []>} : vector<256x96xbf16>, vector<96x32xbf16>, vector<256x32xf32> -> vector<256x32xf32>
    %6 = arith.addf %0, %5 : vector<256x32xf32>
    %c0_6 = arith.constant 0 : index
    %c16 = arith.constant 16 : index
    %c0_7 = arith.constant 0 : index
    %7 = vector.load %arg1[%c0_6, %c16, %c0_7] : memref<1x288x96xbf16, #tpu.memory_space<vmem>>, vector<1x256x96xbf16>
    %8 = vector.shape_cast %7 : vector<1x256x96xbf16> to vector<256x96xbf16>
    %c1 = arith.constant 1 : index
    %c0_8 = arith.constant 0 : index
    %c0_9 = arith.constant 0 : index
    %9 = vector.load %arg2[%c1, %c0_8, %c0_9] : memref<3x96x32xbf16, #tpu.memory_space<vmem>>, vector<1x96x32xbf16>
    %10 = vector.shape_cast %9 : vector<1x96x32xbf16> to vector<96x32xbf16>
    %cst_10 = arith.constant dense<0.000000e+00> : vector<256x32xf32>
    %11 = tpu.matmul %8, %10, %cst_10 {dimension_numbers = #tpu.dot_dimension_numbers<[1], [0], [0], [1], [0, 0, 1, 1], [], []>} : vector<256x96xbf16>, vector<96x32xbf16>, vector<256x32xf32> -> vector<256x32xf32>
    %12 = arith.addf %6, %11 : vector<256x32xf32>
    %c0_11 = arith.constant 0 : index
    %c32 = arith.constant 32 : index
    %c0_12 = arith.constant 0 : index
    %13 = vector.load %arg1[%c0_11, %c32, %c0_12] : memref<1x288x96xbf16, #tpu.memory_space<vmem>>, vector<1x256x96xbf16>
    %14 = vector.shape_cast %13 : vector<1x256x96xbf16> to vector<256x96xbf16>
    %c2 = arith.constant 2 : index
    %c0_13 = arith.constant 0 : index
    %c0_14 = arith.constant 0 : index
    %15 = vector.load %arg2[%c2, %c0_13, %c0_14] : memref<3x96x32xbf16, #tpu.memory_space<vmem>>, vector<1x96x32xbf16>
    %16 = vector.shape_cast %15 : vector<1x96x32xbf16> to vector<96x32xbf16>
    %cst_15 = arith.constant dense<0.000000e+00> : vector<256x32xf32>
    %17 = tpu.matmul %14, %16, %cst_15 {dimension_numbers = #tpu.dot_dimension_numbers<[1], [0], [0], [1], [0, 0, 1, 1], [], []>} : vector<256x96xbf16>, vector<96x32xbf16>, vector<256x32xf32> -> vector<256x32xf32>
    %18 = arith.addf %12, %17 : vector<256x32xf32>
    %c0_16 = arith.constant 0 : index
    %c0_17 = arith.constant 0 : index
    %19 = vector.load %arg3[%c0_16, %c0_17] : memref<1x32xf32, #tpu.memory_space<vmem>>, vector<1x32xf32>
    %20 = vector.broadcast %19 : vector<1x32xf32> to vector<256x32xf32>
    %21 = arith.addf %18, %20 : vector<256x32xf32>
    %c0_18 = arith.constant 0 : index
    %c0_19 = arith.constant 0 : index
    %c0_20 = arith.constant 0 : index
    %22 = vector.load %arg4[%c0_18, %c0_19, %c0_20] : memref<1x256x32xf32, #tpu.memory_space<vmem>>, vector<1x256x32xf32>
    %23 = vector.shape_cast %22 : vector<1x256x32xf32> to vector<256x32xf32>
    %24 = arith.addf %21, %23 : vector<256x32xf32>
    %cst_21 = arith.constant 0.000000e+00 : f32
    %25 = vector.broadcast %cst_21 : f32 to vector<256x32xf32>
    %26 = arith.maximumf %24, %25 : vector<256x32xf32>
    %c0_22 = arith.constant 0 : index
    %c0_23 = arith.constant 0 : index
    %c0_24 = arith.constant 0 : index
    %27 = vector.load %arg5[%c0_22, %c0_23, %c0_24] : memref<1x256x32xf32, #tpu.memory_space<vmem>>, vector<1x256x32xf32>
    %28 = vector.shape_cast %27 : vector<1x256x32xf32> to vector<256x32xf32>
    %29 = vector.shape_cast %26 : vector<256x32xf32> to vector<1x256x32xf32>
    tpu.vector_store %arg5[%c0_22, %c0_23, %c0_24], %29 {strides = array<i32>} : memref<1x256x32xf32, #tpu.memory_space<vmem>>, vector<1x256x32xf32>,
    return
  }
  func.func @transform_0(%arg0: i32) -> (i32, i32, i32) {
    %c0_i32 = arith.constant 0 : i32
    %c0_i32_0 = arith.constant 0 : i32
    %c0_i32_1 = arith.constant 0 : i32
    return %arg0, %c0_i32, %c0_i32_0 : i32, i32, i32
  }
  func.func @transform_1(%arg0: i32) -> (i32, i32, i32) {
    %c0_i32 = arith.constant 0 : i32
    %c0_i32_0 = arith.constant 0 : i32
    %c0_i32_1 = arith.constant 0 : i32
    %c0_i32_2 = arith.constant 0 : i32
    return %c0_i32, %c0_i32_0, %c0_i32_1 : i32, i32, i32
  }
  func.func @transform_2(%arg0: i32) -> (i32, i32) {
    %c0_i32 = arith.constant 0 : i32
    %c0_i32_0 = arith.constant 0 : i32
    %c0_i32_1 = arith.constant 0 : i32
    return %c0_i32, %c0_i32_0 : i32, i32
  }
  func.func @transform_3(%arg0: i32) -> (i32, i32, i32) {
    %c0_i32 = arith.constant 0 : i32
    %c0_i32_0 = arith.constant 0 : i32
    %c0_i32_1 = arith.constant 0 : i32
    return %arg0, %c0_i32, %c0_i32_0 : i32, i32, i32
  }
  func.func @transform_4(%arg0: i32) -> (i32, i32, i32) {
    %c0_i32 = arith.constant 0 : i32
    %c0_i32_0 = arith.constant 0 : i32
    %c0_i32_1 = arith.constant 0 : i32
    return %arg0, %c0_i32, %c0_i32_0 : i32, i32, i32
  }
}

module attributes {stable_mosaic.version = 11 : i64} {
  func.func @_mm_kernel(%arg0: i32, %arg1: i32, %arg2: i32, %arg3: memref<256x128xbf16, #tpu.memory_space<vmem>>, %arg4: memref<128x128xbf16, #tpu.memory_space<vmem>>, %arg5: memref<1x128xf32, #tpu.memory_space<vmem>>, %arg6: memref<256x128xf32, #tpu.memory_space<vmem>>, %arg7: memref<256x128xf32, #tpu.memory_space<vmem>>, %arg8: memref<256x128xf32, #tpu.memory_space<vmem>>) attributes {dimension_semantics = [#tpu.dimension_semantics<parallel>, #tpu.dimension_semantics<parallel>, #tpu.dimension_semantics<arbitrary>], iteration_bounds = array<i64: 2, 1, 1>, scalar_prefetch = 0 : i64, scratch_operands = 1 : i64, tpu.core_type = #tpu.core_type<tc>, window_params = [{transform_indices = @transform_0, window_bounds = array<i64: 256, 128>}, {transform_indices = @transform_1, window_bounds = array<i64: 128, 128>}, {transform_indices = @transform_2, window_bounds = array<i64: 1, 128>}, {transform_indices = @transform_3, window_bounds = array<i64: 256, 128>}, {transform_indices = @transform_4, window_bounds = array<i64: 256, 128>}]} {
    %c0_i32 = arith.constant 0 : i32
    %0 = arith.cmpi eq, %arg2, %c0_i32 : i32
    %1 = arith.extui %0 : i1 to i32
    %c0_i32_0 = arith.constant 0 : i32
    %2 = arith.cmpi ne, %1, %c0_i32_0 : i32
    scf.if %2 {
      %cst_10 = arith.constant 0.000000e+00 : f32
      %12 = vector.broadcast %cst_10 : f32 to vector<256x128xf32>
      %c0_11 = arith.constant 0 : index
      %c0_12 = arith.constant 0 : index
      %13 = vector.load %arg8[%c0_11, %c0_12] : memref<256x128xf32, #tpu.memory_space<vmem>>, vector<256x128xf32>
      tpu.vector_store %arg8[%c0_11, %c0_12], %12 {strides = array<i32>} : memref<256x128xf32, #tpu.memory_space<vmem>>, vector<256x128xf32>,
    } else {
    }
    %c0 = arith.constant 0 : index
    %c0_1 = arith.constant 0 : index
    %3 = vector.load %arg8[%c0, %c0_1] : memref<256x128xf32, #tpu.memory_space<vmem>>, vector<256x128xf32>
    %c0_2 = arith.constant 0 : index
    %c0_3 = arith.constant 0 : index
    %4 = vector.load %arg3[%c0_2, %c0_3] : memref<256x128xbf16, #tpu.memory_space<vmem>>, vector<256x128xbf16>
    %c0_4 = arith.constant 0 : index
    %c0_5 = arith.constant 0 : index
    %5 = vector.load %arg4[%c0_4, %c0_5] : memref<128x128xbf16, #tpu.memory_space<vmem>>, vector<128x128xbf16>
    %cst = arith.constant dense<0.000000e+00> : vector<256x128xf32>
    %6 = tpu.matmul %4, %5, %cst {dimension_numbers = #tpu.dot_dimension_numbers<[1], [0], [0], [1], [0, 0, 1, 1], [], []>} : vector<256x128xbf16>, vector<128x128xbf16>, vector<256x128xf32> -> vector<256x128xf32>
    %7 = arith.addf %3, %6 : vector<256x128xf32>
    %c0_6 = arith.constant 0 : index
    %c0_7 = arith.constant 0 : index
    %8 = vector.load %arg8[%c0_6, %c0_7] : memref<256x128xf32, #tpu.memory_space<vmem>>, vector<256x128xf32>
    tpu.vector_store %arg8[%c0_6, %c0_7], %7 {strides = array<i32>} : memref<256x128xf32, #tpu.memory_space<vmem>>, vector<256x128xf32>,
    %c0_i32_8 = arith.constant 0 : i32
    %9 = arith.cmpi eq, %arg2, %c0_i32_8 : i32
    %10 = arith.extui %9 : i1 to i32
    %c0_i32_9 = arith.constant 0 : i32
    %11 = arith.cmpi ne, %10, %c0_i32_9 : i32
    scf.if %11 {
      %c0_10 = arith.constant 0 : index
      %c0_11 = arith.constant 0 : index
      %12 = vector.load %arg8[%c0_10, %c0_11] : memref<256x128xf32, #tpu.memory_space<vmem>>, vector<256x128xf32>
      %c0_12 = arith.constant 0 : index
      %c0_13 = arith.constant 0 : index
      %13 = vector.load %arg5[%c0_12, %c0_13] : memref<1x128xf32, #tpu.memory_space<vmem>>, vector<1x128xf32>
      %14 = vector.broadcast %13 : vector<1x128xf32> to vector<256x128xf32>
      %15 = arith.addf %12, %14 : vector<256x128xf32>
      %c0_14 = arith.constant 0 : index
      %c0_15 = arith.constant 0 : index
      %16 = vector.load %arg6[%c0_14, %c0_15] : memref<256x128xf32, #tpu.memory_space<vmem>>, vector<256x128xf32>
      %17 = arith.addf %15, %16 : vector<256x128xf32>
      %cst_16 = arith.constant 0.000000e+00 : f32
      %18 = vector.broadcast %cst_16 : f32 to vector<256x128xf32>
      %19 = arith.maximumf %17, %18 : vector<256x128xf32>
      %c0_17 = arith.constant 0 : index
      %c0_18 = arith.constant 0 : index
      %20 = vector.load %arg7[%c0_17, %c0_18] : memref<256x128xf32, #tpu.memory_space<vmem>>, vector<256x128xf32>
      tpu.vector_store %arg7[%c0_17, %c0_18], %19 {strides = array<i32>} : memref<256x128xf32, #tpu.memory_space<vmem>>, vector<256x128xf32>,
    } else {
    }
    return
  }
  func.func @transform_0(%arg0: i32, %arg1: i32, %arg2: i32) -> (i32, i32) {
    %c0_i32 = arith.constant 0 : i32
    return %arg0, %arg2 : i32, i32
  }
  func.func @transform_1(%arg0: i32, %arg1: i32, %arg2: i32) -> (i32, i32) {
    %c0_i32 = arith.constant 0 : i32
    return %arg2, %arg1 : i32, i32
  }
  func.func @transform_2(%arg0: i32, %arg1: i32, %arg2: i32) -> (i32, i32) {
    %c0_i32 = arith.constant 0 : i32
    %c0_i32_0 = arith.constant 0 : i32
    return %c0_i32, %arg1 : i32, i32
  }
  func.func @transform_3(%arg0: i32, %arg1: i32, %arg2: i32) -> (i32, i32) {
    %c0_i32 = arith.constant 0 : i32
    return %arg0, %arg1 : i32, i32
  }
  func.func @transform_4(%arg0: i32, %arg1: i32, %arg2: i32) -> (i32, i32) {
    %c0_i32 = arith.constant 0 : i32
    return %arg0, %arg1 : i32, i32
  }
}

module attributes {stable_mosaic.version = 11 : i64} {
  func.func @_mm_kernel(%arg0: i32, %arg1: i32, %arg2: i32, %arg3: memref<16x128xbf16, #tpu.memory_space<vmem>>, %arg4: memref<128x128xbf16, #tpu.memory_space<vmem>>, %arg5: memref<1x128xf32, #tpu.memory_space<vmem>>, %arg6: memref<16x128xf32, #tpu.memory_space<vmem>>, %arg7: memref<16x128xf32, #tpu.memory_space<vmem>>) attributes {dimension_semantics = [#tpu.dimension_semantics<parallel>, #tpu.dimension_semantics<parallel>, #tpu.dimension_semantics<arbitrary>], iteration_bounds = array<i64: 1, 1, 1>, scalar_prefetch = 0 : i64, scratch_operands = 1 : i64, tpu.core_type = #tpu.core_type<tc>, window_params = [{transform_indices = @transform_0, window_bounds = array<i64: 16, 128>}, {transform_indices = @transform_1, window_bounds = array<i64: 128, 128>}, {transform_indices = @transform_2, window_bounds = array<i64: 1, 128>}, {transform_indices = @transform_3, window_bounds = array<i64: 16, 128>}]} {
    %c0_i32 = arith.constant 0 : i32
    %0 = arith.cmpi eq, %arg2, %c0_i32 : i32
    %1 = arith.extui %0 : i1 to i32
    %c0_i32_0 = arith.constant 0 : i32
    %2 = arith.cmpi ne, %1, %c0_i32_0 : i32
    scf.if %2 {
      %cst_10 = arith.constant 0.000000e+00 : f32
      %12 = vector.broadcast %cst_10 : f32 to vector<16x128xf32>
      %c0_11 = arith.constant 0 : index
      %c0_12 = arith.constant 0 : index
      %13 = vector.load %arg7[%c0_11, %c0_12] : memref<16x128xf32, #tpu.memory_space<vmem>>, vector<16x128xf32>
      tpu.vector_store %arg7[%c0_11, %c0_12], %12 {strides = array<i32>} : memref<16x128xf32, #tpu.memory_space<vmem>>, vector<16x128xf32>,
    } else {
    }
    %c0 = arith.constant 0 : index
    %c0_1 = arith.constant 0 : index
    %3 = vector.load %arg7[%c0, %c0_1] : memref<16x128xf32, #tpu.memory_space<vmem>>, vector<16x128xf32>
    %c0_2 = arith.constant 0 : index
    %c0_3 = arith.constant 0 : index
    %4 = vector.load %arg3[%c0_2, %c0_3] : memref<16x128xbf16, #tpu.memory_space<vmem>>, vector<16x128xbf16>
    %c0_4 = arith.constant 0 : index
    %c0_5 = arith.constant 0 : index
    %5 = vector.load %arg4[%c0_4, %c0_5] : memref<128x128xbf16, #tpu.memory_space<vmem>>, vector<128x128xbf16>
    %cst = arith.constant dense<0.000000e+00> : vector<16x128xf32>
    %6 = tpu.matmul %4, %5, %cst {dimension_numbers = #tpu.dot_dimension_numbers<[1], [0], [0], [1], [0, 0, 1, 1], [], []>} : vector<16x128xbf16>, vector<128x128xbf16>, vector<16x128xf32> -> vector<16x128xf32>
    %7 = arith.addf %3, %6 : vector<16x128xf32>
    %c0_6 = arith.constant 0 : index
    %c0_7 = arith.constant 0 : index
    %8 = vector.load %arg7[%c0_6, %c0_7] : memref<16x128xf32, #tpu.memory_space<vmem>>, vector<16x128xf32>
    tpu.vector_store %arg7[%c0_6, %c0_7], %7 {strides = array<i32>} : memref<16x128xf32, #tpu.memory_space<vmem>>, vector<16x128xf32>,
    %c0_i32_8 = arith.constant 0 : i32
    %9 = arith.cmpi eq, %arg2, %c0_i32_8 : i32
    %10 = arith.extui %9 : i1 to i32
    %c0_i32_9 = arith.constant 0 : i32
    %11 = arith.cmpi ne, %10, %c0_i32_9 : i32
    scf.if %11 {
      %c0_10 = arith.constant 0 : index
      %c0_11 = arith.constant 0 : index
      %12 = vector.load %arg7[%c0_10, %c0_11] : memref<16x128xf32, #tpu.memory_space<vmem>>, vector<16x128xf32>
      %c0_12 = arith.constant 0 : index
      %c0_13 = arith.constant 0 : index
      %13 = vector.load %arg5[%c0_12, %c0_13] : memref<1x128xf32, #tpu.memory_space<vmem>>, vector<1x128xf32>
      %14 = vector.broadcast %13 : vector<1x128xf32> to vector<16x128xf32>
      %15 = arith.addf %12, %14 : vector<16x128xf32>
      %cst_14 = arith.constant 0.000000e+00 : f32
      %16 = vector.broadcast %cst_14 : f32 to vector<16x128xf32>
      %17 = arith.maximumf %15, %16 : vector<16x128xf32>
      %c0_15 = arith.constant 0 : index
      %c0_16 = arith.constant 0 : index
      %18 = vector.load %arg6[%c0_15, %c0_16] : memref<16x128xf32, #tpu.memory_space<vmem>>, vector<16x128xf32>
      tpu.vector_store %arg6[%c0_15, %c0_16], %17 {strides = array<i32>} : memref<16x128xf32, #tpu.memory_space<vmem>>, vector<16x128xf32>,
    } else {
    }
    return
  }
  func.func @transform_0(%arg0: i32, %arg1: i32, %arg2: i32) -> (i32, i32) {
    %c0_i32 = arith.constant 0 : i32
    return %arg0, %arg2 : i32, i32
  }
  func.func @transform_1(%arg0: i32, %arg1: i32, %arg2: i32) -> (i32, i32) {
    %c0_i32 = arith.constant 0 : i32
    return %arg2, %arg1 : i32, i32
  }
  func.func @transform_2(%arg0: i32, %arg1: i32, %arg2: i32) -> (i32, i32) {
    %c0_i32 = arith.constant 0 : i32
    %c0_i32_0 = arith.constant 0 : i32
    return %c0_i32, %arg1 : i32, i32
  }
  func.func @transform_3(%arg0: i32, %arg1: i32, %arg2: i32) -> (i32, i32) {
    %c0_i32 = arith.constant 0 : i32
    return %arg0, %arg1 : i32, i32
  }
}

module attributes {stable_mosaic.version = 11 : i64} {
  func.func @_mm_kernel(%arg0: i32, %arg1: i32, %arg2: i32, %arg3: memref<16x128xbf16, #tpu.memory_space<vmem>>, %arg4: memref<128x128xbf16, #tpu.memory_space<vmem>>, %arg5: memref<1x128xf32, #tpu.memory_space<vmem>>, %arg6: memref<16x128xf32, #tpu.memory_space<vmem>>, %arg7: memref<16x128xf32, #tpu.memory_space<vmem>>) attributes {dimension_semantics = [#tpu.dimension_semantics<parallel>, #tpu.dimension_semantics<parallel>, #tpu.dimension_semantics<arbitrary>], iteration_bounds = array<i64: 1, 1, 1>, scalar_prefetch = 0 : i64, scratch_operands = 1 : i64, tpu.core_type = #tpu.core_type<tc>, window_params = [{transform_indices = @transform_0, window_bounds = array<i64: 16, 128>}, {transform_indices = @transform_1, window_bounds = array<i64: 128, 128>}, {transform_indices = @transform_2, window_bounds = array<i64: 1, 128>}, {transform_indices = @transform_3, window_bounds = array<i64: 16, 128>}]} {
    %c0_i32 = arith.constant 0 : i32
    %0 = arith.cmpi eq, %arg2, %c0_i32 : i32
    %1 = arith.extui %0 : i1 to i32
    %c0_i32_0 = arith.constant 0 : i32
    %2 = arith.cmpi ne, %1, %c0_i32_0 : i32
    scf.if %2 {
      %cst_10 = arith.constant 0.000000e+00 : f32
      %12 = vector.broadcast %cst_10 : f32 to vector<16x128xf32>
      %c0_11 = arith.constant 0 : index
      %c0_12 = arith.constant 0 : index
      %13 = vector.load %arg7[%c0_11, %c0_12] : memref<16x128xf32, #tpu.memory_space<vmem>>, vector<16x128xf32>
      tpu.vector_store %arg7[%c0_11, %c0_12], %12 {strides = array<i32>} : memref<16x128xf32, #tpu.memory_space<vmem>>, vector<16x128xf32>,
    } else {
    }
    %c0 = arith.constant 0 : index
    %c0_1 = arith.constant 0 : index
    %3 = vector.load %arg7[%c0, %c0_1] : memref<16x128xf32, #tpu.memory_space<vmem>>, vector<16x128xf32>
    %c0_2 = arith.constant 0 : index
    %c0_3 = arith.constant 0 : index
    %4 = vector.load %arg3[%c0_2, %c0_3] : memref<16x128xbf16, #tpu.memory_space<vmem>>, vector<16x128xbf16>
    %c0_4 = arith.constant 0 : index
    %c0_5 = arith.constant 0 : index
    %5 = vector.load %arg4[%c0_4, %c0_5] : memref<128x128xbf16, #tpu.memory_space<vmem>>, vector<128x128xbf16>
    %cst = arith.constant dense<0.000000e+00> : vector<16x128xf32>
    %6 = tpu.matmul %4, %5, %cst {dimension_numbers = #tpu.dot_dimension_numbers<[1], [0], [0], [1], [0, 0, 1, 1], [], []>} : vector<16x128xbf16>, vector<128x128xbf16>, vector<16x128xf32> -> vector<16x128xf32>
    %7 = arith.addf %3, %6 : vector<16x128xf32>
    %c0_6 = arith.constant 0 : index
    %c0_7 = arith.constant 0 : index
    %8 = vector.load %arg7[%c0_6, %c0_7] : memref<16x128xf32, #tpu.memory_space<vmem>>, vector<16x128xf32>
    tpu.vector_store %arg7[%c0_6, %c0_7], %7 {strides = array<i32>} : memref<16x128xf32, #tpu.memory_space<vmem>>, vector<16x128xf32>,
    %c0_i32_8 = arith.constant 0 : i32
    %9 = arith.cmpi eq, %arg2, %c0_i32_8 : i32
    %10 = arith.extui %9 : i1 to i32
    %c0_i32_9 = arith.constant 0 : i32
    %11 = arith.cmpi ne, %10, %c0_i32_9 : i32
    scf.if %11 {
      %c0_10 = arith.constant 0 : index
      %c0_11 = arith.constant 0 : index
      %12 = vector.load %arg7[%c0_10, %c0_11] : memref<16x128xf32, #tpu.memory_space<vmem>>, vector<16x128xf32>
      %c0_12 = arith.constant 0 : index
      %c0_13 = arith.constant 0 : index
      %13 = vector.load %arg5[%c0_12, %c0_13] : memref<1x128xf32, #tpu.memory_space<vmem>>, vector<1x128xf32>
      %14 = vector.broadcast %13 : vector<1x128xf32> to vector<16x128xf32>
      %15 = arith.addf %12, %14 : vector<16x128xf32>
      %c0_14 = arith.constant 0 : index
      %c0_15 = arith.constant 0 : index
      %16 = vector.load %arg6[%c0_14, %c0_15] : memref<16x128xf32, #tpu.memory_space<vmem>>, vector<16x128xf32>
      tpu.vector_store %arg6[%c0_14, %c0_15], %15 {strides = array<i32>} : memref<16x128xf32, #tpu.memory_space<vmem>>, vector<16x128xf32>,
    } else {
    }
    return
  }
  func.func @transform_0(%arg0: i32, %arg1: i32, %arg2: i32) -> (i32, i32) {
    %c0_i32 = arith.constant 0 : i32
    return %arg0, %arg2 : i32, i32
  }
  func.func @transform_1(%arg0: i32, %arg1: i32, %arg2: i32) -> (i32, i32) {
    %c0_i32 = arith.constant 0 : i32
    return %arg2, %arg1 : i32, i32
  }
  func.func @transform_2(%arg0: i32, %arg1: i32, %arg2: i32) -> (i32, i32) {
    %c0_i32 = arith.constant 0 : i32
    %c0_i32_0 = arith.constant 0 : i32
    return %c0_i32, %arg1 : i32, i32
  }
  func.func @transform_3(%arg0: i32, %arg1: i32, %arg2: i32) -> (i32, i32) {
    %c0_i32 = arith.constant 0 : i32
    return %arg0, %arg1 : i32, i32
  }
}

module attributes {stable_mosaic.version = 11 : i64} {
  func.func @_conv_kernel(%arg0: i32, %arg1: memref<1x352x14xbf16, #tpu.memory_space<vmem>>, %arg2: memref<7x14x1xbf16, #tpu.memory_space<vmem>>, %arg3: memref<1x1xf32, #tpu.memory_space<vmem>>, %arg4: memref<1x256x1xf32, #tpu.memory_space<vmem>>) attributes {dimension_semantics = [#tpu.dimension_semantics<parallel>], iteration_bounds = array<i64: 2>, scalar_prefetch = 0 : i64, scratch_operands = 0 : i64, tpu.core_type = #tpu.core_type<tc>, window_params = [{transform_indices = @transform_0, window_bounds = array<i64: 1, 352, 14>}, {pipeline_mode = #tpu.pipeline_mode<synchronous>, transform_indices = @transform_1, window_bounds = array<i64: 7, 14, 1>}, {pipeline_mode = #tpu.pipeline_mode<synchronous>, transform_indices = @transform_2, window_bounds = array<i64: 1, 1>}, {transform_indices = @transform_3, window_bounds = array<i64: 1, 256, 1>}]} {
    %cst = arith.constant 0.000000e+00 : f32
    %0 = vector.broadcast %cst : f32 to vector<256x1xf32>
    %c0 = arith.constant 0 : index
    %c0_0 = arith.constant 0 : index
    %c0_1 = arith.constant 0 : index
    %1 = vector.load %arg1[%c0, %c0_0, %c0_1] : memref<1x352x14xbf16, #tpu.memory_space<vmem>>, vector<1x256x14xbf16>
    %2 = vector.shape_cast %1 : vector<1x256x14xbf16> to vector<256x14xbf16>
    %c0_2 = arith.constant 0 : index
    %c0_3 = arith.constant 0 : index
    %c0_4 = arith.constant 0 : index
    %3 = vector.load %arg2[%c0_2, %c0_3, %c0_4] : memref<7x14x1xbf16, #tpu.memory_space<vmem>>, vector<1x14x1xbf16>
    %4 = vector.shape_cast %3 : vector<1x14x1xbf16> to vector<14x1xbf16>
    %cst_5 = arith.constant dense<0.000000e+00> : vector<256x1xf32>
    %5 = tpu.matmul %2, %4, %cst_5 {dimension_numbers = #tpu.dot_dimension_numbers<[1], [0], [0], [1], [0, 0, 1, 1], [], []>} : vector<256x14xbf16>, vector<14x1xbf16>, vector<256x1xf32> -> vector<256x1xf32>
    %6 = arith.addf %0, %5 : vector<256x1xf32>
    %c0_6 = arith.constant 0 : index
    %c16 = arith.constant 16 : index
    %c0_7 = arith.constant 0 : index
    %7 = vector.load %arg1[%c0_6, %c16, %c0_7] : memref<1x352x14xbf16, #tpu.memory_space<vmem>>, vector<1x256x14xbf16>
    %8 = vector.shape_cast %7 : vector<1x256x14xbf16> to vector<256x14xbf16>
    %c1 = arith.constant 1 : index
    %c0_8 = arith.constant 0 : index
    %c0_9 = arith.constant 0 : index
    %9 = vector.load %arg2[%c1, %c0_8, %c0_9] : memref<7x14x1xbf16, #tpu.memory_space<vmem>>, vector<1x14x1xbf16>
    %10 = vector.shape_cast %9 : vector<1x14x1xbf16> to vector<14x1xbf16>
    %cst_10 = arith.constant dense<0.000000e+00> : vector<256x1xf32>
    %11 = tpu.matmul %8, %10, %cst_10 {dimension_numbers = #tpu.dot_dimension_numbers<[1], [0], [0], [1], [0, 0, 1, 1], [], []>} : vector<256x14xbf16>, vector<14x1xbf16>, vector<256x1xf32> -> vector<256x1xf32>
    %12 = arith.addf %6, %11 : vector<256x1xf32>
    %c0_11 = arith.constant 0 : index
    %c32 = arith.constant 32 : index
    %c0_12 = arith.constant 0 : index
    %13 = vector.load %arg1[%c0_11, %c32, %c0_12] : memref<1x352x14xbf16, #tpu.memory_space<vmem>>, vector<1x256x14xbf16>
    %14 = vector.shape_cast %13 : vector<1x256x14xbf16> to vector<256x14xbf16>
    %c2 = arith.constant 2 : index
    %c0_13 = arith.constant 0 : index
    %c0_14 = arith.constant 0 : index
    %15 = vector.load %arg2[%c2, %c0_13, %c0_14] : memref<7x14x1xbf16, #tpu.memory_space<vmem>>, vector<1x14x1xbf16>
    %16 = vector.shape_cast %15 : vector<1x14x1xbf16> to vector<14x1xbf16>
    %cst_15 = arith.constant dense<0.000000e+00> : vector<256x1xf32>
    %17 = tpu.matmul %14, %16, %cst_15 {dimension_numbers = #tpu.dot_dimension_numbers<[1], [0], [0], [1], [0, 0, 1, 1], [], []>} : vector<256x14xbf16>, vector<14x1xbf16>, vector<256x1xf32> -> vector<256x1xf32>
    %18 = arith.addf %12, %17 : vector<256x1xf32>
    %c0_16 = arith.constant 0 : index
    %c48 = arith.constant 48 : index
    %c0_17 = arith.constant 0 : index
    %19 = vector.load %arg1[%c0_16, %c48, %c0_17] : memref<1x352x14xbf16, #tpu.memory_space<vmem>>, vector<1x256x14xbf16>
    %20 = vector.shape_cast %19 : vector<1x256x14xbf16> to vector<256x14xbf16>
    %c3 = arith.constant 3 : index
    %c0_18 = arith.constant 0 : index
    %c0_19 = arith.constant 0 : index
    %21 = vector.load %arg2[%c3, %c0_18, %c0_19] : memref<7x14x1xbf16, #tpu.memory_space<vmem>>, vector<1x14x1xbf16>
    %22 = vector.shape_cast %21 : vector<1x14x1xbf16> to vector<14x1xbf16>
    %cst_20 = arith.constant dense<0.000000e+00> : vector<256x1xf32>
    %23 = tpu.matmul %20, %22, %cst_20 {dimension_numbers = #tpu.dot_dimension_numbers<[1], [0], [0], [1], [0, 0, 1, 1], [], []>} : vector<256x14xbf16>, vector<14x1xbf16>, vector<256x1xf32> -> vector<256x1xf32>
    %24 = arith.addf %18, %23 : vector<256x1xf32>
    %c0_21 = arith.constant 0 : index
    %c64 = arith.constant 64 : index
    %c0_22 = arith.constant 0 : index
    %25 = vector.load %arg1[%c0_21, %c64, %c0_22] : memref<1x352x14xbf16, #tpu.memory_space<vmem>>, vector<1x256x14xbf16>
    %26 = vector.shape_cast %25 : vector<1x256x14xbf16> to vector<256x14xbf16>
    %c4 = arith.constant 4 : index
    %c0_23 = arith.constant 0 : index
    %c0_24 = arith.constant 0 : index
    %27 = vector.load %arg2[%c4, %c0_23, %c0_24] : memref<7x14x1xbf16, #tpu.memory_space<vmem>>, vector<1x14x1xbf16>
    %28 = vector.shape_cast %27 : vector<1x14x1xbf16> to vector<14x1xbf16>
    %cst_25 = arith.constant dense<0.000000e+00> : vector<256x1xf32>
    %29 = tpu.matmul %26, %28, %cst_25 {dimension_numbers = #tpu.dot_dimension_numbers<[1], [0], [0], [1], [0, 0, 1, 1], [], []>} : vector<256x14xbf16>, vector<14x1xbf16>, vector<256x1xf32> -> vector<256x1xf32>
    %30 = arith.addf %24, %29 : vector<256x1xf32>
    %c0_26 = arith.constant 0 : index
    %c80 = arith.constant 80 : index
    %c0_27 = arith.constant 0 : index
    %31 = vector.load %arg1[%c0_26, %c80, %c0_27] : memref<1x352x14xbf16, #tpu.memory_space<vmem>>, vector<1x256x14xbf16>
    %32 = vector.shape_cast %31 : vector<1x256x14xbf16> to vector<256x14xbf16>
    %c5 = arith.constant 5 : index
    %c0_28 = arith.constant 0 : index
    %c0_29 = arith.constant 0 : index
    %33 = vector.load %arg2[%c5, %c0_28, %c0_29] : memref<7x14x1xbf16, #tpu.memory_space<vmem>>, vector<1x14x1xbf16>
    %34 = vector.shape_cast %33 : vector<1x14x1xbf16> to vector<14x1xbf16>
    %cst_30 = arith.constant dense<0.000000e+00> : vector<256x1xf32>
    %35 = tpu.matmul %32, %34, %cst_30 {dimension_numbers = #tpu.dot_dimension_numbers<[1], [0], [0], [1], [0, 0, 1, 1], [], []>} : vector<256x14xbf16>, vector<14x1xbf16>, vector<256x1xf32> -> vector<256x1xf32>
    %36 = arith.addf %30, %35 : vector<256x1xf32>
    %c0_31 = arith.constant 0 : index
    %c96 = arith.constant 96 : index
    %c0_32 = arith.constant 0 : index
    %37 = vector.load %arg1[%c0_31, %c96, %c0_32] : memref<1x352x14xbf16, #tpu.memory_space<vmem>>, vector<1x256x14xbf16>
    %38 = vector.shape_cast %37 : vector<1x256x14xbf16> to vector<256x14xbf16>
    %c6 = arith.constant 6 : index
    %c0_33 = arith.constant 0 : index
    %c0_34 = arith.constant 0 : index
    %39 = vector.load %arg2[%c6, %c0_33, %c0_34] : memref<7x14x1xbf16, #tpu.memory_space<vmem>>, vector<1x14x1xbf16>
    %40 = vector.shape_cast %39 : vector<1x14x1xbf16> to vector<14x1xbf16>
    %cst_35 = arith.constant dense<0.000000e+00> : vector<256x1xf32>
    %41 = tpu.matmul %38, %40, %cst_35 {dimension_numbers = #tpu.dot_dimension_numbers<[1], [0], [0], [1], [0, 0, 1, 1], [], []>} : vector<256x14xbf16>, vector<14x1xbf16>, vector<256x1xf32> -> vector<256x1xf32>
    %42 = arith.addf %36, %41 : vector<256x1xf32>
    %c0_36 = arith.constant 0 : index
    %c0_37 = arith.constant 0 : index
    %43 = vector.load %arg3[%c0_36, %c0_37] : memref<1x1xf32, #tpu.memory_space<vmem>>, vector<1x1xf32>
    %44 = vector.broadcast %43 : vector<1x1xf32> to vector<256x1xf32>
    %45 = arith.addf %42, %44 : vector<256x1xf32>
    %46 = arith.negf %45 : vector<256x1xf32>
    %47 = math.exp %46 : vector<256x1xf32>
    %cst_38 = arith.constant 1.000000e+00 : f32
    %48 = vector.broadcast %cst_38 : f32 to vector<256x1xf32>
    %49 = arith.addf %48, %47 : vector<256x1xf32>
    %50 = arith.divf %48, %49 : vector<256x1xf32>
    %c0_39 = arith.constant 0 : index
    %c0_40 = arith.constant 0 : index
    %c0_41 = arith.constant 0 : index
    %51 = vector.load %arg4[%c0_39, %c0_40, %c0_41] : memref<1x256x1xf32, #tpu.memory_space<vmem>>, vector<1x256x1xf32>
    %52 = vector.shape_cast %51 : vector<1x256x1xf32> to vector<256x1xf32>
    %53 = vector.shape_cast %50 : vector<256x1xf32> to vector<1x256x1xf32>
    tpu.vector_store %arg4[%c0_39, %c0_40, %c0_41], %53 {strides = array<i32>} : memref<1x256x1xf32, #tpu.memory_space<vmem>>, vector<1x256x1xf32>,
    return
  }
  func.func @transform_0(%arg0: i32) -> (i32, i32, i32) {
    %c0_i32 = arith.constant 0 : i32
    %c0_i32_0 = arith.constant 0 : i32
    %c0_i32_1 = arith.constant 0 : i32
    return %arg0, %c0_i32, %c0_i32_0 : i32, i32, i32
  }
  func.func @transform_1(%arg0: i32) -> (i32, i32, i32) {
    %c0_i32 = arith.constant 0 : i32
    %c0_i32_0 = arith.constant 0 : i32
    %c0_i32_1 = arith.constant 0 : i32
    %c0_i32_2 = arith.constant 0 : i32
    return %c0_i32, %c0_i32_0, %c0_i32_1 : i32, i32, i32
  }
  func.func @transform_2(%arg0: i32) -> (i32, i32) {
    %c0_i32 = arith.constant 0 : i32
    %c0_i32_0 = arith.constant 0 : i32
    %c0_i32_1 = arith.constant 0 : i32
    return %c0_i32, %c0_i32_0 : i32, i32
  }
  func.func @transform_3(%arg0: i32) -> (i32, i32, i32) {
    %c0_i32 = arith.constant 0 : i32
    %c0_i32_0 = arith.constant 0 : i32
    %c0_i32_1 = arith.constant 0 : i32
    return %arg0, %c0_i32, %c0_i32_0 : i32, i32, i32
  }
}

</mosaic_0001>

<llo_original>
// kernel: _lambda_.7
$region0: #{_lambda_.7}
  #allocation0 [shape = 'u32[]', space=smem, size = 0x4, offset = 0x4, fixed_abs, tag = 'smem constant byte address 0x4 - core index']
  #allocation1 [shape = 'u32[144,128]{1,0:T(1,128)}', space=vmem, size = 0x12000, scoped, tag = 'internal scratch']
  #allocation2 [shape = 'f32[256,128]{1,0:T(8,128)}', space=vmem, size = 0x20000, scoped, tag = 'scratch operand']
  %s0 = inlined_call_operand.vmem [shape: bf16[512,128], index: 0, kind: input, shape index: {}]
  %s1 = inlined_call_operand.vmem [shape: bf16[128,128], index: 1, kind: input, shape index: {}]
  %s2 = inlined_call_operand.vmem [shape: f32[1,128], index: 2, kind: input, shape index: {}]
  %s3 = inlined_call_operand.vmem [shape: f32[512,128], index: 3, kind: output, shape index: {}]
  %s4 = sld [smem:[#allocation0]]
  $region53: #{_lambda_.7} parent=0
    _
  %s6 = ssub.s32 1, %s4
  %s7 = scalar_select 0, %s6, %s4
  loop: start=0, step=1, limit=4
  $region2: #{_lambda_.7} parent=0 // loop_pre_header
    _
  $region3: #{_lambda_.7} parent=0 // loop_header
    %s9 = sphi 0, %s13
    %p10 = scmp.ge.s32.totalorder %s9, 4
    %s16 = sphi 0, %s35
    %s17 = sphi 0, %s31
    %s18 = sphi 0, %s27
    %s19 = sphi 0, %s16
    %s20 = sphi 0, %s17
    %s21 = sphi 0, %s18
    %s22 = sphi 0, %s19
    %s23 = sphi 0, %s20
    %s24 = sphi 0, %s21
    %s40 = sphi 0, %s42
    %s43 = sphi 0, %s40
    %s44 = sphi 0, %s43
    %s60 = sphi 0, %s44
    %s68 = sphi 0, %s70
    %s71 = sphi 0, %s68
    %s72 = sphi 0, %s71
    %s88 = sphi 0, %s72
    %s94 = sphi 0, %s96
    %s97 = sphi 0, %s94
    %s98 = sphi 0, %s97
    %s114 = sphi 0, %s98
    %s122 = sphi 0, %s124
    %s125 = sphi 0, %s122
    %s126 = sphi 0, %s125
    %s142 = sphi 0, %s126
  $region4: #{_lambda_.7} parent=0 // loop_header_branch
    %12 = sbr.rel (%p10) target = $region8
  $region5: #{_lambda_.7} parent=0 // loop_body
    %s14 = ssub.s32 %s9, 1
    %s15 = ssub.s32 %s9, 2
    %s25 = sadd.s32 1, %s18
    %p26 = scmp.ge.s32.totalorder %s25, 1
    %s27 = scalar_select %p26, 0, %s25
    %s28 = sadd.s32 1, %s17
    %s29 = scalar_select %p26, %s28, %s17
    %p30 = scmp.ge.s32.totalorder %s29, 1
    %s31 = scalar_select %p30, 0, %s29
    %s32 = sadd.s32 1, %s16
    %s33 = scalar_select %p30, %s32, %s16
    %p34 = scmp.ge.s32.totalorder %s33, 2
    %s35 = scalar_select %p34, 0, %s33
    %s36 = ssub.s32 %s16, %s35
    %s37 = ssub.s32 %s18, %s27
    %s38 = sor.u32 %s36, %s37
    %p39 = scmp.eq.s32.totalorder %s38, 0
    %s41 = sadd.s32 %s40, 1
    %s42 = scalar_select %p39, %s40, %s41
    %p45 = pneg %p39
    %p46 = scmp.eq.s32.totalorder %s9, 1
    %p47 = por %p45, %p46
    %p48 = scmp.ne.s32.totalorder %s40, %s43
    %p49 = scmp.eq.s32.totalorder %s9, 0
    %p50 = por %p48, %p49
    %p51 = scmp.ne.s32.totalorder %s40, %s43
    %p52 = scmp.eq.s32.totalorder %s14, 1
    %p53 = por %p51, %p52
    %p54 = scmp.ne.s32.totalorder %s43, %s44
    %p55 = scmp.eq.s32.totalorder %s14, 0
    %p56 = por %p54, %p55
    %p57 = scmp.ne.s32.totalorder %s43, %s44
    %p58 = scmp.eq.s32.totalorder %s15, 1
    %p59 = por %p57, %p58
    %p61 = scmp.ne.s32.totalorder %s44, %s60
    %p62 = scmp.eq.s32.totalorder %s15, 0
    %p63 = por %p61, %p62
    %s64 = ssub.s32 %s18, %s27
    %s65 = ssub.s32 %s17, %s31
    %s66 = sor.u32 %s64, %s65
    %p67 = scmp.eq.s32.totalorder %s66, 0
    %s69 = sadd.s32 %s68, 1
    %s70 = scalar_select %p67, %s68, %s69
    %p73 = pneg %p67
    %p74 = scmp.eq.s32.totalorder %s9, 1
    %p75 = por %p73, %p74
    %p76 = scmp.ne.s32.totalorder %s68, %s71
    %p77 = scmp.eq.s32.totalorder %s9, 0
    %p78 = por %p76, %p77
    %p79 = scmp.ne.s32.totalorder %s68, %s71
    %p80 = scmp.eq.s32.totalorder %s14, 1
    %p81 = por %p79, %p80
    %p82 = scmp.ne.s32.totalorder %s71, %s72
    %p83 = scmp.eq.s32.totalorder %s14, 0
    %p84 = por %p82, %p83
    %p85 = scmp.ne.s32.totalorder %s71, %s72
    %p86 = scmp.eq.s32.totalorder %s15, 1
    %p87 = por %p85, %p86
    %p89 = scmp.ne.s32.totalorder %s72, %s88
    %p90 = scmp.eq.s32.totalorder %s15, 0
    %p91 = por %p89, %p90
    %s92 = ssub.s32 %s17, %s31
    %p93 = scmp.eq.s32.totalorder %s92, 0
    %s95 = sadd.s32 %s94, 1
    %s96 = scalar_select %p93, %s94, %s95
    %p99 = pneg %p93
    %p100 = scmp.eq.s32.totalorder %s9, 1
    %p101 = por %p99, %p100
    %p102 = scmp.ne.s32.totalorder %s94, %s97
    %p103 = scmp.eq.s32.totalorder %s9, 0
    %p104 = por %p102, %p103
    %p105 = scmp.ne.s32.totalorder %s94, %s97
    %p106 = scmp.eq.s32.totalorder %s14, 1
    %p107 = por %p105, %p106
    %p108 = scmp.ne.s32.totalorder %s97, %s98
    %p109 = scmp.eq.s32.totalorder %s14, 0
    %p110 = por %p108, %p109
    %p111 = scmp.ne.s32.totalorder %s97, %s98
    %p112 = scmp.eq.s32.totalorder %s15, 1
    %p113 = por %p111, %p112
    %p115 = scmp.ne.s32.totalorder %s98, %s114
    %p116 = scmp.eq.s32.totalorder %s15, 0
    %p117 = por %p115, %p116
    %s118 = ssub.s32 %s16, %s35
    %s119 = ssub.s32 %s17, %s31
    %s120 = sor.u32 %s118, %s119
    %p121 = scmp.eq.s32.totalorder %s120, 0
    %s123 = sadd.s32 %s122, 1
    %s124 = scalar_select %p121, %s122, %s123
    %p127 = pneg %p121
    %p128 = scmp.eq.s32.totalorder %s9, 1
    %p129 = por %p127, %p128
    %p130 = scmp.ne.s32.totalorder %s122, %s125
    %p131 = scmp.eq.s32.totalorder %s9, 0
    %p132 = por %p130, %p131
    %p133 = scmp.ne.s32.totalorder %s122, %s125
    %p134 = scmp.eq.s32.totalorder %s14, 1
    %p135 = por %p133, %p134
    %p136 = scmp.ne.s32.totalorder %s125, %s126
    %p137 = scmp.eq.s32.totalorder %s14, 0
    %p138 = por %p136, %p137
    %p139 = scmp.ne.s32.totalorder %s125, %s126
    %p140 = scmp.eq.s32.totalorder %s15, 1
    %p141 = por %p139, %p140
    %p143 = scmp.ne.s32.totalorder %s126, %s142
    %p144 = scmp.eq.s32.totalorder %s15, 0
    %p145 = por %p143, %p144
    %p146 = scmp.le.s32.totalorder 1, %s9
    %p147 = scmp.lt.s32.totalorder %s9, 3
    %p148 = pnand %p146, %p147
    %p149 = pneg %p148
    // Predicated region
    $region9: #{_lambda_.7} parent=5 // pred_check
      _
    $region10: #{_lambda_.7} parent=5 // pred_check_branch
      %151 = sbr.rel (%p148) target = $region12
    $region11: #{_lambda_.7} parent=5 // pred_region
      %s152 = ssub.s32 %s9, 1
      // Predicated region
      $region13: #{_lambda_.7} parent=11 // pred_check
        %p153 = pneg %p84
      $region14: #{_lambda_.7} parent=11 // pred_check_branch
        %155 = sbr.rel (%p153) target = $region16
      $region15: #{_lambda_.7} parent=11 // pred_region
        %s156 = smul.u32 16, %s21
        %p157 = scmp.lt.s32.totalorder %s156, 15
        %s158 = scalar_select %p157, %s156, 15
        %p159 = scmp.lt.s32.totalorder %s20, 0
        %s160 = scalar_select %p159, %s20, 0
        %s161 = sadd.s32 %s160, %s158
        %s162 = smul.addr %s161, 4
        %s163 = scalar_lea.vmem %s1, %s162
        %s164 = smul.u32 16, %s21
      $region16: #{_lambda_.7} parent=11 // pred_fallthru
        _
      // Predicated region
      $region17: #{_lambda_.7} parent=11 // pred_check
        %p165 = pneg %p110
      $region18: #{_lambda_.7} parent=11 // pred_check_branch
        %167 = sbr.rel (%p165) target = $region20
      $region19: #{_lambda_.7} parent=11 // pred_region
        %p168 = scmp.lt.s32.totalorder %s20, 0
        %s169 = scalar_select %p168, %s20, 0
        %s170 = scalar_lea.vmem %s2, %s169
      $region20: #{_lambda_.7} parent=11 // pred_fallthru
        _
    $region12: #{_lambda_.7} parent=5 // pred_fallthru
      _
    %p171 = scmp.lt.s32.totalorder %s9, 2
    // Predicated region
    $region21: #{_lambda_.7} parent=5 // pred_check
      %p172 = pneg %p171
    $region22: #{_lambda_.7} parent=5 // pred_check_branch
      %174 = sbr.rel (%p172) target = $region24
    $region23: #{_lambda_.7} parent=5 // pred_region
      // Predicated region
      $region25: #{_lambda_.7} parent=23 // pred_check
        %p175 = pneg %p50
      $region26: #{_lambda_.7} parent=23 // pred_check_branch
        %177 = sbr.rel (%p175) target = $region28
      $region27: #{_lambda_.7} parent=23 // pred_region
        %s178 = smul.u32 32, %s16
        %p179 = scmp.lt.s32.totalorder %s178, 63
        %s180 = scalar_select %p179, %s178, 63
        %p181 = scmp.lt.s32.totalorder %s18, 0
        %s182 = scalar_select %p181, %s18, 0
        %s183 = sadd.s32 %s182, %s180
        %s184 = smul.addr %s183, 4
        %s185 = scalar_lea.vmem %s0, %s184
        %s186 = smul.u32 32, %s16
      $region28: #{_lambda_.7} parent=23 // pred_fallthru
        _
    $region24: #{_lambda_.7} parent=5 // pred_fallthru
      _
    %p187 = scmp.le.s32.totalorder 1, %s9
    %p188 = scmp.lt.s32.totalorder %s9, 3
    %p189 = pnand %p187, %p188
    %p190 = pneg %p189
    // Predicated region
    $region29: #{_lambda_.7} parent=5 // pred_check
      _
    $region30: #{_lambda_.7} parent=5 // pred_check_branch
      %192 = sbr.rel (%p189) target = $region32
    $region31: #{_lambda_.7} parent=5 // pred_region
      %s193 = ssub.s32 %s9, 1
      %s194 = smul.u32 32, %s19
      %p195 = scmp.lt.s32.totalorder %s194, 63
      %s196 = scalar_select %p195, %s194, 63
      %p197 = scmp.lt.s32.totalorder %s21, 0
      %s198 = scalar_select %p197, %s21, 0
      %s199 = sadd.s32 %s198, %s196
      %s200 = smul.addr %s199, 4
      %s201 = scalar_lea.vmem %s0, %s200
      %p202 = pneg %p56
      %p203 = pneg %p53
      %s204 = smul.u32 16, %s21
      %p205 = scmp.lt.s32.totalorder %s204, 15
      %s206 = scalar_select %p205, %s204, 15
      %p207 = scmp.lt.s32.totalorder %s20, 0
      %s208 = scalar_select %p207, %s20, 0
      %s209 = sadd.s32 %s208, %s206
      %s210 = smul.addr %s209, 4
      %s211 = scalar_lea.vmem %s1, %s210
      %p212 = pneg %p84
      %p213 = pneg %p81
      %p214 = scmp.lt.s32.totalorder %s20, 0
      %s215 = scalar_select %p214, %s20, 0
      %s216 = scalar_lea.vmem %s2, %s215
      %p217 = pneg %p110
      %p218 = pneg %p107
      %p219 = pneg %p138
      %p220 = pneg %p135
      %s221 = smul.u32 32, %s19
      %p222 = scmp.lt.s32.totalorder %s221, 63
      %s223 = scalar_select %p222, %s221, 63
      %p224 = scmp.lt.s32.totalorder %s20, 0
      %s225 = scalar_select %p224, %s20, 0
      %s226 = sadd.s32 %s225, %s223
      %s227 = smul.addr %s226, 8
      %s228 = scalar_lea.vmem %s3, %s227
      %s229 = smul.u32 32, %s19
      %p230 = scmp.lt.s32.totalorder %s229, 63
      %s231 = scalar_select %p230, %s229, 63
      %p232 = scmp.lt.s32.totalorder %s21, 0
      %s233 = scalar_select %p232, %s21, 0
      %s234 = sadd.s32 %s233, %s231
      %s235 = smul.addr %s234, 4
      %s236 = scalar_lea.vmem %s0, %s235
      %s237 = smul.u32 32, %s19
      %s238 = smul.u32 16, %s21
      %p239 = scmp.lt.s32.totalorder %s238, 15
      %s240 = scalar_select %p239, %s238, 15
      %p241 = scmp.lt.s32.totalorder %s20, 0
      %s242 = scalar_select %p241, %s20, 0
      %s243 = sadd.s32 %s242, %s240
      %s244 = smul.addr %s243, 4
      %s245 = scalar_lea.vmem %s1, %s244
      %s246 = smul.u32 16, %s21
      %p247 = scmp.lt.s32.totalorder %s20, 0
      %s248 = scalar_select %p247, %s20, 0
      %s249 = scalar_lea.vmem %s2, %s248
      %s250 = smul.u32 32, %s19
      %p251 = scmp.lt.s32.totalorder %s250, 63
      %s252 = scalar_select %p251, %s250, 63
      %p253 = scmp.lt.s32.totalorder %s20, 0
      %s254 = scalar_select %p253, %s20, 0
      %s255 = sadd.s32 %s254, %s252
      %s256 = smul.addr %s255, 8
      %s257 = scalar_lea.vmem %s3, %s256
      %s258 = smul.u32 32, %s19
      %p260 = scmp.eq.s32.totalorder %s21, 0
      // Predicated region
      $region33: #{_lambda_.7} parent=31 // pred_check
        %p261 = pneg %p260
      $region34: #{_lambda_.7} parent=31 // pred_check_branch
        %263 = sbr.rel (%p261) target = $region36
      $region35: #{_lambda_.7} parent=31 // pred_region
        %264 = vst [vmem:[#allocation2] sm:$0xff] 0.0
        %265 = vst [vmem:[#allocation2 + $0x8] sm:$0xff] 0.0
        %266 = vst [vmem:[#allocation2 + $0x10] sm:$0xff] 0.0
        %267 = vst [vmem:[#allocation2 + $0x18] sm:$0xff] 0.0
        %268 = vst [vmem:[#allocation2 + $0x20] sm:$0xff] 0.0
        %269 = vst [vmem:[#allocation2 + $0x28] sm:$0xff] 0.0
        %270 = vst [vmem:[#allocation2 + $0x30] sm:$0xff] 0.0
        %271 = vst [vmem:[#allocation2 + $0x38] sm:$0xff] 0.0
        %272 = vst [vmem:[#allocation2 + $0x40] sm:$0xff] 0.0
        %273 = vst [vmem:[#allocation2 + $0x48] sm:$0xff] 0.0
        %274 = vst [vmem:[#allocation2 + $0x50] sm:$0xff] 0.0
        %275 = vst [vmem:[#allocation2 + $0x58] sm:$0xff] 0.0
        %276 = vst [vmem:[#allocation2 + $0x60] sm:$0xff] 0.0
        %277 = vst [vmem:[#allocation2 + $0x68] sm:$0xff] 0.0
        %278 = vst [vmem:[#allocation2 + $0x70] sm:$0xff] 0.0
        %279 = vst [vmem:[#allocation2 + $0x78] sm:$0xff] 0.0
        %280 = vst [vmem:[#allocation2 + $0x80] sm:$0xff] 0.0
        %281 = vst [vmem:[#allocation2 + $0x88] sm:$0xff] 0.0
        %282 = vst [vmem:[#allocation2 + $0x90] sm:$0xff] 0.0
        %283 = vst [vmem:[#allocation2 + $0x98] sm:$0xff] 0.0
        %284 = vst [vmem:[#allocation2 + $0xa0] sm:$0xff] 0.0
        %285 = vst [vmem:[#allocation2 + $0xa8] sm:$0xff] 0.0
        %286 = vst [vmem:[#allocation2 + $0xb0] sm:$0xff] 0.0
        %287 = vst [vmem:[#allocation2 + $0xb8] sm:$0xff] 0.0
        %288 = vst [vmem:[#allocation2 + $0xc0] sm:$0xff] 0.0
        %289 = vst [vmem:[#allocation2 + $0xc8] sm:$0xff] 0.0
        %290 = vst [vmem:[#allocation2 + $0xd0] sm:$0xff] 0.0
        %291 = vst [vmem:[#allocation2 + $0xd8] sm:$0xff] 0.0
        %292 = vst [vmem:[#allocation2 + $0xe0] sm:$0xff] 0.0
        %293 = vst [vmem:[#allocation2 + $0xe8] sm:$0xff] 0.0
        %294 = vst [vmem:[#allocation2 + $0xf0] sm:$0xff] 0.0
        %295 = vst [vmem:[#allocation2 + $0xf8] sm:$0xff] 0.0
      $region36: #{_lambda_.7} parent=31 // pred_fallthru
        _
      %v296 = vld [vmem:[#allocation2] sm:$0xff]
      %v297 = vld [vmem:[#allocation2 + $0x8] sm:$0xff]
      %v298 = vld [vmem:[#allocation2 + $0x10] sm:$0xff]
      %v299 = vld [vmem:[#allocation2 + $0x18] sm:$0xff]
      %v300 = vld [vmem:[#allocation2 + $0x20] sm:$0xff]
      %v301 = vld [vmem:[#allocation2 + $0x28] sm:$0xff]
      %v302 = vld [vmem:[#allocation2 + $0x30] sm:$0xff]
      %v303 = vld [vmem:[#allocation2 + $0x38] sm:$0xff]
      %v304 = vld [vmem:[#allocation2 + $0x40] sm:$0xff]
      %v305 = vld [vmem:[#allocation2 + $0x48] sm:$0xff]
      %v306 = vld [vmem:[#allocation2 + $0x50] sm:$0xff]
      %v307 = vld [vmem:[#allocation2 + $0x58] sm:$0xff]
      %v308 = vld [vmem:[#allocation2 + $0x60] sm:$0xff]
      %v309 = vld [vmem:[#allocation2 + $0x68] sm:$0xff]
      %v310 = vld [vmem:[#allocation2 + $0x70] sm:$0xff]
      %v311 = vld [vmem:[#allocation2 + $0x78] sm:$0xff]
      %v312 = vld [vmem:[#allocation2 + $0x80] sm:$0xff]
      %v313 = vld [vmem:[#allocation2 + $0x88] sm:$0xff]
      %v314 = vld [vmem:[#allocation2 + $0x90] sm:$0xff]
      %v315 = vld [vmem:[#allocation2 + $0x98] sm:$0xff]
      %v316 = vld [vmem:[#allocation2 + $0xa0] sm:$0xff]
      %v317 = vld [vmem:[#allocation2 + $0xa8] sm:$0xff]
      %v318 = vld [vmem:[#allocation2 + $0xb0] sm:$0xff]
      %v319 = vld [vmem:[#allocation2 + $0xb8] sm:$0xff]
      %v320 = vld [vmem:[#allocation2 + $0xc0] sm:$0xff]
      %v321 = vld [vmem:[#allocation2 + $0xc8] sm:$0xff]
      %v322 = vld [vmem:[#allocation2 + $0xd0] sm:$0xff]
      %v323 = vld [vmem:[#allocation2 + $0xd8] sm:$0xff]
      %v324 = vld [vmem:[#allocation2 + $0xe0] sm:$0xff]
      %v325 = vld [vmem:[#allocation2 + $0xe8] sm:$0xff]
      %v326 = vld [vmem:[#allocation2 + $0xf0] sm:$0xff]
      %v327 = vld [vmem:[#allocation2 + $0xf8] sm:$0xff]
      %v328 = vld [vmem:[%s236] sm:$0xf]
      %v329 = vld [vmem:[%s236 + $0x4] sm:$0xf]
      %v330 = vld [vmem:[%s236 + $0x8] sm:$0xf]
      %v331 = vld [vmem:[%s236 + $0xc] sm:$0xf]
      %v332 = vld [vmem:[%s236 + $0x10] sm:$0xf]
      %v333 = vld [vmem:[%s236 + $0x14] sm:$0xf]
      %v334 = vld [vmem:[%s236 + $0x18] sm:$0xf]
      %v335 = vld [vmem:[%s236 + $0x1c] sm:$0xf]
      %v336 = vld [vmem:[%s236 + $0x20] sm:$0xf]
      %v337 = vld [vmem:[%s236 + $0x24] sm:$0xf]
      %v338 = vld [vmem:[%s236 + $0x28] sm:$0xf]
      %v339 = vld [vmem:[%s236 + $0x2c] sm:$0xf]
      %v340 = vld [vmem:[%s236 + $0x30] sm:$0xf]
      %v341 = vld [vmem:[%s236 + $0x34] sm:$0xf]
      %v342 = vld [vmem:[%s236 + $0x38] sm:$0xf]
      %v343 = vld [vmem:[%s236 + $0x3c] sm:$0xf]
      %v344 = vld [vmem:[%s236 + $0x40] sm:$0xf]
      %v345 = vld [vmem:[%s236 + $0x44] sm:$0xf]
      %v346 = vld [vmem:[%s236 + $0x48] sm:$0xf]
      %v347 = vld [vmem:[%s236 + $0x4c] sm:$0xf]
      %v348 = vld [vmem:[%s236 + $0x50] sm:$0xf]
      %v349 = vld [vmem:[%s236 + $0x54] sm:$0xf]
      %v350 = vld [vmem:[%s236 + $0x58] sm:$0xf]
      %v351 = vld [vmem:[%s236 + $0x5c] sm:$0xf]
      %v352 = vld [vmem:[%s236 + $0x60] sm:$0xf]
      %v353 = vld [vmem:[%s236 + $0x64] sm:$0xf]
      %v354 = vld [vmem:[%s236 + $0x68] sm:$0xf]
      %v355 = vld [vmem:[%s236 + $0x6c] sm:$0xf]
      %v356 = vld [vmem:[%s236 + $0x70] sm:$0xf]
      %v357 = vld [vmem:[%s236 + $0x74] sm:$0xf]
      %v358 = vld [vmem:[%s236 + $0x78] sm:$0xf]
      %v359 = vld [vmem:[%s236 + $0x7c] sm:$0xf]
      %v360 = vld [vmem:[%s245] sm:$0xf]
      %v361 = vld [vmem:[%s245 + $0x4] sm:$0xf]
      %v362 = vld [vmem:[%s245 + $0x8] sm:$0xf]
      %v363 = vld [vmem:[%s245 + $0xc] sm:$0xf]
      %v364 = vld [vmem:[%s245 + $0x10] sm:$0xf]
      %v365 = vld [vmem:[%s245 + $0x14] sm:$0xf]
      %v366 = vld [vmem:[%s245 + $0x18] sm:$0xf]
      %v367 = vld [vmem:[%s245 + $0x1c] sm:$0xf]
      %v368 = vld [vmem:[%s245 + $0x20] sm:$0xf]
      %v369 = vld [vmem:[%s245 + $0x24] sm:$0xf]
      %v370 = vld [vmem:[%s245 + $0x28] sm:$0xf]
      %v371 = vld [vmem:[%s245 + $0x2c] sm:$0xf]
      %v372 = vld [vmem:[%s245 + $0x30] sm:$0xf]
      %v373 = vld [vmem:[%s245 + $0x34] sm:$0xf]
      %v374 = vld [vmem:[%s245 + $0x38] sm:$0xf]
      %v375 = vld [vmem:[%s245 + $0x3c] sm:$0xf]
      %v408 = vunpack.c.l.b16 %v328
      %v409 = vunpack.c.l.b16 %v329
      %v410 = vunpack.c.l.b16 %v330
      %v411 = vunpack.c.l.b16 %v331
      %v412 = vunpack.c.l.b16 %v332
      %v413 = vunpack.c.l.b16 %v333
      %v414 = vunpack.c.l.b16 %v334
      %v415 = vunpack.c.l.b16 %v335
      %v416 = vunpack.c.l.b16 %v336
      %v417 = vunpack.c.l.b16 %v337
      %v418 = vunpack.c.l.b16 %v338
      %v419 = vunpack.c.l.b16 %v339
      %v420 = vunpack.c.l.b16 %v340
      %v421 = vunpack.c.l.b16 %v341
      %v422 = vunpack.c.l.b16 %v342
      %v423 = vunpack.c.l.b16 %v343
      %v424 = vunpack.c.l.b16 %v344
      %v425 = vunpack.c.l.b16 %v345
      %v426 = vunpack.c.l.b16 %v346
      %v427 = vunpack.c.l.b16 %v347
      %v428 = vunpack.c.l.b16 %v348
      %v429 = vunpack.c.l.b16 %v349
      %v430 = vunpack.c.l.b16 %v350
      %v431 = vunpack.c.l.b16 %v351
      %v432 = vunpack.c.l.b16 %v352
      %v433 = vunpack.c.l.b16 %v353
      %v434 = vunpack.c.l.b16 %v354
      %v435 = vunpack.c.l.b16 %v355
      %v436 = vunpack.c.l.b16 %v356
      %v437 = vunpack.c.l.b16 %v357
      %v438 = vunpack.c.l.b16 %v358
      %v439 = vunpack.c.l.b16 %v359
      %v440 = vpack.c.b16 %v409, %v408
      %v441 = vpack.c.b16 %v411, %v410
      %v442 = vpack.c.b16 %v413, %v412
      %v443 = vpack.c.b16 %v415, %v414
      %v444 = vpack.c.b16 %v417, %v416
      %v445 = vpack.c.b16 %v419, %v418
      %v446 = vpack.c.b16 %v421, %v420
      %v447 = vpack.c.b16 %v423, %v422
      %v448 = vpack.c.b16 %v425, %v424
      %v449 = vpack.c.b16 %v427, %v426
      %v450 = vpack.c.b16 %v429, %v428
      %v451 = vpack.c.b16 %v431, %v430
      %v452 = vpack.c.b16 %v433, %v432
      %v453 = vpack.c.b16 %v435, %v434
      %v454 = vpack.c.b16 %v437, %v436
      %v455 = vpack.c.b16 %v439, %v438
      %v488 = vunpack.c.l.b16 %v360
      %v489 = vunpack.c.l.b16 %v361
      %v490 = vunpack.c.l.b16 %v362
      %v491 = vunpack.c.l.b16 %v363
      %v492 = vunpack.c.l.b16 %v364
      %v493 = vunpack.c.l.b16 %v365
      %v494 = vunpack.c.l.b16 %v366
      %v495 = vunpack.c.l.b16 %v367
      %v496 = vunpack.c.l.b16 %v368
      %v497 = vunpack.c.l.b16 %v369
      %v498 = vunpack.c.l.b16 %v370
      %v499 = vunpack.c.l.b16 %v371
      %v500 = vunpack.c.l.b16 %v372
      %v501 = vunpack.c.l.b16 %v373
      %v502 = vunpack.c.l.b16 %v374
      %v503 = vunpack.c.l.b16 %v375
      %v504 = vpack.c.b16 %v489, %v488
      %v505 = vpack.c.b16 %v491, %v490
      %v506 = vpack.c.b16 %v493, %v492
      %v507 = vpack.c.b16 %v495, %v494
      %v508 = vpack.c.b16 %v497, %v496
      %v509 = vpack.c.b16 %v499, %v498
      %v510 = vpack.c.b16 %v501, %v500
      %v511 = vpack.c.b16 %v503, %v502
      %520 = vmatprep.subr.bf16.mxu0 0
      %521 = vmatpush1.bf16.msra.mxu0 %v504
      %522 = vmatprep.subr.bf16.mxu0 0
      %523 = vmatpush1.bf16.msra.mxu0 %v505
      %524 = vmatprep.subr.bf16.mxu0 0
      %525 = vmatpush1.bf16.msra.mxu0 %v506
      %526 = vmatprep.subr.bf16.mxu0 0
      %527 = vmatpush1.bf16.msra.mxu0 %v507
      %528 = vmatprep.subr.bf16.mxu0 0
      %529 = vmatpush1.bf16.msra.mxu0 %v508
      %530 = vmatprep.subr.bf16.mxu0 0
      %531 = vmatpush1.bf16.msra.mxu0 %v509
      %532 = vmatprep.subr.bf16.mxu0 0
      %533 = vmatpush1.bf16.msra.mxu0 %v510
      %534 = vmatprep.subr.bf16.mxu0 0
      %535 = vmatpush1.bf16.msra.mxu0 %v511
      %536 = vmatprep.subr.bf16.mxu0 0
      %537 = vmatpush1.bf16.msra.mxu0 0
      %538 = vmatprep.subr.bf16.mxu0 0
      %539 = vmatpush1.bf16.msra.mxu0 0
      %540 = vmatprep.subr.bf16.mxu0 0
      %541 = vmatpush1.bf16.msra.mxu0 0
      %542 = vmatprep.subr.bf16.mxu0 0
      %543 = vmatpush1.bf16.msra.mxu0 0
      %544 = vmatprep.subr.bf16.mxu0 0
      %545 = vmatpush1.bf16.msra.mxu0 0
      %546 = vmatprep.subr.bf16.mxu0 0
      %547 = vmatpush1.bf16.msra.mxu0 0
      %548 = vmatprep.subr.bf16.mxu0 0
      %549 = vmatpush1.bf16.msra.mxu0 0
      %550 = vmatprep.subr.bf16.mxu0 0
      %551 = vmatpush1.bf16.msra.mxu0 0
      %552 = vmatprep.mubr.bf16.mxu0 0
      %553 = vmatmul.mubr.bf16.gmra.mrb[0].mxu0 %v440
      %v554 = vpop.f32.mrb[0].mxu0
      %v555 = vadd.f32 0.0, %v554
      %v556 = vpop.f32.mrb[0].mxu0
      %v557 = vpop.f32.mrb[0].mxu0
      %v558 = vadd.f32 0.0, %v557
      %v559 = vpop.f32.mrb[0].mxu0
      %560 = vmatprep.mubr.bf16.mxu0 0
      %561 = vmatmul.mubr.bf16.gmra.mrb[0].mxu0 %v441
      %v562 = vpop.f32.mrb[0].mxu0
      %v563 = vadd.f32 0.0, %v562
      %v564 = vpop.f32.mrb[0].mxu0
      %v565 = vpop.f32.mrb[0].mxu0
      %v566 = vadd.f32 0.0, %v565
      %v567 = vpop.f32.mrb[0].mxu0
      %568 = vmatprep.mubr.bf16.mxu0 0
      %569 = vmatmul.mubr.bf16.gmra.mrb[0].mxu0 %v442
      %v570 = vpop.f32.mrb[0].mxu0
      %v571 = vadd.f32 0.0, %v570
      %v572 = vpop.f32.mrb[0].mxu0
      %v573 = vpop.f32.mrb[0].mxu0
      %v574 = vadd.f32 0.0, %v573
      %v575 = vpop.f32.mrb[0].mxu0
      %576 = vmatprep.mubr.bf16.mxu0 0
      %577 = vmatmul.mubr.bf16.gmra.mrb[0].mxu0 %v443
      %v578 = vpop.f32.mrb[0].mxu0
      %v579 = vadd.f32 0.0, %v578
      %v580 = vpop.f32.mrb[0].mxu0
      %v581 = vpop.f32.mrb[0].mxu0
      %v582 = vadd.f32 0.0, %v581
      %v583 = vpop.f32.mrb[0].mxu0
      %584 = vmatprep.mubr.bf16.mxu0 0
      %585 = vmatmul.mubr.bf16.gmra.mrb[0].mxu0 %v444
      %v586 = vpop.f32.mrb[0].mxu0
      %v587 = vadd.f32 0.0, %v586
      %v588 = vpop.f32.mrb[0].mxu0
      %v589 = vpop.f32.mrb[0].mxu0
      %v590 = vadd.f32 0.0, %v589
      %v591 = vpop.f32.mrb[0].mxu0
      %592 = vmatprep.mubr.bf16.mxu0 0
      %593 = vmatmul.mubr.bf16.gmra.mrb[0].mxu0 %v445
      %v594 = vpop.f32.mrb[0].mxu0
      %v595 = vadd.f32 0.0, %v594
      %v596 = vpop.f32.mrb[0].mxu0
      %v597 = vpop.f32.mrb[0].mxu0
      %v598 = vadd.f32 0.0, %v597
      %v599 = vpop.f32.mrb[0].mxu0
      %600 = vmatprep.mubr.bf16.mxu0 0
      %601 = vmatmul.mubr.bf16.gmra.mrb[0].mxu0 %v446
      %v602 = vpop.f32.mrb[0].mxu0
      %v603 = vadd.f32 0.0, %v602
      %v604 = vpop.f32.mrb[0].mxu0
      %v605 = vpop.f32.mrb[0].mxu0
      %v606 = vadd.f32 0.0, %v605
      %v607 = vpop.f32.mrb[0].mxu0
      %608 = vmatprep.mubr.bf16.mxu0 0
      %609 = vmatmul.mubr.bf16.gmra.mrb[0].mxu0 %v447
      %v610 = vpop.f32.mrb[0].mxu0
      %v611 = vadd.f32 0.0, %v610
      %v612 = vpop.f32.mrb[0].mxu0
      %v613 = vpop.f32.mrb[0].mxu0
      %v614 = vadd.f32 0.0, %v613
      %v615 = vpop.f32.mrb[0].mxu0
      %616 = vmatprep.mubr.bf16.mxu0 0
      %617 = vmatmul.mubr.bf16.gmra.mrb[0].mxu0 %v448
      %v618 = vpop.f32.mrb[0].mxu0
      %v619 = vadd.f32 0.0, %v618
      %v620 = vpop.f32.mrb[0].mxu0
      %v621 = vpop.f32.mrb[0].mxu0
      %v622 = vadd.f32 0.0, %v621
      %v623 = vpop.f32.mrb[0].mxu0
      %624 = vmatprep.mubr.bf16.mxu0 0
      %625 = vmatmul.mubr.bf16.gmra.mrb[0].mxu0 %v449
      %v626 = vpop.f32.mrb[0].mxu0
      %v627 = vadd.f32 0.0, %v626
      %v628 = vpop.f32.mrb[0].mxu0
      %v629 = vpop.f32.mrb[0].mxu0
      %v630 = vadd.f32 0.0, %v629
      %v631 = vpop.f32.mrb[0].mxu0
      %632 = vmatprep.mubr.bf16.mxu0 0
      %633 = vmatmul.mubr.bf16.gmra.mrb[0].mxu0 %v450
      %v634 = vpop.f32.mrb[0].mxu0
      %v635 = vadd.f32 0.0, %v634
      %v636 = vpop.f32.mrb[0].mxu0
      %v637 = vpop.f32.mrb[0].mxu0
      %v638 = vadd.f32 0.0, %v637
      %v639 = vpop.f32.mrb[0].mxu0
      %640 = vmatprep.mubr.bf16.mxu0 0
      %641 = vmatmul.mubr.bf16.gmra.mrb[0].mxu0 %v451
      %v642 = vpop.f32.mrb[0].mxu0
      %v643 = vadd.f32 0.0, %v642
      %v644 = vpop.f32.mrb[0].mxu0
      %v645 = vpop.f32.mrb[0].mxu0
      %v646 = vadd.f32 0.0, %v645
      %v647 = vpop.f32.mrb[0].mxu0
      %648 = vmatprep.mubr.bf16.mxu0 0
      %649 = vmatmul.mubr.bf16.gmra.mrb[0].mxu0 %v452
      %v650 = vpop.f32.mrb[0].mxu0
      %v651 = vadd.f32 0.0, %v650
      %v652 = vpop.f32.mrb[0].mxu0
      %v653 = vpop.f32.mrb[0].mxu0
      %v654 = vadd.f32 0.0, %v653
      %v655 = vpop.f32.mrb[0].mxu0
      %656 = vmatprep.mubr.bf16.mxu0 0
      %657 = vmatmul.mubr.bf16.gmra.mrb[0].mxu0 %v453
      %v658 = vpop.f32.mrb[0].mxu0
      %v659 = vadd.f32 0.0, %v658
      %v660 = vpop.f32.mrb[0].mxu0
      %v661 = vpop.f32.mrb[0].mxu0
      %v662 = vadd.f32 0.0, %v661
      %v663 = vpop.f32.mrb[0].mxu0
      %664 = vmatprep.mubr.bf16.mxu0 0
      %665 = vmatmul.mubr.bf16.gmra.mrb[0].mxu0 %v454
      %v666 = vpop.f32.mrb[0].mxu0
      %v667 = vadd.f32 0.0, %v666
      %v668 = vpop.f32.mrb[0].mxu0
      %v669 = vpop.f32.mrb[0].mxu0
      %v670 = vadd.f32 0.0, %v669
      %v671 = vpop.f32.mrb[0].mxu0
      %672 = vmatprep.mubr.bf16.mxu0 0
      %673 = vmatmul.mubr.bf16.gmra.mrb[0].mxu0 %v455
      %v674 = vpop.f32.mrb[0].mxu0
      %v675 = vadd.f32 0.0, %v674
      %v676 = vpop.f32.mrb[0].mxu0
      %v677 = vpop.f32.mrb[0].mxu0
      %v678 = vadd.f32 0.0, %v677
      %v679 = vpop.f32.mrb[0].mxu0
      %680 = vdwg.mxu0
      %v681 = vadd.f32 %v296, %v555
      %v682 = vadd.f32 %v297, %v558
      %v683 = vadd.f32 %v298, %v563
      %v684 = vadd.f32 %v299, %v566
      %v685 = vadd.f32 %v300, %v571
      %v686 = vadd.f32 %v301, %v574
      %v687 = vadd.f32 %v302, %v579
      %v688 = vadd.f32 %v303, %v582
      %v689 = vadd.f32 %v304, %v587
      %v690 = vadd.f32 %v305, %v590
      %v691 = vadd.f32 %v306, %v595
      %v692 = vadd.f32 %v307, %v598
      %v693 = vadd.f32 %v308, %v603
      %v694 = vadd.f32 %v309, %v606
      %v695 = vadd.f32 %v310, %v611
      %v696 = vadd.f32 %v311, %v614
      %v697 = vadd.f32 %v312, %v619
      %v698 = vadd.f32 %v313, %v622
      %v699 = vadd.f32 %v314, %v627
      %v700 = vadd.f32 %v315, %v630
      %v701 = vadd.f32 %v316, %v635
      %v702 = vadd.f32 %v317, %v638
      %v703 = vadd.f32 %v318, %v643
      %v704 = vadd.f32 %v319, %v646
      %v705 = vadd.f32 %v320, %v651
      %v706 = vadd.f32 %v321, %v654
      %v707 = vadd.f32 %v322, %v659
      %v708 = vadd.f32 %v323, %v662
      %v709 = vadd.f32 %v324, %v667
      %v710 = vadd.f32 %v325, %v670
      %v711 = vadd.f32 %v326, %v675
      %v712 = vadd.f32 %v327, %v678
      %713 = vst [vmem:[#allocation2] sm:$0xff] %v681
      %714 = vst [vmem:[#allocation2 + $0x8] sm:$0xff] %v682
      %715 = vst [vmem:[#allocation2 + $0x10] sm:$0xff] %v683
      %716 = vst [vmem:[#allocation2 + $0x18] sm:$0xff] %v684
      %717 = vst [vmem:[#allocation2 + $0x20] sm:$0xff] %v685
      %718 = vst [vmem:[#allocation2 + $0x28] sm:$0xff] %v686
      %719 = vst [vmem:[#allocation2 + $0x30] sm:$0xff] %v687
      %720 = vst [vmem:[#allocation2 + $0x38] sm:$0xff] %v688
      %721 = vst [vmem:[#allocation2 + $0x40] sm:$0xff] %v689
      %722 = vst [vmem:[#allocation2 + $0x48] sm:$0xff] %v690
      %723 = vst [vmem:[#allocation2 + $0x50] sm:$0xff] %v691
      %724 = vst [vmem:[#allocation2 + $0x58] sm:$0xff] %v692
      %725 = vst [vmem:[#allocation2 + $0x60] sm:$0xff] %v693
      %726 = vst [vmem:[#allocation2 + $0x68] sm:$0xff] %v694
      %727 = vst [vmem:[#allocation2 + $0x70] sm:$0xff] %v695
      %728 = vst [vmem:[#allocation2 + $0x78] sm:$0xff] %v696
      %729 = vst [vmem:[#allocation2 + $0x80] sm:$0xff] %v697
      %730 = vst [vmem:[#allocation2 + $0x88] sm:$0xff] %v698
      %731 = vst [vmem:[#allocation2 + $0x90] sm:$0xff] %v699
      %732 = vst [vmem:[#allocation2 + $0x98] sm:$0xff] %v700
      %733 = vst [vmem:[#allocation2 + $0xa0] sm:$0xff] %v701
      %734 = vst [vmem:[#allocation2 + $0xa8] sm:$0xff] %v702
      %735 = vst [vmem:[#allocation2 + $0xb0] sm:$0xff] %v703
      %736 = vst [vmem:[#allocation2 + $0xb8] sm:$0xff] %v704
      %737 = vst [vmem:[#allocation2 + $0xc0] sm:$0xff] %v705
      %738 = vst [vmem:[#allocation2 + $0xc8] sm:$0xff] %v706
      %739 = vst [vmem:[#allocation2 + $0xd0] sm:$0xff] %v707
      %740 = vst [vmem:[#allocation2 + $0xd8] sm:$0xff] %v708
      %741 = vst [vmem:[#allocation2 + $0xe0] sm:$0xff] %v709
      %742 = vst [vmem:[#allocation2 + $0xe8] sm:$0xff] %v710
      %743 = vst [vmem:[#allocation2 + $0xf0] sm:$0xff] %v711
      %744 = vst [vmem:[#allocation2 + $0xf8] sm:$0xff] %v712
      // Predicated region
      $region37: #{_lambda_.7} parent=31 // pred_check
        %p745 = pneg %p260
      $region38: #{_lambda_.7} parent=31 // pred_check_branch
        %747 = sbr.rel (%p745) target = $region40
      $region39: #{_lambda_.7} parent=31 // pred_region
        %v748 = vld [vmem:[#allocation2] sm:$0xff]
        %v749 = vld [vmem:[#allocation2 + $0x8] sm:$0xff]
        %v750 = vld [vmem:[#allocation2 + $0x10] sm:$0xff]
        %v751 = vld [vmem:[#allocation2 + $0x18] sm:$0xff]
        %v752 = vld [vmem:[#allocation2 + $0x20] sm:$0xff]
        %v753 = vld [vmem:[#allocation2 + $0x28] sm:$0xff]
        %v754 = vld [vmem:[#allocation2 + $0x30] sm:$0xff]
        %v755 = vld [vmem:[#allocation2 + $0x38] sm:$0xff]
        %v756 = vld [vmem:[#allocation2 + $0x40] sm:$0xff]
        %v757 = vld [vmem:[#allocation2 + $0x48] sm:$0xff]
        %v758 = vld [vmem:[#allocation2 + $0x50] sm:$0xff]
        %v759 = vld [vmem:[#allocation2 + $0x58] sm:$0xff]
        %v760 = vld [vmem:[#allocation2 + $0x60] sm:$0xff]
        %v761 = vld [vmem:[#allocation2 + $0x68] sm:$0xff]
        %v762 = vld [vmem:[#allocation2 + $0x70] sm:$0xff]
        %v763 = vld [vmem:[#allocation2 + $0x78] sm:$0xff]
        %v764 = vld [vmem:[#allocation2 + $0x80] sm:$0xff]
        %v765 = vld [vmem:[#allocation2 + $0x88] sm:$0xff]
        %v766 = vld [vmem:[#allocation2 + $0x90] sm:$0xff]
        %v767 = vld [vmem:[#allocation2 + $0x98] sm:$0xff]
        %v768 = vld [vmem:[#allocation2 + $0xa0] sm:$0xff]
        %v769 = vld [vmem:[#allocation2 + $0xa8] sm:$0xff]
        %v770 = vld [vmem:[#allocation2 + $0xb0] sm:$0xff]
        %v771 = vld [vmem:[#allocation2 + $0xb8] sm:$0xff]
        %v772 = vld [vmem:[#allocation2 + $0xc0] sm:$0xff]
        %v773 = vld [vmem:[#allocation2 + $0xc8] sm:$0xff]
        %v774 = vld [vmem:[#allocation2 + $0xd0] sm:$0xff]
        %v775 = vld [vmem:[#allocation2 + $0xd8] sm:$0xff]
        %v776 = vld [vmem:[#allocation2 + $0xe0] sm:$0xff]
        %v777 = vld [vmem:[#allocation2 + $0xe8] sm:$0xff]
        %v778 = vld [vmem:[#allocation2 + $0xf0] sm:$0xff]
        %v779 = vld [vmem:[#allocation2 + $0xf8] sm:$0xff]
        %v780 = vld [vmem:[%s249] sm:$0x1]
        %v782 = vlaneseq
        %v783 = vshrl.u32 %v782, 7
        %v784 = vsub.s32 0, %v783
        %v785 = vrot.slane %v780, %v784
        %v787 = vadd.f32 %v748, %v785
        %v788 = vadd.f32 %v749, %v785
        %v789 = vadd.f32 %v750, %v785
        %v790 = vadd.f32 %v751, %v785
        %v791 = vadd.f32 %v752, %v785
        %v792 = vadd.f32 %v753, %v785
        %v793 = vadd.f32 %v754, %v785
        %v794 = vadd.f32 %v755, %v785
        %v795 = vadd.f32 %v756, %v785
        %v796 = vadd.f32 %v757, %v785
        %v797 = vadd.f32 %v758, %v785
        %v798 = vadd.f32 %v759, %v785
        %v799 = vadd.f32 %v760, %v785
        %v800 = vadd.f32 %v761, %v785
        %v801 = vadd.f32 %v762, %v785
        %v802 = vadd.f32 %v763, %v785
        %v803 = vadd.f32 %v764, %v785
        %v804 = vadd.f32 %v765, %v785
        %v805 = vadd.f32 %v766, %v785
        %v806 = vadd.f32 %v767, %v785
        %v807 = vadd.f32 %v768, %v785
        %v808 = vadd.f32 %v769, %v785
        %v809 = vadd.f32 %v770, %v785
        %v810 = vadd.f32 %v771, %v785
        %v811 = vadd.f32 %v772, %v785
        %v812 = vadd.f32 %v773, %v785
        %v813 = vadd.f32 %v774, %v785
        %v814 = vadd.f32 %v775, %v785
        %v815 = vadd.f32 %v776, %v785
        %v816 = vadd.f32 %v777, %v785
        %v817 = vadd.f32 %v778, %v785
        %v818 = vadd.f32 %v779, %v785
        %v819 = vmax.f32 %v787, 0.0
        %v820 = vmax.f32 %v788, 0.0
        %v821 = vmax.f32 %v789, 0.0
        %v822 = vmax.f32 %v790, 0.0
        %v823 = vmax.f32 %v791, 0.0
        %v824 = vmax.f32 %v792, 0.0
        %v825 = vmax.f32 %v793, 0.0
        %v826 = vmax.f32 %v794, 0.0
        %v827 = vmax.f32 %v795, 0.0
        %v828 = vmax.f32 %v796, 0.0
        %v829 = vmax.f32 %v797, 0.0
        %v830 = vmax.f32 %v798, 0.0
        %v831 = vmax.f32 %v799, 0.0
        %v832 = vmax.f32 %v800, 0.0
        %v833 = vmax.f32 %v801, 0.0
        %v834 = vmax.f32 %v802, 0.0
        %v835 = vmax.f32 %v803, 0.0
        %v836 = vmax.f32 %v804, 0.0
        %v837 = vmax.f32 %v805, 0.0
        %v838 = vmax.f32 %v806, 0.0
        %v839 = vmax.f32 %v807, 0.0
        %v840 = vmax.f32 %v808, 0.0
        %v841 = vmax.f32 %v809, 0.0
        %v842 = vmax.f32 %v810, 0.0
        %v843 = vmax.f32 %v811, 0.0
        %v844 = vmax.f32 %v812, 0.0
        %v845 = vmax.f32 %v813, 0.0
        %v846 = vmax.f32 %v814, 0.0
        %v847 = vmax.f32 %v815, 0.0
        %v848 = vmax.f32 %v816, 0.0
        %v849 = vmax.f32 %v817, 0.0
        %v850 = vmax.f32 %v818, 0.0
        %851 = vst [vmem:[%s257] sm:$0xff] %v819
        %852 = vst [vmem:[%s257 + $0x8] sm:$0xff] %v820
        %853 = vst [vmem:[%s257 + $0x10] sm:$0xff] %v821
        %854 = vst [vmem:[%s257 + $0x18] sm:$0xff] %v822
        %855 = vst [vmem:[%s257 + $0x20] sm:$0xff] %v823
        %856 = vst [vmem:[%s257 + $0x28] sm:$0xff] %v824
        %857 = vst [vmem:[%s257 + $0x30] sm:$0xff] %v825
        %858 = vst [vmem:[%s257 + $0x38] sm:$0xff] %v826
        %859 = vst [vmem:[%s257 + $0x40] sm:$0xff] %v827
        %860 = vst [vmem:[%s257 + $0x48] sm:$0xff] %v828
        %861 = vst [vmem:[%s257 + $0x50] sm:$0xff] %v829
        %862 = vst [vmem:[%s257 + $0x58] sm:$0xff] %v830
        %863 = vst [vmem:[%s257 + $0x60] sm:$0xff] %v831
        %864 = vst [vmem:[%s257 + $0x68] sm:$0xff] %v832
        %865 = vst [vmem:[%s257 + $0x70] sm:$0xff] %v833
        %866 = vst [vmem:[%s257 + $0x78] sm:$0xff] %v834
        %867 = vst [vmem:[%s257 + $0x80] sm:$0xff] %v835
        %868 = vst [vmem:[%s257 + $0x88] sm:$0xff] %v836
        %869 = vst [vmem:[%s257 + $0x90] sm:$0xff] %v837
        %870 = vst [vmem:[%s257 + $0x98] sm:$0xff] %v838
        %871 = vst [vmem:[%s257 + $0xa0] sm:$0xff] %v839
        %872 = vst [vmem:[%s257 + $0xa8] sm:$0xff] %v840
        %873 = vst [vmem:[%s257 + $0xb0] sm:$0xff] %v841
        %874 = vst [vmem:[%s257 + $0xb8] sm:$0xff] %v842
        %875 = vst [vmem:[%s257 + $0xc0] sm:$0xff] %v843
        %876 = vst [vmem:[%s257 + $0xc8] sm:$0xff] %v844
        %877 = vst [vmem:[%s257 + $0xd0] sm:$0xff] %v845
        %878 = vst [vmem:[%s257 + $0xd8] sm:$0xff] %v846
        %879 = vst [vmem:[%s257 + $0xe0] sm:$0xff] %v847
        %880 = vst [vmem:[%s257 + $0xe8] sm:$0xff] %v848
        %881 = vst [vmem:[%s257 + $0xf0] sm:$0xff] %v849
        %882 = vst [vmem:[%s257 + $0xf8] sm:$0xff] %v850
      $region40: #{_lambda_.7} parent=31 // pred_fallthru
        _
      %s883 = smul.u32 32, %s19
      %p884 = scmp.lt.s32.totalorder %s883, 63
      %s885 = scalar_select %p884, %s883, 63
      %p886 = scmp.lt.s32.totalorder %s20, 0
      %s887 = scalar_select %p886, %s20, 0
      %s888 = sadd.s32 %s887, %s885
      %s889 = smul.addr %s888, 8
      %s890 = scalar_lea.vmem %s3, %s889
      // Predicated region
      $region41: #{_lambda_.7} parent=31 // pred_check
        %p891 = pneg %p135
      $region42: #{_lambda_.7} parent=31 // pred_check_branch
        %893 = sbr.rel (%p891) target = $region44
      $region43: #{_lambda_.7} parent=31 // pred_region
        %s894 = smul.u32 32, %s19
      $region44: #{_lambda_.7} parent=31 // pred_fallthru
        _
    $region32: #{_lambda_.7} parent=5 // pred_fallthru
      _
    %p895 = scmp.le.s32.totalorder 2, %s9
    // Predicated region
    $region45: #{_lambda_.7} parent=5 // pred_check
      %p896 = pneg %p895
    $region46: #{_lambda_.7} parent=5 // pred_check_branch
      %898 = sbr.rel (%p896) target = $region48
    $region47: #{_lambda_.7} parent=5 // pred_region
      %s899 = ssub.s32 %s9, 2
      // Predicated region
      $region49: #{_lambda_.7} parent=47 // pred_check
        %p900 = pneg %p141
      $region50: #{_lambda_.7} parent=47 // pred_check_branch
        %902 = sbr.rel (%p900) target = $region52
      $region51: #{_lambda_.7} parent=47 // pred_region
        %s903 = smul.u32 32, %s22
        %p904 = scmp.lt.s32.totalorder %s903, 63
        %s905 = scalar_select %p904, %s903, 63
        %p906 = scmp.lt.s32.totalorder %s23, 0
        %s907 = scalar_select %p906, %s23, 0
        %s908 = sadd.s32 %s907, %s905
        %s909 = smul.addr %s908, 8
        %s910 = scalar_lea.vmem %s3, %s909
      $region52: #{_lambda_.7} parent=47 // pred_fallthru
        _
    $region48: #{_lambda_.7} parent=5 // pred_fallthru
      _
  $region6: #{_lambda_.7} parent=0 // loop_footer
    %s13 = sadd.s32 1, %s9
  $region7: #{_lambda_.7} parent=0 // loop_footer_branch
    %8 = sbr.rel target = $region3
  $region8: #{_lambda_.7} parent=0 // loop_exit
    _

// kernel: _lambda_.8
$region0: #{_lambda_.8}
  #allocation0 [shape = 'u32[]', space=smem, size = 0x4, offset = 0x4, fixed_abs, tag = 'smem constant byte address 0x4 - core index']
  #allocation1 [shape = 'u32[144,128]{1,0:T(1,128)}', space=vmem, size = 0x12000, scoped, tag = 'internal scratch']
  %s0 = inlined_call_operand.vmem [shape: bf16[2,288,96], index: 0, kind: input, shape index: {}]
  %s1 = inlined_call_operand.vmem [shape: bf16[3,96,32], index: 1, kind: input, shape index: {}]
  %s2 = inlined_call_operand.vmem [shape: f32[1,32], index: 2, kind: input, shape index: {}]
  %s3 = inlined_call_operand.vmem [shape: f32[2,256,32], index: 3, kind: input, shape index: {}]
  %s4 = inlined_call_operand.vmem [shape: f32[2,256,32], index: 4, kind: output, shape index: {}]
  %s5 = sld [smem:[#allocation0]]
  $region49: #{_lambda_.8} parent=0
    _
  %s7 = ssub.s32 1, %s5
  %s8 = scalar_select 0, %s7, %s5
  loop: start=0, step=1, limit=4
  $region2: #{_lambda_.8} parent=0 // loop_pre_header
    _
  $region3: #{_lambda_.8} parent=0 // loop_header
    %s10 = sphi 0, %s14
    %p11 = scmp.ge.s32.totalorder %s10, 4
    %s20 = sphi 0, %s22
    %s23 = sphi 0, %s20
    %s24 = sphi 0, %s23
    %s40 = sphi 0, %s24
    %s44 = sphi 0, %s44
    %s46 = sphi 0, %s44
    %s47 = sphi 0, %s46
    %s61 = sphi 0, %s47
    %s65 = sphi 0, %s65
    %s67 = sphi 0, %s65
    %s68 = sphi 0, %s67
    %s82 = sphi 0, %s68
    %s88 = sphi 0, %s90
    %s91 = sphi 0, %s88
    %s92 = sphi 0, %s91
    %s108 = sphi 0, %s92
    %s114 = sphi 0, %s116
    %s117 = sphi 0, %s114
    %s118 = sphi 0, %s117
    %s134 = sphi 0, %s118
  $region4: #{_lambda_.8} parent=0 // loop_header_branch
    %13 = sbr.rel (%p11) target = $region8
  $region5: #{_lambda_.8} parent=0 // loop_body
    %s15 = ssub.s32 %s10, 1
    %s16 = ssub.s32 %s10, 2
    %s17 = sadd.s32 %s10, 1
    %s18 = ssub.s32 %s10, %s17
    %p19 = scmp.eq.s32.totalorder %s18, 0
    %s21 = sadd.s32 %s20, 1
    %s22 = scalar_select %p19, %s20, %s21
    %p25 = pneg %p19
    %p26 = scmp.eq.s32.totalorder %s10, 1
    %p27 = por %p25, %p26
    %p28 = scmp.ne.s32.totalorder %s20, %s23
    %p29 = scmp.eq.s32.totalorder %s10, 0
    %p30 = por %p28, %p29
    %p31 = scmp.ne.s32.totalorder %s20, %s23
    %p32 = scmp.eq.s32.totalorder %s15, 1
    %p33 = por %p31, %p32
    %p34 = scmp.ne.s32.totalorder %s23, %s24
    %p35 = scmp.eq.s32.totalorder %s15, 0
    %p36 = por %p34, %p35
    %p37 = scmp.ne.s32.totalorder %s23, %s24
    %p38 = scmp.eq.s32.totalorder %s16, 1
    %p39 = por %p37, %p38
    %p41 = scmp.ne.s32.totalorder %s24, %s40
    %p42 = scmp.eq.s32.totalorder %s16, 0
    %p43 = por %p41, %p42
    %s45 = sadd.s32 %s44, 1
    %p48 = scmp.eq.s32.totalorder %s10, 1
    %p49 = scmp.ne.s32.totalorder %s44, %s46
    %p50 = scmp.eq.s32.totalorder %s10, 0
    %p51 = por %p49, %p50
    %p52 = scmp.ne.s32.totalorder %s44, %s46
    %p53 = scmp.eq.s32.totalorder %s15, 1
    %p54 = por %p52, %p53
    %p55 = scmp.ne.s32.totalorder %s46, %s47
    %p56 = scmp.eq.s32.totalorder %s15, 0
    %p57 = por %p55, %p56
    %p58 = scmp.ne.s32.totalorder %s46, %s47
    %p59 = scmp.eq.s32.totalorder %s16, 1
    %p60 = por %p58, %p59
    %p62 = scmp.ne.s32.totalorder %s47, %s61
    %p63 = scmp.eq.s32.totalorder %s16, 0
    %p64 = por %p62, %p63
    %s66 = sadd.s32 %s65, 1
    %p69 = scmp.eq.s32.totalorder %s10, 1
    %p70 = scmp.ne.s32.totalorder %s65, %s67
    %p71 = scmp.eq.s32.totalorder %s10, 0
    %p72 = por %p70, %p71
    %p73 = scmp.ne.s32.totalorder %s65, %s67
    %p74 = scmp.eq.s32.totalorder %s15, 1
    %p75 = por %p73, %p74
    %p76 = scmp.ne.s32.totalorder %s67, %s68
    %p77 = scmp.eq.s32.totalorder %s15, 0
    %p78 = por %p76, %p77
    %p79 = scmp.ne.s32.totalorder %s67, %s68
    %p80 = scmp.eq.s32.totalorder %s16, 1
    %p81 = por %p79, %p80
    %p83 = scmp.ne.s32.totalorder %s68, %s82
    %p84 = scmp.eq.s32.totalorder %s16, 0
    %p85 = por %p83, %p84
    %s86 = ssub.s32 %s10, %s17
    %p87 = scmp.eq.s32.totalorder %s86, 0
    %s89 = sadd.s32 %s88, 1
    %s90 = scalar_select %p87, %s88, %s89
    %p93 = pneg %p87
    %p94 = scmp.eq.s32.totalorder %s10, 1
    %p95 = por %p93, %p94
    %p96 = scmp.ne.s32.totalorder %s88, %s91
    %p97 = scmp.eq.s32.totalorder %s10, 0
    %p98 = por %p96, %p97
    %p99 = scmp.ne.s32.totalorder %s88, %s91
    %p100 = scmp.eq.s32.totalorder %s15, 1
    %p101 = por %p99, %p100
    %p102 = scmp.ne.s32.totalorder %s91, %s92
    %p103 = scmp.eq.s32.totalorder %s15, 0
    %p104 = por %p102, %p103
    %p105 = scmp.ne.s32.totalorder %s91, %s92
    %p106 = scmp.eq.s32.totalorder %s16, 1
    %p107 = por %p105, %p106
    %p109 = scmp.ne.s32.totalorder %s92, %s108
    %p110 = scmp.eq.s32.totalorder %s16, 0
    %p111 = por %p109, %p110
    %s112 = ssub.s32 %s10, %s17
    %p113 = scmp.eq.s32.totalorder %s112, 0
    %s115 = sadd.s32 %s114, 1
    %s116 = scalar_select %p113, %s114, %s115
    %p119 = pneg %p113
    %p120 = scmp.eq.s32.totalorder %s10, 1
    %p121 = por %p119, %p120
    %p122 = scmp.ne.s32.totalorder %s114, %s117
    %p123 = scmp.eq.s32.totalorder %s10, 0
    %p124 = por %p122, %p123
    %p125 = scmp.ne.s32.totalorder %s114, %s117
    %p126 = scmp.eq.s32.totalorder %s15, 1
    %p127 = por %p125, %p126
    %p128 = scmp.ne.s32.totalorder %s117, %s118
    %p129 = scmp.eq.s32.totalorder %s15, 0
    %p130 = por %p128, %p129
    %p131 = scmp.ne.s32.totalorder %s117, %s118
    %p132 = scmp.eq.s32.totalorder %s16, 1
    %p133 = por %p131, %p132
    %p135 = scmp.ne.s32.totalorder %s118, %s134
    %p136 = scmp.eq.s32.totalorder %s16, 0
    %p137 = por %p135, %p136
    %p138 = scmp.le.s32.totalorder 1, %s10
    %p139 = scmp.lt.s32.totalorder %s10, 3
    %p140 = pnand %p138, %p139
    %p141 = pneg %p140
    // Predicated region
    $region9: #{_lambda_.8} parent=5 // pred_check
      _
    $region10: #{_lambda_.8} parent=5 // pred_check_branch
      %143 = sbr.rel (%p140) target = $region12
    $region11: #{_lambda_.8} parent=5 // pred_region
      %s144 = ssub.s32 %s10, 1
      // Predicated region
      $region13: #{_lambda_.8} parent=11 // pred_check
        %p145 = pneg %p57
      $region14: #{_lambda_.8} parent=11 // pred_check_branch
        %147 = sbr.rel (%p145) target = $region16
      $region15: #{_lambda_.8} parent=11 // pred_region
        _
      $region16: #{_lambda_.8} parent=11 // pred_fallthru
        _
      // Predicated region
      $region17: #{_lambda_.8} parent=11 // pred_check
        %p148 = pneg %p78
      $region18: #{_lambda_.8} parent=11 // pred_check_branch
        %150 = sbr.rel (%p148) target = $region20
      $region19: #{_lambda_.8} parent=11 // pred_region
        _
      $region20: #{_lambda_.8} parent=11 // pred_fallthru
        _
    $region12: #{_lambda_.8} parent=5 // pred_fallthru
      _
    %p151 = scmp.lt.s32.totalorder %s10, 2
    // Predicated region
    $region21: #{_lambda_.8} parent=5 // pred_check
      %p152 = pneg %p151
    $region22: #{_lambda_.8} parent=5 // pred_check_branch
      %154 = sbr.rel (%p152) target = $region24
    $region23: #{_lambda_.8} parent=5 // pred_region
      // Predicated region
      $region25: #{_lambda_.8} parent=23 // pred_check
        %p155 = pneg %p30
      $region26: #{_lambda_.8} parent=23 // pred_check_branch
        %157 = sbr.rel (%p155) target = $region28
      $region27: #{_lambda_.8} parent=23 // pred_region
        %p158 = scmp.lt.s32.totalorder %s10, 1
        %s159 = scalar_select %p158, %s10, 1
        %s160 = smul.addr %s159, 36
        %s161 = smul.addr %s160, 4
        %s162 = scalar_lea.vmem %s0, %s161
      $region28: #{_lambda_.8} parent=23 // pred_fallthru
        _
      // Predicated region
      $region29: #{_lambda_.8} parent=23 // pred_check
        %p163 = pneg %p98
      $region30: #{_lambda_.8} parent=23 // pred_check_branch
        %165 = sbr.rel (%p163) target = $region32
      $region31: #{_lambda_.8} parent=23 // pred_region
        %p166 = scmp.lt.s32.totalorder %s10, 1
        %s167 = scalar_select %p166, %s10, 1
        %s168 = smul.addr %s167, 32
        %s169 = smul.addr %s168, 8
        %s170 = scalar_lea.vmem %s3, %s169
      $region32: #{_lambda_.8} parent=23 // pred_fallthru
        _
    $region24: #{_lambda_.8} parent=5 // pred_fallthru
      _
    %p171 = scmp.le.s32.totalorder 1, %s10
    %p172 = scmp.lt.s32.totalorder %s10, 3
    %p173 = pnand %p171, %p172
    %p174 = pneg %p173
    // Predicated region
    $region33: #{_lambda_.8} parent=5 // pred_check
      _
    $region34: #{_lambda_.8} parent=5 // pred_check_branch
      %176 = sbr.rel (%p173) target = $region36
    $region35: #{_lambda_.8} parent=5 // pred_region
      %s177 = ssub.s32 %s10, 1
      %p178 = scmp.lt.s32.totalorder %s15, 1
      %s179 = scalar_select %p178, %s15, 1
      %s180 = smul.addr %s179, 36
      %s181 = smul.addr %s180, 4
      %s182 = scalar_lea.vmem %s0, %s181
      %p183 = pneg %p36
      %p184 = pneg %p33
      %p185 = pneg %p57
      %p186 = pneg %p54
      %p187 = pneg %p78
      %p188 = pneg %p75
      %p189 = scmp.lt.s32.totalorder %s15, 1
      %s190 = scalar_select %p189, %s15, 1
      %s191 = smul.addr %s190, 32
      %s192 = smul.addr %s191, 8
      %s193 = scalar_lea.vmem %s3, %s192
      %p194 = pneg %p104
      %p195 = pneg %p101
      %p196 = pneg %p130
      %p197 = pneg %p127
      %p198 = scmp.lt.s32.totalorder %s15, 1
      %s199 = scalar_select %p198, %s15, 1
      %s200 = smul.addr %s199, 32
      %s201 = smul.addr %s200, 8
      %s202 = scalar_lea.vmem %s4, %s201
      %p203 = scmp.lt.s32.totalorder %s15, 1
      %s204 = scalar_select %p203, %s15, 1
      %s205 = smul.addr %s204, 36
      %s206 = smul.addr %s205, 4
      %s207 = scalar_lea.vmem %s0, %s206
      %p208 = scmp.lt.s32.totalorder %s15, 1
      %s209 = scalar_select %p208, %s15, 1
      %s210 = smul.addr %s209, 32
      %s211 = smul.addr %s210, 8
      %s212 = scalar_lea.vmem %s3, %s211
      %p213 = scmp.lt.s32.totalorder %s15, 1
      %s214 = scalar_select %p213, %s15, 1
      %s215 = smul.addr %s214, 32
      %s216 = smul.addr %s215, 8
      %s217 = scalar_lea.vmem %s4, %s216
      %v219 = vld [vmem:[%s207] sm:$0xf]
      %v220 = vld [vmem:[%s207 + $0x4] sm:$0xf]
      %v221 = vld [vmem:[%s207 + $0x8] sm:$0xf]
      %v222 = vld [vmem:[%s207 + $0xc] sm:$0xf]
      %v223 = vld [vmem:[%s207 + $0x10] sm:$0xf]
      %v224 = vld [vmem:[%s207 + $0x14] sm:$0xf]
      %v225 = vld [vmem:[%s207 + $0x18] sm:$0xf]
      %v226 = vld [vmem:[%s207 + $0x1c] sm:$0xf]
      %v227 = vld [vmem:[%s207 + $0x20] sm:$0xf]
      %v228 = vld [vmem:[%s207 + $0x24] sm:$0xf]
      %v229 = vld [vmem:[%s207 + $0x28] sm:$0xf]
      %v230 = vld [vmem:[%s207 + $0x2c] sm:$0xf]
      %v231 = vld [vmem:[%s207 + $0x30] sm:$0xf]
      %v232 = vld [vmem:[%s207 + $0x34] sm:$0xf]
      %v233 = vld [vmem:[%s207 + $0x38] sm:$0xf]
      %v234 = vld [vmem:[%s207 + $0x3c] sm:$0xf]
      %v235 = vld [vmem:[%s207 + $0x40] sm:$0xf]
      %v236 = vld [vmem:[%s207 + $0x44] sm:$0xf]
      %v237 = vld [vmem:[%s207 + $0x48] sm:$0xf]
      %v238 = vld [vmem:[%s207 + $0x4c] sm:$0xf]
      %v239 = vld [vmem:[%s207 + $0x50] sm:$0xf]
      %v240 = vld [vmem:[%s207 + $0x54] sm:$0xf]
      %v241 = vld [vmem:[%s207 + $0x58] sm:$0xf]
      %v242 = vld [vmem:[%s207 + $0x5c] sm:$0xf]
      %v243 = vld [vmem:[%s207 + $0x60] sm:$0xf]
      %v244 = vld [vmem:[%s207 + $0x64] sm:$0xf]
      %v245 = vld [vmem:[%s207 + $0x68] sm:$0xf]
      %v246 = vld [vmem:[%s207 + $0x6c] sm:$0xf]
      %v247 = vld [vmem:[%s207 + $0x70] sm:$0xf]
      %v248 = vld [vmem:[%s207 + $0x74] sm:$0xf]
      %v249 = vld [vmem:[%s207 + $0x78] sm:$0xf]
      %v250 = vld [vmem:[%s207 + $0x7c] sm:$0xf]
      %v251 = vld [vmem:[%s1] sm:$0xf]
      %v252 = vld [vmem:[%s1 + $0x4] sm:$0xf]
      %v253 = vld [vmem:[%s1 + $0x8] sm:$0xf]
      %v254 = vld [vmem:[%s1 + $0xc] sm:$0xf]
      %v255 = vld [vmem:[%s1 + $0x10] sm:$0xf]
      %v256 = vld [vmem:[%s1 + $0x14] sm:$0xf]
      %v257 = vld [vmem:[%s1 + $0x18] sm:$0xf]
      %v258 = vld [vmem:[%s1 + $0x1c] sm:$0xf]
      %v259 = vld [vmem:[%s1 + $0x20] sm:$0xf]
      %v260 = vld [vmem:[%s1 + $0x24] sm:$0xf]
      %v261 = vld [vmem:[%s1 + $0x28] sm:$0xf]
      %v262 = vld [vmem:[%s1 + $0x2c] sm:$0xf]
      %v263 = vld [vmem:[%s207 + $0x80] sm:$0xf]
      %v264 = vld [vmem:[%s207 + $0x84] sm:$0xf]
      %s265 = scalar_lea.vmem %s1, 48
      %v266 = vld [vmem:[%s265] sm:$0xf]
      %v267 = vld [vmem:[%s265 + $0x4] sm:$0xf]
      %v268 = vld [vmem:[%s265 + $0x8] sm:$0xf]
      %v269 = vld [vmem:[%s265 + $0xc] sm:$0xf]
      %v270 = vld [vmem:[%s265 + $0x10] sm:$0xf]
      %v271 = vld [vmem:[%s265 + $0x14] sm:$0xf]
      %v272 = vld [vmem:[%s265 + $0x18] sm:$0xf]
      %v273 = vld [vmem:[%s265 + $0x1c] sm:$0xf]
      %v274 = vld [vmem:[%s265 + $0x20] sm:$0xf]
      %v275 = vld [vmem:[%s265 + $0x24] sm:$0xf]
      %v276 = vld [vmem:[%s265 + $0x28] sm:$0xf]
      %v277 = vld [vmem:[%s265 + $0x2c] sm:$0xf]
      %v310 = vunpack.c.l.b16 %v221
      %v311 = vunpack.c.l.b16 %v222
      %v312 = vunpack.c.l.b16 %v223
      %v313 = vunpack.c.l.b16 %v224
      %v314 = vunpack.c.l.b16 %v225
      %v315 = vunpack.c.l.b16 %v226
      %v316 = vunpack.c.l.b16 %v227
      %v317 = vunpack.c.l.b16 %v228
      %v318 = vunpack.c.l.b16 %v229
      %v319 = vunpack.c.l.b16 %v230
      %v320 = vunpack.c.l.b16 %v231
      %v321 = vunpack.c.l.b16 %v232
      %v322 = vunpack.c.l.b16 %v233
      %v323 = vunpack.c.l.b16 %v234
      %v324 = vunpack.c.l.b16 %v235
      %v325 = vunpack.c.l.b16 %v236
      %v326 = vunpack.c.l.b16 %v237
      %v327 = vunpack.c.l.b16 %v238
      %v328 = vunpack.c.l.b16 %v239
      %v329 = vunpack.c.l.b16 %v240
      %v330 = vunpack.c.l.b16 %v241
      %v331 = vunpack.c.l.b16 %v242
      %v332 = vunpack.c.l.b16 %v243
      %v333 = vunpack.c.l.b16 %v244
      %v334 = vunpack.c.l.b16 %v245
      %v335 = vunpack.c.l.b16 %v246
      %v336 = vunpack.c.l.b16 %v247
      %v337 = vunpack.c.l.b16 %v248
      %v338 = vunpack.c.l.b16 %v249
      %v339 = vunpack.c.l.b16 %v250
      %v340 = vunpack.c.l.b16 %v263
      %v341 = vunpack.c.l.b16 %v264
      %v342 = vpack.c.b16 %v311, %v310
      %v343 = vpack.c.b16 %v313, %v312
      %v344 = vpack.c.b16 %v315, %v314
      %v345 = vpack.c.b16 %v317, %v316
      %v346 = vpack.c.b16 %v319, %v318
      %v347 = vpack.c.b16 %v321, %v320
      %v348 = vpack.c.b16 %v323, %v322
      %v349 = vpack.c.b16 %v325, %v324
      %v350 = vpack.c.b16 %v327, %v326
      %v351 = vpack.c.b16 %v329, %v328
      %v352 = vpack.c.b16 %v331, %v330
      %v353 = vpack.c.b16 %v333, %v332
      %v354 = vpack.c.b16 %v335, %v334
      %v355 = vpack.c.b16 %v337, %v336
      %v356 = vpack.c.b16 %v339, %v338
      %v357 = vpack.c.b16 %v341, %v340
      %v370 = vunpack.c.l.b16 %v266
      %v371 = vunpack.c.l.b16 %v267
      %v372 = vunpack.c.l.b16 %v268
      %v373 = vunpack.c.l.b16 %v269
      %v374 = vunpack.c.l.b16 %v270
      %v375 = vunpack.c.l.b16 %v271
      %v376 = vunpack.c.l.b16 %v272
      %v377 = vunpack.c.l.b16 %v273
      %v378 = vunpack.c.l.b16 %v274
      %v379 = vunpack.c.l.b16 %v275
      %v380 = vunpack.c.l.b16 %v276
      %v381 = vunpack.c.l.b16 %v277
      %v382 = vpack.c.b16 %v371, %v370
      %v383 = vpack.c.b16 %v373, %v372
      %v384 = vpack.c.b16 %v375, %v374
      %v385 = vpack.c.b16 %v377, %v376
      %v386 = vpack.c.b16 %v379, %v378
      %v387 = vpack.c.b16 %v381, %v380
      %vm394 = vcmask 785408
      %v396 = vsel %vm394, %v342, 0
      %v399 = vsel %vm394, %v343, 0
      %v402 = vsel %vm394, %v344, 0
      %v405 = vsel %vm394, %v345, 0
      %v408 = vsel %vm394, %v346, 0
      %v411 = vsel %vm394, %v347, 0
      %v414 = vsel %vm394, %v348, 0
      %v417 = vsel %vm394, %v349, 0
      %v420 = vsel %vm394, %v350, 0
      %v423 = vsel %vm394, %v351, 0
      %v426 = vsel %vm394, %v352, 0
      %v429 = vsel %vm394, %v353, 0
      %v432 = vsel %vm394, %v354, 0
      %v435 = vsel %vm394, %v355, 0
      %v438 = vsel %vm394, %v356, 0
      %v441 = vsel %vm394, %v357, 0
      %443 = vmatprep.subr.bf16.mxu0 0
      %444 = vmatpush1.bf16.msra.mxu0 %v382
      %445 = vmatprep.subr.bf16.mxu0 0
      %446 = vmatpush1.bf16.msra.mxu0 %v383
      %447 = vmatprep.subr.bf16.mxu0 0
      %448 = vmatpush1.bf16.msra.mxu0 %v384
      %449 = vmatprep.subr.bf16.mxu0 0
      %450 = vmatpush1.bf16.msra.mxu0 %v385
      %451 = vmatprep.subr.bf16.mxu0 0
      %452 = vmatpush1.bf16.msra.mxu0 %v386
      %453 = vmatprep.subr.bf16.mxu0 0
      %454 = vmatpush1.bf16.msra.mxu0 %v387
      %455 = vmatprep.subr.bf16.mxu0 0
      %456 = vmatpush1.bf16.msra.mxu0 0
      %457 = vmatprep.subr.bf16.mxu0 0
      %458 = vmatpush1.bf16.msra.mxu0 0
      %459 = vmatprep.subr.bf16.mxu0 0
      %460 = vmatpush1.bf16.msra.mxu0 0
      %461 = vmatprep.subr.bf16.mxu0 0
      %462 = vmatpush1.bf16.msra.mxu0 0
      %463 = vmatprep.subr.bf16.mxu0 0
      %464 = vmatpush1.bf16.msra.mxu0 0
      %465 = vmatprep.subr.bf16.mxu0 0
      %466 = vmatpush1.bf16.msra.mxu0 0
      %467 = vmatprep.subr.bf16.mxu0 0
      %468 = vmatpush1.bf16.msra.mxu0 0
      %469 = vmatprep.subr.bf16.mxu0 0
      %470 = vmatpush1.bf16.msra.mxu0 0
      %471 = vmatprep.subr.bf16.mxu0 0
      %472 = vmatpush1.bf16.msra.mxu0 0
      %473 = vmatprep.subr.bf16.mxu0 0
      %474 = vmatpush1.bf16.msra.mxu0 0
      %475 = vmatprep.mubr.bf16.mxu0 0
      %476 = vmatmul.mubr.bf16.gmra.mrb[0].mxu0 %v396
      %v477 = vpop.f32.mrb[0].mxu0
      %v478 = vadd.f32 0.0, %v477
      %v479 = vpop.f32.mrb[0].mxu0
      %v480 = vpop.f32.mrb[0].mxu0
      %v481 = vadd.f32 0.0, %v480
      %v482 = vpop.f32.mrb[0].mxu0
      %483 = vmatprep.mubr.bf16.mxu0 0
      %484 = vmatmul.mubr.bf16.gmra.mrb[0].mxu0 %v399
      %v485 = vpop.f32.mrb[0].mxu0
      %v486 = vadd.f32 0.0, %v485
      %v487 = vpop.f32.mrb[0].mxu0
      %v488 = vpop.f32.mrb[0].mxu0
      %v489 = vadd.f32 0.0, %v488
      %v490 = vpop.f32.mrb[0].mxu0
      %491 = vmatprep.mubr.bf16.mxu0 0
      %492 = vmatmul.mubr.bf16.gmra.mrb[0].mxu0 %v402
      %v493 = vpop.f32.mrb[0].mxu0
      %v494 = vadd.f32 0.0, %v493
      %v495 = vpop.f32.mrb[0].mxu0
      %v496 = vpop.f32.mrb[0].mxu0
      %v497 = vadd.f32 0.0, %v496
      %v498 = vpop.f32.mrb[0].mxu0
      %499 = vmatprep.mubr.bf16.mxu0 0
      %500 = vmatmul.mubr.bf16.gmra.mrb[0].mxu0 %v405
      %v501 = vpop.f32.mrb[0].mxu0
      %v502 = vadd.f32 0.0, %v501
      %v503 = vpop.f32.mrb[0].mxu0
      %v504 = vpop.f32.mrb[0].mxu0
      %v505 = vadd.f32 0.0, %v504
      %v506 = vpop.f32.mrb[0].mxu0
      %507 = vmatprep.mubr.bf16.mxu0 0
      %508 = vmatmul.mubr.bf16.gmra.mrb[0].mxu0 %v408
      %v509 = vpop.f32.mrb[0].mxu0
      %v510 = vadd.f32 0.0, %v509
      %v511 = vpop.f32.mrb[0].mxu0
      %v512 = vpop.f32.mrb[0].mxu0
      %v513 = vadd.f32 0.0, %v512
      %v514 = vpop.f32.mrb[0].mxu0
      %515 = vmatprep.mubr.bf16.mxu0 0
      %516 = vmatmul.mubr.bf16.gmra.mrb[0].mxu0 %v411
      %v517 = vpop.f32.mrb[0].mxu0
      %v518 = vadd.f32 0.0, %v517
      %v519 = vpop.f32.mrb[0].mxu0
      %v520 = vpop.f32.mrb[0].mxu0
      %v521 = vadd.f32 0.0, %v520
      %v522 = vpop.f32.mrb[0].mxu0
      %523 = vmatprep.mubr.bf16.mxu0 0
      %524 = vmatmul.mubr.bf16.gmra.mrb[0].mxu0 %v414
      %v525 = vpop.f32.mrb[0].mxu0
      %v526 = vadd.f32 0.0, %v525
      %v527 = vpop.f32.mrb[0].mxu0
      %v528 = vpop.f32.mrb[0].mxu0
      %v529 = vadd.f32 0.0, %v528
      %v530 = vpop.f32.mrb[0].mxu0
      %531 = vmatprep.mubr.bf16.mxu0 0
      %532 = vmatmul.mubr.bf16.gmra.mrb[0].mxu0 %v417
      %v533 = vpop.f32.mrb[0].mxu0
      %v534 = vadd.f32 0.0, %v533
      %v535 = vpop.f32.mrb[0].mxu0
      %v536 = vpop.f32.mrb[0].mxu0
      %v537 = vadd.f32 0.0, %v536
      %v538 = vpop.f32.mrb[0].mxu0
      %539 = vmatprep.mubr.bf16.mxu0 0
      %540 = vmatmul.mubr.bf16.gmra.mrb[0].mxu0 %v420
      %v541 = vpop.f32.mrb[0].mxu0
      %v542 = vadd.f32 0.0, %v541
      %v543 = vpop.f32.mrb[0].mxu0
      %v544 = vpop.f32.mrb[0].mxu0
      %v545 = vadd.f32 0.0, %v544
      %v546 = vpop.f32.mrb[0].mxu0
      %547 = vmatprep.mubr.bf16.mxu0 0
      %548 = vmatmul.mubr.bf16.gmra.mrb[0].mxu0 %v423
      %v549 = vpop.f32.mrb[0].mxu0
      %v550 = vadd.f32 0.0, %v549
      %v551 = vpop.f32.mrb[0].mxu0
      %v552 = vpop.f32.mrb[0].mxu0
      %v553 = vadd.f32 0.0, %v552
      %v554 = vpop.f32.mrb[0].mxu0
      %555 = vmatprep.mubr.bf16.mxu0 0
      %556 = vmatmul.mubr.bf16.gmra.mrb[0].mxu0 %v426
      %v557 = vpop.f32.mrb[0].mxu0
      %v558 = vadd.f32 0.0, %v557
      %v559 = vpop.f32.mrb[0].mxu0
      %v560 = vpop.f32.mrb[0].mxu0
      %v561 = vadd.f32 0.0, %v560
      %v562 = vpop.f32.mrb[0].mxu0
      %563 = vmatprep.mubr.bf16.mxu0 0
      %564 = vmatmul.mubr.bf16.gmra.mrb[0].mxu0 %v429
      %v565 = vpop.f32.mrb[0].mxu0
      %v566 = vadd.f32 0.0, %v565
      %v567 = vpop.f32.mrb[0].mxu0
      %v568 = vpop.f32.mrb[0].mxu0
      %v569 = vadd.f32 0.0, %v568
      %v570 = vpop.f32.mrb[0].mxu0
      %571 = vmatprep.mubr.bf16.mxu0 0
      %572 = vmatmul.mubr.bf16.gmra.mrb[0].mxu0 %v432
      %v573 = vpop.f32.mrb[0].mxu0
      %v574 = vadd.f32 0.0, %v573
      %v575 = vpop.f32.mrb[0].mxu0
      %v576 = vpop.f32.mrb[0].mxu0
      %v577 = vadd.f32 0.0, %v576
      %v578 = vpop.f32.mrb[0].mxu0
      %579 = vmatprep.mubr.bf16.mxu0 0
      %580 = vmatmul.mubr.bf16.gmra.mrb[0].mxu0 %v435
      %v581 = vpop.f32.mrb[0].mxu0
      %v582 = vadd.f32 0.0, %v581
      %v583 = vpop.f32.mrb[0].mxu0
      %v584 = vpop.f32.mrb[0].mxu0
      %v585 = vadd.f32 0.0, %v584
      %v586 = vpop.f32.mrb[0].mxu0
      %587 = vmatprep.mubr.bf16.mxu0 0
      %588 = vmatmul.mubr.bf16.gmra.mrb[0].mxu0 %v438
      %v589 = vpop.f32.mrb[0].mxu0
      %v590 = vadd.f32 0.0, %v589
      %v591 = vpop.f32.mrb[0].mxu0
      %v592 = vpop.f32.mrb[0].mxu0
      %v593 = vadd.f32 0.0, %v592
      %v594 = vpop.f32.mrb[0].mxu0
      %595 = vmatprep.mubr.bf16.mxu0 0
      %596 = vmatmul.mubr.bf16.gmra.mrb[0].mxu0 %v441
      %v597 = vpop.f32.mrb[0].mxu0
      %v598 = vadd.f32 0.0, %v597
      %v599 = vpop.f32.mrb[0].mxu0
      %v600 = vpop.f32.mrb[0].mxu0
      %v601 = vadd.f32 0.0, %v600
      %v602 = vpop.f32.mrb[0].mxu0
      %603 = vdwg.mxu0
      %v606 = vunpack.c.l.b16 %v219
      %v607 = vunpack.c.l.b16 %v220
      %v608 = vpack.c.b16 %v607, %v606
      %v621 = vunpack.c.l.b16 %v251
      %v622 = vunpack.c.l.b16 %v252
      %v623 = vunpack.c.l.b16 %v253
      %v624 = vunpack.c.l.b16 %v254
      %v625 = vunpack.c.l.b16 %v255
      %v626 = vunpack.c.l.b16 %v256
      %v627 = vunpack.c.l.b16 %v257
      %v628 = vunpack.c.l.b16 %v258
      %v629 = vunpack.c.l.b16 %v259
      %v630 = vunpack.c.l.b16 %v260
      %v631 = vunpack.c.l.b16 %v261
      %v632 = vunpack.c.l.b16 %v262
      %v633 = vpack.c.b16 %v622, %v621
      %v634 = vpack.c.b16 %v624, %v623
      %v635 = vpack.c.b16 %v626, %v625
      %v636 = vpack.c.b16 %v628, %v627
      %v637 = vpack.c.b16 %v630, %v629
      %v638 = vpack.c.b16 %v632, %v631
      %v646 = vsel %vm394, %v608, 0
      %648 = vmatprep.subr.bf16.mxu0 0
      %649 = vmatpush1.bf16.msra.mxu0 %v633
      %650 = vmatprep.subr.bf16.mxu0 0
      %651 = vmatpush1.bf16.msra.mxu0 %v634
      %652 = vmatprep.subr.bf16.mxu0 0
      %653 = vmatpush1.bf16.msra.mxu0 %v635
      %654 = vmatprep.subr.bf16.mxu0 0
      %655 = vmatpush1.bf16.msra.mxu0 %v636
      %656 = vmatprep.subr.bf16.mxu0 0
      %657 = vmatpush1.bf16.msra.mxu0 %v637
      %658 = vmatprep.subr.bf16.mxu0 0
      %659 = vmatpush1.bf16.msra.mxu0 %v638
      %660 = vmatprep.subr.bf16.mxu0 0
      %661 = vmatpush1.bf16.msra.mxu0 0
      %662 = vmatprep.subr.bf16.mxu0 0
      %663 = vmatpush1.bf16.msra.mxu0 0
      %664 = vmatprep.subr.bf16.mxu0 0
      %665 = vmatpush1.bf16.msra.mxu0 0
      %666 = vmatprep.subr.bf16.mxu0 0
      %667 = vmatpush1.bf16.msra.mxu0 0
      %668 = vmatprep.subr.bf16.mxu0 0
      %669 = vmatpush1.bf16.msra.mxu0 0
      %670 = vmatprep.subr.bf16.mxu0 0
      %671 = vmatpush1.bf16.msra.mxu0 0
      %672 = vmatprep.subr.bf16.mxu0 0
      %673 = vmatpush1.bf16.msra.mxu0 0
      %674 = vmatprep.subr.bf16.mxu0 0
      %675 = vmatpush1.bf16.msra.mxu0 0
      %676 = vmatprep.subr.bf16.mxu0 0
      %677 = vmatpush1.bf16.msra.mxu0 0
      %678 = vmatprep.subr.bf16.mxu0 0
      %679 = vmatpush1.bf16.msra.mxu0 0
      %680 = vmatprep.mubr.bf16.mxu0 0
      %681 = vmatmul.mubr.bf16.gmra.mrb[0].mxu0 %v646
      %v682 = vpop.f32.mrb[0].mxu0
      %v683 = vadd.f32 %v478, %v682
      %v684 = vpop.f32.mrb[0].mxu0
      %v685 = vpop.f32.mrb[0].mxu0
      %v686 = vadd.f32 %v481, %v685
      %v687 = vpop.f32.mrb[0].mxu0
      %688 = vmatprep.mubr.bf16.mxu0 0
      %689 = vmatmul.mubr.bf16.gmra.mrb[0].mxu0 %v396
      %v690 = vpop.f32.mrb[0].mxu0
      %v691 = vadd.f32 %v486, %v690
      %v692 = vpop.f32.mrb[0].mxu0
      %v693 = vpop.f32.mrb[0].mxu0
      %v694 = vadd.f32 %v489, %v693
      %v695 = vpop.f32.mrb[0].mxu0
      %696 = vmatprep.mubr.bf16.mxu0 0
      %697 = vmatmul.mubr.bf16.gmra.mrb[0].mxu0 %v399
      %v698 = vpop.f32.mrb[0].mxu0
      %v699 = vadd.f32 %v494, %v698
      %v700 = vpop.f32.mrb[0].mxu0
      %v701 = vpop.f32.mrb[0].mxu0
      %v702 = vadd.f32 %v497, %v701
      %v703 = vpop.f32.mrb[0].mxu0
      %704 = vmatprep.mubr.bf16.mxu0 0
      %705 = vmatmul.mubr.bf16.gmra.mrb[0].mxu0 %v402
      %v706 = vpop.f32.mrb[0].mxu0
      %v707 = vadd.f32 %v502, %v706
      %v708 = vpop.f32.mrb[0].mxu0
      %v709 = vpop.f32.mrb[0].mxu0
      %v710 = vadd.f32 %v505, %v709
      %v711 = vpop.f32.mrb[0].mxu0
      %712 = vmatprep.mubr.bf16.mxu0 0
      %713 = vmatmul.mubr.bf16.gmra.mrb[0].mxu0 %v405
      %v714 = vpop.f32.mrb[0].mxu0
      %v715 = vadd.f32 %v510, %v714
      %v716 = vpop.f32.mrb[0].mxu0
      %v717 = vpop.f32.mrb[0].mxu0
      %v718 = vadd.f32 %v513, %v717
      %v719 = vpop.f32.mrb[0].mxu0
      %720 = vmatprep.mubr.bf16.mxu0 0
      %721 = vmatmul.mubr.bf16.gmra.mrb[0].mxu0 %v408
      %v722 = vpop.f32.mrb[0].mxu0
      %v723 = vadd.f32 %v518, %v722
      %v724 = vpop.f32.mrb[0].mxu0
      %v725 = vpop.f32.mrb[0].mxu0
      %v726 = vadd.f32 %v521, %v725
      %v727 = vpop.f32.mrb[0].mxu0
      %728 = vmatprep.mubr.bf16.mxu0 0
      %729 = vmatmul.mubr.bf16.gmra.mrb[0].mxu0 %v411
      %v730 = vpop.f32.mrb[0].mxu0
      %v731 = vadd.f32 %v526, %v730
      %v732 = vpop.f32.mrb[0].mxu0
      %v733 = vpop.f32.mrb[0].mxu0
      %v734 = vadd.f32 %v529, %v733
      %v735 = vpop.f32.mrb[0].mxu0
      %736 = vmatprep.mubr.bf16.mxu0 0
      %737 = vmatmul.mubr.bf16.gmra.mrb[0].mxu0 %v414
      %v738 = vpop.f32.mrb[0].mxu0
      %v739 = vadd.f32 %v534, %v738
      %v740 = vpop.f32.mrb[0].mxu0
      %v741 = vpop.f32.mrb[0].mxu0
      %v742 = vadd.f32 %v537, %v741
      %v743 = vpop.f32.mrb[0].mxu0
      %744 = vmatprep.mubr.bf16.mxu0 0
      %745 = vmatmul.mubr.bf16.gmra.mrb[0].mxu0 %v417
      %v746 = vpop.f32.mrb[0].mxu0
      %v747 = vadd.f32 %v542, %v746
      %v748 = vpop.f32.mrb[0].mxu0
      %v749 = vpop.f32.mrb[0].mxu0
      %v750 = vadd.f32 %v545, %v749
      %v751 = vpop.f32.mrb[0].mxu0
      %752 = vmatprep.mubr.bf16.mxu0 0
      %753 = vmatmul.mubr.bf16.gmra.mrb[0].mxu0 %v420
      %v754 = vpop.f32.mrb[0].mxu0
      %v755 = vadd.f32 %v550, %v754
      %v756 = vpop.f32.mrb[0].mxu0
      %v757 = vpop.f32.mrb[0].mxu0
      %v758 = vadd.f32 %v553, %v757
      %v759 = vpop.f32.mrb[0].mxu0
      %760 = vmatprep.mubr.bf16.mxu0 0
      %761 = vmatmul.mubr.bf16.gmra.mrb[0].mxu0 %v423
      %v762 = vpop.f32.mrb[0].mxu0
      %v763 = vadd.f32 %v558, %v762
      %v764 = vpop.f32.mrb[0].mxu0
      %v765 = vpop.f32.mrb[0].mxu0
      %v766 = vadd.f32 %v561, %v765
      %v767 = vpop.f32.mrb[0].mxu0
      %768 = vmatprep.mubr.bf16.mxu0 0
      %769 = vmatmul.mubr.bf16.gmra.mrb[0].mxu0 %v426
      %v770 = vpop.f32.mrb[0].mxu0
      %v771 = vadd.f32 %v566, %v770
      %v772 = vpop.f32.mrb[0].mxu0
      %v773 = vpop.f32.mrb[0].mxu0
      %v774 = vadd.f32 %v569, %v773
      %v775 = vpop.f32.mrb[0].mxu0
      %776 = vmatprep.mubr.bf16.mxu0 0
      %777 = vmatmul.mubr.bf16.gmra.mrb[0].mxu0 %v429
      %v778 = vpop.f32.mrb[0].mxu0
      %v779 = vadd.f32 %v574, %v778
      %v780 = vpop.f32.mrb[0].mxu0
      %v781 = vpop.f32.mrb[0].mxu0
      %v782 = vadd.f32 %v577, %v781
      %v783 = vpop.f32.mrb[0].mxu0
      %784 = vmatprep.mubr.bf16.mxu0 0
      %785 = vmatmul.mubr.bf16.gmra.mrb[0].mxu0 %v432
      %v786 = vpop.f32.mrb[0].mxu0
      %v787 = vadd.f32 %v582, %v786
      %v788 = vpop.f32.mrb[0].mxu0
      %v789 = vpop.f32.mrb[0].mxu0
      %v790 = vadd.f32 %v585, %v789
      %v791 = vpop.f32.mrb[0].mxu0
      %792 = vmatprep.mubr.bf16.mxu0 0
      %793 = vmatmul.mubr.bf16.gmra.mrb[0].mxu0 %v435
      %v794 = vpop.f32.mrb[0].mxu0
      %v795 = vadd.f32 %v590, %v794
      %v796 = vpop.f32.mrb[0].mxu0
      %v797 = vpop.f32.mrb[0].mxu0
      %v798 = vadd.f32 %v593, %v797
      %v799 = vpop.f32.mrb[0].mxu0
      %800 = vmatprep.mubr.bf16.mxu0 0
      %801 = vmatmul.mubr.bf16.gmra.mrb[0].mxu0 %v438
      %v802 = vpop.f32.mrb[0].mxu0
      %v803 = vadd.f32 %v598, %v802
      %v804 = vpop.f32.mrb[0].mxu0
      %v805 = vpop.f32.mrb[0].mxu0
      %v806 = vadd.f32 %v601, %v805
      %v807 = vpop.f32.mrb[0].mxu0
      %808 = vdwg.mxu0
      %v809 = vld [vmem:[%s207 + $0x10] sm:$0xf]
      %v810 = vld [vmem:[%s207 + $0x14] sm:$0xf]
      %v811 = vld [vmem:[%s207 + $0x18] sm:$0xf]
      %v812 = vld [vmem:[%s207 + $0x1c] sm:$0xf]
      %v813 = vld [vmem:[%s207 + $0x20] sm:$0xf]
      %v814 = vld [vmem:[%s207 + $0x24] sm:$0xf]
      %v815 = vld [vmem:[%s207 + $0x28] sm:$0xf]
      %v816 = vld [vmem:[%s207 + $0x2c] sm:$0xf]
      %v817 = vld [vmem:[%s207 + $0x30] sm:$0xf]
      %v818 = vld [vmem:[%s207 + $0x34] sm:$0xf]
      %v819 = vld [vmem:[%s207 + $0x38] sm:$0xf]
      %v820 = vld [vmem:[%s207 + $0x3c] sm:$0xf]
      %v821 = vld [vmem:[%s207 + $0x40] sm:$0xf]
      %v822 = vld [vmem:[%s207 + $0x44] sm:$0xf]
      %v823 = vld [vmem:[%s207 + $0x48] sm:$0xf]
      %v824 = vld [vmem:[%s207 + $0x4c] sm:$0xf]
      %v825 = vld [vmem:[%s207 + $0x50] sm:$0xf]
      %v826 = vld [vmem:[%s207 + $0x54] sm:$0xf]
      %v827 = vld [vmem:[%s207 + $0x58] sm:$0xf]
      %v828 = vld [vmem:[%s207 + $0x5c] sm:$0xf]
      %v829 = vld [vmem:[%s207 + $0x60] sm:$0xf]
      %v830 = vld [vmem:[%s207 + $0x64] sm:$0xf]
      %v831 = vld [vmem:[%s207 + $0x68] sm:$0xf]
      %v832 = vld [vmem:[%s207 + $0x6c] sm:$0xf]
      %v833 = vld [vmem:[%s207 + $0x70] sm:$0xf]
      %v834 = vld [vmem:[%s207 + $0x74] sm:$0xf]
      %v835 = vld [vmem:[%s207 + $0x78] sm:$0xf]
      %v836 = vld [vmem:[%s207 + $0x7c] sm:$0xf]
      %v837 = vld [vmem:[%s207 + $0x80] sm:$0xf]
      %v838 = vld [vmem:[%s207 + $0x84] sm:$0xf]
      %v839 = vld [vmem:[%s207 + $0x88] sm:$0xf]
      %v840 = vld [vmem:[%s207 + $0x8c] sm:$0xf]
      %s841 = scalar_lea.vmem %s1, 96
      %v842 = vld [vmem:[%s841] sm:$0xf]
      %v843 = vld [vmem:[%s841 + $0x4] sm:$0xf]
      %v844 = vld [vmem:[%s841 + $0x8] sm:$0xf]
      %v845 = vld [vmem:[%s841 + $0xc] sm:$0xf]
      %v846 = vld [vmem:[%s841 + $0x10] sm:$0xf]
      %v847 = vld [vmem:[%s841 + $0x14] sm:$0xf]
      %v848 = vld [vmem:[%s841 + $0x18] sm:$0xf]
      %v849 = vld [vmem:[%s841 + $0x1c] sm:$0xf]
      %v850 = vld [vmem:[%s841 + $0x20] sm:$0xf]
      %v851 = vld [vmem:[%s841 + $0x24] sm:$0xf]
      %v852 = vld [vmem:[%s841 + $0x28] sm:$0xf]
      %v853 = vld [vmem:[%s841 + $0x2c] sm:$0xf]
      %v886 = vunpack.c.l.b16 %v809
      %v887 = vunpack.c.l.b16 %v810
      %v888 = vunpack.c.l.b16 %v811
      %v889 = vunpack.c.l.b16 %v812
      %v890 = vunpack.c.l.b16 %v813
      %v891 = vunpack.c.l.b16 %v814
      %v892 = vunpack.c.l.b16 %v815
      %v893 = vunpack.c.l.b16 %v816
      %v894 = vunpack.c.l.b16 %v817
      %v895 = vunpack.c.l.b16 %v818
      %v896 = vunpack.c.l.b16 %v819
      %v897 = vunpack.c.l.b16 %v820
      %v898 = vunpack.c.l.b16 %v821
      %v899 = vunpack.c.l.b16 %v822
      %v900 = vunpack.c.l.b16 %v823
      %v901 = vunpack.c.l.b16 %v824
      %v902 = vunpack.c.l.b16 %v825
      %v903 = vunpack.c.l.b16 %v826
      %v904 = vunpack.c.l.b16 %v827
      %v905 = vunpack.c.l.b16 %v828
      %v906 = vunpack.c.l.b16 %v829
      %v907 = vunpack.c.l.b16 %v830
      %v908 = vunpack.c.l.b16 %v831
      %v909 = vunpack.c.l.b16 %v832
      %v910 = vunpack.c.l.b16 %v833
      %v911 = vunpack.c.l.b16 %v834
      %v912 = vunpack.c.l.b16 %v835
      %v913 = vunpack.c.l.b16 %v836
      %v914 = vunpack.c.l.b16 %v837
      %v915 = vunpack.c.l.b16 %v838
      %v916 = vunpack.c.l.b16 %v839
      %v917 = vunpack.c.l.b16 %v840
      %v918 = vpack.c.b16 %v887, %v886
      %v919 = vpack.c.b16 %v889, %v888
      %v920 = vpack.c.b16 %v891, %v890
      %v921 = vpack.c.b16 %v893, %v892
      %v922 = vpack.c.b16 %v895, %v894
      %v923 = vpack.c.b16 %v897, %v896
      %v924 = vpack.c.b16 %v899, %v898
      %v925 = vpack.c.b16 %v901, %v900
      %v926 = vpack.c.b16 %v903, %v902
      %v927 = vpack.c.b16 %v905, %v904
      %v928 = vpack.c.b16 %v907, %v906
      %v929 = vpack.c.b16 %v909, %v908
      %v930 = vpack.c.b16 %v911, %v910
      %v931 = vpack.c.b16 %v913, %v912
      %v932 = vpack.c.b16 %v915, %v914
      %v933 = vpack.c.b16 %v917, %v916
      %v946 = vunpack.c.l.b16 %v842
      %v947 = vunpack.c.l.b16 %v843
      %v948 = vunpack.c.l.b16 %v844
      %v949 = vunpack.c.l.b16 %v845
      %v950 = vunpack.c.l.b16 %v846
      %v951 = vunpack.c.l.b16 %v847
      %v952 = vunpack.c.l.b16 %v848
      %v953 = vunpack.c.l.b16 %v849
      %v954 = vunpack.c.l.b16 %v850
      %v955 = vunpack.c.l.b16 %v851
      %v956 = vunpack.c.l.b16 %v852
      %v957 = vunpack.c.l.b16 %v853
      %v958 = vpack.c.b16 %v947, %v946
      %v959 = vpack.c.b16 %v949, %v948
      %v960 = vpack.c.b16 %v951, %v950
      %v961 = vpack.c.b16 %v953, %v952
      %v962 = vpack.c.b16 %v955, %v954
      %v963 = vpack.c.b16 %v957, %v956
      %v971 = vsel %vm394, %v918, 0
      %v974 = vsel %vm394, %v919, 0
      %v977 = vsel %vm394, %v920, 0
      %v980 = vsel %vm394, %v921, 0
      %v983 = vsel %vm394, %v922, 0
      %v986 = vsel %vm394, %v923, 0
      %v989 = vsel %vm394, %v924, 0
      %v992 = vsel %vm394, %v925, 0
      %v995 = vsel %vm394, %v926, 0
      %v998 = vsel %vm394, %v927, 0
      %v1001 = vsel %vm394, %v928, 0
      %v1004 = vsel %vm394, %v929, 0
      %v1007 = vsel %vm394, %v930, 0
      %v1010 = vsel %vm394, %v931, 0
      %v1013 = vsel %vm394, %v932, 0
      %v1016 = vsel %vm394, %v933, 0
      %1018 = vmatprep.subr.bf16.mxu0 0
      %1019 = vmatpush1.bf16.msra.mxu0 %v958
      %1020 = vmatprep.subr.bf16.mxu0 0
      %1021 = vmatpush1.bf16.msra.mxu0 %v959
      %1022 = vmatprep.subr.bf16.mxu0 0
      %1023 = vmatpush1.bf16.msra.mxu0 %v960
      %1024 = vmatprep.subr.bf16.mxu0 0
      %1025 = vmatpush1.bf16.msra.mxu0 %v961
      %1026 = vmatprep.subr.bf16.mxu0 0
      %1027 = vmatpush1.bf16.msra.mxu0 %v962
      %1028 = vmatprep.subr.bf16.mxu0 0
      %1029 = vmatpush1.bf16.msra.mxu0 %v963
      %1030 = vmatprep.subr.bf16.mxu0 0
      %1031 = vmatpush1.bf16.msra.mxu0 0
      %1032 = vmatprep.subr.bf16.mxu0 0
      %1033 = vmatpush1.bf16.msra.mxu0 0
      %1034 = vmatprep.subr.bf16.mxu0 0
      %1035 = vmatpush1.bf16.msra.mxu0 0
      %1036 = vmatprep.subr.bf16.mxu0 0
      %1037 = vmatpush1.bf16.msra.mxu0 0
      %1038 = vmatprep.subr.bf16.mxu0 0
      %1039 = vmatpush1.bf16.msra.mxu0 0
      %1040 = vmatprep.subr.bf16.mxu0 0
      %1041 = vmatpush1.bf16.msra.mxu0 0
      %1042 = vmatprep.subr.bf16.mxu0 0
      %1043 = vmatpush1.bf16.msra.mxu0 0
      %1044 = vmatprep.subr.bf16.mxu0 0
      %1045 = vmatpush1.bf16.msra.mxu0 0
      %1046 = vmatprep.subr.bf16.mxu0 0
      %1047 = vmatpush1.bf16.msra.mxu0 0
      %1048 = vmatprep.subr.bf16.mxu0 0
      %1049 = vmatpush1.bf16.msra.mxu0 0
      %1050 = vmatprep.mubr.bf16.mxu0 0
      %1051 = vmatmul.mubr.bf16.gmra.mrb[0].mxu0 %v971
      %v1052 = vpop.f32.mrb[0].mxu0
      %v1053 = vadd.f32 0.0, %v1052
      %v1054 = vpop.f32.mrb[0].mxu0
      %v1055 = vpop.f32.mrb[0].mxu0
      %v1056 = vadd.f32 0.0, %v1055
      %v1057 = vpop.f32.mrb[0].mxu0
      %1058 = vmatprep.mubr.bf16.mxu0 0
      %1059 = vmatmul.mubr.bf16.gmra.mrb[0].mxu0 %v974
      %v1060 = vpop.f32.mrb[0].mxu0
      %v1061 = vadd.f32 0.0, %v1060
      %v1062 = vpop.f32.mrb[0].mxu0
      %v1063 = vpop.f32.mrb[0].mxu0
      %v1064 = vadd.f32 0.0, %v1063
      %v1065 = vpop.f32.mrb[0].mxu0
      %1066 = vmatprep.mubr.bf16.mxu0 0
      %1067 = vmatmul.mubr.bf16.gmra.mrb[0].mxu0 %v977
      %v1068 = vpop.f32.mrb[0].mxu0
      %v1069 = vadd.f32 0.0, %v1068
      %v1070 = vpop.f32.mrb[0].mxu0
      %v1071 = vpop.f32.mrb[0].mxu0
      %v1072 = vadd.f32 0.0, %v1071
      %v1073 = vpop.f32.mrb[0].mxu0
      %1074 = vmatprep.mubr.bf16.mxu0 0
      %1075 = vmatmul.mubr.bf16.gmra.mrb[0].mxu0 %v980
      %v1076 = vpop.f32.mrb[0].mxu0
      %v1077 = vadd.f32 0.0, %v1076
      %v1078 = vpop.f32.mrb[0].mxu0
      %v1079 = vpop.f32.mrb[0].mxu0
      %v1080 = vadd.f32 0.0, %v1079
      %v1081 = vpop.f32.mrb[0].mxu0
      %1082 = vmatprep.mubr.bf16.mxu0 0
      %1083 = vmatmul.mubr.bf16.gmra.mrb[0].mxu0 %v983
      %v1084 = vpop.f32.mrb[0].mxu0
      %v1085 = vadd.f32 0.0, %v1084
      %v1086 = vpop.f32.mrb[0].mxu0
      %v1087 = vpop.f32.mrb[0].mxu0
      %v1088 = vadd.f32 0.0, %v1087
      %v1089 = vpop.f32.mrb[0].mxu0
      %1090 = vmatprep.mubr.bf16.mxu0 0
      %1091 = vmatmul.mubr.bf16.gmra.mrb[0].mxu0 %v986
      %v1092 = vpop.f32.mrb[0].mxu0
      %v1093 = vadd.f32 0.0, %v1092
      %v1094 = vpop.f32.mrb[0].mxu0
      %v1095 = vpop.f32.mrb[0].mxu0
      %v1096 = vadd.f32 0.0, %v1095
      %v1097 = vpop.f32.mrb[0].mxu0
      %1098 = vmatprep.mubr.bf16.mxu0 0
      %1099 = vmatmul.mubr.bf16.gmra.mrb[0].mxu0 %v989
      %v1100 = vpop.f32.mrb[0].mxu0
      %v1101 = vadd.f32 0.0, %v1100
      %v1102 = vpop.f32.mrb[0].mxu0
      %v1103 = vpop.f32.mrb[0].mxu0
      %v1104 = vadd.f32 0.0, %v1103
      %v1105 = vpop.f32.mrb[0].mxu0
      %1106 = vmatprep.mubr.bf16.mxu0 0
      %1107 = vmatmul.mubr.bf16.gmra.mrb[0].mxu0 %v992
      %v1108 = vpop.f32.mrb[0].mxu0
      %v1109 = vadd.f32 0.0, %v1108
      %v1110 = vpop.f32.mrb[0].mxu0
      %v1111 = vpop.f32.mrb[0].mxu0
      %v1112 = vadd.f32 0.0, %v1111
      %v1113 = vpop.f32.mrb[0].mxu0
      %1114 = vmatprep.mubr.bf16.mxu0 0
      %1115 = vmatmul.mubr.bf16.gmra.mrb[0].mxu0 %v995
      %v1116 = vpop.f32.mrb[0].mxu0
      %v1117 = vadd.f32 0.0, %v1116
      %v1118 = vpop.f32.mrb[0].mxu0
      %v1119 = vpop.f32.mrb[0].mxu0
      %v1120 = vadd.f32 0.0, %v1119
      %v1121 = vpop.f32.mrb[0].mxu0
      %1122 = vmatprep.mubr.bf16.mxu0 0
      %1123 = vmatmul.mubr.bf16.gmra.mrb[0].mxu0 %v998
      %v1124 = vpop.f32.mrb[0].mxu0
      %v1125 = vadd.f32 0.0, %v1124
      %v1126 = vpop.f32.mrb[0].mxu0
      %v1127 = vpop.f32.mrb[0].mxu0
      %v1128 = vadd.f32 0.0, %v1127
      %v1129 = vpop.f32.mrb[0].mxu0
      %1130 = vmatprep.mubr.bf16.mxu0 0
      %1131 = vmatmul.mubr.bf16.gmra.mrb[0].mxu0 %v1001
      %v1132 = vpop.f32.mrb[0].mxu0
      %v1133 = vadd.f32 0.0, %v1132
      %v1134 = vpop.f32.mrb[0].mxu0
      %v1135 = vpop.f32.mrb[0].mxu0
      %v1136 = vadd.f32 0.0, %v1135
      %v1137 = vpop.f32.mrb[0].mxu0
      %1138 = vmatprep.mubr.bf16.mxu0 0
      %1139 = vmatmul.mubr.bf16.gmra.mrb[0].mxu0 %v1004
      %v1140 = vpop.f32.mrb[0].mxu0
      %v1141 = vadd.f32 0.0, %v1140
      %v1142 = vpop.f32.mrb[0].mxu0
      %v1143 = vpop.f32.mrb[0].mxu0
      %v1144 = vadd.f32 0.0, %v1143
      %v1145 = vpop.f32.mrb[0].mxu0
      %1146 = vmatprep.mubr.bf16.mxu0 0
      %1147 = vmatmul.mubr.bf16.gmra.mrb[0].mxu0 %v1007
      %v1148 = vpop.f32.mrb[0].mxu0
      %v1149 = vadd.f32 0.0, %v1148
      %v1150 = vpop.f32.mrb[0].mxu0
      %v1151 = vpop.f32.mrb[0].mxu0
      %v1152 = vadd.f32 0.0, %v1151
      %v1153 = vpop.f32.mrb[0].mxu0
      %1154 = vmatprep.mubr.bf16.mxu0 0
      %1155 = vmatmul.mubr.bf16.gmra.mrb[0].mxu0 %v1010
      %v1156 = vpop.f32.mrb[0].mxu0
      %v1157 = vadd.f32 0.0, %v1156
      %v1158 = vpop.f32.mrb[0].mxu0
      %v1159 = vpop.f32.mrb[0].mxu0
      %v1160 = vadd.f32 0.0, %v1159
      %v1161 = vpop.f32.mrb[0].mxu0
      %1162 = vmatprep.mubr.bf16.mxu0 0
      %1163 = vmatmul.mubr.bf16.gmra.mrb[0].mxu0 %v1013
      %v1164 = vpop.f32.mrb[0].mxu0
      %v1165 = vadd.f32 0.0, %v1164
      %v1166 = vpop.f32.mrb[0].mxu0
      %v1167 = vpop.f32.mrb[0].mxu0
      %v1168 = vadd.f32 0.0, %v1167
      %v1169 = vpop.f32.mrb[0].mxu0
      %1170 = vmatprep.mubr.bf16.mxu0 0
      %1171 = vmatmul.mubr.bf16.gmra.mrb[0].mxu0 %v1016
      %v1172 = vpop.f32.mrb[0].mxu0
      %v1173 = vadd.f32 0.0, %v1172
      %v1174 = vpop.f32.mrb[0].mxu0
      %v1175 = vpop.f32.mrb[0].mxu0
      %v1176 = vadd.f32 0.0, %v1175
      %v1177 = vpop.f32.mrb[0].mxu0
      %1178 = vdwg.mxu0
      %v1179 = vadd.f32 %v683, %v1053
      %v1180 = vadd.f32 %v686, %v1056
      %v1181 = vadd.f32 %v691, %v1061
      %v1182 = vadd.f32 %v694, %v1064
      %v1183 = vadd.f32 %v699, %v1069
      %v1184 = vadd.f32 %v702, %v1072
      %v1185 = vadd.f32 %v707, %v1077
      %v1186 = vadd.f32 %v710, %v1080
      %v1187 = vadd.f32 %v715, %v1085
      %v1188 = vadd.f32 %v718, %v1088
      %v1189 = vadd.f32 %v723, %v1093
      %v1190 = vadd.f32 %v726, %v1096
      %v1191 = vadd.f32 %v731, %v1101
      %v1192 = vadd.f32 %v734, %v1104
      %v1193 = vadd.f32 %v739, %v1109
      %v1194 = vadd.f32 %v742, %v1112
      %v1195 = vadd.f32 %v747, %v1117
      %v1196 = vadd.f32 %v750, %v1120
      %v1197 = vadd.f32 %v755, %v1125
      %v1198 = vadd.f32 %v758, %v1128
      %v1199 = vadd.f32 %v763, %v1133
      %v1200 = vadd.f32 %v766, %v1136
      %v1201 = vadd.f32 %v771, %v1141
      %v1202 = vadd.f32 %v774, %v1144
      %v1203 = vadd.f32 %v779, %v1149
      %v1204 = vadd.f32 %v782, %v1152
      %v1205 = vadd.f32 %v787, %v1157
      %v1206 = vadd.f32 %v790, %v1160
      %v1207 = vadd.f32 %v795, %v1165
      %v1208 = vadd.f32 %v798, %v1168
      %v1209 = vadd.f32 %v803, %v1173
      %v1210 = vadd.f32 %v806, %v1176
      %v1211 = vld [vmem:[%s2] sm:$0x1]
      %v1213 = vlaneseq
      %v1214 = vshrl.u32 %v1213, 7
      %v1215 = vsub.s32 0, %v1214
      %v1216 = vrot.slane %v1211, %v1215
      %v1218 = vadd.f32 %v1179, %v1216
      %v1219 = vadd.f32 %v1180, %v1216
      %v1220 = vadd.f32 %v1181, %v1216
      %v1221 = vadd.f32 %v1182, %v1216
      %v1222 = vadd.f32 %v1183, %v1216
      %v1223 = vadd.f32 %v1184, %v1216
      %v1224 = vadd.f32 %v1185, %v1216
      %v1225 = vadd.f32 %v1186, %v1216
      %v1226 = vadd.f32 %v1187, %v1216
      %v1227 = vadd.f32 %v1188, %v1216
      %v1228 = vadd.f32 %v1189, %v1216
      %v1229 = vadd.f32 %v1190, %v1216
      %v1230 = vadd.f32 %v1191, %v1216
      %v1231 = vadd.f32 %v1192, %v1216
      %v1232 = vadd.f32 %v1193, %v1216
      %v1233 = vadd.f32 %v1194, %v1216
      %v1234 = vadd.f32 %v1195, %v1216
      %v1235 = vadd.f32 %v1196, %v1216
      %v1236 = vadd.f32 %v1197, %v1216
      %v1237 = vadd.f32 %v1198, %v1216
      %v1238 = vadd.f32 %v1199, %v1216
      %v1239 = vadd.f32 %v1200, %v1216
      %v1240 = vadd.f32 %v1201, %v1216
      %v1241 = vadd.f32 %v1202, %v1216
      %v1242 = vadd.f32 %v1203, %v1216
      %v1243 = vadd.f32 %v1204, %v1216
      %v1244 = vadd.f32 %v1205, %v1216
      %v1245 = vadd.f32 %v1206, %v1216
      %v1246 = vadd.f32 %v1207, %v1216
      %v1247 = vadd.f32 %v1208, %v1216
      %v1248 = vadd.f32 %v1209, %v1216
      %v1249 = vadd.f32 %v1210, %v1216
      %v1250 = vld [vmem:[%s212] sm:$0xff]
      %v1251 = vld [vmem:[%s212 + $0x8] sm:$0xff]
      %v1252 = vld [vmem:[%s212 + $0x10] sm:$0xff]
      %v1253 = vld [vmem:[%s212 + $0x18] sm:$0xff]
      %v1254 = vld [vmem:[%s212 + $0x20] sm:$0xff]
      %v1255 = vld [vmem:[%s212 + $0x28] sm:$0xff]
      %v1256 = vld [vmem:[%s212 + $0x30] sm:$0xff]
      %v1257 = vld [vmem:[%s212 + $0x38] sm:$0xff]
      %v1258 = vld [vmem:[%s212 + $0x40] sm:$0xff]
      %v1259 = vld [vmem:[%s212 + $0x48] sm:$0xff]
      %v1260 = vld [vmem:[%s212 + $0x50] sm:$0xff]
      %v1261 = vld [vmem:[%s212 + $0x58] sm:$0xff]
      %v1262 = vld [vmem:[%s212 + $0x60] sm:$0xff]
      %v1263 = vld [vmem:[%s212 + $0x68] sm:$0xff]
      %v1264 = vld [vmem:[%s212 + $0x70] sm:$0xff]
      %v1265 = vld [vmem:[%s212 + $0x78] sm:$0xff]
      %v1266 = vld [vmem:[%s212 + $0x80] sm:$0xff]
      %v1267 = vld [vmem:[%s212 + $0x88] sm:$0xff]
      %v1268 = vld [vmem:[%s212 + $0x90] sm:$0xff]
      %v1269 = vld [vmem:[%s212 + $0x98] sm:$0xff]
      %v1270 = vld [vmem:[%s212 + $0xa0] sm:$0xff]
      %v1271 = vld [vmem:[%s212 + $0xa8] sm:$0xff]
      %v1272 = vld [vmem:[%s212 + $0xb0] sm:$0xff]
      %v1273 = vld [vmem:[%s212 + $0xb8] sm:$0xff]
      %v1274 = vld [vmem:[%s212 + $0xc0] sm:$0xff]
      %v1275 = vld [vmem:[%s212 + $0xc8] sm:$0xff]
      %v1276 = vld [vmem:[%s212 + $0xd0] sm:$0xff]
      %v1277 = vld [vmem:[%s212 + $0xd8] sm:$0xff]
      %v1278 = vld [vmem:[%s212 + $0xe0] sm:$0xff]
      %v1279 = vld [vmem:[%s212 + $0xe8] sm:$0xff]
      %v1280 = vld [vmem:[%s212 + $0xf0] sm:$0xff]
      %v1281 = vld [vmem:[%s212 + $0xf8] sm:$0xff]
      %v1282 = vadd.f32 %v1218, %v1250
      %v1283 = vadd.f32 %v1219, %v1251
      %v1284 = vadd.f32 %v1220, %v1252
      %v1285 = vadd.f32 %v1221, %v1253
      %v1286 = vadd.f32 %v1222, %v1254
      %v1287 = vadd.f32 %v1223, %v1255
      %v1288 = vadd.f32 %v1224, %v1256
      %v1289 = vadd.f32 %v1225, %v1257
      %v1290 = vadd.f32 %v1226, %v1258
      %v1291 = vadd.f32 %v1227, %v1259
      %v1292 = vadd.f32 %v1228, %v1260
      %v1293 = vadd.f32 %v1229, %v1261
      %v1294 = vadd.f32 %v1230, %v1262
      %v1295 = vadd.f32 %v1231, %v1263
      %v1296 = vadd.f32 %v1232, %v1264
      %v1297 = vadd.f32 %v1233, %v1265
      %v1298 = vadd.f32 %v1234, %v1266
      %v1299 = vadd.f32 %v1235, %v1267
      %v1300 = vadd.f32 %v1236, %v1268
      %v1301 = vadd.f32 %v1237, %v1269
      %v1302 = vadd.f32 %v1238, %v1270
      %v1303 = vadd.f32 %v1239, %v1271
      %v1304 = vadd.f32 %v1240, %v1272
      %v1305 = vadd.f32 %v1241, %v1273
      %v1306 = vadd.f32 %v1242, %v1274
      %v1307 = vadd.f32 %v1243, %v1275
      %v1308 = vadd.f32 %v1244, %v1276
      %v1309 = vadd.f32 %v1245, %v1277
      %v1310 = vadd.f32 %v1246, %v1278
      %v1311 = vadd.f32 %v1247, %v1279
      %v1312 = vadd.f32 %v1248, %v1280
      %v1313 = vadd.f32 %v1249, %v1281
      %v1314 = vmax.f32 %v1282, 0.0
      %v1315 = vmax.f32 %v1283, 0.0
      %v1316 = vmax.f32 %v1284, 0.0
      %v1317 = vmax.f32 %v1285, 0.0
      %v1318 = vmax.f32 %v1286, 0.0
      %v1319 = vmax.f32 %v1287, 0.0
      %v1320 = vmax.f32 %v1288, 0.0
      %v1321 = vmax.f32 %v1289, 0.0
      %v1322 = vmax.f32 %v1290, 0.0
      %v1323 = vmax.f32 %v1291, 0.0
      %v1324 = vmax.f32 %v1292, 0.0
      %v1325 = vmax.f32 %v1293, 0.0
      %v1326 = vmax.f32 %v1294, 0.0
      %v1327 = vmax.f32 %v1295, 0.0
      %v1328 = vmax.f32 %v1296, 0.0
      %v1329 = vmax.f32 %v1297, 0.0
      %v1330 = vmax.f32 %v1298, 0.0
      %v1331 = vmax.f32 %v1299, 0.0
      %v1332 = vmax.f32 %v1300, 0.0
      %v1333 = vmax.f32 %v1301, 0.0
      %v1334 = vmax.f32 %v1302, 0.0
      %v1335 = vmax.f32 %v1303, 0.0
      %v1336 = vmax.f32 %v1304, 0.0
      %v1337 = vmax.f32 %v1305, 0.0
      %v1338 = vmax.f32 %v1306, 0.0
      %v1339 = vmax.f32 %v1307, 0.0
      %v1340 = vmax.f32 %v1308, 0.0
      %v1341 = vmax.f32 %v1309, 0.0
      %v1342 = vmax.f32 %v1310, 0.0
      %v1343 = vmax.f32 %v1311, 0.0
      %v1344 = vmax.f32 %v1312, 0.0
      %v1345 = vmax.f32 %v1313, 0.0
      %vm1346 = vcmask 261120
      %1347 = vst.msk [vmem:[%s217] sm:$0xff] %vm1346, %v1314
      %1348 = vst.msk [vmem:[%s217 + $0x8] sm:$0xff] %vm1346, %v1315
      %1349 = vst.msk [vmem:[%s217 + $0x10] sm:$0xff] %vm1346, %v1316
      %1350 = vst.msk [vmem:[%s217 + $0x18] sm:$0xff] %vm1346, %v1317
      %1351 = vst.msk [vmem:[%s217 + $0x20] sm:$0xff] %vm1346, %v1318
      %1352 = vst.msk [vmem:[%s217 + $0x28] sm:$0xff] %vm1346, %v1319
      %1353 = vst.msk [vmem:[%s217 + $0x30] sm:$0xff] %vm1346, %v1320
      %1354 = vst.msk [vmem:[%s217 + $0x38] sm:$0xff] %vm1346, %v1321
      %1355 = vst.msk [vmem:[%s217 + $0x40] sm:$0xff] %vm1346, %v1322
      %1356 = vst.msk [vmem:[%s217 + $0x48] sm:$0xff] %vm1346, %v1323
      %1357 = vst.msk [vmem:[%s217 + $0x50] sm:$0xff] %vm1346, %v1324
      %1358 = vst.msk [vmem:[%s217 + $0x58] sm:$0xff] %vm1346, %v1325
      %1359 = vst.msk [vmem:[%s217 + $0x60] sm:$0xff] %vm1346, %v1326
      %1360 = vst.msk [vmem:[%s217 + $0x68] sm:$0xff] %vm1346, %v1327
      %1361 = vst.msk [vmem:[%s217 + $0x70] sm:$0xff] %vm1346, %v1328
      %1362 = vst.msk [vmem:[%s217 + $0x78] sm:$0xff] %vm1346, %v1329
      %1363 = vst.msk [vmem:[%s217 + $0x80] sm:$0xff] %vm1346, %v1330
      %1364 = vst.msk [vmem:[%s217 + $0x88] sm:$0xff] %vm1346, %v1331
      %1365 = vst.msk [vmem:[%s217 + $0x90] sm:$0xff] %vm1346, %v1332
      %1366 = vst.msk [vmem:[%s217 + $0x98] sm:$0xff] %vm1346, %v1333
      %1367 = vst.msk [vmem:[%s217 + $0xa0] sm:$0xff] %vm1346, %v1334
      %1368 = vst.msk [vmem:[%s217 + $0xa8] sm:$0xff] %vm1346, %v1335
      %1369 = vst.msk [vmem:[%s217 + $0xb0] sm:$0xff] %vm1346, %v1336
      %1370 = vst.msk [vmem:[%s217 + $0xb8] sm:$0xff] %vm1346, %v1337
      %1371 = vst.msk [vmem:[%s217 + $0xc0] sm:$0xff] %vm1346, %v1338
      %1372 = vst.msk [vmem:[%s217 + $0xc8] sm:$0xff] %vm1346, %v1339
      %1373 = vst.msk [vmem:[%s217 + $0xd0] sm:$0xff] %vm1346, %v1340
      %1374 = vst.msk [vmem:[%s217 + $0xd8] sm:$0xff] %vm1346, %v1341
      %1375 = vst.msk [vmem:[%s217 + $0xe0] sm:$0xff] %vm1346, %v1342
      %1376 = vst.msk [vmem:[%s217 + $0xe8] sm:$0xff] %vm1346, %v1343
      %1377 = vst.msk [vmem:[%s217 + $0xf0] sm:$0xff] %vm1346, %v1344
      %1378 = vst.msk [vmem:[%s217 + $0xf8] sm:$0xff] %vm1346, %v1345
      %p1379 = scmp.lt.s32.totalorder %s15, 1
      %s1380 = scalar_select %p1379, %s15, 1
      %s1381 = smul.addr %s1380, 32
      %s1382 = smul.addr %s1381, 8
      %s1383 = scalar_lea.vmem %s4, %s1382
      // Predicated region
      $region37: #{_lambda_.8} parent=35 // pred_check
        %p1384 = pneg %p127
      $region38: #{_lambda_.8} parent=35 // pred_check_branch
        %1386 = sbr.rel (%p1384) target = $region40
      $region39: #{_lambda_.8} parent=35 // pred_region
        _
      $region40: #{_lambda_.8} parent=35 // pred_fallthru
        _
    $region36: #{_lambda_.8} parent=5 // pred_fallthru
      _
    %p1387 = scmp.le.s32.totalorder 2, %s10
    // Predicated region
    $region41: #{_lambda_.8} parent=5 // pred_check
      %p1388 = pneg %p1387
    $region42: #{_lambda_.8} parent=5 // pred_check_branch
      %1390 = sbr.rel (%p1388) target = $region44
    $region43: #{_lambda_.8} parent=5 // pred_region
      %s1391 = ssub.s32 %s10, 2
      // Predicated region
      $region45: #{_lambda_.8} parent=43 // pred_check
        %p1392 = pneg %p133
      $region46: #{_lambda_.8} parent=43 // pred_check_branch
        %1394 = sbr.rel (%p1392) target = $region48
      $region47: #{_lambda_.8} parent=43 // pred_region
        %p1395 = scmp.lt.s32.totalorder %s16, 1
        %s1396 = scalar_select %p1395, %s16, 1
        %s1397 = smul.addr %s1396, 32
        %s1398 = smul.addr %s1397, 8
        %s1399 = scalar_lea.vmem %s4, %s1398
      $region48: #{_lambda_.8} parent=43 // pred_fallthru
        _
    $region44: #{_lambda_.8} parent=5 // pred_fallthru
      _
  $region6: #{_lambda_.8} parent=0 // loop_footer
    %s14 = sadd.s32 1, %s10
  $region7: #{_lambda_.8} parent=0 // loop_footer_branch
    %9 = sbr.rel target = $region3
  $region8: #{_lambda_.8} parent=0 // loop_exit
    _

// kernel: _lambda_.11
$region0: #{_lambda_.11}
  #allocation0 [shape = 'u32[]', space=smem, size = 0x4, offset = 0x4, fixed_abs, tag = 'smem constant byte address 0x4 - core index']
  #allocation1 [shape = 'u32[144,128]{1,0:T(1,128)}', space=vmem, size = 0x12000, scoped, tag = 'internal scratch']
  #allocation2 [shape = 'f32[16,128]{1,0:T(8,128)}', space=vmem, size = 0x2000, scoped, tag = 'scratch operand']
  %s0 = inlined_call_operand.vmem [shape: bf16[16,128], index: 0, kind: input, shape index: {}]
  %s1 = inlined_call_operand.vmem [shape: bf16[128,128], index: 1, kind: input, shape index: {}]
  %s2 = inlined_call_operand.vmem [shape: f32[1,128], index: 2, kind: input, shape index: {}]
  %s3 = inlined_call_operand.vmem [shape: f32[16,128], index: 3, kind: output, shape index: {}]
  %s4 = sld [smem:[#allocation0]]
  $region30: #{_lambda_.11} parent=0
    _
  %s6 = ssub.s32 1, %s4
  %s7 = scalar_select 0, %s6, %s4
  // Predicated region
  $region2: #{_lambda_.11} parent=0 // pred_check
    _
  $region3: #{_lambda_.11} parent=0 // pred_check_branch
    %9 = sbr.rel (0) target = $region5
  $region4: #{_lambda_.11} parent=0 // pred_region
    _
  $region5: #{_lambda_.11} parent=0 // pred_fallthru
    _
  // Predicated region
  $region6: #{_lambda_.11} parent=0 // pred_check
    _
  $region7: #{_lambda_.11} parent=0 // pred_check_branch
    %11 = sbr.rel (0) target = $region9
  $region8: #{_lambda_.11} parent=0 // pred_region
    _
  $region9: #{_lambda_.11} parent=0 // pred_fallthru
    _
  // Predicated region
  $region10: #{_lambda_.11} parent=0 // pred_check
    _
  $region11: #{_lambda_.11} parent=0 // pred_check_branch
    %13 = sbr.rel (0) target = $region13
  $region12: #{_lambda_.11} parent=0 // pred_region
    _
  $region13: #{_lambda_.11} parent=0 // pred_fallthru
    _
  %p15 = scmp.eq.s32.totalorder 0, 0
  // Predicated region
  $region14: #{_lambda_.11} parent=0 // pred_check
    %p16 = pneg %p15
  $region15: #{_lambda_.11} parent=0 // pred_check_branch
    %18 = sbr.rel (%p16) target = $region17
  $region16: #{_lambda_.11} parent=0 // pred_region
    %19 = vst [vmem:[#allocation2] sm:$0xff] 0.0
    %20 = vst [vmem:[#allocation2 + $0x8] sm:$0xff] 0.0
  $region17: #{_lambda_.11} parent=0 // pred_fallthru
    _
  %v21 = vld [vmem:[#allocation2] sm:$0xff]
  %v22 = vld [vmem:[#allocation2 + $0x8] sm:$0xff]
  %v23 = vld [vmem:[%s0] sm:$0xf]
  %v24 = vld [vmem:[%s0 + $0x4] sm:$0xf]
  %v25 = vld [vmem:[%s1] sm:$0xf]
  %v26 = vld [vmem:[%s1 + $0x4] sm:$0xf]
  %v27 = vld [vmem:[%s1 + $0x8] sm:$0xf]
  %v28 = vld [vmem:[%s1 + $0xc] sm:$0xf]
  %v29 = vld [vmem:[%s1 + $0x10] sm:$0xf]
  %v30 = vld [vmem:[%s1 + $0x14] sm:$0xf]
  %v31 = vld [vmem:[%s1 + $0x18] sm:$0xf]
  %v32 = vld [vmem:[%s1 + $0x1c] sm:$0xf]
  %v33 = vld [vmem:[%s1 + $0x20] sm:$0xf]
  %v34 = vld [vmem:[%s1 + $0x24] sm:$0xf]
  %v35 = vld [vmem:[%s1 + $0x28] sm:$0xf]
  %v36 = vld [vmem:[%s1 + $0x2c] sm:$0xf]
  %v37 = vld [vmem:[%s1 + $0x30] sm:$0xf]
  %v38 = vld [vmem:[%s1 + $0x34] sm:$0xf]
  %v39 = vld [vmem:[%s1 + $0x38] sm:$0xf]
  %v40 = vld [vmem:[%s1 + $0x3c] sm:$0xf]
  %v43 = vunpack.c.l.b16 %v23
  %v44 = vunpack.c.l.b16 %v24
  %v45 = vpack.c.b16 %v44, %v43
  %v63 = vunpack.c.l.b16 %v25
  %v64 = vunpack.c.l.b16 %v26
  %v65 = vunpack.c.l.b16 %v27
  %v66 = vunpack.c.l.b16 %v28
  %v67 = vunpack.c.l.b16 %v29
  %v68 = vunpack.c.l.b16 %v30
  %v69 = vunpack.c.l.b16 %v31
  %v70 = vunpack.c.l.b16 %v32
  %v71 = vunpack.c.l.b16 %v33
  %v72 = vunpack.c.l.b16 %v34
  %v73 = vunpack.c.l.b16 %v35
  %v74 = vunpack.c.l.b16 %v36
  %v75 = vunpack.c.l.b16 %v37
  %v76 = vunpack.c.l.b16 %v38
  %v77 = vunpack.c.l.b16 %v39
  %v78 = vunpack.c.l.b16 %v40
  %v79 = vpack.c.b16 %v64, %v63
  %v80 = vpack.c.b16 %v66, %v65
  %v81 = vpack.c.b16 %v68, %v67
  %v82 = vpack.c.b16 %v70, %v69
  %v83 = vpack.c.b16 %v72, %v71
  %v84 = vpack.c.b16 %v74, %v73
  %v85 = vpack.c.b16 %v76, %v75
  %v86 = vpack.c.b16 %v78, %v77
  %95 = vmatprep.subr.bf16.mxu0 0
  %96 = vmatpush1.bf16.msra.mxu0 %v79
  %97 = vmatprep.subr.bf16.mxu0 0
  %98 = vmatpush1.bf16.msra.mxu0 %v80
  %99 = vmatprep.subr.bf16.mxu0 0
  %100 = vmatpush1.bf16.msra.mxu0 %v81
  %101 = vmatprep.subr.bf16.mxu0 0
  %102 = vmatpush1.bf16.msra.mxu0 %v82
  %103 = vmatprep.subr.bf16.mxu0 0
  %104 = vmatpush1.bf16.msra.mxu0 %v83
  %105 = vmatprep.subr.bf16.mxu0 0
  %106 = vmatpush1.bf16.msra.mxu0 %v84
  %107 = vmatprep.subr.bf16.mxu0 0
  %108 = vmatpush1.bf16.msra.mxu0 %v85
  %109 = vmatprep.subr.bf16.mxu0 0
  %110 = vmatpush1.bf16.msra.mxu0 %v86
  %111 = vmatprep.subr.bf16.mxu0 0
  %112 = vmatpush1.bf16.msra.mxu0 0
  %113 = vmatprep.subr.bf16.mxu0 0
  %114 = vmatpush1.bf16.msra.mxu0 0
  %115 = vmatprep.subr.bf16.mxu0 0
  %116 = vmatpush1.bf16.msra.mxu0 0
  %117 = vmatprep.subr.bf16.mxu0 0
  %118 = vmatpush1.bf16.msra.mxu0 0
  %119 = vmatprep.subr.bf16.mxu0 0
  %120 = vmatpush1.bf16.msra.mxu0 0
  %121 = vmatprep.subr.bf16.mxu0 0
  %122 = vmatpush1.bf16.msra.mxu0 0
  %123 = vmatprep.subr.bf16.mxu0 0
  %124 = vmatpush1.bf16.msra.mxu0 0
  %125 = vmatprep.subr.bf16.mxu0 0
  %126 = vmatpush1.bf16.msra.mxu0 0
  %127 = vmatprep.mubr.bf16.mxu0 0
  %128 = vmatmul.mubr.bf16.gmra.mrb[0].mxu0 %v45
  %v129 = vpop.f32.mrb[0].mxu0
  %v130 = vadd.f32 0.0, %v129
  %v131 = vpop.f32.mrb[0].mxu0
  %v132 = vpop.f32.mrb[0].mxu0
  %v133 = vadd.f32 0.0, %v132
  %v134 = vpop.f32.mrb[0].mxu0
  %135 = vdwg.mxu0
  %v136 = vadd.f32 %v21, %v130
  %v137 = vadd.f32 %v22, %v133
  %138 = vst [vmem:[#allocation2] sm:$0xff] %v136
  %139 = vst [vmem:[#allocation2 + $0x8] sm:$0xff] %v137
  // Predicated region
  $region18: #{_lambda_.11} parent=0 // pred_check
    %p140 = pneg %p15
  $region19: #{_lambda_.11} parent=0 // pred_check_branch
    %142 = sbr.rel (%p140) target = $region21
  $region20: #{_lambda_.11} parent=0 // pred_region
    %v143 = vld [vmem:[#allocation2] sm:$0xff]
    %v144 = vld [vmem:[#allocation2 + $0x8] sm:$0xff]
    %v145 = vld [vmem:[%s2] sm:$0x1]
    %v147 = vlaneseq
    %v148 = vshrl.u32 %v147, 7
    %v149 = vsub.s32 0, %v148
    %v150 = vrot.slane %v145, %v149
    %v152 = vadd.f32 %v143, %v150
    %v153 = vadd.f32 %v144, %v150
    %v154 = vmax.f32 %v152, 0.0
    %v155 = vmax.f32 %v153, 0.0
    %156 = vst [vmem:[%s3] sm:$0xff] %v154
    %157 = vst [vmem:[%s3 + $0x8] sm:$0xff] %v155
  $region21: #{_lambda_.11} parent=0 // pred_fallthru
    _
  // Predicated region
  $region22: #{_lambda_.11} parent=0 // pred_check
    _
  $region23: #{_lambda_.11} parent=0 // pred_check_branch
    %159 = sbr.rel (0) target = $region25
  $region24: #{_lambda_.11} parent=0 // pred_region
    _
  $region25: #{_lambda_.11} parent=0 // pred_fallthru
    _
  // Predicated region
  $region26: #{_lambda_.11} parent=0 // pred_check
    _
  $region27: #{_lambda_.11} parent=0 // pred_check_branch
    %161 = sbr.rel (0) target = $region29
  $region28: #{_lambda_.11} parent=0 // pred_region
    _
  $region29: #{_lambda_.11} parent=0 // pred_fallthru
    _

// kernel: mul.10
$region0: #{mul.10}
  #allocation0 [shape = 's32[1]{0}', space=sflag, size = 0x4, scoped, tag = 'scoped memory for mul.10']
  %s0 = inlined_call_operand.vmem [shape: f32[2,32], index: 0, kind: input, shape index: {}]
  %s1 = inlined_call_operand.vmem [shape: f32[2,16,16,32], index: 1, kind: output, shape index: {}]
  // Predicated region
  $region2: #{mul.10} parent=0 // pred_check
    _
  $region3: #{mul.10} parent=0 // pred_check_branch
    %3 = sbr.rel (0) target = $region5
  $region4: #{mul.10} parent=0 // pred_region
    _
  $region5: #{mul.10} parent=0 // pred_fallthru
    _
  %v4 = vld [vmem:[%s0] ss:$0 sm:$0xff]
  %5 = vst [vmem:[%s1] sm:$0xff] %v4
  %s6 = scalar_lea.vmem %s0, 1
  %v7 = vld [vmem:[%s6] ss:$0 sm:$0xff]
  %s8 = scalar_lea.vmem %s1, 256
  %9 = vst [vmem:[%s8] sm:$0xff] %v7
  %s10 = scalar_lea.vmem %s1, 16
  %11 = vst [vmem:[%s10] sm:$0xff] %v4
  %s12 = scalar_lea.vmem %s1, 272
  %13 = vst [vmem:[%s12] sm:$0xff] %v7
  %s14 = scalar_lea.vmem %s1, 32
  %15 = vst [vmem:[%s14] sm:$0xff] %v4
  %s16 = scalar_lea.vmem %s1, 288
  %17 = vst [vmem:[%s16] sm:$0xff] %v7
  %s18 = scalar_lea.vmem %s1, 48
  %19 = vst [vmem:[%s18] sm:$0xff] %v4
  %s20 = scalar_lea.vmem %s1, 304
  %21 = vst [vmem:[%s20] sm:$0xff] %v7
  %s22 = scalar_lea.vmem %s1, 64
  %23 = vst [vmem:[%s22] sm:$0xff] %v4
  %s24 = scalar_lea.vmem %s1, 320
  %25 = vst [vmem:[%s24] sm:$0xff] %v7
  %s26 = scalar_lea.vmem %s1, 80
  %27 = vst [vmem:[%s26] sm:$0xff] %v4
  %s28 = scalar_lea.vmem %s1, 336
  %29 = vst [vmem:[%s28] sm:$0xff] %v7
  %s30 = scalar_lea.vmem %s1, 96
  %31 = vst [vmem:[%s30] sm:$0xff] %v4
  %s32 = scalar_lea.vmem %s1, 352
  %33 = vst [vmem:[%s32] sm:$0xff] %v7
  %s34 = scalar_lea.vmem %s1, 112
  %35 = vst [vmem:[%s34] sm:$0xff] %v4
  %s36 = scalar_lea.vmem %s1, 368
  %37 = vst [vmem:[%s36] sm:$0xff] %v7
  %s38 = scalar_lea.vmem %s1, 128
  %39 = vst [vmem:[%s38] sm:$0xff] %v4
  %s40 = scalar_lea.vmem %s1, 384
  %41 = vst [vmem:[%s40] sm:$0xff] %v7
  %s42 = scalar_lea.vmem %s1, 144
  %43 = vst [vmem:[%s42] sm:$0xff] %v4
  %s44 = scalar_lea.vmem %s1, 400
  %45 = vst [vmem:[%s44] sm:$0xff] %v7
  %s46 = scalar_lea.vmem %s1, 160
  %47 = vst [vmem:[%s46] sm:$0xff] %v4
  %s48 = scalar_lea.vmem %s1, 416
  %49 = vst [vmem:[%s48] sm:$0xff] %v7
  %s50 = scalar_lea.vmem %s1, 176
  %51 = vst [vmem:[%s50] sm:$0xff] %v4
  %s52 = scalar_lea.vmem %s1, 432
  %53 = vst [vmem:[%s52] sm:$0xff] %v7
  %s54 = scalar_lea.vmem %s1, 192
  %55 = vst [vmem:[%s54] sm:$0xff] %v4
  %s56 = scalar_lea.vmem %s1, 448
  %57 = vst [vmem:[%s56] sm:$0xff] %v7
  %s58 = scalar_lea.vmem %s1, 208
  %59 = vst [vmem:[%s58] sm:$0xff] %v4
  %s60 = scalar_lea.vmem %s1, 464
  %61 = vst [vmem:[%s60] sm:$0xff] %v7
  %s62 = scalar_lea.vmem %s1, 224
  %63 = vst [vmem:[%s62] sm:$0xff] %v4
  %s64 = scalar_lea.vmem %s1, 480
  %65 = vst [vmem:[%s64] sm:$0xff] %v7
  %s66 = scalar_lea.vmem %s1, 240
  %67 = vst [vmem:[%s66] sm:$0xff] %v4
  %s68 = scalar_lea.vmem %s1, 496
  %69 = vst [vmem:[%s68] sm:$0xff] %v7
  %s70 = scalar_lea.vmem %s1, 8
  %71 = vst [vmem:[%s70] sm:$0xff] %v4
  %s72 = scalar_lea.vmem %s1, 264
  %73 = vst [vmem:[%s72] sm:$0xff] %v7
  %s74 = scalar_lea.vmem %s1, 24
  %75 = vst [vmem:[%s74] sm:$0xff] %v4
  %s76 = scalar_lea.vmem %s1, 280
  %77 = vst [vmem:[%s76] sm:$0xff] %v7
  %s78 = scalar_lea.vmem %s1, 40
  %79 = vst [vmem:[%s78] sm:$0xff] %v4
  %s80 = scalar_lea.vmem %s1, 296
  %81 = vst [vmem:[%s80] sm:$0xff] %v7
  %s82 = scalar_lea.vmem %s1, 56
  %83 = vst [vmem:[%s82] sm:$0xff] %v4
  %s84 = scalar_lea.vmem %s1, 312
  %85 = vst [vmem:[%s84] sm:$0xff] %v7
  %s86 = scalar_lea.vmem %s1, 72
  %87 = vst [vmem:[%s86] sm:$0xff] %v4
  %s88 = scalar_lea.vmem %s1, 328
  %89 = vst [vmem:[%s88] sm:$0xff] %v7
  %s90 = scalar_lea.vmem %s1, 88
  %91 = vst [vmem:[%s90] sm:$0xff] %v4
  %s92 = scalar_lea.vmem %s1, 344
  %93 = vst [vmem:[%s92] sm:$0xff] %v7
  %s94 = scalar_lea.vmem %s1, 104
  %95 = vst [vmem:[%s94] sm:$0xff] %v4
  %s96 = scalar_lea.vmem %s1, 360
  %97 = vst [vmem:[%s96] sm:$0xff] %v7
  %s98 = scalar_lea.vmem %s1, 120
  %99 = vst [vmem:[%s98] sm:$0xff] %v4
  %s100 = scalar_lea.vmem %s1, 376
  %101 = vst [vmem:[%s100] sm:$0xff] %v7
  %s102 = scalar_lea.vmem %s1, 136
  %103 = vst [vmem:[%s102] sm:$0xff] %v4
  %s104 = scalar_lea.vmem %s1, 392
  %105 = vst [vmem:[%s104] sm:$0xff] %v7
  %s106 = scalar_lea.vmem %s1, 152
  %107 = vst [vmem:[%s106] sm:$0xff] %v4
  %s108 = scalar_lea.vmem %s1, 408
  %109 = vst [vmem:[%s108] sm:$0xff] %v7
  %s110 = scalar_lea.vmem %s1, 168
  %111 = vst [vmem:[%s110] sm:$0xff] %v4
  %s112 = scalar_lea.vmem %s1, 424
  %113 = vst [vmem:[%s112] sm:$0xff] %v7
  %s114 = scalar_lea.vmem %s1, 184
  %115 = vst [vmem:[%s114] sm:$0xff] %v4
  %s116 = scalar_lea.vmem %s1, 440
  %117 = vst [vmem:[%s116] sm:$0xff] %v7
  %s118 = scalar_lea.vmem %s1, 200
  %119 = vst [vmem:[%s118] sm:$0xff] %v4
  %s120 = scalar_lea.vmem %s1, 456
  %121 = vst [vmem:[%s120] sm:$0xff] %v7
  %s122 = scalar_lea.vmem %s1, 216
  %123 = vst [vmem:[%s122] sm:$0xff] %v4
  %s124 = scalar_lea.vmem %s1, 472
  %125 = vst [vmem:[%s124] sm:$0xff] %v7
  %s126 = scalar_lea.vmem %s1, 232
  %127 = vst [vmem:[%s126] sm:$0xff] %v4
  %s128 = scalar_lea.vmem %s1, 488
  %129 = vst [vmem:[%s128] sm:$0xff] %v7
  %s130 = scalar_lea.vmem %s1, 248
  %131 = vst [vmem:[%s130] sm:$0xff] %v4
  %s132 = scalar_lea.vmem %s1, 504
  %133 = vst [vmem:[%s132] sm:$0xff] %v7

// kernel: _lambda_.10
$region0: #{_lambda_.10}
  #allocation0 [shape = 'u32[]', space=smem, size = 0x4, offset = 0x4, fixed_abs, tag = 'smem constant byte address 0x4 - core index']
  #allocation1 [shape = 'u32[144,128]{1,0:T(1,128)}', space=vmem, size = 0x12000, scoped, tag = 'internal scratch']
  #allocation2 [shape = 'f32[256,128]{1,0:T(8,128)}', space=vmem, size = 0x20000, scoped, tag = 'scratch operand']
  %s0 = inlined_call_operand.vmem [shape: bf16[512,128], index: 0, kind: input, shape index: {}]
  %s1 = inlined_call_operand.vmem [shape: bf16[128,128], index: 1, kind: input, shape index: {}]
  %s2 = inlined_call_operand.vmem [shape: f32[1,128], index: 2, kind: input, shape index: {}]
  %s3 = inlined_call_operand.vmem [shape: f32[512,128], index: 3, kind: input, shape index: {}]
  %s4 = inlined_call_operand.vmem [shape: f32[512,128], index: 4, kind: output, shape index: {}]
  %s5 = sld [smem:[#allocation0]]
  $region57: #{_lambda_.10} parent=0
    _
  %s7 = ssub.s32 1, %s5
  %s8 = scalar_select 0, %s7, %s5
  loop: start=0, step=1, limit=4
  $region2: #{_lambda_.10} parent=0 // loop_pre_header
    _
  $region3: #{_lambda_.10} parent=0 // loop_header
    %s10 = sphi 0, %s14
    %p11 = scmp.ge.s32.totalorder %s10, 4
    %s17 = sphi 0, %s36
    %s18 = sphi 0, %s32
    %s19 = sphi 0, %s28
    %s20 = sphi 0, %s17
    %s21 = sphi 0, %s18
    %s22 = sphi 0, %s19
    %s23 = sphi 0, %s20
    %s24 = sphi 0, %s21
    %s25 = sphi 0, %s22
    %s41 = sphi 0, %s43
    %s44 = sphi 0, %s41
    %s45 = sphi 0, %s44
    %s61 = sphi 0, %s45
    %s69 = sphi 0, %s71
    %s72 = sphi 0, %s69
    %s73 = sphi 0, %s72
    %s89 = sphi 0, %s73
    %s95 = sphi 0, %s97
    %s98 = sphi 0, %s95
    %s99 = sphi 0, %s98
    %s115 = sphi 0, %s99
    %s123 = sphi 0, %s125
    %s126 = sphi 0, %s123
    %s127 = sphi 0, %s126
    %s143 = sphi 0, %s127
    %s151 = sphi 0, %s153
    %s154 = sphi 0, %s151
    %s155 = sphi 0, %s154
    %s171 = sphi 0, %s155
  $region4: #{_lambda_.10} parent=0 // loop_header_branch
    %13 = sbr.rel (%p11) target = $region8
  $region5: #{_lambda_.10} parent=0 // loop_body
    %s15 = ssub.s32 %s10, 1
    %s16 = ssub.s32 %s10, 2
    %s26 = sadd.s32 1, %s19
    %p27 = scmp.ge.s32.totalorder %s26, 1
    %s28 = scalar_select %p27, 0, %s26
    %s29 = sadd.s32 1, %s18
    %s30 = scalar_select %p27, %s29, %s18
    %p31 = scmp.ge.s32.totalorder %s30, 1
    %s32 = scalar_select %p31, 0, %s30
    %s33 = sadd.s32 1, %s17
    %s34 = scalar_select %p31, %s33, %s17
    %p35 = scmp.ge.s32.totalorder %s34, 2
    %s36 = scalar_select %p35, 0, %s34
    %s37 = ssub.s32 %s17, %s36
    %s38 = ssub.s32 %s19, %s28
    %s39 = sor.u32 %s37, %s38
    %p40 = scmp.eq.s32.totalorder %s39, 0
    %s42 = sadd.s32 %s41, 1
    %s43 = scalar_select %p40, %s41, %s42
    %p46 = pneg %p40
    %p47 = scmp.eq.s32.totalorder %s10, 1
    %p48 = por %p46, %p47
    %p49 = scmp.ne.s32.totalorder %s41, %s44
    %p50 = scmp.eq.s32.totalorder %s10, 0
    %p51 = por %p49, %p50
    %p52 = scmp.ne.s32.totalorder %s41, %s44
    %p53 = scmp.eq.s32.totalorder %s15, 1
    %p54 = por %p52, %p53
    %p55 = scmp.ne.s32.totalorder %s44, %s45
    %p56 = scmp.eq.s32.totalorder %s15, 0
    %p57 = por %p55, %p56
    %p58 = scmp.ne.s32.totalorder %s44, %s45
    %p59 = scmp.eq.s32.totalorder %s16, 1
    %p60 = por %p58, %p59
    %p62 = scmp.ne.s32.totalorder %s45, %s61
    %p63 = scmp.eq.s32.totalorder %s16, 0
    %p64 = por %p62, %p63
    %s65 = ssub.s32 %s19, %s28
    %s66 = ssub.s32 %s18, %s32
    %s67 = sor.u32 %s65, %s66
    %p68 = scmp.eq.s32.totalorder %s67, 0
    %s70 = sadd.s32 %s69, 1
    %s71 = scalar_select %p68, %s69, %s70
    %p74 = pneg %p68
    %p75 = scmp.eq.s32.totalorder %s10, 1
    %p76 = por %p74, %p75
    %p77 = scmp.ne.s32.totalorder %s69, %s72
    %p78 = scmp.eq.s32.totalorder %s10, 0
    %p79 = por %p77, %p78
    %p80 = scmp.ne.s32.totalorder %s69, %s72
    %p81 = scmp.eq.s32.totalorder %s15, 1
    %p82 = por %p80, %p81
    %p83 = scmp.ne.s32.totalorder %s72, %s73
    %p84 = scmp.eq.s32.totalorder %s15, 0
    %p85 = por %p83, %p84
    %p86 = scmp.ne.s32.totalorder %s72, %s73
    %p87 = scmp.eq.s32.totalorder %s16, 1
    %p88 = por %p86, %p87
    %p90 = scmp.ne.s32.totalorder %s73, %s89
    %p91 = scmp.eq.s32.totalorder %s16, 0
    %p92 = por %p90, %p91
    %s93 = ssub.s32 %s18, %s32
    %p94 = scmp.eq.s32.totalorder %s93, 0
    %s96 = sadd.s32 %s95, 1
    %s97 = scalar_select %p94, %s95, %s96
    %p100 = pneg %p94
    %p101 = scmp.eq.s32.totalorder %s10, 1
    %p102 = por %p100, %p101
    %p103 = scmp.ne.s32.totalorder %s95, %s98
    %p104 = scmp.eq.s32.totalorder %s10, 0
    %p105 = por %p103, %p104
    %p106 = scmp.ne.s32.totalorder %s95, %s98
    %p107 = scmp.eq.s32.totalorder %s15, 1
    %p108 = por %p106, %p107
    %p109 = scmp.ne.s32.totalorder %s98, %s99
    %p110 = scmp.eq.s32.totalorder %s15, 0
    %p111 = por %p109, %p110
    %p112 = scmp.ne.s32.totalorder %s98, %s99
    %p113 = scmp.eq.s32.totalorder %s16, 1
    %p114 = por %p112, %p113
    %p116 = scmp.ne.s32.totalorder %s99, %s115
    %p117 = scmp.eq.s32.totalorder %s16, 0
    %p118 = por %p116, %p117
    %s119 = ssub.s32 %s17, %s36
    %s120 = ssub.s32 %s18, %s32
    %s121 = sor.u32 %s119, %s120
    %p122 = scmp.eq.s32.totalorder %s121, 0
    %s124 = sadd.s32 %s123, 1
    %s125 = scalar_select %p122, %s123, %s124
    %p128 = pneg %p122
    %p129 = scmp.eq.s32.totalorder %s10, 1
    %p130 = por %p128, %p129
    %p131 = scmp.ne.s32.totalorder %s123, %s126
    %p132 = scmp.eq.s32.totalorder %s10, 0
    %p133 = por %p131, %p132
    %p134 = scmp.ne.s32.totalorder %s123, %s126
    %p135 = scmp.eq.s32.totalorder %s15, 1
    %p136 = por %p134, %p135
    %p137 = scmp.ne.s32.totalorder %s126, %s127
    %p138 = scmp.eq.s32.totalorder %s15, 0
    %p139 = por %p137, %p138
    %p140 = scmp.ne.s32.totalorder %s126, %s127
    %p141 = scmp.eq.s32.totalorder %s16, 1
    %p142 = por %p140, %p141
    %p144 = scmp.ne.s32.totalorder %s127, %s143
    %p145 = scmp.eq.s32.totalorder %s16, 0
    %p146 = por %p144, %p145
    %s147 = ssub.s32 %s17, %s36
    %s148 = ssub.s32 %s18, %s32
    %s149 = sor.u32 %s147, %s148
    %p150 = scmp.eq.s32.totalorder %s149, 0
    %s152 = sadd.s32 %s151, 1
    %s153 = scalar_select %p150, %s151, %s152
    %p156 = pneg %p150
    %p157 = scmp.eq.s32.totalorder %s10, 1
    %p158 = por %p156, %p157
    %p159 = scmp.ne.s32.totalorder %s151, %s154
    %p160 = scmp.eq.s32.totalorder %s10, 0
    %p161 = por %p159, %p160
    %p162 = scmp.ne.s32.totalorder %s151, %s154
    %p163 = scmp.eq.s32.totalorder %s15, 1
    %p164 = por %p162, %p163
    %p165 = scmp.ne.s32.totalorder %s154, %s155
    %p166 = scmp.eq.s32.totalorder %s15, 0
    %p167 = por %p165, %p166
    %p168 = scmp.ne.s32.totalorder %s154, %s155
    %p169 = scmp.eq.s32.totalorder %s16, 1
    %p170 = por %p168, %p169
    %p172 = scmp.ne.s32.totalorder %s155, %s171
    %p173 = scmp.eq.s32.totalorder %s16, 0
    %p174 = por %p172, %p173
    %p175 = scmp.le.s32.totalorder 1, %s10
    %p176 = scmp.lt.s32.totalorder %s10, 3
    %p177 = pnand %p175, %p176
    %p178 = pneg %p177
    // Predicated region
    $region9: #{_lambda_.10} parent=5 // pred_check
      _
    $region10: #{_lambda_.10} parent=5 // pred_check_branch
      %180 = sbr.rel (%p177) target = $region12
    $region11: #{_lambda_.10} parent=5 // pred_region
      %s181 = ssub.s32 %s10, 1
      // Predicated region
      $region13: #{_lambda_.10} parent=11 // pred_check
        %p182 = pneg %p85
      $region14: #{_lambda_.10} parent=11 // pred_check_branch
        %184 = sbr.rel (%p182) target = $region16
      $region15: #{_lambda_.10} parent=11 // pred_region
        %s185 = smul.u32 16, %s22
        %p186 = scmp.lt.s32.totalorder %s185, 15
        %s187 = scalar_select %p186, %s185, 15
        %p188 = scmp.lt.s32.totalorder %s21, 0
        %s189 = scalar_select %p188, %s21, 0
        %s190 = sadd.s32 %s189, %s187
        %s191 = smul.addr %s190, 4
        %s192 = scalar_lea.vmem %s1, %s191
        %s193 = smul.u32 16, %s22
      $region16: #{_lambda_.10} parent=11 // pred_fallthru
        _
      // Predicated region
      $region17: #{_lambda_.10} parent=11 // pred_check
        %p194 = pneg %p111
      $region18: #{_lambda_.10} parent=11 // pred_check_branch
        %196 = sbr.rel (%p194) target = $region20
      $region19: #{_lambda_.10} parent=11 // pred_region
        %p197 = scmp.lt.s32.totalorder %s21, 0
        %s198 = scalar_select %p197, %s21, 0
        %s199 = scalar_lea.vmem %s2, %s198
      $region20: #{_lambda_.10} parent=11 // pred_fallthru
        _
    $region12: #{_lambda_.10} parent=5 // pred_fallthru
      _
    %p200 = scmp.lt.s32.totalorder %s10, 2
    // Predicated region
    $region21: #{_lambda_.10} parent=5 // pred_check
      %p201 = pneg %p200
    $region22: #{_lambda_.10} parent=5 // pred_check_branch
      %203 = sbr.rel (%p201) target = $region24
    $region23: #{_lambda_.10} parent=5 // pred_region
      // Predicated region
      $region25: #{_lambda_.10} parent=23 // pred_check
        %p204 = pneg %p51
      $region26: #{_lambda_.10} parent=23 // pred_check_branch
        %206 = sbr.rel (%p204) target = $region28
      $region27: #{_lambda_.10} parent=23 // pred_region
        %s207 = smul.u32 32, %s17
        %p208 = scmp.lt.s32.totalorder %s207, 63
        %s209 = scalar_select %p208, %s207, 63
        %p210 = scmp.lt.s32.totalorder %s19, 0
        %s211 = scalar_select %p210, %s19, 0
        %s212 = sadd.s32 %s211, %s209
        %s213 = smul.addr %s212, 4
        %s214 = scalar_lea.vmem %s0, %s213
        %s215 = smul.u32 32, %s17
      $region28: #{_lambda_.10} parent=23 // pred_fallthru
        _
      // Predicated region
      $region29: #{_lambda_.10} parent=23 // pred_check
        %p216 = pneg %p133
      $region30: #{_lambda_.10} parent=23 // pred_check_branch
        %218 = sbr.rel (%p216) target = $region32
      $region31: #{_lambda_.10} parent=23 // pred_region
        %s219 = smul.u32 32, %s17
        %p220 = scmp.lt.s32.totalorder %s219, 63
        %s221 = scalar_select %p220, %s219, 63
        %p222 = scmp.lt.s32.totalorder %s18, 0
        %s223 = scalar_select %p222, %s18, 0
        %s224 = sadd.s32 %s223, %s221
        %s225 = smul.addr %s224, 8
        %s226 = scalar_lea.vmem %s3, %s225
        %s227 = smul.u32 32, %s17
      $region32: #{_lambda_.10} parent=23 // pred_fallthru
        _
    $region24: #{_lambda_.10} parent=5 // pred_fallthru
      _
    %p228 = scmp.le.s32.totalorder 1, %s10
    %p229 = scmp.lt.s32.totalorder %s10, 3
    %p230 = pnand %p228, %p229
    %p231 = pneg %p230
    // Predicated region
    $region33: #{_lambda_.10} parent=5 // pred_check
      _
    $region34: #{_lambda_.10} parent=5 // pred_check_branch
      %233 = sbr.rel (%p230) target = $region36
    $region35: #{_lambda_.10} parent=5 // pred_region
      %s234 = ssub.s32 %s10, 1
      %s235 = smul.u32 32, %s20
      %p236 = scmp.lt.s32.totalorder %s235, 63
      %s237 = scalar_select %p236, %s235, 63
      %p238 = scmp.lt.s32.totalorder %s22, 0
      %s239 = scalar_select %p238, %s22, 0
      %s240 = sadd.s32 %s239, %s237
      %s241 = smul.addr %s240, 4
      %s242 = scalar_lea.vmem %s0, %s241
      %p243 = pneg %p57
      %p244 = pneg %p54
      %s245 = smul.u32 16, %s22
      %p246 = scmp.lt.s32.totalorder %s245, 15
      %s247 = scalar_select %p246, %s245, 15
      %p248 = scmp.lt.s32.totalorder %s21, 0
      %s249 = scalar_select %p248, %s21, 0
      %s250 = sadd.s32 %s249, %s247
      %s251 = smul.addr %s250, 4
      %s252 = scalar_lea.vmem %s1, %s251
      %p253 = pneg %p85
      %p254 = pneg %p82
      %p255 = scmp.lt.s32.totalorder %s21, 0
      %s256 = scalar_select %p255, %s21, 0
      %s257 = scalar_lea.vmem %s2, %s256
      %p258 = pneg %p111
      %p259 = pneg %p108
      %s260 = smul.u32 32, %s20
      %p261 = scmp.lt.s32.totalorder %s260, 63
      %s262 = scalar_select %p261, %s260, 63
      %p263 = scmp.lt.s32.totalorder %s21, 0
      %s264 = scalar_select %p263, %s21, 0
      %s265 = sadd.s32 %s264, %s262
      %s266 = smul.addr %s265, 8
      %s267 = scalar_lea.vmem %s3, %s266
      %p268 = pneg %p139
      %p269 = pneg %p136
      %p270 = pneg %p167
      %p271 = pneg %p164
      %s272 = smul.u32 32, %s20
      %p273 = scmp.lt.s32.totalorder %s272, 63
      %s274 = scalar_select %p273, %s272, 63
      %p275 = scmp.lt.s32.totalorder %s21, 0
      %s276 = scalar_select %p275, %s21, 0
      %s277 = sadd.s32 %s276, %s274
      %s278 = smul.addr %s277, 8
      %s279 = scalar_lea.vmem %s4, %s278
      %s280 = smul.u32 32, %s20
      %p281 = scmp.lt.s32.totalorder %s280, 63
      %s282 = scalar_select %p281, %s280, 63
      %p283 = scmp.lt.s32.totalorder %s22, 0
      %s284 = scalar_select %p283, %s22, 0
      %s285 = sadd.s32 %s284, %s282
      %s286 = smul.addr %s285, 4
      %s287 = scalar_lea.vmem %s0, %s286
      %s288 = smul.u32 32, %s20
      %s289 = smul.u32 16, %s22
      %p290 = scmp.lt.s32.totalorder %s289, 15
      %s291 = scalar_select %p290, %s289, 15
      %p292 = scmp.lt.s32.totalorder %s21, 0
      %s293 = scalar_select %p292, %s21, 0
      %s294 = sadd.s32 %s293, %s291
      %s295 = smul.addr %s294, 4
      %s296 = scalar_lea.vmem %s1, %s295
      %s297 = smul.u32 16, %s22
      %p298 = scmp.lt.s32.totalorder %s21, 0
      %s299 = scalar_select %p298, %s21, 0
      %s300 = scalar_lea.vmem %s2, %s299
      %s301 = smul.u32 32, %s20
      %p302 = scmp.lt.s32.totalorder %s301, 63
      %s303 = scalar_select %p302, %s301, 63
      %p304 = scmp.lt.s32.totalorder %s21, 0
      %s305 = scalar_select %p304, %s21, 0
      %s306 = sadd.s32 %s305, %s303
      %s307 = smul.addr %s306, 8
      %s308 = scalar_lea.vmem %s3, %s307
      %s309 = smul.u32 32, %s20
      %s310 = smul.u32 32, %s20
      %p311 = scmp.lt.s32.totalorder %s310, 63
      %s312 = scalar_select %p311, %s310, 63
      %p313 = scmp.lt.s32.totalorder %s21, 0
      %s314 = scalar_select %p313, %s21, 0
      %s315 = sadd.s32 %s314, %s312
      %s316 = smul.addr %s315, 8
      %s317 = scalar_lea.vmem %s4, %s316
      %s318 = smul.u32 32, %s20
      %p320 = scmp.eq.s32.totalorder %s22, 0
      // Predicated region
      $region37: #{_lambda_.10} parent=35 // pred_check
        %p321 = pneg %p320
      $region38: #{_lambda_.10} parent=35 // pred_check_branch
        %323 = sbr.rel (%p321) target = $region40
      $region39: #{_lambda_.10} parent=35 // pred_region
        %324 = vst [vmem:[#allocation2] sm:$0xff] 0.0
        %325 = vst [vmem:[#allocation2 + $0x8] sm:$0xff] 0.0
        %326 = vst [vmem:[#allocation2 + $0x10] sm:$0xff] 0.0
        %327 = vst [vmem:[#allocation2 + $0x18] sm:$0xff] 0.0
        %328 = vst [vmem:[#allocation2 + $0x20] sm:$0xff] 0.0
        %329 = vst [vmem:[#allocation2 + $0x28] sm:$0xff] 0.0
        %330 = vst [vmem:[#allocation2 + $0x30] sm:$0xff] 0.0
        %331 = vst [vmem:[#allocation2 + $0x38] sm:$0xff] 0.0
        %332 = vst [vmem:[#allocation2 + $0x40] sm:$0xff] 0.0
        %333 = vst [vmem:[#allocation2 + $0x48] sm:$0xff] 0.0
        %334 = vst [vmem:[#allocation2 + $0x50] sm:$0xff] 0.0
        %335 = vst [vmem:[#allocation2 + $0x58] sm:$0xff] 0.0
        %336 = vst [vmem:[#allocation2 + $0x60] sm:$0xff] 0.0
        %337 = vst [vmem:[#allocation2 + $0x68] sm:$0xff] 0.0
        %338 = vst [vmem:[#allocation2 + $0x70] sm:$0xff] 0.0
        %339 = vst [vmem:[#allocation2 + $0x78] sm:$0xff] 0.0
        %340 = vst [vmem:[#allocation2 + $0x80] sm:$0xff] 0.0
        %341 = vst [vmem:[#allocation2 + $0x88] sm:$0xff] 0.0
        %342 = vst [vmem:[#allocation2 + $0x90] sm:$0xff] 0.0
        %343 = vst [vmem:[#allocation2 + $0x98] sm:$0xff] 0.0
        %344 = vst [vmem:[#allocation2 + $0xa0] sm:$0xff] 0.0
        %345 = vst [vmem:[#allocation2 + $0xa8] sm:$0xff] 0.0
        %346 = vst [vmem:[#allocation2 + $0xb0] sm:$0xff] 0.0
        %347 = vst [vmem:[#allocation2 + $0xb8] sm:$0xff] 0.0
        %348 = vst [vmem:[#allocation2 + $0xc0] sm:$0xff] 0.0
        %349 = vst [vmem:[#allocation2 + $0xc8] sm:$0xff] 0.0
        %350 = vst [vmem:[#allocation2 + $0xd0] sm:$0xff] 0.0
        %351 = vst [vmem:[#allocation2 + $0xd8] sm:$0xff] 0.0
        %352 = vst [vmem:[#allocation2 + $0xe0] sm:$0xff] 0.0
        %353 = vst [vmem:[#allocation2 + $0xe8] sm:$0xff] 0.0
        %354 = vst [vmem:[#allocation2 + $0xf0] sm:$0xff] 0.0
        %355 = vst [vmem:[#allocation2 + $0xf8] sm:$0xff] 0.0
      $region40: #{_lambda_.10} parent=35 // pred_fallthru
        _
      %v356 = vld [vmem:[#allocation2] sm:$0xff]
      %v357 = vld [vmem:[#allocation2 + $0x8] sm:$0xff]
      %v358 = vld [vmem:[#allocation2 + $0x10] sm:$0xff]
      %v359 = vld [vmem:[#allocation2 + $0x18] sm:$0xff]
      %v360 = vld [vmem:[#allocation2 + $0x20] sm:$0xff]
      %v361 = vld [vmem:[#allocation2 + $0x28] sm:$0xff]
      %v362 = vld [vmem:[#allocation2 + $0x30] sm:$0xff]
      %v363 = vld [vmem:[#allocation2 + $0x38] sm:$0xff]
      %v364 = vld [vmem:[#allocation2 + $0x40] sm:$0xff]
      %v365 = vld [vmem:[#allocation2 + $0x48] sm:$0xff]
      %v366 = vld [vmem:[#allocation2 + $0x50] sm:$0xff]
      %v367 = vld [vmem:[#allocation2 + $0x58] sm:$0xff]
      %v368 = vld [vmem:[#allocation2 + $0x60] sm:$0xff]
      %v369 = vld [vmem:[#allocation2 + $0x68] sm:$0xff]
      %v370 = vld [vmem:[#allocation2 + $0x70] sm:$0xff]
      %v371 = vld [vmem:[#allocation2 + $0x78] sm:$0xff]
      %v372 = vld [vmem:[#allocation2 + $0x80] sm:$0xff]
      %v373 = vld [vmem:[#allocation2 + $0x88] sm:$0xff]
      %v374 = vld [vmem:[#allocation2 + $0x90] sm:$0xff]
      %v375 = vld [vmem:[#allocation2 + $0x98] sm:$0xff]
      %v376 = vld [vmem:[#allocation2 + $0xa0] sm:$0xff]
      %v377 = vld [vmem:[#allocation2 + $0xa8] sm:$0xff]
      %v378 = vld [vmem:[#allocation2 + $0xb0] sm:$0xff]
      %v379 = vld [vmem:[#allocation2 + $0xb8] sm:$0xff]
      %v380 = vld [vmem:[#allocation2 + $0xc0] sm:$0xff]
      %v381 = vld [vmem:[#allocation2 + $0xc8] sm:$0xff]
      %v382 = vld [vmem:[#allocation2 + $0xd0] sm:$0xff]
      %v383 = vld [vmem:[#allocation2 + $0xd8] sm:$0xff]
      %v384 = vld [vmem:[#allocation2 + $0xe0] sm:$0xff]
      %v385 = vld [vmem:[#allocation2 + $0xe8] sm:$0xff]
      %v386 = vld [vmem:[#allocation2 + $0xf0] sm:$0xff]
      %v387 = vld [vmem:[#allocation2 + $0xf8] sm:$0xff]
      %v388 = vld [vmem:[%s287] sm:$0xf]
      %v389 = vld [vmem:[%s287 + $0x4] sm:$0xf]
      %v390 = vld [vmem:[%s287 + $0x8] sm:$0xf]
      %v391 = vld [vmem:[%s287 + $0xc] sm:$0xf]
      %v392 = vld [vmem:[%s287 + $0x10] sm:$0xf]
      %v393 = vld [vmem:[%s287 + $0x14] sm:$0xf]
      %v394 = vld [vmem:[%s287 + $0x18] sm:$0xf]
      %v395 = vld [vmem:[%s287 + $0x1c] sm:$0xf]
      %v396 = vld [vmem:[%s287 + $0x20] sm:$0xf]
      %v397 = vld [vmem:[%s287 + $0x24] sm:$0xf]
      %v398 = vld [vmem:[%s287 + $0x28] sm:$0xf]
      %v399 = vld [vmem:[%s287 + $0x2c] sm:$0xf]
      %v400 = vld [vmem:[%s287 + $0x30] sm:$0xf]
      %v401 = vld [vmem:[%s287 + $0x34] sm:$0xf]
      %v402 = vld [vmem:[%s287 + $0x38] sm:$0xf]
      %v403 = vld [vmem:[%s287 + $0x3c] sm:$0xf]
      %v404 = vld [vmem:[%s287 + $0x40] sm:$0xf]
      %v405 = vld [vmem:[%s287 + $0x44] sm:$0xf]
      %v406 = vld [vmem:[%s287 + $0x48] sm:$0xf]
      %v407 = vld [vmem:[%s287 + $0x4c] sm:$0xf]
      %v408 = vld [vmem:[%s287 + $0x50] sm:$0xf]
      %v409 = vld [vmem:[%s287 + $0x54] sm:$0xf]
      %v410 = vld [vmem:[%s287 + $0x58] sm:$0xf]
      %v411 = vld [vmem:[%s287 + $0x5c] sm:$0xf]
      %v412 = vld [vmem:[%s287 + $0x60] sm:$0xf]
      %v413 = vld [vmem:[%s287 + $0x64] sm:$0xf]
      %v414 = vld [vmem:[%s287 + $0x68] sm:$0xf]
      %v415 = vld [vmem:[%s287 + $0x6c] sm:$0xf]
      %v416 = vld [vmem:[%s287 + $0x70] sm:$0xf]
      %v417 = vld [vmem:[%s287 + $0x74] sm:$0xf]
      %v418 = vld [vmem:[%s287 + $0x78] sm:$0xf]
      %v419 = vld [vmem:[%s287 + $0x7c] sm:$0xf]
      %v420 = vld [vmem:[%s296] sm:$0xf]
      %v421 = vld [vmem:[%s296 + $0x4] sm:$0xf]
      %v422 = vld [vmem:[%s296 + $0x8] sm:$0xf]
      %v423 = vld [vmem:[%s296 + $0xc] sm:$0xf]
      %v424 = vld [vmem:[%s296 + $0x10] sm:$0xf]
      %v425 = vld [vmem:[%s296 + $0x14] sm:$0xf]
      %v426 = vld [vmem:[%s296 + $0x18] sm:$0xf]
      %v427 = vld [vmem:[%s296 + $0x1c] sm:$0xf]
      %v428 = vld [vmem:[%s296 + $0x20] sm:$0xf]
      %v429 = vld [vmem:[%s296 + $0x24] sm:$0xf]
      %v430 = vld [vmem:[%s296 + $0x28] sm:$0xf]
      %v431 = vld [vmem:[%s296 + $0x2c] sm:$0xf]
      %v432 = vld [vmem:[%s296 + $0x30] sm:$0xf]
      %v433 = vld [vmem:[%s296 + $0x34] sm:$0xf]
      %v434 = vld [vmem:[%s296 + $0x38] sm:$0xf]
      %v435 = vld [vmem:[%s296 + $0x3c] sm:$0xf]
      %v468 = vunpack.c.l.b16 %v388
      %v469 = vunpack.c.l.b16 %v389
      %v470 = vunpack.c.l.b16 %v390
      %v471 = vunpack.c.l.b16 %v391
      %v472 = vunpack.c.l.b16 %v392
      %v473 = vunpack.c.l.b16 %v393
      %v474 = vunpack.c.l.b16 %v394
      %v475 = vunpack.c.l.b16 %v395
      %v476 = vunpack.c.l.b16 %v396
      %v477 = vunpack.c.l.b16 %v397
      %v478 = vunpack.c.l.b16 %v398
      %v479 = vunpack.c.l.b16 %v399
      %v480 = vunpack.c.l.b16 %v400
      %v481 = vunpack.c.l.b16 %v401
      %v482 = vunpack.c.l.b16 %v402
      %v483 = vunpack.c.l.b16 %v403
      %v484 = vunpack.c.l.b16 %v404
      %v485 = vunpack.c.l.b16 %v405
      %v486 = vunpack.c.l.b16 %v406
      %v487 = vunpack.c.l.b16 %v407
      %v488 = vunpack.c.l.b16 %v408
      %v489 = vunpack.c.l.b16 %v409
      %v490 = vunpack.c.l.b16 %v410
      %v491 = vunpack.c.l.b16 %v411
      %v492 = vunpack.c.l.b16 %v412
      %v493 = vunpack.c.l.b16 %v413
      %v494 = vunpack.c.l.b16 %v414
      %v495 = vunpack.c.l.b16 %v415
      %v496 = vunpack.c.l.b16 %v416
      %v497 = vunpack.c.l.b16 %v417
      %v498 = vunpack.c.l.b16 %v418
      %v499 = vunpack.c.l.b16 %v419
      %v500 = vpack.c.b16 %v469, %v468
      %v501 = vpack.c.b16 %v471, %v470
      %v502 = vpack.c.b16 %v473, %v472
      %v503 = vpack.c.b16 %v475, %v474
      %v504 = vpack.c.b16 %v477, %v476
      %v505 = vpack.c.b16 %v479, %v478
      %v506 = vpack.c.b16 %v481, %v480
      %v507 = vpack.c.b16 %v483, %v482
      %v508 = vpack.c.b16 %v485, %v484
      %v509 = vpack.c.b16 %v487, %v486
      %v510 = vpack.c.b16 %v489, %v488
      %v511 = vpack.c.b16 %v491, %v490
      %v512 = vpack.c.b16 %v493, %v492
      %v513 = vpack.c.b16 %v495, %v494
      %v514 = vpack.c.b16 %v497, %v496
      %v515 = vpack.c.b16 %v499, %v498
      %v548 = vunpack.c.l.b16 %v420
      %v549 = vunpack.c.l.b16 %v421
      %v550 = vunpack.c.l.b16 %v422
      %v551 = vunpack.c.l.b16 %v423
      %v552 = vunpack.c.l.b16 %v424
      %v553 = vunpack.c.l.b16 %v425
      %v554 = vunpack.c.l.b16 %v426
      %v555 = vunpack.c.l.b16 %v427
      %v556 = vunpack.c.l.b16 %v428
      %v557 = vunpack.c.l.b16 %v429
      %v558 = vunpack.c.l.b16 %v430
      %v559 = vunpack.c.l.b16 %v431
      %v560 = vunpack.c.l.b16 %v432
      %v561 = vunpack.c.l.b16 %v433
      %v562 = vunpack.c.l.b16 %v434
      %v563 = vunpack.c.l.b16 %v435
      %v564 = vpack.c.b16 %v549, %v548
      %v565 = vpack.c.b16 %v551, %v550
      %v566 = vpack.c.b16 %v553, %v552
      %v567 = vpack.c.b16 %v555, %v554
      %v568 = vpack.c.b16 %v557, %v556
      %v569 = vpack.c.b16 %v559, %v558
      %v570 = vpack.c.b16 %v561, %v560
      %v571 = vpack.c.b16 %v563, %v562
      %580 = vmatprep.subr.bf16.mxu0 0
      %581 = vmatpush1.bf16.msra.mxu0 %v564
      %582 = vmatprep.subr.bf16.mxu0 0
      %583 = vmatpush1.bf16.msra.mxu0 %v565
      %584 = vmatprep.subr.bf16.mxu0 0
      %585 = vmatpush1.bf16.msra.mxu0 %v566
      %586 = vmatprep.subr.bf16.mxu0 0
      %587 = vmatpush1.bf16.msra.mxu0 %v567
      %588 = vmatprep.subr.bf16.mxu0 0
      %589 = vmatpush1.bf16.msra.mxu0 %v568
      %590 = vmatprep.subr.bf16.mxu0 0
      %591 = vmatpush1.bf16.msra.mxu0 %v569
      %592 = vmatprep.subr.bf16.mxu0 0
      %593 = vmatpush1.bf16.msra.mxu0 %v570
      %594 = vmatprep.subr.bf16.mxu0 0
      %595 = vmatpush1.bf16.msra.mxu0 %v571
      %596 = vmatprep.subr.bf16.mxu0 0
      %597 = vmatpush1.bf16.msra.mxu0 0
      %598 = vmatprep.subr.bf16.mxu0 0
      %599 = vmatpush1.bf16.msra.mxu0 0
      %600 = vmatprep.subr.bf16.mxu0 0
      %601 = vmatpush1.bf16.msra.mxu0 0
      %602 = vmatprep.subr.bf16.mxu0 0
      %603 = vmatpush1.bf16.msra.mxu0 0
      %604 = vmatprep.subr.bf16.mxu0 0
      %605 = vmatpush1.bf16.msra.mxu0 0
      %606 = vmatprep.subr.bf16.mxu0 0
      %607 = vmatpush1.bf16.msra.mxu0 0
      %608 = vmatprep.subr.bf16.mxu0 0
      %609 = vmatpush1.bf16.msra.mxu0 0
      %610 = vmatprep.subr.bf16.mxu0 0
      %611 = vmatpush1.bf16.msra.mxu0 0
      %612 = vmatprep.mubr.bf16.mxu0 0
      %613 = vmatmul.mubr.bf16.gmra.mrb[0].mxu0 %v500
      %v614 = vpop.f32.mrb[0].mxu0
      %v615 = vadd.f32 0.0, %v614
      %v616 = vpop.f32.mrb[0].mxu0
      %v617 = vpop.f32.mrb[0].mxu0
      %v618 = vadd.f32 0.0, %v617
      %v619 = vpop.f32.mrb[0].mxu0
      %620 = vmatprep.mubr.bf16.mxu0 0
      %621 = vmatmul.mubr.bf16.gmra.mrb[0].mxu0 %v501
      %v622 = vpop.f32.mrb[0].mxu0
      %v623 = vadd.f32 0.0, %v622
      %v624 = vpop.f32.mrb[0].mxu0
      %v625 = vpop.f32.mrb[0].mxu0
      %v626 = vadd.f32 0.0, %v625
      %v627 = vpop.f32.mrb[0].mxu0
      %628 = vmatprep.mubr.bf16.mxu0 0
      %629 = vmatmul.mubr.bf16.gmra.mrb[0].mxu0 %v502
      %v630 = vpop.f32.mrb[0].mxu0
      %v631 = vadd.f32 0.0, %v630
      %v632 = vpop.f32.mrb[0].mxu0
      %v633 = vpop.f32.mrb[0].mxu0
      %v634 = vadd.f32 0.0, %v633
      %v635 = vpop.f32.mrb[0].mxu0
      %636 = vmatprep.mubr.bf16.mxu0 0
      %637 = vmatmul.mubr.bf16.gmra.mrb[0].mxu0 %v503
      %v638 = vpop.f32.mrb[0].mxu0
      %v639 = vadd.f32 0.0, %v638
      %v640 = vpop.f32.mrb[0].mxu0
      %v641 = vpop.f32.mrb[0].mxu0
      %v642 = vadd.f32 0.0, %v641
      %v643 = vpop.f32.mrb[0].mxu0
      %644 = vmatprep.mubr.bf16.mxu0 0
      %645 = vmatmul.mubr.bf16.gmra.mrb[0].mxu0 %v504
      %v646 = vpop.f32.mrb[0].mxu0
      %v647 = vadd.f32 0.0, %v646
      %v648 = vpop.f32.mrb[0].mxu0
      %v649 = vpop.f32.mrb[0].mxu0
      %v650 = vadd.f32 0.0, %v649
      %v651 = vpop.f32.mrb[0].mxu0
      %652 = vmatprep.mubr.bf16.mxu0 0
      %653 = vmatmul.mubr.bf16.gmra.mrb[0].mxu0 %v505
      %v654 = vpop.f32.mrb[0].mxu0
      %v655 = vadd.f32 0.0, %v654
      %v656 = vpop.f32.mrb[0].mxu0
      %v657 = vpop.f32.mrb[0].mxu0
      %v658 = vadd.f32 0.0, %v657
      %v659 = vpop.f32.mrb[0].mxu0
      %660 = vmatprep.mubr.bf16.mxu0 0
      %661 = vmatmul.mubr.bf16.gmra.mrb[0].mxu0 %v506
      %v662 = vpop.f32.mrb[0].mxu0
      %v663 = vadd.f32 0.0, %v662
      %v664 = vpop.f32.mrb[0].mxu0
      %v665 = vpop.f32.mrb[0].mxu0
      %v666 = vadd.f32 0.0, %v665
      %v667 = vpop.f32.mrb[0].mxu0
      %668 = vmatprep.mubr.bf16.mxu0 0
      %669 = vmatmul.mubr.bf16.gmra.mrb[0].mxu0 %v507
      %v670 = vpop.f32.mrb[0].mxu0
      %v671 = vadd.f32 0.0, %v670
      %v672 = vpop.f32.mrb[0].mxu0
      %v673 = vpop.f32.mrb[0].mxu0
      %v674 = vadd.f32 0.0, %v673
      %v675 = vpop.f32.mrb[0].mxu0
      %676 = vmatprep.mubr.bf16.mxu0 0
      %677 = vmatmul.mubr.bf16.gmra.mrb[0].mxu0 %v508
      %v678 = vpop.f32.mrb[0].mxu0
      %v679 = vadd.f32 0.0, %v678
      %v680 = vpop.f32.mrb[0].mxu0
      %v681 = vpop.f32.mrb[0].mxu0
      %v682 = vadd.f32 0.0, %v681
      %v683 = vpop.f32.mrb[0].mxu0
      %684 = vmatprep.mubr.bf16.mxu0 0
      %685 = vmatmul.mubr.bf16.gmra.mrb[0].mxu0 %v509
      %v686 = vpop.f32.mrb[0].mxu0
      %v687 = vadd.f32 0.0, %v686
      %v688 = vpop.f32.mrb[0].mxu0
      %v689 = vpop.f32.mrb[0].mxu0
      %v690 = vadd.f32 0.0, %v689
      %v691 = vpop.f32.mrb[0].mxu0
      %692 = vmatprep.mubr.bf16.mxu0 0
      %693 = vmatmul.mubr.bf16.gmra.mrb[0].mxu0 %v510
      %v694 = vpop.f32.mrb[0].mxu0
      %v695 = vadd.f32 0.0, %v694
      %v696 = vpop.f32.mrb[0].mxu0
      %v697 = vpop.f32.mrb[0].mxu0
      %v698 = vadd.f32 0.0, %v697
      %v699 = vpop.f32.mrb[0].mxu0
      %700 = vmatprep.mubr.bf16.mxu0 0
      %701 = vmatmul.mubr.bf16.gmra.mrb[0].mxu0 %v511
      %v702 = vpop.f32.mrb[0].mxu0
      %v703 = vadd.f32 0.0, %v702
      %v704 = vpop.f32.mrb[0].mxu0
      %v705 = vpop.f32.mrb[0].mxu0
      %v706 = vadd.f32 0.0, %v705
      %v707 = vpop.f32.mrb[0].mxu0
      %708 = vmatprep.mubr.bf16.mxu0 0
      %709 = vmatmul.mubr.bf16.gmra.mrb[0].mxu0 %v512
      %v710 = vpop.f32.mrb[0].mxu0
      %v711 = vadd.f32 0.0, %v710
      %v712 = vpop.f32.mrb[0].mxu0
      %v713 = vpop.f32.mrb[0].mxu0
      %v714 = vadd.f32 0.0, %v713
      %v715 = vpop.f32.mrb[0].mxu0
      %716 = vmatprep.mubr.bf16.mxu0 0
      %717 = vmatmul.mubr.bf16.gmra.mrb[0].mxu0 %v513
      %v718 = vpop.f32.mrb[0].mxu0
      %v719 = vadd.f32 0.0, %v718
      %v720 = vpop.f32.mrb[0].mxu0
      %v721 = vpop.f32.mrb[0].mxu0
      %v722 = vadd.f32 0.0, %v721
      %v723 = vpop.f32.mrb[0].mxu0
      %724 = vmatprep.mubr.bf16.mxu0 0
      %725 = vmatmul.mubr.bf16.gmra.mrb[0].mxu0 %v514
      %v726 = vpop.f32.mrb[0].mxu0
      %v727 = vadd.f32 0.0, %v726
      %v728 = vpop.f32.mrb[0].mxu0
      %v729 = vpop.f32.mrb[0].mxu0
      %v730 = vadd.f32 0.0, %v729
      %v731 = vpop.f32.mrb[0].mxu0
      %732 = vmatprep.mubr.bf16.mxu0 0
      %733 = vmatmul.mubr.bf16.gmra.mrb[0].mxu0 %v515
      %v734 = vpop.f32.mrb[0].mxu0
      %v735 = vadd.f32 0.0, %v734
      %v736 = vpop.f32.mrb[0].mxu0
      %v737 = vpop.f32.mrb[0].mxu0
      %v738 = vadd.f32 0.0, %v737
      %v739 = vpop.f32.mrb[0].mxu0
      %740 = vdwg.mxu0
      %v741 = vadd.f32 %v356, %v615
      %v742 = vadd.f32 %v357, %v618
      %v743 = vadd.f32 %v358, %v623
      %v744 = vadd.f32 %v359, %v626
      %v745 = vadd.f32 %v360, %v631
      %v746 = vadd.f32 %v361, %v634
      %v747 = vadd.f32 %v362, %v639
      %v748 = vadd.f32 %v363, %v642
      %v749 = vadd.f32 %v364, %v647
      %v750 = vadd.f32 %v365, %v650
      %v751 = vadd.f32 %v366, %v655
      %v752 = vadd.f32 %v367, %v658
      %v753 = vadd.f32 %v368, %v663
      %v754 = vadd.f32 %v369, %v666
      %v755 = vadd.f32 %v370, %v671
      %v756 = vadd.f32 %v371, %v674
      %v757 = vadd.f32 %v372, %v679
      %v758 = vadd.f32 %v373, %v682
      %v759 = vadd.f32 %v374, %v687
      %v760 = vadd.f32 %v375, %v690
      %v761 = vadd.f32 %v376, %v695
      %v762 = vadd.f32 %v377, %v698
      %v763 = vadd.f32 %v378, %v703
      %v764 = vadd.f32 %v379, %v706
      %v765 = vadd.f32 %v380, %v711
      %v766 = vadd.f32 %v381, %v714
      %v767 = vadd.f32 %v382, %v719
      %v768 = vadd.f32 %v383, %v722
      %v769 = vadd.f32 %v384, %v727
      %v770 = vadd.f32 %v385, %v730
      %v771 = vadd.f32 %v386, %v735
      %v772 = vadd.f32 %v387, %v738
      %773 = vst [vmem:[#allocation2] sm:$0xff] %v741
      %774 = vst [vmem:[#allocation2 + $0x8] sm:$0xff] %v742
      %775 = vst [vmem:[#allocation2 + $0x10] sm:$0xff] %v743
      %776 = vst [vmem:[#allocation2 + $0x18] sm:$0xff] %v744
      %777 = vst [vmem:[#allocation2 + $0x20] sm:$0xff] %v745
      %778 = vst [vmem:[#allocation2 + $0x28] sm:$0xff] %v746
      %779 = vst [vmem:[#allocation2 + $0x30] sm:$0xff] %v747
      %780 = vst [vmem:[#allocation2 + $0x38] sm:$0xff] %v748
      %781 = vst [vmem:[#allocation2 + $0x40] sm:$0xff] %v749
      %782 = vst [vmem:[#allocation2 + $0x48] sm:$0xff] %v750
      %783 = vst [vmem:[#allocation2 + $0x50] sm:$0xff] %v751
      %784 = vst [vmem:[#allocation2 + $0x58] sm:$0xff] %v752
      %785 = vst [vmem:[#allocation2 + $0x60] sm:$0xff] %v753
      %786 = vst [vmem:[#allocation2 + $0x68] sm:$0xff] %v754
      %787 = vst [vmem:[#allocation2 + $0x70] sm:$0xff] %v755
      %788 = vst [vmem:[#allocation2 + $0x78] sm:$0xff] %v756
      %789 = vst [vmem:[#allocation2 + $0x80] sm:$0xff] %v757
      %790 = vst [vmem:[#allocation2 + $0x88] sm:$0xff] %v758
      %791 = vst [vmem:[#allocation2 + $0x90] sm:$0xff] %v759
      %792 = vst [vmem:[#allocation2 + $0x98] sm:$0xff] %v760
      %793 = vst [vmem:[#allocation2 + $0xa0] sm:$0xff] %v761
      %794 = vst [vmem:[#allocation2 + $0xa8] sm:$0xff] %v762
      %795 = vst [vmem:[#allocation2 + $0xb0] sm:$0xff] %v763
      %796 = vst [vmem:[#allocation2 + $0xb8] sm:$0xff] %v764
      %797 = vst [vmem:[#allocation2 + $0xc0] sm:$0xff] %v765
      %798 = vst [vmem:[#allocation2 + $0xc8] sm:$0xff] %v766
      %799 = vst [vmem:[#allocation2 + $0xd0] sm:$0xff] %v767
      %800 = vst [vmem:[#allocation2 + $0xd8] sm:$0xff] %v768
      %801 = vst [vmem:[#allocation2 + $0xe0] sm:$0xff] %v769
      %802 = vst [vmem:[#allocation2 + $0xe8] sm:$0xff] %v770
      %803 = vst [vmem:[#allocation2 + $0xf0] sm:$0xff] %v771
      %804 = vst [vmem:[#allocation2 + $0xf8] sm:$0xff] %v772
      // Predicated region
      $region41: #{_lambda_.10} parent=35 // pred_check
        %p805 = pneg %p320
      $region42: #{_lambda_.10} parent=35 // pred_check_branch
        %807 = sbr.rel (%p805) target = $region44
      $region43: #{_lambda_.10} parent=35 // pred_region
        %v808 = vld [vmem:[#allocation2] sm:$0xff]
        %v809 = vld [vmem:[#allocation2 + $0x8] sm:$0xff]
        %v810 = vld [vmem:[#allocation2 + $0x10] sm:$0xff]
        %v811 = vld [vmem:[#allocation2 + $0x18] sm:$0xff]
        %v812 = vld [vmem:[#allocation2 + $0x20] sm:$0xff]
        %v813 = vld [vmem:[#allocation2 + $0x28] sm:$0xff]
        %v814 = vld [vmem:[#allocation2 + $0x30] sm:$0xff]
        %v815 = vld [vmem:[#allocation2 + $0x38] sm:$0xff]
        %v816 = vld [vmem:[#allocation2 + $0x40] sm:$0xff]
        %v817 = vld [vmem:[#allocation2 + $0x48] sm:$0xff]
        %v818 = vld [vmem:[#allocation2 + $0x50] sm:$0xff]
        %v819 = vld [vmem:[#allocation2 + $0x58] sm:$0xff]
        %v820 = vld [vmem:[#allocation2 + $0x60] sm:$0xff]
        %v821 = vld [vmem:[#allocation2 + $0x68] sm:$0xff]
        %v822 = vld [vmem:[#allocation2 + $0x70] sm:$0xff]
        %v823 = vld [vmem:[#allocation2 + $0x78] sm:$0xff]
        %v824 = vld [vmem:[#allocation2 + $0x80] sm:$0xff]
        %v825 = vld [vmem:[#allocation2 + $0x88] sm:$0xff]
        %v826 = vld [vmem:[#allocation2 + $0x90] sm:$0xff]
        %v827 = vld [vmem:[#allocation2 + $0x98] sm:$0xff]
        %v828 = vld [vmem:[#allocation2 + $0xa0] sm:$0xff]
        %v829 = vld [vmem:[#allocation2 + $0xa8] sm:$0xff]
        %v830 = vld [vmem:[#allocation2 + $0xb0] sm:$0xff]
        %v831 = vld [vmem:[#allocation2 + $0xb8] sm:$0xff]
        %v832 = vld [vmem:[#allocation2 + $0xc0] sm:$0xff]
        %v833 = vld [vmem:[#allocation2 + $0xc8] sm:$0xff]
        %v834 = vld [vmem:[#allocation2 + $0xd0] sm:$0xff]
        %v835 = vld [vmem:[#allocation2 + $0xd8] sm:$0xff]
        %v836 = vld [vmem:[#allocation2 + $0xe0] sm:$0xff]
        %v837 = vld [vmem:[#allocation2 + $0xe8] sm:$0xff]
        %v838 = vld [vmem:[#allocation2 + $0xf0] sm:$0xff]
        %v839 = vld [vmem:[#allocation2 + $0xf8] sm:$0xff]
        %v840 = vld [vmem:[%s300] sm:$0x1]
        %v842 = vlaneseq
        %v843 = vshrl.u32 %v842, 7
        %v844 = vsub.s32 0, %v843
        %v845 = vrot.slane %v840, %v844
        %v847 = vadd.f32 %v808, %v845
        %v848 = vadd.f32 %v809, %v845
        %v849 = vadd.f32 %v810, %v845
        %v850 = vadd.f32 %v811, %v845
        %v851 = vadd.f32 %v812, %v845
        %v852 = vadd.f32 %v813, %v845
        %v853 = vadd.f32 %v814, %v845
        %v854 = vadd.f32 %v815, %v845
        %v855 = vadd.f32 %v816, %v845
        %v856 = vadd.f32 %v817, %v845
        %v857 = vadd.f32 %v818, %v845
        %v858 = vadd.f32 %v819, %v845
        %v859 = vadd.f32 %v820, %v845
        %v860 = vadd.f32 %v821, %v845
        %v861 = vadd.f32 %v822, %v845
        %v862 = vadd.f32 %v823, %v845
        %v863 = vadd.f32 %v824, %v845
        %v864 = vadd.f32 %v825, %v845
        %v865 = vadd.f32 %v826, %v845
        %v866 = vadd.f32 %v827, %v845
        %v867 = vadd.f32 %v828, %v845
        %v868 = vadd.f32 %v829, %v845
        %v869 = vadd.f32 %v830, %v845
        %v870 = vadd.f32 %v831, %v845
        %v871 = vadd.f32 %v832, %v845
        %v872 = vadd.f32 %v833, %v845
        %v873 = vadd.f32 %v834, %v845
        %v874 = vadd.f32 %v835, %v845
        %v875 = vadd.f32 %v836, %v845
        %v876 = vadd.f32 %v837, %v845
        %v877 = vadd.f32 %v838, %v845
        %v878 = vadd.f32 %v839, %v845
        %v879 = vld [vmem:[%s308] sm:$0xff]
        %v880 = vld [vmem:[%s308 + $0x8] sm:$0xff]
        %v881 = vld [vmem:[%s308 + $0x10] sm:$0xff]
        %v882 = vld [vmem:[%s308 + $0x18] sm:$0xff]
        %v883 = vld [vmem:[%s308 + $0x20] sm:$0xff]
        %v884 = vld [vmem:[%s308 + $0x28] sm:$0xff]
        %v885 = vld [vmem:[%s308 + $0x30] sm:$0xff]
        %v886 = vld [vmem:[%s308 + $0x38] sm:$0xff]
        %v887 = vld [vmem:[%s308 + $0x40] sm:$0xff]
        %v888 = vld [vmem:[%s308 + $0x48] sm:$0xff]
        %v889 = vld [vmem:[%s308 + $0x50] sm:$0xff]
        %v890 = vld [vmem:[%s308 + $0x58] sm:$0xff]
        %v891 = vld [vmem:[%s308 + $0x60] sm:$0xff]
        %v892 = vld [vmem:[%s308 + $0x68] sm:$0xff]
        %v893 = vld [vmem:[%s308 + $0x70] sm:$0xff]
        %v894 = vld [vmem:[%s308 + $0x78] sm:$0xff]
        %v895 = vld [vmem:[%s308 + $0x80] sm:$0xff]
        %v896 = vld [vmem:[%s308 + $0x88] sm:$0xff]
        %v897 = vld [vmem:[%s308 + $0x90] sm:$0xff]
        %v898 = vld [vmem:[%s308 + $0x98] sm:$0xff]
        %v899 = vld [vmem:[%s308 + $0xa0] sm:$0xff]
        %v900 = vld [vmem:[%s308 + $0xa8] sm:$0xff]
        %v901 = vld [vmem:[%s308 + $0xb0] sm:$0xff]
        %v902 = vld [vmem:[%s308 + $0xb8] sm:$0xff]
        %v903 = vld [vmem:[%s308 + $0xc0] sm:$0xff]
        %v904 = vld [vmem:[%s308 + $0xc8] sm:$0xff]
        %v905 = vld [vmem:[%s308 + $0xd0] sm:$0xff]
        %v906 = vld [vmem:[%s308 + $0xd8] sm:$0xff]
        %v907 = vld [vmem:[%s308 + $0xe0] sm:$0xff]
        %v908 = vld [vmem:[%s308 + $0xe8] sm:$0xff]
        %v909 = vld [vmem:[%s308 + $0xf0] sm:$0xff]
        %v910 = vld [vmem:[%s308 + $0xf8] sm:$0xff]
        %v911 = vadd.f32 %v847, %v879
        %v912 = vadd.f32 %v848, %v880
        %v913 = vadd.f32 %v849, %v881
        %v914 = vadd.f32 %v850, %v882
        %v915 = vadd.f32 %v851, %v883
        %v916 = vadd.f32 %v852, %v884
        %v917 = vadd.f32 %v853, %v885
        %v918 = vadd.f32 %v854, %v886
        %v919 = vadd.f32 %v855, %v887
        %v920 = vadd.f32 %v856, %v888
        %v921 = vadd.f32 %v857, %v889
        %v922 = vadd.f32 %v858, %v890
        %v923 = vadd.f32 %v859, %v891
        %v924 = vadd.f32 %v860, %v892
        %v925 = vadd.f32 %v861, %v893
        %v926 = vadd.f32 %v862, %v894
        %v927 = vadd.f32 %v863, %v895
        %v928 = vadd.f32 %v864, %v896
        %v929 = vadd.f32 %v865, %v897
        %v930 = vadd.f32 %v866, %v898
        %v931 = vadd.f32 %v867, %v899
        %v932 = vadd.f32 %v868, %v900
        %v933 = vadd.f32 %v869, %v901
        %v934 = vadd.f32 %v870, %v902
        %v935 = vadd.f32 %v871, %v903
        %v936 = vadd.f32 %v872, %v904
        %v937 = vadd.f32 %v873, %v905
        %v938 = vadd.f32 %v874, %v906
        %v939 = vadd.f32 %v875, %v907
        %v940 = vadd.f32 %v876, %v908
        %v941 = vadd.f32 %v877, %v909
        %v942 = vadd.f32 %v878, %v910
        %v943 = vmax.f32 %v911, 0.0
        %v944 = vmax.f32 %v912, 0.0
        %v945 = vmax.f32 %v913, 0.0
        %v946 = vmax.f32 %v914, 0.0
        %v947 = vmax.f32 %v915, 0.0
        %v948 = vmax.f32 %v916, 0.0
        %v949 = vmax.f32 %v917, 0.0
        %v950 = vmax.f32 %v918, 0.0
        %v951 = vmax.f32 %v919, 0.0
        %v952 = vmax.f32 %v920, 0.0
        %v953 = vmax.f32 %v921, 0.0
        %v954 = vmax.f32 %v922, 0.0
        %v955 = vmax.f32 %v923, 0.0
        %v956 = vmax.f32 %v924, 0.0
        %v957 = vmax.f32 %v925, 0.0
        %v958 = vmax.f32 %v926, 0.0
        %v959 = vmax.f32 %v927, 0.0
        %v960 = vmax.f32 %v928, 0.0
        %v961 = vmax.f32 %v929, 0.0
        %v962 = vmax.f32 %v930, 0.0
        %v963 = vmax.f32 %v931, 0.0
        %v964 = vmax.f32 %v932, 0.0
        %v965 = vmax.f32 %v933, 0.0
        %v966 = vmax.f32 %v934, 0.0
        %v967 = vmax.f32 %v935, 0.0
        %v968 = vmax.f32 %v936, 0.0
        %v969 = vmax.f32 %v937, 0.0
        %v970 = vmax.f32 %v938, 0.0
        %v971 = vmax.f32 %v939, 0.0
        %v972 = vmax.f32 %v940, 0.0
        %v973 = vmax.f32 %v941, 0.0
        %v974 = vmax.f32 %v942, 0.0
        %975 = vst [vmem:[%s317] sm:$0xff] %v943
        %976 = vst [vmem:[%s317 + $0x8] sm:$0xff] %v944
        %977 = vst [vmem:[%s317 + $0x10] sm:$0xff] %v945
        %978 = vst [vmem:[%s317 + $0x18] sm:$0xff] %v946
        %979 = vst [vmem:[%s317 + $0x20] sm:$0xff] %v947
        %980 = vst [vmem:[%s317 + $0x28] sm:$0xff] %v948
        %981 = vst [vmem:[%s317 + $0x30] sm:$0xff] %v949
        %982 = vst [vmem:[%s317 + $0x38] sm:$0xff] %v950
        %983 = vst [vmem:[%s317 + $0x40] sm:$0xff] %v951
        %984 = vst [vmem:[%s317 + $0x48] sm:$0xff] %v952
        %985 = vst [vmem:[%s317 + $0x50] sm:$0xff] %v953
        %986 = vst [vmem:[%s317 + $0x58] sm:$0xff] %v954
        %987 = vst [vmem:[%s317 + $0x60] sm:$0xff] %v955
        %988 = vst [vmem:[%s317 + $0x68] sm:$0xff] %v956
        %989 = vst [vmem:[%s317 + $0x70] sm:$0xff] %v957
        %990 = vst [vmem:[%s317 + $0x78] sm:$0xff] %v958
        %991 = vst [vmem:[%s317 + $0x80] sm:$0xff] %v959
        %992 = vst [vmem:[%s317 + $0x88] sm:$0xff] %v960
        %993 = vst [vmem:[%s317 + $0x90] sm:$0xff] %v961
        %994 = vst [vmem:[%s317 + $0x98] sm:$0xff] %v962
        %995 = vst [vmem:[%s317 + $0xa0] sm:$0xff] %v963
        %996 = vst [vmem:[%s317 + $0xa8] sm:$0xff] %v964
        %997 = vst [vmem:[%s317 + $0xb0] sm:$0xff] %v965
        %998 = vst [vmem:[%s317 + $0xb8] sm:$0xff] %v966
        %999 = vst [vmem:[%s317 + $0xc0] sm:$0xff] %v967
        %1000 = vst [vmem:[%s317 + $0xc8] sm:$0xff] %v968
        %1001 = vst [vmem:[%s317 + $0xd0] sm:$0xff] %v969
        %1002 = vst [vmem:[%s317 + $0xd8] sm:$0xff] %v970
        %1003 = vst [vmem:[%s317 + $0xe0] sm:$0xff] %v971
        %1004 = vst [vmem:[%s317 + $0xe8] sm:$0xff] %v972
        %1005 = vst [vmem:[%s317 + $0xf0] sm:$0xff] %v973
        %1006 = vst [vmem:[%s317 + $0xf8] sm:$0xff] %v974
      $region44: #{_lambda_.10} parent=35 // pred_fallthru
        _
      %s1007 = smul.u32 32, %s20
      %p1008 = scmp.lt.s32.totalorder %s1007, 63
      %s1009 = scalar_select %p1008, %s1007, 63
      %p1010 = scmp.lt.s32.totalorder %s21, 0
      %s1011 = scalar_select %p1010, %s21, 0
      %s1012 = sadd.s32 %s1011, %s1009
      %s1013 = smul.addr %s1012, 8
      %s1014 = scalar_lea.vmem %s4, %s1013
      // Predicated region
      $region45: #{_lambda_.10} parent=35 // pred_check
        %p1015 = pneg %p164
      $region46: #{_lambda_.10} parent=35 // pred_check_branch
        %1017 = sbr.rel (%p1015) target = $region48
      $region47: #{_lambda_.10} parent=35 // pred_region
        %s1018 = smul.u32 32, %s20
      $region48: #{_lambda_.10} parent=35 // pred_fallthru
        _
    $region36: #{_lambda_.10} parent=5 // pred_fallthru
      _
    %p1019 = scmp.le.s32.totalorder 2, %s10
    // Predicated region
    $region49: #{_lambda_.10} parent=5 // pred_check
      %p1020 = pneg %p1019
    $region50: #{_lambda_.10} parent=5 // pred_check_branch
      %1022 = sbr.rel (%p1020) target = $region52
    $region51: #{_lambda_.10} parent=5 // pred_region
      %s1023 = ssub.s32 %s10, 2
      // Predicated region
      $region53: #{_lambda_.10} parent=51 // pred_check
        %p1024 = pneg %p170
      $region54: #{_lambda_.10} parent=51 // pred_check_branch
        %1026 = sbr.rel (%p1024) target = $region56
      $region55: #{_lambda_.10} parent=51 // pred_region
        %s1027 = smul.u32 32, %s23
        %p1028 = scmp.lt.s32.totalorder %s1027, 63
        %s1029 = scalar_select %p1028, %s1027, 63
        %p1030 = scmp.lt.s32.totalorder %s24, 0
        %s1031 = scalar_select %p1030, %s24, 0
        %s1032 = sadd.s32 %s1031, %s1029
        %s1033 = smul.addr %s1032, 8
        %s1034 = scalar_lea.vmem %s4, %s1033
      $region56: #{_lambda_.10} parent=51 // pred_fallthru
        _
    $region52: #{_lambda_.10} parent=5 // pred_fallthru
      _
  $region6: #{_lambda_.10} parent=0 // loop_footer
    %s14 = sadd.s32 1, %s10
  $region7: #{_lambda_.10} parent=0 // loop_footer_branch
    %9 = sbr.rel target = $region3
  $region8: #{_lambda_.10} parent=0 // loop_exit
    _

// kernel: _lambda_.12
$region0: #{_lambda_.12}
  #allocation0 [shape = 'u32[]', space=smem, size = 0x4, offset = 0x4, fixed_abs, tag = 'smem constant byte address 0x4 - core index']
  #allocation1 [shape = 'u32[144,128]{1,0:T(1,128)}', space=vmem, size = 0x12000, scoped, tag = 'internal scratch']
  #allocation2 [shape = 'f32[16,128]{1,0:T(8,128)}', space=vmem, size = 0x2000, scoped, tag = 'scratch operand']
  %s0 = inlined_call_operand.vmem [shape: bf16[16,128], index: 0, kind: input, shape index: {}]
  %s1 = inlined_call_operand.vmem [shape: bf16[128,128], index: 1, kind: input, shape index: {}]
  %s2 = inlined_call_operand.vmem [shape: f32[1,128], index: 2, kind: input, shape index: {}]
  %s3 = inlined_call_operand.vmem [shape: f32[16,128], index: 3, kind: output, shape index: {}]
  %s4 = sld [smem:[#allocation0]]
  $region30: #{_lambda_.12} parent=0
    _
  %s6 = ssub.s32 1, %s4
  %s7 = scalar_select 0, %s6, %s4
  // Predicated region
  $region2: #{_lambda_.12} parent=0 // pred_check
    _
  $region3: #{_lambda_.12} parent=0 // pred_check_branch
    %9 = sbr.rel (0) target = $region5
  $region4: #{_lambda_.12} parent=0 // pred_region
    _
  $region5: #{_lambda_.12} parent=0 // pred_fallthru
    _
  // Predicated region
  $region6: #{_lambda_.12} parent=0 // pred_check
    _
  $region7: #{_lambda_.12} parent=0 // pred_check_branch
    %11 = sbr.rel (0) target = $region9
  $region8: #{_lambda_.12} parent=0 // pred_region
    _
  $region9: #{_lambda_.12} parent=0 // pred_fallthru
    _
  // Predicated region
  $region10: #{_lambda_.12} parent=0 // pred_check
    _
  $region11: #{_lambda_.12} parent=0 // pred_check_branch
    %13 = sbr.rel (0) target = $region13
  $region12: #{_lambda_.12} parent=0 // pred_region
    _
  $region13: #{_lambda_.12} parent=0 // pred_fallthru
    _
  %p15 = scmp.eq.s32.totalorder 0, 0
  // Predicated region
  $region14: #{_lambda_.12} parent=0 // pred_check
    %p16 = pneg %p15
  $region15: #{_lambda_.12} parent=0 // pred_check_branch
    %18 = sbr.rel (%p16) target = $region17
  $region16: #{_lambda_.12} parent=0 // pred_region
    %19 = vst [vmem:[#allocation2] sm:$0xff] 0.0
    %20 = vst [vmem:[#allocation2 + $0x8] sm:$0xff] 0.0
  $region17: #{_lambda_.12} parent=0 // pred_fallthru
    _
  %v21 = vld [vmem:[#allocation2] sm:$0xff]
  %v22 = vld [vmem:[#allocation2 + $0x8] sm:$0xff]
  %v23 = vld [vmem:[%s0] sm:$0xf]
  %v24 = vld [vmem:[%s0 + $0x4] sm:$0xf]
  %v25 = vld [vmem:[%s1] sm:$0xf]
  %v26 = vld [vmem:[%s1 + $0x4] sm:$0xf]
  %v27 = vld [vmem:[%s1 + $0x8] sm:$0xf]
  %v28 = vld [vmem:[%s1 + $0xc] sm:$0xf]
  %v29 = vld [vmem:[%s1 + $0x10] sm:$0xf]
  %v30 = vld [vmem:[%s1 + $0x14] sm:$0xf]
  %v31 = vld [vmem:[%s1 + $0x18] sm:$0xf]
  %v32 = vld [vmem:[%s1 + $0x1c] sm:$0xf]
  %v33 = vld [vmem:[%s1 + $0x20] sm:$0xf]
  %v34 = vld [vmem:[%s1 + $0x24] sm:$0xf]
  %v35 = vld [vmem:[%s1 + $0x28] sm:$0xf]
  %v36 = vld [vmem:[%s1 + $0x2c] sm:$0xf]
  %v37 = vld [vmem:[%s1 + $0x30] sm:$0xf]
  %v38 = vld [vmem:[%s1 + $0x34] sm:$0xf]
  %v39 = vld [vmem:[%s1 + $0x38] sm:$0xf]
  %v40 = vld [vmem:[%s1 + $0x3c] sm:$0xf]
  %v43 = vunpack.c.l.b16 %v23
  %v44 = vunpack.c.l.b16 %v24
  %v45 = vpack.c.b16 %v44, %v43
  %v63 = vunpack.c.l.b16 %v25
  %v64 = vunpack.c.l.b16 %v26
  %v65 = vunpack.c.l.b16 %v27
  %v66 = vunpack.c.l.b16 %v28
  %v67 = vunpack.c.l.b16 %v29
  %v68 = vunpack.c.l.b16 %v30
  %v69 = vunpack.c.l.b16 %v31
  %v70 = vunpack.c.l.b16 %v32
  %v71 = vunpack.c.l.b16 %v33
  %v72 = vunpack.c.l.b16 %v34
  %v73 = vunpack.c.l.b16 %v35
  %v74 = vunpack.c.l.b16 %v36
  %v75 = vunpack.c.l.b16 %v37
  %v76 = vunpack.c.l.b16 %v38
  %v77 = vunpack.c.l.b16 %v39
  %v78 = vunpack.c.l.b16 %v40
  %v79 = vpack.c.b16 %v64, %v63
  %v80 = vpack.c.b16 %v66, %v65
  %v81 = vpack.c.b16 %v68, %v67
  %v82 = vpack.c.b16 %v70, %v69
  %v83 = vpack.c.b16 %v72, %v71
  %v84 = vpack.c.b16 %v74, %v73
  %v85 = vpack.c.b16 %v76, %v75
  %v86 = vpack.c.b16 %v78, %v77
  %95 = vmatprep.subr.bf16.mxu0 0
  %96 = vmatpush1.bf16.msra.mxu0 %v79
  %97 = vmatprep.subr.bf16.mxu0 0
  %98 = vmatpush1.bf16.msra.mxu0 %v80
  %99 = vmatprep.subr.bf16.mxu0 0
  %100 = vmatpush1.bf16.msra.mxu0 %v81
  %101 = vmatprep.subr.bf16.mxu0 0
  %102 = vmatpush1.bf16.msra.mxu0 %v82
  %103 = vmatprep.subr.bf16.mxu0 0
  %104 = vmatpush1.bf16.msra.mxu0 %v83
  %105 = vmatprep.subr.bf16.mxu0 0
  %106 = vmatpush1.bf16.msra.mxu0 %v84
  %107 = vmatprep.subr.bf16.mxu0 0
  %108 = vmatpush1.bf16.msra.mxu0 %v85
  %109 = vmatprep.subr.bf16.mxu0 0
  %110 = vmatpush1.bf16.msra.mxu0 %v86
  %111 = vmatprep.subr.bf16.mxu0 0
  %112 = vmatpush1.bf16.msra.mxu0 0
  %113 = vmatprep.subr.bf16.mxu0 0
  %114 = vmatpush1.bf16.msra.mxu0 0
  %115 = vmatprep.subr.bf16.mxu0 0
  %116 = vmatpush1.bf16.msra.mxu0 0
  %117 = vmatprep.subr.bf16.mxu0 0
  %118 = vmatpush1.bf16.msra.mxu0 0
  %119 = vmatprep.subr.bf16.mxu0 0
  %120 = vmatpush1.bf16.msra.mxu0 0
  %121 = vmatprep.subr.bf16.mxu0 0
  %122 = vmatpush1.bf16.msra.mxu0 0
  %123 = vmatprep.subr.bf16.mxu0 0
  %124 = vmatpush1.bf16.msra.mxu0 0
  %125 = vmatprep.subr.bf16.mxu0 0
  %126 = vmatpush1.bf16.msra.mxu0 0
  %127 = vmatprep.mubr.bf16.mxu0 0
  %128 = vmatmul.mubr.bf16.gmra.mrb[0].mxu0 %v45
  %v129 = vpop.f32.mrb[0].mxu0
  %v130 = vadd.f32 0.0, %v129
  %v131 = vpop.f32.mrb[0].mxu0
  %v132 = vpop.f32.mrb[0].mxu0
  %v133 = vadd.f32 0.0, %v132
  %v134 = vpop.f32.mrb[0].mxu0
  %135 = vdwg.mxu0
  %v136 = vadd.f32 %v21, %v130
  %v137 = vadd.f32 %v22, %v133
  %138 = vst [vmem:[#allocation2] sm:$0xff] %v136
  %139 = vst [vmem:[#allocation2 + $0x8] sm:$0xff] %v137
  // Predicated region
  $region18: #{_lambda_.12} parent=0 // pred_check
    %p140 = pneg %p15
  $region19: #{_lambda_.12} parent=0 // pred_check_branch
    %142 = sbr.rel (%p140) target = $region21
  $region20: #{_lambda_.12} parent=0 // pred_region
    %v143 = vld [vmem:[#allocation2] sm:$0xff]
    %v144 = vld [vmem:[#allocation2 + $0x8] sm:$0xff]
    %v145 = vld [vmem:[%s2] sm:$0x1]
    %v147 = vlaneseq
    %v148 = vshrl.u32 %v147, 7
    %v149 = vsub.s32 0, %v148
    %v150 = vrot.slane %v145, %v149
    %v152 = vadd.f32 %v143, %v150
    %v153 = vadd.f32 %v144, %v150
    %154 = vst [vmem:[%s3] sm:$0xff] %v152
    %155 = vst [vmem:[%s3 + $0x8] sm:$0xff] %v153
  $region21: #{_lambda_.12} parent=0 // pred_fallthru
    _
  // Predicated region
  $region22: #{_lambda_.12} parent=0 // pred_check
    _
  $region23: #{_lambda_.12} parent=0 // pred_check_branch
    %157 = sbr.rel (0) target = $region25
  $region24: #{_lambda_.12} parent=0 // pred_region
    _
  $region25: #{_lambda_.12} parent=0 // pred_fallthru
    _
  // Predicated region
  $region26: #{_lambda_.12} parent=0 // pred_check
    _
  $region27: #{_lambda_.12} parent=0 // pred_check_branch
    %159 = sbr.rel (0) target = $region29
  $region28: #{_lambda_.12} parent=0 // pred_region
    _
  $region29: #{_lambda_.12} parent=0 // pred_fallthru
    _

// kernel: mul.13
$region0: #{mul.13}
  %s0 = inlined_call_operand.vmem [shape: f32[2,256], index: 0, kind: input, shape index: {}]
  %s1 = inlined_call_operand.vmem [shape: f32[2,16,16], index: 1, kind: output, shape index: {}]
  $region1: #{mul.13} parent=0
    #allocation0 [shape = 'u8[8192]{0}', space=vmem, size = 0x2000, scoped, tag = 'scoped mem for input reshape']
    %s3 = sshllo.u32 0, 2
    %s4 = scalar_lea.vmem %s0, 2
    %v5 = vld [vmem:[%s4] sm:%s3]
    %s6 = scalar_lea.vmem [#allocation0], 8
    %7 = vst [vmem:[%s6] sm:%s3] %v5
    %v8 = vld [vmem:[%s0] sm:%s3]
    %9 = vst [vmem:[#allocation0] sm:%s3] %v8
    %v10 = vld [vmem:[#allocation0] sm:$0x3]
    %vm11 = vcmask 130048
    %12 = vst.msk [vmem:[%s1] ss:$16 sm:$0x3] %vm11, %v10
    %s13 = scalar_lea.vmem [#allocation0], 8
    %v14 = vld [vmem:[%s13] sm:$0x3]
    %vm15 = vcmask 130048
    %s16 = scalar_lea.vmem %s1, 8
    %17 = vst.msk [vmem:[%s16] ss:$16 sm:$0x3] %vm15, %v14
    %v18 = vld.sshfl [vmem:[#allocation0] sm:$0xff pattern:$0x99999180]
    %19 = vrot.lane.b32.xlu0 %v18, 112
    %v20 = vpop.permute.xlu0 %19
    %vm21 = vcmask 130048
    %s22 = scalar_lea.vmem %s1, 1
    %23 = vst.msk [vmem:[%s22] ss:$8 sm:$0xf] %vm21, %v20
    %v24 = vld.sshfl [vmem:[#allocation0] sm:$0xff pattern:$0x99999180]
    %25 = vrot.lane.b32.xlu0 %v24, 96
    %v26 = vpop.permute.xlu0 %25
    %vm27 = vcmask 130048
    %s28 = scalar_lea.vmem %s1, 2
    %29 = vst.msk [vmem:[%s28] ss:$8 sm:$0xf] %vm27, %v26
    %v30 = vld.sshfl [vmem:[#allocation0] sm:$0xff pattern:$0x99999180]
    %31 = vrot.lane.b32.xlu0 %v30, 80
    %v32 = vpop.permute.xlu0 %31
    %vm33 = vcmask 130048
    %s34 = scalar_lea.vmem %s1, 3
    %35 = vst.msk [vmem:[%s34] ss:$8 sm:$0xf] %vm33, %v32
    %v36 = vld.sshfl [vmem:[#allocation0] sm:$0xff pattern:$0x99999180]
    %37 = vrot.lane.b32.xlu0 %v36, 64
    %v38 = vpop.permute.xlu0 %37
    %vm39 = vcmask 130048
    %s40 = scalar_lea.vmem %s1, 4
    %41 = vst.msk [vmem:[%s40] ss:$8 sm:$0xf] %vm39, %v38
    %v42 = vld.sshfl [vmem:[#allocation0] sm:$0xff pattern:$0x99999180]
    %43 = vrot.lane.b32.xlu0 %v42, 48
    %v44 = vpop.permute.xlu0 %43
    %vm45 = vcmask 130048
    %s46 = scalar_lea.vmem %s1, 5
    %47 = vst.msk [vmem:[%s46] ss:$8 sm:$0xf] %vm45, %v44
    %v48 = vld.sshfl [vmem:[#allocation0] sm:$0xff pattern:$0x99999180]
    %49 = vrot.lane.b32.xlu0 %v48, 32
    %v50 = vpop.permute.xlu0 %49
    %vm51 = vcmask 130048
    %s52 = scalar_lea.vmem %s1, 6
    %53 = vst.msk [vmem:[%s52] ss:$8 sm:$0xf] %vm51, %v50
    %v54 = vld.sshfl [vmem:[#allocation0] sm:$0xff pattern:$0x99999180]
    %55 = vrot.lane.b32.xlu0 %v54, 16
    %v56 = vpop.permute.xlu0 %55
    %vm57 = vcmask 130048
    %s58 = scalar_lea.vmem %s1, 7
    %59 = vst.msk [vmem:[%s58] ss:$8 sm:$0xf] %vm57, %v56

// kernel: _lambda_.13
$region0: #{_lambda_.13}
  #allocation0 [shape = 'u32[]', space=smem, size = 0x4, offset = 0x4, fixed_abs, tag = 'smem constant byte address 0x4 - core index']
  #allocation1 [shape = 'u32[144,128]{1,0:T(1,128)}', space=vmem, size = 0x12000, scoped, tag = 'internal scratch']
  #allocation2 [shape = 'f32[1,1]{1,0:T(1,128)S(1)}', space=vmem, size = 0x200, scoped, tag = 'scoped memory for _lambda_.13']
  %s0 = inlined_call_operand.vmem [shape: bf16[2,352,14], index: 0, kind: input, shape index: {}]
  %s1 = inlined_call_operand.vmem [shape: bf16[7,14,1], index: 1, kind: input, shape index: {}]
  %s2 = inlined_call_operand.<no memory space> [shape: f32[1,1], index: 2, kind: input, shape index: {}]
  %s3 = inlined_call_operand.vmem [shape: f32[2,256,1], index: 3, kind: output, shape index: {}]
  %s4 = sld [smem:[#allocation0]]
  $region45: #{_lambda_.13} parent=0
    _
  %s6 = ssub.s32 1, %s4
  %s7 = scalar_select 0, %s6, %s4
  %v8 = vstv %s2
  %9 = vst [vmem:[#allocation2] sm:$0x1] %v8
  loop: start=0, step=1, limit=4
  $region2: #{_lambda_.13} parent=0 // loop_pre_header
    _
  $region3: #{_lambda_.13} parent=0 // loop_header
    %s11 = sphi 0, %s15
    %p12 = scmp.ge.s32.totalorder %s11, 4
    %s21 = sphi 0, %s23
    %s24 = sphi 0, %s21
    %s25 = sphi 0, %s24
    %s41 = sphi 0, %s25
    %s45 = sphi 0, %s45
    %s47 = sphi 0, %s45
    %s48 = sphi 0, %s47
    %s62 = sphi 0, %s48
    %s66 = sphi 0, %s66
    %s68 = sphi 0, %s66
    %s69 = sphi 0, %s68
    %s83 = sphi 0, %s69
    %s89 = sphi 0, %s91
    %s92 = sphi 0, %s89
    %s93 = sphi 0, %s92
    %s109 = sphi 0, %s93
  $region4: #{_lambda_.13} parent=0 // loop_header_branch
    %14 = sbr.rel (%p12) target = $region8
  $region5: #{_lambda_.13} parent=0 // loop_body
    %s16 = ssub.s32 %s11, 1
    %s17 = ssub.s32 %s11, 2
    %s18 = sadd.s32 %s11, 1
    %s19 = ssub.s32 %s11, %s18
    %p20 = scmp.eq.s32.totalorder %s19, 0
    %s22 = sadd.s32 %s21, 1
    %s23 = scalar_select %p20, %s21, %s22
    %p26 = pneg %p20
    %p27 = scmp.eq.s32.totalorder %s11, 1
    %p28 = por %p26, %p27
    %p29 = scmp.ne.s32.totalorder %s21, %s24
    %p30 = scmp.eq.s32.totalorder %s11, 0
    %p31 = por %p29, %p30
    %p32 = scmp.ne.s32.totalorder %s21, %s24
    %p33 = scmp.eq.s32.totalorder %s16, 1
    %p34 = por %p32, %p33
    %p35 = scmp.ne.s32.totalorder %s24, %s25
    %p36 = scmp.eq.s32.totalorder %s16, 0
    %p37 = por %p35, %p36
    %p38 = scmp.ne.s32.totalorder %s24, %s25
    %p39 = scmp.eq.s32.totalorder %s17, 1
    %p40 = por %p38, %p39
    %p42 = scmp.ne.s32.totalorder %s25, %s41
    %p43 = scmp.eq.s32.totalorder %s17, 0
    %p44 = por %p42, %p43
    %s46 = sadd.s32 %s45, 1
    %p49 = scmp.eq.s32.totalorder %s11, 1
    %p50 = scmp.ne.s32.totalorder %s45, %s47
    %p51 = scmp.eq.s32.totalorder %s11, 0
    %p52 = por %p50, %p51
    %p53 = scmp.ne.s32.totalorder %s45, %s47
    %p54 = scmp.eq.s32.totalorder %s16, 1
    %p55 = por %p53, %p54
    %p56 = scmp.ne.s32.totalorder %s47, %s48
    %p57 = scmp.eq.s32.totalorder %s16, 0
    %p58 = por %p56, %p57
    %p59 = scmp.ne.s32.totalorder %s47, %s48
    %p60 = scmp.eq.s32.totalorder %s17, 1
    %p61 = por %p59, %p60
    %p63 = scmp.ne.s32.totalorder %s48, %s62
    %p64 = scmp.eq.s32.totalorder %s17, 0
    %p65 = por %p63, %p64
    %s67 = sadd.s32 %s66, 1
    %p70 = scmp.eq.s32.totalorder %s11, 1
    %p71 = scmp.ne.s32.totalorder %s66, %s68
    %p72 = scmp.eq.s32.totalorder %s11, 0
    %p73 = por %p71, %p72
    %p74 = scmp.ne.s32.totalorder %s66, %s68
    %p75 = scmp.eq.s32.totalorder %s16, 1
    %p76 = por %p74, %p75
    %p77 = scmp.ne.s32.totalorder %s68, %s69
    %p78 = scmp.eq.s32.totalorder %s16, 0
    %p79 = por %p77, %p78
    %p80 = scmp.ne.s32.totalorder %s68, %s69
    %p81 = scmp.eq.s32.totalorder %s17, 1
    %p82 = por %p80, %p81
    %p84 = scmp.ne.s32.totalorder %s69, %s83
    %p85 = scmp.eq.s32.totalorder %s17, 0
    %p86 = por %p84, %p85
    %s87 = ssub.s32 %s11, %s18
    %p88 = scmp.eq.s32.totalorder %s87, 0
    %s90 = sadd.s32 %s89, 1
    %s91 = scalar_select %p88, %s89, %s90
    %p94 = pneg %p88
    %p95 = scmp.eq.s32.totalorder %s11, 1
    %p96 = por %p94, %p95
    %p97 = scmp.ne.s32.totalorder %s89, %s92
    %p98 = scmp.eq.s32.totalorder %s11, 0
    %p99 = por %p97, %p98
    %p100 = scmp.ne.s32.totalorder %s89, %s92
    %p101 = scmp.eq.s32.totalorder %s16, 1
    %p102 = por %p100, %p101
    %p103 = scmp.ne.s32.totalorder %s92, %s93
    %p104 = scmp.eq.s32.totalorder %s16, 0
    %p105 = por %p103, %p104
    %p106 = scmp.ne.s32.totalorder %s92, %s93
    %p107 = scmp.eq.s32.totalorder %s17, 1
    %p108 = por %p106, %p107
    %p110 = scmp.ne.s32.totalorder %s93, %s109
    %p111 = scmp.eq.s32.totalorder %s17, 0
    %p112 = por %p110, %p111
    %p113 = scmp.le.s32.totalorder 1, %s11
    %p114 = scmp.lt.s32.totalorder %s11, 3
    %p115 = pnand %p113, %p114
    %p116 = pneg %p115
    // Predicated region
    $region9: #{_lambda_.13} parent=5 // pred_check
      _
    $region10: #{_lambda_.13} parent=5 // pred_check_branch
      %118 = sbr.rel (%p115) target = $region12
    $region11: #{_lambda_.13} parent=5 // pred_region
      %s119 = ssub.s32 %s11, 1
      // Predicated region
      $region13: #{_lambda_.13} parent=11 // pred_check
        %p120 = pneg %p58
      $region14: #{_lambda_.13} parent=11 // pred_check_branch
        %122 = sbr.rel (%p120) target = $region16
      $region15: #{_lambda_.13} parent=11 // pred_region
        _
      $region16: #{_lambda_.13} parent=11 // pred_fallthru
        _
      // Predicated region
      $region17: #{_lambda_.13} parent=11 // pred_check
        %p123 = pneg %p79
      $region18: #{_lambda_.13} parent=11 // pred_check_branch
        %125 = sbr.rel (%p123) target = $region20
      $region19: #{_lambda_.13} parent=11 // pred_region
        _
      $region20: #{_lambda_.13} parent=11 // pred_fallthru
        _
    $region12: #{_lambda_.13} parent=5 // pred_fallthru
      _
    %p126 = scmp.lt.s32.totalorder %s11, 2
    // Predicated region
    $region21: #{_lambda_.13} parent=5 // pred_check
      %p127 = pneg %p126
    $region22: #{_lambda_.13} parent=5 // pred_check_branch
      %129 = sbr.rel (%p127) target = $region24
    $region23: #{_lambda_.13} parent=5 // pred_region
      // Predicated region
      $region25: #{_lambda_.13} parent=23 // pred_check
        %p130 = pneg %p31
      $region26: #{_lambda_.13} parent=23 // pred_check_branch
        %132 = sbr.rel (%p130) target = $region28
      $region27: #{_lambda_.13} parent=23 // pred_region
        %p133 = scmp.lt.s32.totalorder %s11, 1
        %s134 = scalar_select %p133, %s11, 1
        %s135 = smul.addr %s134, 44
        %s136 = smul.addr %s135, 4
        %s137 = scalar_lea.vmem %s0, %s136
      $region28: #{_lambda_.13} parent=23 // pred_fallthru
        _
    $region24: #{_lambda_.13} parent=5 // pred_fallthru
      _
    %p138 = scmp.le.s32.totalorder 1, %s11
    %p139 = scmp.lt.s32.totalorder %s11, 3
    %p140 = pnand %p138, %p139
    %p141 = pneg %p140
    // Predicated region
    $region29: #{_lambda_.13} parent=5 // pred_check
      _
    $region30: #{_lambda_.13} parent=5 // pred_check_branch
      %143 = sbr.rel (%p140) target = $region32
    $region31: #{_lambda_.13} parent=5 // pred_region
      %s144 = ssub.s32 %s11, 1
      %p145 = scmp.lt.s32.totalorder %s16, 1
      %s146 = scalar_select %p145, %s16, 1
      %s147 = smul.addr %s146, 44
      %s148 = smul.addr %s147, 4
      %s149 = scalar_lea.vmem %s0, %s148
      %p150 = pneg %p37
      %p151 = pneg %p34
      %p152 = pneg %p58
      %p153 = pneg %p55
      %p154 = pneg %p79
      %p155 = pneg %p76
      %p156 = pneg %p105
      %p157 = pneg %p102
      %p158 = scmp.lt.s32.totalorder %s16, 1
      %s159 = scalar_select %p158, %s16, 1
      %s160 = smul.addr %s159, 32
      %s161 = smul.addr %s160, 8
      %s162 = scalar_lea.vmem %s3, %s161
      %p163 = scmp.lt.s32.totalorder %s16, 1
      %s164 = scalar_select %p163, %s16, 1
      %s165 = smul.addr %s164, 44
      %s166 = smul.addr %s165, 4
      %s167 = scalar_lea.vmem %s0, %s166
      %p168 = scmp.lt.s32.totalorder %s16, 1
      %s169 = scalar_select %p168, %s16, 1
      %s170 = smul.addr %s169, 32
      %s171 = smul.addr %s170, 8
      %s172 = scalar_lea.vmem %s3, %s171
      %v174 = vld [vmem:[%s167] sm:$0xf]
      %v175 = vld [vmem:[%s167 + $0x4] sm:$0xf]
      %v176 = vld [vmem:[%s167 + $0x8] sm:$0xf]
      %v177 = vld [vmem:[%s167 + $0xc] sm:$0xf]
      %v178 = vld [vmem:[%s167 + $0x10] sm:$0xf]
      %v179 = vld [vmem:[%s167 + $0x14] sm:$0xf]
      %v180 = vld [vmem:[%s167 + $0x18] sm:$0xf]
      %v181 = vld [vmem:[%s167 + $0x1c] sm:$0xf]
      %v182 = vld [vmem:[%s167 + $0x20] sm:$0xf]
      %v183 = vld [vmem:[%s167 + $0x24] sm:$0xf]
      %v184 = vld [vmem:[%s167 + $0x28] sm:$0xf]
      %v185 = vld [vmem:[%s167 + $0x2c] sm:$0xf]
      %v186 = vld [vmem:[%s167 + $0x30] sm:$0xf]
      %v187 = vld [vmem:[%s167 + $0x34] sm:$0xf]
      %v188 = vld [vmem:[%s167 + $0x38] sm:$0xf]
      %v189 = vld [vmem:[%s167 + $0x3c] sm:$0xf]
      %v190 = vld [vmem:[%s167 + $0x40] sm:$0xf]
      %v191 = vld [vmem:[%s167 + $0x44] sm:$0xf]
      %v192 = vld [vmem:[%s167 + $0x48] sm:$0xf]
      %v193 = vld [vmem:[%s167 + $0x4c] sm:$0xf]
      %v194 = vld [vmem:[%s167 + $0x50] sm:$0xf]
      %v195 = vld [vmem:[%s167 + $0x54] sm:$0xf]
      %v196 = vld [vmem:[%s167 + $0x58] sm:$0xf]
      %v197 = vld [vmem:[%s167 + $0x5c] sm:$0xf]
      %v198 = vld [vmem:[%s167 + $0x60] sm:$0xf]
      %v199 = vld [vmem:[%s167 + $0x64] sm:$0xf]
      %v200 = vld [vmem:[%s167 + $0x68] sm:$0xf]
      %v201 = vld [vmem:[%s167 + $0x6c] sm:$0xf]
      %v202 = vld [vmem:[%s167 + $0x70] sm:$0xf]
      %v203 = vld [vmem:[%s167 + $0x74] sm:$0xf]
      %v204 = vld [vmem:[%s167 + $0x78] sm:$0xf]
      %v205 = vld [vmem:[%s167 + $0x7c] sm:$0xf]
      %v206 = vld [vmem:[%s1] sm:$0xf]
      %v207 = vld [vmem:[%s1 + $0x4] sm:$0x7]
      %v208 = vld [vmem:[%s167 + $0x80] sm:$0xf]
      %v209 = vld [vmem:[%s167 + $0x84] sm:$0xf]
      %s210 = scalar_lea.vmem %s1, 8
      %v211 = vld [vmem:[%s210] sm:$0xf]
      %v212 = vld [vmem:[%s210 + $0x4] sm:$0x7]
      %v245 = vunpack.c.l.b16 %v176
      %v246 = vunpack.c.l.b16 %v177
      %v247 = vunpack.c.l.b16 %v178
      %v248 = vunpack.c.l.b16 %v179
      %v249 = vunpack.c.l.b16 %v180
      %v250 = vunpack.c.l.b16 %v181
      %v251 = vunpack.c.l.b16 %v182
      %v252 = vunpack.c.l.b16 %v183
      %v253 = vunpack.c.l.b16 %v184
      %v254 = vunpack.c.l.b16 %v185
      %v255 = vunpack.c.l.b16 %v186
      %v256 = vunpack.c.l.b16 %v187
      %v257 = vunpack.c.l.b16 %v188
      %v258 = vunpack.c.l.b16 %v189
      %v259 = vunpack.c.l.b16 %v190
      %v260 = vunpack.c.l.b16 %v191
      %v261 = vunpack.c.l.b16 %v192
      %v262 = vunpack.c.l.b16 %v193
      %v263 = vunpack.c.l.b16 %v194
      %v264 = vunpack.c.l.b16 %v195
      %v265 = vunpack.c.l.b16 %v196
      %v266 = vunpack.c.l.b16 %v197
      %v267 = vunpack.c.l.b16 %v198
      %v268 = vunpack.c.l.b16 %v199
      %v269 = vunpack.c.l.b16 %v200
      %v270 = vunpack.c.l.b16 %v201
      %v271 = vunpack.c.l.b16 %v202
      %v272 = vunpack.c.l.b16 %v203
      %v273 = vunpack.c.l.b16 %v204
      %v274 = vunpack.c.l.b16 %v205
      %v275 = vunpack.c.l.b16 %v208
      %v276 = vunpack.c.l.b16 %v209
      %v277 = vpack.c.b16 %v246, %v245
      %v278 = vpack.c.b16 %v248, %v247
      %v279 = vpack.c.b16 %v250, %v249
      %v280 = vpack.c.b16 %v252, %v251
      %v281 = vpack.c.b16 %v254, %v253
      %v282 = vpack.c.b16 %v256, %v255
      %v283 = vpack.c.b16 %v258, %v257
      %v284 = vpack.c.b16 %v260, %v259
      %v285 = vpack.c.b16 %v262, %v261
      %v286 = vpack.c.b16 %v264, %v263
      %v287 = vpack.c.b16 %v266, %v265
      %v288 = vpack.c.b16 %v268, %v267
      %v289 = vpack.c.b16 %v270, %v269
      %v290 = vpack.c.b16 %v272, %v271
      %v291 = vpack.c.b16 %v274, %v273
      %v292 = vpack.c.b16 %v276, %v275
      %v295 = vunpack.c.l.b16 %v211
      %v296 = vunpack.c.l.b16 %v212
      %v297 = vpack.c.b16 %v296, %v295
      %vm298 = vcmask 113664
      %v300 = vsel %vm298, %v277, 0
      %v303 = vsel %vm298, %v278, 0
      %v306 = vsel %vm298, %v279, 0
      %v309 = vsel %vm298, %v280, 0
      %v312 = vsel %vm298, %v281, 0
      %v315 = vsel %vm298, %v282, 0
      %v318 = vsel %vm298, %v283, 0
      %v321 = vsel %vm298, %v284, 0
      %v324 = vsel %vm298, %v285, 0
      %v327 = vsel %vm298, %v286, 0
      %v330 = vsel %vm298, %v287, 0
      %v333 = vsel %vm298, %v288, 0
      %v336 = vsel %vm298, %v289, 0
      %v339 = vsel %vm298, %v290, 0
      %v342 = vsel %vm298, %v291, 0
      %v345 = vsel %vm298, %v292, 0
      %vm347 = vcmask 1046528
      %v349 = vsel %vm347, %v297, 0
      %351 = vmatprep.subr.bf16.mxu0 0
      %352 = vmatpush1.bf16.msra.mxu0 %v349
      %353 = vmatprep.subr.bf16.mxu0 0
      %354 = vmatpush1.bf16.msra.mxu0 0
      %355 = vmatprep.subr.bf16.mxu0 0
      %356 = vmatpush1.bf16.msra.mxu0 0
      %357 = vmatprep.subr.bf16.mxu0 0
      %358 = vmatpush1.bf16.msra.mxu0 0
      %359 = vmatprep.subr.bf16.mxu0 0
      %360 = vmatpush1.bf16.msra.mxu0 0
      %361 = vmatprep.subr.bf16.mxu0 0
      %362 = vmatpush1.bf16.msra.mxu0 0
      %363 = vmatprep.subr.bf16.mxu0 0
      %364 = vmatpush1.bf16.msra.mxu0 0
      %365 = vmatprep.subr.bf16.mxu0 0
      %366 = vmatpush1.bf16.msra.mxu0 0
      %367 = vmatprep.subr.bf16.mxu0 0
      %368 = vmatpush1.bf16.msra.mxu0 0
      %369 = vmatprep.subr.bf16.mxu0 0
      %370 = vmatpush1.bf16.msra.mxu0 0
      %371 = vmatprep.subr.bf16.mxu0 0
      %372 = vmatpush1.bf16.msra.mxu0 0
      %373 = vmatprep.subr.bf16.mxu0 0
      %374 = vmatpush1.bf16.msra.mxu0 0
      %375 = vmatprep.subr.bf16.mxu0 0
      %376 = vmatpush1.bf16.msra.mxu0 0
      %377 = vmatprep.subr.bf16.mxu0 0
      %378 = vmatpush1.bf16.msra.mxu0 0
      %379 = vmatprep.subr.bf16.mxu0 0
      %380 = vmatpush1.bf16.msra.mxu0 0
      %381 = vmatprep.subr.bf16.mxu0 0
      %382 = vmatpush1.bf16.msra.mxu0 0
      %383 = vmatprep.mubr.bf16.mxu0 0
      %384 = vmatmul.mubr.bf16.gmra.mrb[0].mxu0 %v300
      %v385 = vpop.f32.mrb[0].mxu0
      %v386 = vadd.f32 0.0, %v385
      %v387 = vpop.f32.mrb[0].mxu0
      %v388 = vpop.f32.mrb[0].mxu0
      %v389 = vadd.f32 0.0, %v388
      %v390 = vpop.f32.mrb[0].mxu0
      %391 = vmatprep.mubr.bf16.mxu0 0
      %392 = vmatmul.mubr.bf16.gmra.mrb[0].mxu0 %v303
      %v393 = vpop.f32.mrb[0].mxu0
      %v394 = vadd.f32 0.0, %v393
      %v395 = vpop.f32.mrb[0].mxu0
      %v396 = vpop.f32.mrb[0].mxu0
      %v397 = vadd.f32 0.0, %v396
      %v398 = vpop.f32.mrb[0].mxu0
      %399 = vmatprep.mubr.bf16.mxu0 0
      %400 = vmatmul.mubr.bf16.gmra.mrb[0].mxu0 %v306
      %v401 = vpop.f32.mrb[0].mxu0
      %v402 = vadd.f32 0.0, %v401
      %v403 = vpop.f32.mrb[0].mxu0
      %v404 = vpop.f32.mrb[0].mxu0
      %v405 = vadd.f32 0.0, %v404
      %v406 = vpop.f32.mrb[0].mxu0
      %407 = vmatprep.mubr.bf16.mxu0 0
      %408 = vmatmul.mubr.bf16.gmra.mrb[0].mxu0 %v309
      %v409 = vpop.f32.mrb[0].mxu0
      %v410 = vadd.f32 0.0, %v409
      %v411 = vpop.f32.mrb[0].mxu0
      %v412 = vpop.f32.mrb[0].mxu0
      %v413 = vadd.f32 0.0, %v412
      %v414 = vpop.f32.mrb[0].mxu0
      %415 = vmatprep.mubr.bf16.mxu0 0
      %416 = vmatmul.mubr.bf16.gmra.mrb[0].mxu0 %v312
      %v417 = vpop.f32.mrb[0].mxu0
      %v418 = vadd.f32 0.0, %v417
      %v419 = vpop.f32.mrb[0].mxu0
      %v420 = vpop.f32.mrb[0].mxu0
      %v421 = vadd.f32 0.0, %v420
      %v422 = vpop.f32.mrb[0].mxu0
      %423 = vmatprep.mubr.bf16.mxu0 0
      %424 = vmatmul.mubr.bf16.gmra.mrb[0].mxu0 %v315
      %v425 = vpop.f32.mrb[0].mxu0
      %v426 = vadd.f32 0.0, %v425
      %v427 = vpop.f32.mrb[0].mxu0
      %v428 = vpop.f32.mrb[0].mxu0
      %v429 = vadd.f32 0.0, %v428
      %v430 = vpop.f32.mrb[0].mxu0
      %431 = vmatprep.mubr.bf16.mxu0 0
      %432 = vmatmul.mubr.bf16.gmra.mrb[0].mxu0 %v318
      %v433 = vpop.f32.mrb[0].mxu0
      %v434 = vadd.f32 0.0, %v433
      %v435 = vpop.f32.mrb[0].mxu0
      %v436 = vpop.f32.mrb[0].mxu0
      %v437 = vadd.f32 0.0, %v436
      %v438 = vpop.f32.mrb[0].mxu0
      %439 = vmatprep.mubr.bf16.mxu0 0
      %440 = vmatmul.mubr.bf16.gmra.mrb[0].mxu0 %v321
      %v441 = vpop.f32.mrb[0].mxu0
      %v442 = vadd.f32 0.0, %v441
      %v443 = vpop.f32.mrb[0].mxu0
      %v444 = vpop.f32.mrb[0].mxu0
      %v445 = vadd.f32 0.0, %v444
      %v446 = vpop.f32.mrb[0].mxu0
      %447 = vmatprep.mubr.bf16.mxu0 0
      %448 = vmatmul.mubr.bf16.gmra.mrb[0].mxu0 %v324
      %v449 = vpop.f32.mrb[0].mxu0
      %v450 = vadd.f32 0.0, %v449
      %v451 = vpop.f32.mrb[0].mxu0
      %v452 = vpop.f32.mrb[0].mxu0
      %v453 = vadd.f32 0.0, %v452
      %v454 = vpop.f32.mrb[0].mxu0
      %455 = vmatprep.mubr.bf16.mxu0 0
      %456 = vmatmul.mubr.bf16.gmra.mrb[0].mxu0 %v327
      %v457 = vpop.f32.mrb[0].mxu0
      %v458 = vadd.f32 0.0, %v457
      %v459 = vpop.f32.mrb[0].mxu0
      %v460 = vpop.f32.mrb[0].mxu0
      %v461 = vadd.f32 0.0, %v460
      %v462 = vpop.f32.mrb[0].mxu0
      %463 = vmatprep.mubr.bf16.mxu0 0
      %464 = vmatmul.mubr.bf16.gmra.mrb[0].mxu0 %v330
      %v465 = vpop.f32.mrb[0].mxu0
      %v466 = vadd.f32 0.0, %v465
      %v467 = vpop.f32.mrb[0].mxu0
      %v468 = vpop.f32.mrb[0].mxu0
      %v469 = vadd.f32 0.0, %v468
      %v470 = vpop.f32.mrb[0].mxu0
      %471 = vmatprep.mubr.bf16.mxu0 0
      %472 = vmatmul.mubr.bf16.gmra.mrb[0].mxu0 %v333
      %v473 = vpop.f32.mrb[0].mxu0
      %v474 = vadd.f32 0.0, %v473
      %v475 = vpop.f32.mrb[0].mxu0
      %v476 = vpop.f32.mrb[0].mxu0
      %v477 = vadd.f32 0.0, %v476
      %v478 = vpop.f32.mrb[0].mxu0
      %479 = vmatprep.mubr.bf16.mxu0 0
      %480 = vmatmul.mubr.bf16.gmra.mrb[0].mxu0 %v336
      %v481 = vpop.f32.mrb[0].mxu0
      %v482 = vadd.f32 0.0, %v481
      %v483 = vpop.f32.mrb[0].mxu0
      %v484 = vpop.f32.mrb[0].mxu0
      %v485 = vadd.f32 0.0, %v484
      %v486 = vpop.f32.mrb[0].mxu0
      %487 = vmatprep.mubr.bf16.mxu0 0
      %488 = vmatmul.mubr.bf16.gmra.mrb[0].mxu0 %v339
      %v489 = vpop.f32.mrb[0].mxu0
      %v490 = vadd.f32 0.0, %v489
      %v491 = vpop.f32.mrb[0].mxu0
      %v492 = vpop.f32.mrb[0].mxu0
      %v493 = vadd.f32 0.0, %v492
      %v494 = vpop.f32.mrb[0].mxu0
      %495 = vmatprep.mubr.bf16.mxu0 0
      %496 = vmatmul.mubr.bf16.gmra.mrb[0].mxu0 %v342
      %v497 = vpop.f32.mrb[0].mxu0
      %v498 = vadd.f32 0.0, %v497
      %v499 = vpop.f32.mrb[0].mxu0
      %v500 = vpop.f32.mrb[0].mxu0
      %v501 = vadd.f32 0.0, %v500
      %v502 = vpop.f32.mrb[0].mxu0
      %503 = vmatprep.mubr.bf16.mxu0 0
      %504 = vmatmul.mubr.bf16.gmra.mrb[0].mxu0 %v345
      %v505 = vpop.f32.mrb[0].mxu0
      %v506 = vadd.f32 0.0, %v505
      %v507 = vpop.f32.mrb[0].mxu0
      %v508 = vpop.f32.mrb[0].mxu0
      %v509 = vadd.f32 0.0, %v508
      %v510 = vpop.f32.mrb[0].mxu0
      %511 = vdwg.mxu0
      %v514 = vunpack.c.l.b16 %v174
      %v515 = vunpack.c.l.b16 %v175
      %v516 = vpack.c.b16 %v515, %v514
      %v519 = vunpack.c.l.b16 %v206
      %v520 = vunpack.c.l.b16 %v207
      %v521 = vpack.c.b16 %v520, %v519
      %v523 = vsel %vm298, %v516, 0
      %v526 = vsel %vm347, %v521, 0
      %528 = vmatprep.subr.bf16.mxu0 0
      %529 = vmatpush1.bf16.msra.mxu0 %v526
      %530 = vmatprep.subr.bf16.mxu0 0
      %531 = vmatpush1.bf16.msra.mxu0 0
      %532 = vmatprep.subr.bf16.mxu0 0
      %533 = vmatpush1.bf16.msra.mxu0 0
      %534 = vmatprep.subr.bf16.mxu0 0
      %535 = vmatpush1.bf16.msra.mxu0 0
      %536 = vmatprep.subr.bf16.mxu0 0
      %537 = vmatpush1.bf16.msra.mxu0 0
      %538 = vmatprep.subr.bf16.mxu0 0
      %539 = vmatpush1.bf16.msra.mxu0 0
      %540 = vmatprep.subr.bf16.mxu0 0
      %541 = vmatpush1.bf16.msra.mxu0 0
      %542 = vmatprep.subr.bf16.mxu0 0
      %543 = vmatpush1.bf16.msra.mxu0 0
      %544 = vmatprep.subr.bf16.mxu0 0
      %545 = vmatpush1.bf16.msra.mxu0 0
      %546 = vmatprep.subr.bf16.mxu0 0
      %547 = vmatpush1.bf16.msra.mxu0 0
      %548 = vmatprep.subr.bf16.mxu0 0
      %549 = vmatpush1.bf16.msra.mxu0 0
      %550 = vmatprep.subr.bf16.mxu0 0
      %551 = vmatpush1.bf16.msra.mxu0 0
      %552 = vmatprep.subr.bf16.mxu0 0
      %553 = vmatpush1.bf16.msra.mxu0 0
      %554 = vmatprep.subr.bf16.mxu0 0
      %555 = vmatpush1.bf16.msra.mxu0 0
      %556 = vmatprep.subr.bf16.mxu0 0
      %557 = vmatpush1.bf16.msra.mxu0 0
      %558 = vmatprep.subr.bf16.mxu0 0
      %559 = vmatpush1.bf16.msra.mxu0 0
      %560 = vmatprep.mubr.bf16.mxu0 0
      %561 = vmatmul.mubr.bf16.gmra.mrb[0].mxu0 %v523
      %v562 = vpop.f32.mrb[0].mxu0
      %v563 = vadd.f32 %v386, %v562
      %v564 = vpop.f32.mrb[0].mxu0
      %v565 = vpop.f32.mrb[0].mxu0
      %v566 = vadd.f32 %v389, %v565
      %v567 = vpop.f32.mrb[0].mxu0
      %568 = vmatprep.mubr.bf16.mxu0 0
      %569 = vmatmul.mubr.bf16.gmra.mrb[0].mxu0 %v300
      %v570 = vpop.f32.mrb[0].mxu0
      %v571 = vadd.f32 %v394, %v570
      %v572 = vpop.f32.mrb[0].mxu0
      %v573 = vpop.f32.mrb[0].mxu0
      %v574 = vadd.f32 %v397, %v573
      %v575 = vpop.f32.mrb[0].mxu0
      %576 = vmatprep.mubr.bf16.mxu0 0
      %577 = vmatmul.mubr.bf16.gmra.mrb[0].mxu0 %v303
      %v578 = vpop.f32.mrb[0].mxu0
      %v579 = vadd.f32 %v402, %v578
      %v580 = vpop.f32.mrb[0].mxu0
      %v581 = vpop.f32.mrb[0].mxu0
      %v582 = vadd.f32 %v405, %v581
      %v583 = vpop.f32.mrb[0].mxu0
      %584 = vmatprep.mubr.bf16.mxu0 0
      %585 = vmatmul.mubr.bf16.gmra.mrb[0].mxu0 %v306
      %v586 = vpop.f32.mrb[0].mxu0
      %v587 = vadd.f32 %v410, %v586
      %v588 = vpop.f32.mrb[0].mxu0
      %v589 = vpop.f32.mrb[0].mxu0
      %v590 = vadd.f32 %v413, %v589
      %v591 = vpop.f32.mrb[0].mxu0
      %592 = vmatprep.mubr.bf16.mxu0 0
      %593 = vmatmul.mubr.bf16.gmra.mrb[0].mxu0 %v309
      %v594 = vpop.f32.mrb[0].mxu0
      %v595 = vadd.f32 %v418, %v594
      %v596 = vpop.f32.mrb[0].mxu0
      %v597 = vpop.f32.mrb[0].mxu0
      %v598 = vadd.f32 %v421, %v597
      %v599 = vpop.f32.mrb[0].mxu0
      %600 = vmatprep.mubr.bf16.mxu0 0
      %601 = vmatmul.mubr.bf16.gmra.mrb[0].mxu0 %v312
      %v602 = vpop.f32.mrb[0].mxu0
      %v603 = vadd.f32 %v426, %v602
      %v604 = vpop.f32.mrb[0].mxu0
      %v605 = vpop.f32.mrb[0].mxu0
      %v606 = vadd.f32 %v429, %v605
      %v607 = vpop.f32.mrb[0].mxu0
      %608 = vmatprep.mubr.bf16.mxu0 0
      %609 = vmatmul.mubr.bf16.gmra.mrb[0].mxu0 %v315
      %v610 = vpop.f32.mrb[0].mxu0
      %v611 = vadd.f32 %v434, %v610
      %v612 = vpop.f32.mrb[0].mxu0
      %v613 = vpop.f32.mrb[0].mxu0
      %v614 = vadd.f32 %v437, %v613
      %v615 = vpop.f32.mrb[0].mxu0
      %616 = vmatprep.mubr.bf16.mxu0 0
      %617 = vmatmul.mubr.bf16.gmra.mrb[0].mxu0 %v318
      %v618 = vpop.f32.mrb[0].mxu0
      %v619 = vadd.f32 %v442, %v618
      %v620 = vpop.f32.mrb[0].mxu0
      %v621 = vpop.f32.mrb[0].mxu0
      %v622 = vadd.f32 %v445, %v621
      %v623 = vpop.f32.mrb[0].mxu0
      %624 = vmatprep.mubr.bf16.mxu0 0
      %625 = vmatmul.mubr.bf16.gmra.mrb[0].mxu0 %v321
      %v626 = vpop.f32.mrb[0].mxu0
      %v627 = vadd.f32 %v450, %v626
      %v628 = vpop.f32.mrb[0].mxu0
      %v629 = vpop.f32.mrb[0].mxu0
      %v630 = vadd.f32 %v453, %v629
      %v631 = vpop.f32.mrb[0].mxu0
      %632 = vmatprep.mubr.bf16.mxu0 0
      %633 = vmatmul.mubr.bf16.gmra.mrb[0].mxu0 %v324
      %v634 = vpop.f32.mrb[0].mxu0
      %v635 = vadd.f32 %v458, %v634
      %v636 = vpop.f32.mrb[0].mxu0
      %v637 = vpop.f32.mrb[0].mxu0
      %v638 = vadd.f32 %v461, %v637
      %v639 = vpop.f32.mrb[0].mxu0
      %640 = vmatprep.mubr.bf16.mxu0 0
      %641 = vmatmul.mubr.bf16.gmra.mrb[0].mxu0 %v327
      %v642 = vpop.f32.mrb[0].mxu0
      %v643 = vadd.f32 %v466, %v642
      %v644 = vpop.f32.mrb[0].mxu0
      %v645 = vpop.f32.mrb[0].mxu0
      %v646 = vadd.f32 %v469, %v645
      %v647 = vpop.f32.mrb[0].mxu0
      %648 = vmatprep.mubr.bf16.mxu0 0
      %649 = vmatmul.mubr.bf16.gmra.mrb[0].mxu0 %v330
      %v650 = vpop.f32.mrb[0].mxu0
      %v651 = vadd.f32 %v474, %v650
      %v652 = vpop.f32.mrb[0].mxu0
      %v653 = vpop.f32.mrb[0].mxu0
      %v654 = vadd.f32 %v477, %v653
      %v655 = vpop.f32.mrb[0].mxu0
      %656 = vmatprep.mubr.bf16.mxu0 0
      %657 = vmatmul.mubr.bf16.gmra.mrb[0].mxu0 %v333
      %v658 = vpop.f32.mrb[0].mxu0
      %v659 = vadd.f32 %v482, %v658
      %v660 = vpop.f32.mrb[0].mxu0
      %v661 = vpop.f32.mrb[0].mxu0
      %v662 = vadd.f32 %v485, %v661
      %v663 = vpop.f32.mrb[0].mxu0
      %664 = vmatprep.mubr.bf16.mxu0 0
      %665 = vmatmul.mubr.bf16.gmra.mrb[0].mxu0 %v336
      %v666 = vpop.f32.mrb[0].mxu0
      %v667 = vadd.f32 %v490, %v666
      %v668 = vpop.f32.mrb[0].mxu0
      %v669 = vpop.f32.mrb[0].mxu0
      %v670 = vadd.f32 %v493, %v669
      %v671 = vpop.f32.mrb[0].mxu0
      %672 = vmatprep.mubr.bf16.mxu0 0
      %673 = vmatmul.mubr.bf16.gmra.mrb[0].mxu0 %v339
      %v674 = vpop.f32.mrb[0].mxu0
      %v675 = vadd.f32 %v498, %v674
      %v676 = vpop.f32.mrb[0].mxu0
      %v677 = vpop.f32.mrb[0].mxu0
      %v678 = vadd.f32 %v501, %v677
      %v679 = vpop.f32.mrb[0].mxu0
      %680 = vmatprep.mubr.bf16.mxu0 0
      %681 = vmatmul.mubr.bf16.gmra.mrb[0].mxu0 %v342
      %v682 = vpop.f32.mrb[0].mxu0
      %v683 = vadd.f32 %v506, %v682
      %v684 = vpop.f32.mrb[0].mxu0
      %v685 = vpop.f32.mrb[0].mxu0
      %v686 = vadd.f32 %v509, %v685
      %v687 = vpop.f32.mrb[0].mxu0
      %688 = vdwg.mxu0
      %v689 = vld [vmem:[%s167 + $0x10] sm:$0xf]
      %v690 = vld [vmem:[%s167 + $0x14] sm:$0xf]
      %v691 = vld [vmem:[%s167 + $0x18] sm:$0xf]
      %v692 = vld [vmem:[%s167 + $0x1c] sm:$0xf]
      %v693 = vld [vmem:[%s167 + $0x20] sm:$0xf]
      %v694 = vld [vmem:[%s167 + $0x24] sm:$0xf]
      %v695 = vld [vmem:[%s167 + $0x28] sm:$0xf]
      %v696 = vld [vmem:[%s167 + $0x2c] sm:$0xf]
      %v697 = vld [vmem:[%s167 + $0x30] sm:$0xf]
      %v698 = vld [vmem:[%s167 + $0x34] sm:$0xf]
      %v699 = vld [vmem:[%s167 + $0x38] sm:$0xf]
      %v700 = vld [vmem:[%s167 + $0x3c] sm:$0xf]
      %v701 = vld [vmem:[%s167 + $0x40] sm:$0xf]
      %v702 = vld [vmem:[%s167 + $0x44] sm:$0xf]
      %v703 = vld [vmem:[%s167 + $0x48] sm:$0xf]
      %v704 = vld [vmem:[%s167 + $0x4c] sm:$0xf]
      %v705 = vld [vmem:[%s167 + $0x50] sm:$0xf]
      %v706 = vld [vmem:[%s167 + $0x54] sm:$0xf]
      %v707 = vld [vmem:[%s167 + $0x58] sm:$0xf]
      %v708 = vld [vmem:[%s167 + $0x5c] sm:$0xf]
      %v709 = vld [vmem:[%s167 + $0x60] sm:$0xf]
      %v710 = vld [vmem:[%s167 + $0x64] sm:$0xf]
      %v711 = vld [vmem:[%s167 + $0x68] sm:$0xf]
      %v712 = vld [vmem:[%s167 + $0x6c] sm:$0xf]
      %v713 = vld [vmem:[%s167 + $0x70] sm:$0xf]
      %v714 = vld [vmem:[%s167 + $0x74] sm:$0xf]
      %v715 = vld [vmem:[%s167 + $0x78] sm:$0xf]
      %v716 = vld [vmem:[%s167 + $0x7c] sm:$0xf]
      %v717 = vld [vmem:[%s167 + $0x80] sm:$0xf]
      %v718 = vld [vmem:[%s167 + $0x84] sm:$0xf]
      %v719 = vld [vmem:[%s167 + $0x88] sm:$0xf]
      %v720 = vld [vmem:[%s167 + $0x8c] sm:$0xf]
      %s721 = scalar_lea.vmem %s1, 16
      %v722 = vld [vmem:[%s721] sm:$0xf]
      %v723 = vld [vmem:[%s721 + $0x4] sm:$0x7]
      %v756 = vunpack.c.l.b16 %v689
      %v757 = vunpack.c.l.b16 %v690
      %v758 = vunpack.c.l.b16 %v691
      %v759 = vunpack.c.l.b16 %v692
      %v760 = vunpack.c.l.b16 %v693
      %v761 = vunpack.c.l.b16 %v694
      %v762 = vunpack.c.l.b16 %v695
      %v763 = vunpack.c.l.b16 %v696
      %v764 = vunpack.c.l.b16 %v697
      %v765 = vunpack.c.l.b16 %v698
      %v766 = vunpack.c.l.b16 %v699
      %v767 = vunpack.c.l.b16 %v700
      %v768 = vunpack.c.l.b16 %v701
      %v769 = vunpack.c.l.b16 %v702
      %v770 = vunpack.c.l.b16 %v703
      %v771 = vunpack.c.l.b16 %v704
      %v772 = vunpack.c.l.b16 %v705
      %v773 = vunpack.c.l.b16 %v706
      %v774 = vunpack.c.l.b16 %v707
      %v775 = vunpack.c.l.b16 %v708
      %v776 = vunpack.c.l.b16 %v709
      %v777 = vunpack.c.l.b16 %v710
      %v778 = vunpack.c.l.b16 %v711
      %v779 = vunpack.c.l.b16 %v712
      %v780 = vunpack.c.l.b16 %v713
      %v781 = vunpack.c.l.b16 %v714
      %v782 = vunpack.c.l.b16 %v715
      %v783 = vunpack.c.l.b16 %v716
      %v784 = vunpack.c.l.b16 %v717
      %v785 = vunpack.c.l.b16 %v718
      %v786 = vunpack.c.l.b16 %v719
      %v787 = vunpack.c.l.b16 %v720
      %v788 = vpack.c.b16 %v757, %v756
      %v789 = vpack.c.b16 %v759, %v758
      %v790 = vpack.c.b16 %v761, %v760
      %v791 = vpack.c.b16 %v763, %v762
      %v792 = vpack.c.b16 %v765, %v764
      %v793 = vpack.c.b16 %v767, %v766
      %v794 = vpack.c.b16 %v769, %v768
      %v795 = vpack.c.b16 %v771, %v770
      %v796 = vpack.c.b16 %v773, %v772
      %v797 = vpack.c.b16 %v775, %v774
      %v798 = vpack.c.b16 %v777, %v776
      %v799 = vpack.c.b16 %v779, %v778
      %v800 = vpack.c.b16 %v781, %v780
      %v801 = vpack.c.b16 %v783, %v782
      %v802 = vpack.c.b16 %v785, %v784
      %v803 = vpack.c.b16 %v787, %v786
      %v806 = vunpack.c.l.b16 %v722
      %v807 = vunpack.c.l.b16 %v723
      %v808 = vpack.c.b16 %v807, %v806
      %v810 = vsel %vm298, %v788, 0
      %v813 = vsel %vm298, %v789, 0
      %v816 = vsel %vm298, %v790, 0
      %v819 = vsel %vm298, %v791, 0
      %v822 = vsel %vm298, %v792, 0
      %v825 = vsel %vm298, %v793, 0
      %v828 = vsel %vm298, %v794, 0
      %v831 = vsel %vm298, %v795, 0
      %v834 = vsel %vm298, %v796, 0
      %v837 = vsel %vm298, %v797, 0
      %v840 = vsel %vm298, %v798, 0
      %v843 = vsel %vm298, %v799, 0
      %v846 = vsel %vm298, %v800, 0
      %v849 = vsel %vm298, %v801, 0
      %v852 = vsel %vm298, %v802, 0
      %v855 = vsel %vm298, %v803, 0
      %v858 = vsel %vm347, %v808, 0
      %860 = vmatprep.subr.bf16.mxu0 0
      %861 = vmatpush1.bf16.msra.mxu0 %v858
      %862 = vmatprep.subr.bf16.mxu0 0
      %863 = vmatpush1.bf16.msra.mxu0 0
      %864 = vmatprep.subr.bf16.mxu0 0
      %865 = vmatpush1.bf16.msra.mxu0 0
      %866 = vmatprep.subr.bf16.mxu0 0
      %867 = vmatpush1.bf16.msra.mxu0 0
      %868 = vmatprep.subr.bf16.mxu0 0
      %869 = vmatpush1.bf16.msra.mxu0 0
      %870 = vmatprep.subr.bf16.mxu0 0
      %871 = vmatpush1.bf16.msra.mxu0 0
      %872 = vmatprep.subr.bf16.mxu0 0
      %873 = vmatpush1.bf16.msra.mxu0 0
      %874 = vmatprep.subr.bf16.mxu0 0
      %875 = vmatpush1.bf16.msra.mxu0 0
      %876 = vmatprep.subr.bf16.mxu0 0
      %877 = vmatpush1.bf16.msra.mxu0 0
      %878 = vmatprep.subr.bf16.mxu0 0
      %879 = vmatpush1.bf16.msra.mxu0 0
      %880 = vmatprep.subr.bf16.mxu0 0
      %881 = vmatpush1.bf16.msra.mxu0 0
      %882 = vmatprep.subr.bf16.mxu0 0
      %883 = vmatpush1.bf16.msra.mxu0 0
      %884 = vmatprep.subr.bf16.mxu0 0
      %885 = vmatpush1.bf16.msra.mxu0 0
      %886 = vmatprep.subr.bf16.mxu0 0
      %887 = vmatpush1.bf16.msra.mxu0 0
      %888 = vmatprep.subr.bf16.mxu0 0
      %889 = vmatpush1.bf16.msra.mxu0 0
      %890 = vmatprep.subr.bf16.mxu0 0
      %891 = vmatpush1.bf16.msra.mxu0 0
      %892 = vmatprep.mubr.bf16.mxu0 0
      %893 = vmatmul.mubr.bf16.gmra.mrb[0].mxu0 %v810
      %v894 = vpop.f32.mrb[0].mxu0
      %v895 = vadd.f32 0.0, %v894
      %v896 = vpop.f32.mrb[0].mxu0
      %v897 = vpop.f32.mrb[0].mxu0
      %v898 = vadd.f32 0.0, %v897
      %v899 = vpop.f32.mrb[0].mxu0
      %900 = vmatprep.mubr.bf16.mxu0 0
      %901 = vmatmul.mubr.bf16.gmra.mrb[0].mxu0 %v813
      %v902 = vpop.f32.mrb[0].mxu0
      %v903 = vadd.f32 0.0, %v902
      %v904 = vpop.f32.mrb[0].mxu0
      %v905 = vpop.f32.mrb[0].mxu0
      %v906 = vadd.f32 0.0, %v905
      %v907 = vpop.f32.mrb[0].mxu0
      %908 = vmatprep.mubr.bf16.mxu0 0
      %909 = vmatmul.mubr.bf16.gmra.mrb[0].mxu0 %v816
      %v910 = vpop.f32.mrb[0].mxu0
      %v911 = vadd.f32 0.0, %v910
      %v912 = vpop.f32.mrb[0].mxu0
      %v913 = vpop.f32.mrb[0].mxu0
      %v914 = vadd.f32 0.0, %v913
      %v915 = vpop.f32.mrb[0].mxu0
      %916 = vmatprep.mubr.bf16.mxu0 0
      %917 = vmatmul.mubr.bf16.gmra.mrb[0].mxu0 %v819
      %v918 = vpop.f32.mrb[0].mxu0
      %v919 = vadd.f32 0.0, %v918
      %v920 = vpop.f32.mrb[0].mxu0
      %v921 = vpop.f32.mrb[0].mxu0
      %v922 = vadd.f32 0.0, %v921
      %v923 = vpop.f32.mrb[0].mxu0
      %924 = vmatprep.mubr.bf16.mxu0 0
      %925 = vmatmul.mubr.bf16.gmra.mrb[0].mxu0 %v822
      %v926 = vpop.f32.mrb[0].mxu0
      %v927 = vadd.f32 0.0, %v926
      %v928 = vpop.f32.mrb[0].mxu0
      %v929 = vpop.f32.mrb[0].mxu0
      %v930 = vadd.f32 0.0, %v929
      %v931 = vpop.f32.mrb[0].mxu0
      %932 = vmatprep.mubr.bf16.mxu0 0
      %933 = vmatmul.mubr.bf16.gmra.mrb[0].mxu0 %v825
      %v934 = vpop.f32.mrb[0].mxu0
      %v935 = vadd.f32 0.0, %v934
      %v936 = vpop.f32.mrb[0].mxu0
      %v937 = vpop.f32.mrb[0].mxu0
      %v938 = vadd.f32 0.0, %v937
      %v939 = vpop.f32.mrb[0].mxu0
      %940 = vmatprep.mubr.bf16.mxu0 0
      %941 = vmatmul.mubr.bf16.gmra.mrb[0].mxu0 %v828
      %v942 = vpop.f32.mrb[0].mxu0
      %v943 = vadd.f32 0.0, %v942
      %v944 = vpop.f32.mrb[0].mxu0
      %v945 = vpop.f32.mrb[0].mxu0
      %v946 = vadd.f32 0.0, %v945
      %v947 = vpop.f32.mrb[0].mxu0
      %948 = vmatprep.mubr.bf16.mxu0 0
      %949 = vmatmul.mubr.bf16.gmra.mrb[0].mxu0 %v831
      %v950 = vpop.f32.mrb[0].mxu0
      %v951 = vadd.f32 0.0, %v950
      %v952 = vpop.f32.mrb[0].mxu0
      %v953 = vpop.f32.mrb[0].mxu0
      %v954 = vadd.f32 0.0, %v953
      %v955 = vpop.f32.mrb[0].mxu0
      %956 = vmatprep.mubr.bf16.mxu0 0
      %957 = vmatmul.mubr.bf16.gmra.mrb[0].mxu0 %v834
      %v958 = vpop.f32.mrb[0].mxu0
      %v959 = vadd.f32 0.0, %v958
      %v960 = vpop.f32.mrb[0].mxu0
      %v961 = vpop.f32.mrb[0].mxu0
      %v962 = vadd.f32 0.0, %v961
      %v963 = vpop.f32.mrb[0].mxu0
      %964 = vmatprep.mubr.bf16.mxu0 0
      %965 = vmatmul.mubr.bf16.gmra.mrb[0].mxu0 %v837
      %v966 = vpop.f32.mrb[0].mxu0
      %v967 = vadd.f32 0.0, %v966
      %v968 = vpop.f32.mrb[0].mxu0
      %v969 = vpop.f32.mrb[0].mxu0
      %v970 = vadd.f32 0.0, %v969
      %v971 = vpop.f32.mrb[0].mxu0
      %972 = vmatprep.mubr.bf16.mxu0 0
      %973 = vmatmul.mubr.bf16.gmra.mrb[0].mxu0 %v840
      %v974 = vpop.f32.mrb[0].mxu0
      %v975 = vadd.f32 0.0, %v974
      %v976 = vpop.f32.mrb[0].mxu0
      %v977 = vpop.f32.mrb[0].mxu0
      %v978 = vadd.f32 0.0, %v977
      %v979 = vpop.f32.mrb[0].mxu0
      %980 = vmatprep.mubr.bf16.mxu0 0
      %981 = vmatmul.mubr.bf16.gmra.mrb[0].mxu0 %v843
      %v982 = vpop.f32.mrb[0].mxu0
      %v983 = vadd.f32 0.0, %v982
      %v984 = vpop.f32.mrb[0].mxu0
      %v985 = vpop.f32.mrb[0].mxu0
      %v986 = vadd.f32 0.0, %v985
      %v987 = vpop.f32.mrb[0].mxu0
      %988 = vmatprep.mubr.bf16.mxu0 0
      %989 = vmatmul.mubr.bf16.gmra.mrb[0].mxu0 %v846
      %v990 = vpop.f32.mrb[0].mxu0
      %v991 = vadd.f32 0.0, %v990
      %v992 = vpop.f32.mrb[0].mxu0
      %v993 = vpop.f32.mrb[0].mxu0
      %v994 = vadd.f32 0.0, %v993
      %v995 = vpop.f32.mrb[0].mxu0
      %996 = vmatprep.mubr.bf16.mxu0 0
      %997 = vmatmul.mubr.bf16.gmra.mrb[0].mxu0 %v849
      %v998 = vpop.f32.mrb[0].mxu0
      %v999 = vadd.f32 0.0, %v998
      %v1000 = vpop.f32.mrb[0].mxu0
      %v1001 = vpop.f32.mrb[0].mxu0
      %v1002 = vadd.f32 0.0, %v1001
      %v1003 = vpop.f32.mrb[0].mxu0
      %1004 = vmatprep.mubr.bf16.mxu0 0
      %1005 = vmatmul.mubr.bf16.gmra.mrb[0].mxu0 %v852
      %v1006 = vpop.f32.mrb[0].mxu0
      %v1007 = vadd.f32 0.0, %v1006
      %v1008 = vpop.f32.mrb[0].mxu0
      %v1009 = vpop.f32.mrb[0].mxu0
      %v1010 = vadd.f32 0.0, %v1009
      %v1011 = vpop.f32.mrb[0].mxu0
      %1012 = vmatprep.mubr.bf16.mxu0 0
      %1013 = vmatmul.mubr.bf16.gmra.mrb[0].mxu0 %v855
      %v1014 = vpop.f32.mrb[0].mxu0
      %v1015 = vadd.f32 0.0, %v1014
      %v1016 = vpop.f32.mrb[0].mxu0
      %v1017 = vpop.f32.mrb[0].mxu0
      %v1018 = vadd.f32 0.0, %v1017
      %v1019 = vpop.f32.mrb[0].mxu0
      %1020 = vdwg.mxu0
      %v1021 = vadd.f32 %v563, %v895
      %v1022 = vadd.f32 %v566, %v898
      %v1023 = vadd.f32 %v571, %v903
      %v1024 = vadd.f32 %v574, %v906
      %v1025 = vadd.f32 %v579, %v911
      %v1026 = vadd.f32 %v582, %v914
      %v1027 = vadd.f32 %v587, %v919
      %v1028 = vadd.f32 %v590, %v922
      %v1029 = vadd.f32 %v595, %v927
      %v1030 = vadd.f32 %v598, %v930
      %v1031 = vadd.f32 %v603, %v935
      %v1032 = vadd.f32 %v606, %v938
      %v1033 = vadd.f32 %v611, %v943
      %v1034 = vadd.f32 %v614, %v946
      %v1035 = vadd.f32 %v619, %v951
      %v1036 = vadd.f32 %v622, %v954
      %v1037 = vadd.f32 %v627, %v959
      %v1038 = vadd.f32 %v630, %v962
      %v1039 = vadd.f32 %v635, %v967
      %v1040 = vadd.f32 %v638, %v970
      %v1041 = vadd.f32 %v643, %v975
      %v1042 = vadd.f32 %v646, %v978
      %v1043 = vadd.f32 %v651, %v983
      %v1044 = vadd.f32 %v654, %v986
      %v1045 = vadd.f32 %v659, %v991
      %v1046 = vadd.f32 %v662, %v994
      %v1047 = vadd.f32 %v667, %v999
      %v1048 = vadd.f32 %v670, %v1002
      %v1049 = vadd.f32 %v675, %v1007
      %v1050 = vadd.f32 %v678, %v1010
      %v1051 = vadd.f32 %v683, %v1015
      %v1052 = vadd.f32 %v686, %v1018
      %v1053 = vld [vmem:[%s167 + $0x18] sm:$0xf]
      %v1054 = vld [vmem:[%s167 + $0x1c] sm:$0xf]
      %v1055 = vld [vmem:[%s167 + $0x20] sm:$0xf]
      %v1056 = vld [vmem:[%s167 + $0x24] sm:$0xf]
      %v1057 = vld [vmem:[%s167 + $0x28] sm:$0xf]
      %v1058 = vld [vmem:[%s167 + $0x2c] sm:$0xf]
      %v1059 = vld [vmem:[%s167 + $0x30] sm:$0xf]
      %v1060 = vld [vmem:[%s167 + $0x34] sm:$0xf]
      %v1061 = vld [vmem:[%s167 + $0x38] sm:$0xf]
      %v1062 = vld [vmem:[%s167 + $0x3c] sm:$0xf]
      %v1063 = vld [vmem:[%s167 + $0x40] sm:$0xf]
      %v1064 = vld [vmem:[%s167 + $0x44] sm:$0xf]
      %v1065 = vld [vmem:[%s167 + $0x48] sm:$0xf]
      %v1066 = vld [vmem:[%s167 + $0x4c] sm:$0xf]
      %v1067 = vld [vmem:[%s167 + $0x50] sm:$0xf]
      %v1068 = vld [vmem:[%s167 + $0x54] sm:$0xf]
      %v1069 = vld [vmem:[%s167 + $0x58] sm:$0xf]
      %v1070 = vld [vmem:[%s167 + $0x5c] sm:$0xf]
      %v1071 = vld [vmem:[%s167 + $0x60] sm:$0xf]
      %v1072 = vld [vmem:[%s167 + $0x64] sm:$0xf]
      %v1073 = vld [vmem:[%s167 + $0x68] sm:$0xf]
      %v1074 = vld [vmem:[%s167 + $0x6c] sm:$0xf]
      %v1075 = vld [vmem:[%s167 + $0x70] sm:$0xf]
      %v1076 = vld [vmem:[%s167 + $0x74] sm:$0xf]
      %v1077 = vld [vmem:[%s167 + $0x78] sm:$0xf]
      %v1078 = vld [vmem:[%s167 + $0x7c] sm:$0xf]
      %v1079 = vld [vmem:[%s167 + $0x80] sm:$0xf]
      %v1080 = vld [vmem:[%s167 + $0x84] sm:$0xf]
      %v1081 = vld [vmem:[%s167 + $0x88] sm:$0xf]
      %v1082 = vld [vmem:[%s167 + $0x8c] sm:$0xf]
      %v1083 = vld [vmem:[%s167 + $0x90] sm:$0xf]
      %v1084 = vld [vmem:[%s167 + $0x94] sm:$0xf]
      %s1085 = scalar_lea.vmem %s1, 24
      %v1086 = vld [vmem:[%s1085] sm:$0xf]
      %v1087 = vld [vmem:[%s1085 + $0x4] sm:$0x7]
      %v1120 = vunpack.c.l.b16 %v1053
      %v1121 = vunpack.c.l.b16 %v1054
      %v1122 = vunpack.c.l.b16 %v1055
      %v1123 = vunpack.c.l.b16 %v1056
      %v1124 = vunpack.c.l.b16 %v1057
      %v1125 = vunpack.c.l.b16 %v1058
      %v1126 = vunpack.c.l.b16 %v1059
      %v1127 = vunpack.c.l.b16 %v1060
      %v1128 = vunpack.c.l.b16 %v1061
      %v1129 = vunpack.c.l.b16 %v1062
      %v1130 = vunpack.c.l.b16 %v1063
      %v1131 = vunpack.c.l.b16 %v1064
      %v1132 = vunpack.c.l.b16 %v1065
      %v1133 = vunpack.c.l.b16 %v1066
      %v1134 = vunpack.c.l.b16 %v1067
      %v1135 = vunpack.c.l.b16 %v1068
      %v1136 = vunpack.c.l.b16 %v1069
      %v1137 = vunpack.c.l.b16 %v1070
      %v1138 = vunpack.c.l.b16 %v1071
      %v1139 = vunpack.c.l.b16 %v1072
      %v1140 = vunpack.c.l.b16 %v1073
      %v1141 = vunpack.c.l.b16 %v1074
      %v1142 = vunpack.c.l.b16 %v1075
      %v1143 = vunpack.c.l.b16 %v1076
      %v1144 = vunpack.c.l.b16 %v1077
      %v1145 = vunpack.c.l.b16 %v1078
      %v1146 = vunpack.c.l.b16 %v1079
      %v1147 = vunpack.c.l.b16 %v1080
      %v1148 = vunpack.c.l.b16 %v1081
      %v1149 = vunpack.c.l.b16 %v1082
      %v1150 = vunpack.c.l.b16 %v1083
      %v1151 = vunpack.c.l.b16 %v1084
      %v1152 = vpack.c.b16 %v1121, %v1120
      %v1153 = vpack.c.b16 %v1123, %v1122
      %v1154 = vpack.c.b16 %v1125, %v1124
      %v1155 = vpack.c.b16 %v1127, %v1126
      %v1156 = vpack.c.b16 %v1129, %v1128
      %v1157 = vpack.c.b16 %v1131, %v1130
      %v1158 = vpack.c.b16 %v1133, %v1132
      %v1159 = vpack.c.b16 %v1135, %v1134
      %v1160 = vpack.c.b16 %v1137, %v1136
      %v1161 = vpack.c.b16 %v1139, %v1138
      %v1162 = vpack.c.b16 %v1141, %v1140
      %v1163 = vpack.c.b16 %v1143, %v1142
      %v1164 = vpack.c.b16 %v1145, %v1144
      %v1165 = vpack.c.b16 %v1147, %v1146
      %v1166 = vpack.c.b16 %v1149, %v1148
      %v1167 = vpack.c.b16 %v1151, %v1150
      %v1170 = vunpack.c.l.b16 %v1086
      %v1171 = vunpack.c.l.b16 %v1087
      %v1172 = vpack.c.b16 %v1171, %v1170
      %v1174 = vsel %vm298, %v1152, 0
      %v1177 = vsel %vm298, %v1153, 0
      %v1180 = vsel %vm298, %v1154, 0
      %v1183 = vsel %vm298, %v1155, 0
      %v1186 = vsel %vm298, %v1156, 0
      %v1189 = vsel %vm298, %v1157, 0
      %v1192 = vsel %vm298, %v1158, 0
      %v1195 = vsel %vm298, %v1159, 0
      %v1198 = vsel %vm298, %v1160, 0
      %v1201 = vsel %vm298, %v1161, 0
      %v1204 = vsel %vm298, %v1162, 0
      %v1207 = vsel %vm298, %v1163, 0
      %v1210 = vsel %vm298, %v1164, 0
      %v1213 = vsel %vm298, %v1165, 0
      %v1216 = vsel %vm298, %v1166, 0
      %v1219 = vsel %vm298, %v1167, 0
      %v1222 = vsel %vm347, %v1172, 0
      %1224 = vmatprep.subr.bf16.mxu0 0
      %1225 = vmatpush1.bf16.msra.mxu0 %v1222
      %1226 = vmatprep.subr.bf16.mxu0 0
      %1227 = vmatpush1.bf16.msra.mxu0 0
      %1228 = vmatprep.subr.bf16.mxu0 0
      %1229 = vmatpush1.bf16.msra.mxu0 0
      %1230 = vmatprep.subr.bf16.mxu0 0
      %1231 = vmatpush1.bf16.msra.mxu0 0
      %1232 = vmatprep.subr.bf16.mxu0 0
      %1233 = vmatpush1.bf16.msra.mxu0 0
      %1234 = vmatprep.subr.bf16.mxu0 0
      %1235 = vmatpush1.bf16.msra.mxu0 0
      %1236 = vmatprep.subr.bf16.mxu0 0
      %1237 = vmatpush1.bf16.msra.mxu0 0
      %1238 = vmatprep.subr.bf16.mxu0 0
      %1239 = vmatpush1.bf16.msra.mxu0 0
      %1240 = vmatprep.subr.bf16.mxu0 0
      %1241 = vmatpush1.bf16.msra.mxu0 0
      %1242 = vmatprep.subr.bf16.mxu0 0
      %1243 = vmatpush1.bf16.msra.mxu0 0
      %1244 = vmatprep.subr.bf16.mxu0 0
      %1245 = vmatpush1.bf16.msra.mxu0 0
      %1246 = vmatprep.subr.bf16.mxu0 0
      %1247 = vmatpush1.bf16.msra.mxu0 0
      %1248 = vmatprep.subr.bf16.mxu0 0
      %1249 = vmatpush1.bf16.msra.mxu0 0
      %1250 = vmatprep.subr.bf16.mxu0 0
      %1251 = vmatpush1.bf16.msra.mxu0 0
      %1252 = vmatprep.subr.bf16.mxu0 0
      %1253 = vmatpush1.bf16.msra.mxu0 0
      %1254 = vmatprep.subr.bf16.mxu0 0
      %1255 = vmatpush1.bf16.msra.mxu0 0
      %1256 = vmatprep.mubr.bf16.mxu0 0
      %1257 = vmatmul.mubr.bf16.gmra.mrb[0].mxu0 %v1174
      %v1258 = vpop.f32.mrb[0].mxu0
      %v1259 = vadd.f32 0.0, %v1258
      %v1260 = vpop.f32.mrb[0].mxu0
      %v1261 = vpop.f32.mrb[0].mxu0
      %v1262 = vadd.f32 0.0, %v1261
      %v1263 = vpop.f32.mrb[0].mxu0
      %1264 = vmatprep.mubr.bf16.mxu0 0
      %1265 = vmatmul.mubr.bf16.gmra.mrb[0].mxu0 %v1177
      %v1266 = vpop.f32.mrb[0].mxu0
      %v1267 = vadd.f32 0.0, %v1266
      %v1268 = vpop.f32.mrb[0].mxu0
      %v1269 = vpop.f32.mrb[0].mxu0
      %v1270 = vadd.f32 0.0, %v1269
      %v1271 = vpop.f32.mrb[0].mxu0
      %1272 = vmatprep.mubr.bf16.mxu0 0
      %1273 = vmatmul.mubr.bf16.gmra.mrb[0].mxu0 %v1180
      %v1274 = vpop.f32.mrb[0].mxu0
      %v1275 = vadd.f32 0.0, %v1274
      %v1276 = vpop.f32.mrb[0].mxu0
      %v1277 = vpop.f32.mrb[0].mxu0
      %v1278 = vadd.f32 0.0, %v1277
      %v1279 = vpop.f32.mrb[0].mxu0
      %1280 = vmatprep.mubr.bf16.mxu0 0
      %1281 = vmatmul.mubr.bf16.gmra.mrb[0].mxu0 %v1183
      %v1282 = vpop.f32.mrb[0].mxu0
      %v1283 = vadd.f32 0.0, %v1282
      %v1284 = vpop.f32.mrb[0].mxu0
      %v1285 = vpop.f32.mrb[0].mxu0
      %v1286 = vadd.f32 0.0, %v1285
      %v1287 = vpop.f32.mrb[0].mxu0
      %1288 = vmatprep.mubr.bf16.mxu0 0
      %1289 = vmatmul.mubr.bf16.gmra.mrb[0].mxu0 %v1186
      %v1290 = vpop.f32.mrb[0].mxu0
      %v1291 = vadd.f32 0.0, %v1290
      %v1292 = vpop.f32.mrb[0].mxu0
      %v1293 = vpop.f32.mrb[0].mxu0
      %v1294 = vadd.f32 0.0, %v1293
      %v1295 = vpop.f32.mrb[0].mxu0
      %1296 = vmatprep.mubr.bf16.mxu0 0
      %1297 = vmatmul.mubr.bf16.gmra.mrb[0].mxu0 %v1189
      %v1298 = vpop.f32.mrb[0].mxu0
      %v1299 = vadd.f32 0.0, %v1298
      %v1300 = vpop.f32.mrb[0].mxu0
      %v1301 = vpop.f32.mrb[0].mxu0
      %v1302 = vadd.f32 0.0, %v1301
      %v1303 = vpop.f32.mrb[0].mxu0
      %1304 = vmatprep.mubr.bf16.mxu0 0
      %1305 = vmatmul.mubr.bf16.gmra.mrb[0].mxu0 %v1192
      %v1306 = vpop.f32.mrb[0].mxu0
      %v1307 = vadd.f32 0.0, %v1306
      %v1308 = vpop.f32.mrb[0].mxu0
      %v1309 = vpop.f32.mrb[0].mxu0
      %v1310 = vadd.f32 0.0, %v1309
      %v1311 = vpop.f32.mrb[0].mxu0
      %1312 = vmatprep.mubr.bf16.mxu0 0
      %1313 = vmatmul.mubr.bf16.gmra.mrb[0].mxu0 %v1195
      %v1314 = vpop.f32.mrb[0].mxu0
      %v1315 = vadd.f32 0.0, %v1314
      %v1316 = vpop.f32.mrb[0].mxu0
      %v1317 = vpop.f32.mrb[0].mxu0
      %v1318 = vadd.f32 0.0, %v1317
      %v1319 = vpop.f32.mrb[0].mxu0
      %1320 = vmatprep.mubr.bf16.mxu0 0
      %1321 = vmatmul.mubr.bf16.gmra.mrb[0].mxu0 %v1198
      %v1322 = vpop.f32.mrb[0].mxu0
      %v1323 = vadd.f32 0.0, %v1322
      %v1324 = vpop.f32.mrb[0].mxu0
      %v1325 = vpop.f32.mrb[0].mxu0
      %v1326 = vadd.f32 0.0, %v1325
      %v1327 = vpop.f32.mrb[0].mxu0
      %1328 = vmatprep.mubr.bf16.mxu0 0
      %1329 = vmatmul.mubr.bf16.gmra.mrb[0].mxu0 %v1201
      %v1330 = vpop.f32.mrb[0].mxu0
      %v1331 = vadd.f32 0.0, %v1330
      %v1332 = vpop.f32.mrb[0].mxu0
      %v1333 = vpop.f32.mrb[0].mxu0
      %v1334 = vadd.f32 0.0, %v1333
      %v1335 = vpop.f32.mrb[0].mxu0
      %1336 = vmatprep.mubr.bf16.mxu0 0
      %1337 = vmatmul.mubr.bf16.gmra.mrb[0].mxu0 %v1204
      %v1338 = vpop.f32.mrb[0].mxu0
      %v1339 = vadd.f32 0.0, %v1338
      %v1340 = vpop.f32.mrb[0].mxu0
      %v1341 = vpop.f32.mrb[0].mxu0
      %v1342 = vadd.f32 0.0, %v1341
      %v1343 = vpop.f32.mrb[0].mxu0
      %1344 = vmatprep.mubr.bf16.mxu0 0
      %1345 = vmatmul.mubr.bf16.gmra.mrb[0].mxu0 %v1207
      %v1346 = vpop.f32.mrb[0].mxu0
      %v1347 = vadd.f32 0.0, %v1346
      %v1348 = vpop.f32.mrb[0].mxu0
      %v1349 = vpop.f32.mrb[0].mxu0
      %v1350 = vadd.f32 0.0, %v1349
      %v1351 = vpop.f32.mrb[0].mxu0
      %1352 = vmatprep.mubr.bf16.mxu0 0
      %1353 = vmatmul.mubr.bf16.gmra.mrb[0].mxu0 %v1210
      %v1354 = vpop.f32.mrb[0].mxu0
      %v1355 = vadd.f32 0.0, %v1354
      %v1356 = vpop.f32.mrb[0].mxu0
      %v1357 = vpop.f32.mrb[0].mxu0
      %v1358 = vadd.f32 0.0, %v1357
      %v1359 = vpop.f32.mrb[0].mxu0
      %1360 = vmatprep.mubr.bf16.mxu0 0
      %1361 = vmatmul.mubr.bf16.gmra.mrb[0].mxu0 %v1213
      %v1362 = vpop.f32.mrb[0].mxu0
      %v1363 = vadd.f32 0.0, %v1362
      %v1364 = vpop.f32.mrb[0].mxu0
      %v1365 = vpop.f32.mrb[0].mxu0
      %v1366 = vadd.f32 0.0, %v1365
      %v1367 = vpop.f32.mrb[0].mxu0
      %1368 = vmatprep.mubr.bf16.mxu0 0
      %1369 = vmatmul.mubr.bf16.gmra.mrb[0].mxu0 %v1216
      %v1370 = vpop.f32.mrb[0].mxu0
      %v1371 = vadd.f32 0.0, %v1370
      %v1372 = vpop.f32.mrb[0].mxu0
      %v1373 = vpop.f32.mrb[0].mxu0
      %v1374 = vadd.f32 0.0, %v1373
      %v1375 = vpop.f32.mrb[0].mxu0
      %1376 = vmatprep.mubr.bf16.mxu0 0
      %1377 = vmatmul.mubr.bf16.gmra.mrb[0].mxu0 %v1219
      %v1378 = vpop.f32.mrb[0].mxu0
      %v1379 = vadd.f32 0.0, %v1378
      %v1380 = vpop.f32.mrb[0].mxu0
      %v1381 = vpop.f32.mrb[0].mxu0
      %v1382 = vadd.f32 0.0, %v1381
      %v1383 = vpop.f32.mrb[0].mxu0
      %1384 = vdwg.mxu0
      %v1385 = vadd.f32 %v1021, %v1259
      %v1386 = vadd.f32 %v1022, %v1262
      %v1387 = vadd.f32 %v1023, %v1267
      %v1388 = vadd.f32 %v1024, %v1270
      %v1389 = vadd.f32 %v1025, %v1275
      %v1390 = vadd.f32 %v1026, %v1278
      %v1391 = vadd.f32 %v1027, %v1283
      %v1392 = vadd.f32 %v1028, %v1286
      %v1393 = vadd.f32 %v1029, %v1291
      %v1394 = vadd.f32 %v1030, %v1294
      %v1395 = vadd.f32 %v1031, %v1299
      %v1396 = vadd.f32 %v1032, %v1302
      %v1397 = vadd.f32 %v1033, %v1307
      %v1398 = vadd.f32 %v1034, %v1310
      %v1399 = vadd.f32 %v1035, %v1315
      %v1400 = vadd.f32 %v1036, %v1318
      %v1401 = vadd.f32 %v1037, %v1323
      %v1402 = vadd.f32 %v1038, %v1326
      %v1403 = vadd.f32 %v1039, %v1331
      %v1404 = vadd.f32 %v1040, %v1334
      %v1405 = vadd.f32 %v1041, %v1339
      %v1406 = vadd.f32 %v1042, %v1342
      %v1407 = vadd.f32 %v1043, %v1347
      %v1408 = vadd.f32 %v1044, %v1350
      %v1409 = vadd.f32 %v1045, %v1355
      %v1410 = vadd.f32 %v1046, %v1358
      %v1411 = vadd.f32 %v1047, %v1363
      %v1412 = vadd.f32 %v1048, %v1366
      %v1413 = vadd.f32 %v1049, %v1371
      %v1414 = vadd.f32 %v1050, %v1374
      %v1415 = vadd.f32 %v1051, %v1379
      %v1416 = vadd.f32 %v1052, %v1382
      %v1417 = vld [vmem:[%s167 + $0x20] sm:$0xf]
      %v1418 = vld [vmem:[%s167 + $0x24] sm:$0xf]
      %v1419 = vld [vmem:[%s167 + $0x28] sm:$0xf]
      %v1420 = vld [vmem:[%s167 + $0x2c] sm:$0xf]
      %v1421 = vld [vmem:[%s167 + $0x30] sm:$0xf]
      %v1422 = vld [vmem:[%s167 + $0x34] sm:$0xf]
      %v1423 = vld [vmem:[%s167 + $0x38] sm:$0xf]
      %v1424 = vld [vmem:[%s167 + $0x3c] sm:$0xf]
      %v1425 = vld [vmem:[%s167 + $0x40] sm:$0xf]
      %v1426 = vld [vmem:[%s167 + $0x44] sm:$0xf]
      %v1427 = vld [vmem:[%s167 + $0x48] sm:$0xf]
      %v1428 = vld [vmem:[%s167 + $0x4c] sm:$0xf]
      %v1429 = vld [vmem:[%s167 + $0x50] sm:$0xf]
      %v1430 = vld [vmem:[%s167 + $0x54] sm:$0xf]
      %v1431 = vld [vmem:[%s167 + $0x58] sm:$0xf]
      %v1432 = vld [vmem:[%s167 + $0x5c] sm:$0xf]
      %v1433 = vld [vmem:[%s167 + $0x60] sm:$0xf]
      %v1434 = vld [vmem:[%s167 + $0x64] sm:$0xf]
      %v1435 = vld [vmem:[%s167 + $0x68] sm:$0xf]
      %v1436 = vld [vmem:[%s167 + $0x6c] sm:$0xf]
      %v1437 = vld [vmem:[%s167 + $0x70] sm:$0xf]
      %v1438 = vld [vmem:[%s167 + $0x74] sm:$0xf]
      %v1439 = vld [vmem:[%s167 + $0x78] sm:$0xf]
      %v1440 = vld [vmem:[%s167 + $0x7c] sm:$0xf]
      %v1441 = vld [vmem:[%s167 + $0x80] sm:$0xf]
      %v1442 = vld [vmem:[%s167 + $0x84] sm:$0xf]
      %v1443 = vld [vmem:[%s167 + $0x88] sm:$0xf]
      %v1444 = vld [vmem:[%s167 + $0x8c] sm:$0xf]
      %v1445 = vld [vmem:[%s167 + $0x90] sm:$0xf]
      %v1446 = vld [vmem:[%s167 + $0x94] sm:$0xf]
      %v1447 = vld [vmem:[%s167 + $0x98] sm:$0xf]
      %v1448 = vld [vmem:[%s167 + $0x9c] sm:$0xf]
      %s1449 = scalar_lea.vmem %s1, 32
      %v1450 = vld [vmem:[%s1449] sm:$0xf]
      %v1451 = vld [vmem:[%s1449 + $0x4] sm:$0x7]
      %v1484 = vunpack.c.l.b16 %v1417
      %v1485 = vunpack.c.l.b16 %v1418
      %v1486 = vunpack.c.l.b16 %v1419
      %v1487 = vunpack.c.l.b16 %v1420
      %v1488 = vunpack.c.l.b16 %v1421
      %v1489 = vunpack.c.l.b16 %v1422
      %v1490 = vunpack.c.l.b16 %v1423
      %v1491 = vunpack.c.l.b16 %v1424
      %v1492 = vunpack.c.l.b16 %v1425
      %v1493 = vunpack.c.l.b16 %v1426
      %v1494 = vunpack.c.l.b16 %v1427
      %v1495 = vunpack.c.l.b16 %v1428
      %v1496 = vunpack.c.l.b16 %v1429
      %v1497 = vunpack.c.l.b16 %v1430
      %v1498 = vunpack.c.l.b16 %v1431
      %v1499 = vunpack.c.l.b16 %v1432
      %v1500 = vunpack.c.l.b16 %v1433
      %v1501 = vunpack.c.l.b16 %v1434
      %v1502 = vunpack.c.l.b16 %v1435
      %v1503 = vunpack.c.l.b16 %v1436
      %v1504 = vunpack.c.l.b16 %v1437
      %v1505 = vunpack.c.l.b16 %v1438
      %v1506 = vunpack.c.l.b16 %v1439
      %v1507 = vunpack.c.l.b16 %v1440
      %v1508 = vunpack.c.l.b16 %v1441
      %v1509 = vunpack.c.l.b16 %v1442
      %v1510 = vunpack.c.l.b16 %v1443
      %v1511 = vunpack.c.l.b16 %v1444
      %v1512 = vunpack.c.l.b16 %v1445
      %v1513 = vunpack.c.l.b16 %v1446
      %v1514 = vunpack.c.l.b16 %v1447
      %v1515 = vunpack.c.l.b16 %v1448
      %v1516 = vpack.c.b16 %v1485, %v1484
      %v1517 = vpack.c.b16 %v1487, %v1486
      %v1518 = vpack.c.b16 %v1489, %v1488
      %v1519 = vpack.c.b16 %v1491, %v1490
      %v1520 = vpack.c.b16 %v1493, %v1492
      %v1521 = vpack.c.b16 %v1495, %v1494
      %v1522 = vpack.c.b16 %v1497, %v1496
      %v1523 = vpack.c.b16 %v1499, %v1498
      %v1524 = vpack.c.b16 %v1501, %v1500
      %v1525 = vpack.c.b16 %v1503, %v1502
      %v1526 = vpack.c.b16 %v1505, %v1504
      %v1527 = vpack.c.b16 %v1507, %v1506
      %v1528 = vpack.c.b16 %v1509, %v1508
      %v1529 = vpack.c.b16 %v1511, %v1510
      %v1530 = vpack.c.b16 %v1513, %v1512
      %v1531 = vpack.c.b16 %v1515, %v1514
      %v1534 = vunpack.c.l.b16 %v1450
      %v1535 = vunpack.c.l.b16 %v1451
      %v1536 = vpack.c.b16 %v1535, %v1534
      %v1538 = vsel %vm298, %v1516, 0
      %v1541 = vsel %vm298, %v1517, 0
      %v1544 = vsel %vm298, %v1518, 0
      %v1547 = vsel %vm298, %v1519, 0
      %v1550 = vsel %vm298, %v1520, 0
      %v1553 = vsel %vm298, %v1521, 0
      %v1556 = vsel %vm298, %v1522, 0
      %v1559 = vsel %vm298, %v1523, 0
      %v1562 = vsel %vm298, %v1524, 0
      %v1565 = vsel %vm298, %v1525, 0
      %v1568 = vsel %vm298, %v1526, 0
      %v1571 = vsel %vm298, %v1527, 0
      %v1574 = vsel %vm298, %v1528, 0
      %v1577 = vsel %vm298, %v1529, 0
      %v1580 = vsel %vm298, %v1530, 0
      %v1583 = vsel %vm298, %v1531, 0
      %v1586 = vsel %vm347, %v1536, 0
      %1588 = vmatprep.subr.bf16.mxu0 0
      %1589 = vmatpush1.bf16.msra.mxu0 %v1586
      %1590 = vmatprep.subr.bf16.mxu0 0
      %1591 = vmatpush1.bf16.msra.mxu0 0
      %1592 = vmatprep.subr.bf16.mxu0 0
      %1593 = vmatpush1.bf16.msra.mxu0 0
      %1594 = vmatprep.subr.bf16.mxu0 0
      %1595 = vmatpush1.bf16.msra.mxu0 0
      %1596 = vmatprep.subr.bf16.mxu0 0
      %1597 = vmatpush1.bf16.msra.mxu0 0
      %1598 = vmatprep.subr.bf16.mxu0 0
      %1599 = vmatpush1.bf16.msra.mxu0 0
      %1600 = vmatprep.subr.bf16.mxu0 0
      %1601 = vmatpush1.bf16.msra.mxu0 0
      %1602 = vmatprep.subr.bf16.mxu0 0
      %1603 = vmatpush1.bf16.msra.mxu0 0
      %1604 = vmatprep.subr.bf16.mxu0 0
      %1605 = vmatpush1.bf16.msra.mxu0 0
      %1606 = vmatprep.subr.bf16.mxu0 0
      %1607 = vmatpush1.bf16.msra.mxu0 0
      %1608 = vmatprep.subr.bf16.mxu0 0
      %1609 = vmatpush1.bf16.msra.mxu0 0
      %1610 = vmatprep.subr.bf16.mxu0 0
      %1611 = vmatpush1.bf16.msra.mxu0 0
      %1612 = vmatprep.subr.bf16.mxu0 0
      %1613 = vmatpush1.bf16.msra.mxu0 0
      %1614 = vmatprep.subr.bf16.mxu0 0
      %1615 = vmatpush1.bf16.msra.mxu0 0
      %1616 = vmatprep.subr.bf16.mxu0 0
      %1617 = vmatpush1.bf16.msra.mxu0 0
      %1618 = vmatprep.subr.bf16.mxu0 0
      %1619 = vmatpush1.bf16.msra.mxu0 0
      %1620 = vmatprep.mubr.bf16.mxu0 0
      %1621 = vmatmul.mubr.bf16.gmra.mrb[0].mxu0 %v1538
      %v1622 = vpop.f32.mrb[0].mxu0
      %v1623 = vadd.f32 0.0, %v1622
      %v1624 = vpop.f32.mrb[0].mxu0
      %v1625 = vpop.f32.mrb[0].mxu0
      %v1626 = vadd.f32 0.0, %v1625
      %v1627 = vpop.f32.mrb[0].mxu0
      %1628 = vmatprep.mubr.bf16.mxu0 0
      %1629 = vmatmul.mubr.bf16.gmra.mrb[0].mxu0 %v1541
      %v1630 = vpop.f32.mrb[0].mxu0
      %v1631 = vadd.f32 0.0, %v1630
      %v1632 = vpop.f32.mrb[0].mxu0
      %v1633 = vpop.f32.mrb[0].mxu0
      %v1634 = vadd.f32 0.0, %v1633
      %v1635 = vpop.f32.mrb[0].mxu0
      %1636 = vmatprep.mubr.bf16.mxu0 0
      %1637 = vmatmul.mubr.bf16.gmra.mrb[0].mxu0 %v1544
      %v1638 = vpop.f32.mrb[0].mxu0
      %v1639 = vadd.f32 0.0, %v1638
      %v1640 = vpop.f32.mrb[0].mxu0
      %v1641 = vpop.f32.mrb[0].mxu0
      %v1642 = vadd.f32 0.0, %v1641
      %v1643 = vpop.f32.mrb[0].mxu0
      %1644 = vmatprep.mubr.bf16.mxu0 0
      %1645 = vmatmul.mubr.bf16.gmra.mrb[0].mxu0 %v1547
      %v1646 = vpop.f32.mrb[0].mxu0
      %v1647 = vadd.f32 0.0, %v1646
      %v1648 = vpop.f32.mrb[0].mxu0
      %v1649 = vpop.f32.mrb[0].mxu0
      %v1650 = vadd.f32 0.0, %v1649
      %v1651 = vpop.f32.mrb[0].mxu0
      %1652 = vmatprep.mubr.bf16.mxu0 0
      %1653 = vmatmul.mubr.bf16.gmra.mrb[0].mxu0 %v1550
      %v1654 = vpop.f32.mrb[0].mxu0
      %v1655 = vadd.f32 0.0, %v1654
      %v1656 = vpop.f32.mrb[0].mxu0
      %v1657 = vpop.f32.mrb[0].mxu0
      %v1658 = vadd.f32 0.0, %v1657
      %v1659 = vpop.f32.mrb[0].mxu0
      %1660 = vmatprep.mubr.bf16.mxu0 0
      %1661 = vmatmul.mubr.bf16.gmra.mrb[0].mxu0 %v1553
      %v1662 = vpop.f32.mrb[0].mxu0
      %v1663 = vadd.f32 0.0, %v1662
      %v1664 = vpop.f32.mrb[0].mxu0
      %v1665 = vpop.f32.mrb[0].mxu0
      %v1666 = vadd.f32 0.0, %v1665
      %v1667 = vpop.f32.mrb[0].mxu0
      %1668 = vmatprep.mubr.bf16.mxu0 0
      %1669 = vmatmul.mubr.bf16.gmra.mrb[0].mxu0 %v1556
      %v1670 = vpop.f32.mrb[0].mxu0
      %v1671 = vadd.f32 0.0, %v1670
      %v1672 = vpop.f32.mrb[0].mxu0
      %v1673 = vpop.f32.mrb[0].mxu0
      %v1674 = vadd.f32 0.0, %v1673
      %v1675 = vpop.f32.mrb[0].mxu0
      %1676 = vmatprep.mubr.bf16.mxu0 0
      %1677 = vmatmul.mubr.bf16.gmra.mrb[0].mxu0 %v1559
      %v1678 = vpop.f32.mrb[0].mxu0
      %v1679 = vadd.f32 0.0, %v1678
      %v1680 = vpop.f32.mrb[0].mxu0
      %v1681 = vpop.f32.mrb[0].mxu0
      %v1682 = vadd.f32 0.0, %v1681
      %v1683 = vpop.f32.mrb[0].mxu0
      %1684 = vmatprep.mubr.bf16.mxu0 0
      %1685 = vmatmul.mubr.bf16.gmra.mrb[0].mxu0 %v1562
      %v1686 = vpop.f32.mrb[0].mxu0
      %v1687 = vadd.f32 0.0, %v1686
      %v1688 = vpop.f32.mrb[0].mxu0
      %v1689 = vpop.f32.mrb[0].mxu0
      %v1690 = vadd.f32 0.0, %v1689
      %v1691 = vpop.f32.mrb[0].mxu0
      %1692 = vmatprep.mubr.bf16.mxu0 0
      %1693 = vmatmul.mubr.bf16.gmra.mrb[0].mxu0 %v1565
      %v1694 = vpop.f32.mrb[0].mxu0
      %v1695 = vadd.f32 0.0, %v1694
      %v1696 = vpop.f32.mrb[0].mxu0
      %v1697 = vpop.f32.mrb[0].mxu0
      %v1698 = vadd.f32 0.0, %v1697
      %v1699 = vpop.f32.mrb[0].mxu0
      %1700 = vmatprep.mubr.bf16.mxu0 0
      %1701 = vmatmul.mubr.bf16.gmra.mrb[0].mxu0 %v1568
      %v1702 = vpop.f32.mrb[0].mxu0
      %v1703 = vadd.f32 0.0, %v1702
      %v1704 = vpop.f32.mrb[0].mxu0
      %v1705 = vpop.f32.mrb[0].mxu0
      %v1706 = vadd.f32 0.0, %v1705
      %v1707 = vpop.f32.mrb[0].mxu0
      %1708 = vmatprep.mubr.bf16.mxu0 0
      %1709 = vmatmul.mubr.bf16.gmra.mrb[0].mxu0 %v1571
      %v1710 = vpop.f32.mrb[0].mxu0
      %v1711 = vadd.f32 0.0, %v1710
      %v1712 = vpop.f32.mrb[0].mxu0
      %v1713 = vpop.f32.mrb[0].mxu0
      %v1714 = vadd.f32 0.0, %v1713
      %v1715 = vpop.f32.mrb[0].mxu0
      %1716 = vmatprep.mubr.bf16.mxu0 0
      %1717 = vmatmul.mubr.bf16.gmra.mrb[0].mxu0 %v1574
      %v1718 = vpop.f32.mrb[0].mxu0
      %v1719 = vadd.f32 0.0, %v1718
      %v1720 = vpop.f32.mrb[0].mxu0
      %v1721 = vpop.f32.mrb[0].mxu0
      %v1722 = vadd.f32 0.0, %v1721
      %v1723 = vpop.f32.mrb[0].mxu0
      %1724 = vmatprep.mubr.bf16.mxu0 0
      %1725 = vmatmul.mubr.bf16.gmra.mrb[0].mxu0 %v1577
      %v1726 = vpop.f32.mrb[0].mxu0
      %v1727 = vadd.f32 0.0, %v1726
      %v1728 = vpop.f32.mrb[0].mxu0
      %v1729 = vpop.f32.mrb[0].mxu0
      %v1730 = vadd.f32 0.0, %v1729
      %v1731 = vpop.f32.mrb[0].mxu0
      %1732 = vmatprep.mubr.bf16.mxu0 0
      %1733 = vmatmul.mubr.bf16.gmra.mrb[0].mxu0 %v1580
      %v1734 = vpop.f32.mrb[0].mxu0
      %v1735 = vadd.f32 0.0, %v1734
      %v1736 = vpop.f32.mrb[0].mxu0
      %v1737 = vpop.f32.mrb[0].mxu0
      %v1738 = vadd.f32 0.0, %v1737
      %v1739 = vpop.f32.mrb[0].mxu0
      %1740 = vmatprep.mubr.bf16.mxu0 0
      %1741 = vmatmul.mubr.bf16.gmra.mrb[0].mxu0 %v1583
      %v1742 = vpop.f32.mrb[0].mxu0
      %v1743 = vadd.f32 0.0, %v1742
      %v1744 = vpop.f32.mrb[0].mxu0
      %v1745 = vpop.f32.mrb[0].mxu0
      %v1746 = vadd.f32 0.0, %v1745
      %v1747 = vpop.f32.mrb[0].mxu0
      %1748 = vdwg.mxu0
      %v1749 = vadd.f32 %v1385, %v1623
      %v1750 = vadd.f32 %v1386, %v1626
      %v1751 = vadd.f32 %v1387, %v1631
      %v1752 = vadd.f32 %v1388, %v1634
      %v1753 = vadd.f32 %v1389, %v1639
      %v1754 = vadd.f32 %v1390, %v1642
      %v1755 = vadd.f32 %v1391, %v1647
      %v1756 = vadd.f32 %v1392, %v1650
      %v1757 = vadd.f32 %v1393, %v1655
      %v1758 = vadd.f32 %v1394, %v1658
      %v1759 = vadd.f32 %v1395, %v1663
      %v1760 = vadd.f32 %v1396, %v1666
      %v1761 = vadd.f32 %v1397, %v1671
      %v1762 = vadd.f32 %v1398, %v1674
      %v1763 = vadd.f32 %v1399, %v1679
      %v1764 = vadd.f32 %v1400, %v1682
      %v1765 = vadd.f32 %v1401, %v1687
      %v1766 = vadd.f32 %v1402, %v1690
      %v1767 = vadd.f32 %v1403, %v1695
      %v1768 = vadd.f32 %v1404, %v1698
      %v1769 = vadd.f32 %v1405, %v1703
      %v1770 = vadd.f32 %v1406, %v1706
      %v1771 = vadd.f32 %v1407, %v1711
      %v1772 = vadd.f32 %v1408, %v1714
      %v1773 = vadd.f32 %v1409, %v1719
      %v1774 = vadd.f32 %v1410, %v1722
      %v1775 = vadd.f32 %v1411, %v1727
      %v1776 = vadd.f32 %v1412, %v1730
      %v1777 = vadd.f32 %v1413, %v1735
      %v1778 = vadd.f32 %v1414, %v1738
      %v1779 = vadd.f32 %v1415, %v1743
      %v1780 = vadd.f32 %v1416, %v1746
      %v1781 = vld [vmem:[%s167 + $0x28] sm:$0xf]
      %v1782 = vld [vmem:[%s167 + $0x2c] sm:$0xf]
      %v1783 = vld [vmem:[%s167 + $0x30] sm:$0xf]
      %v1784 = vld [vmem:[%s167 + $0x34] sm:$0xf]
      %v1785 = vld [vmem:[%s167 + $0x38] sm:$0xf]
      %v1786 = vld [vmem:[%s167 + $0x3c] sm:$0xf]
      %v1787 = vld [vmem:[%s167 + $0x40] sm:$0xf]
      %v1788 = vld [vmem:[%s167 + $0x44] sm:$0xf]
      %v1789 = vld [vmem:[%s167 + $0x48] sm:$0xf]
      %v1790 = vld [vmem:[%s167 + $0x4c] sm:$0xf]
      %v1791 = vld [vmem:[%s167 + $0x50] sm:$0xf]
      %v1792 = vld [vmem:[%s167 + $0x54] sm:$0xf]
      %v1793 = vld [vmem:[%s167 + $0x58] sm:$0xf]
      %v1794 = vld [vmem:[%s167 + $0x5c] sm:$0xf]
      %v1795 = vld [vmem:[%s167 + $0x60] sm:$0xf]
      %v1796 = vld [vmem:[%s167 + $0x64] sm:$0xf]
      %v1797 = vld [vmem:[%s167 + $0x68] sm:$0xf]
      %v1798 = vld [vmem:[%s167 + $0x6c] sm:$0xf]
      %v1799 = vld [vmem:[%s167 + $0x70] sm:$0xf]
      %v1800 = vld [vmem:[%s167 + $0x74] sm:$0xf]
      %v1801 = vld [vmem:[%s167 + $0x78] sm:$0xf]
      %v1802 = vld [vmem:[%s167 + $0x7c] sm:$0xf]
      %v1803 = vld [vmem:[%s167 + $0x80] sm:$0xf]
      %v1804 = vld [vmem:[%s167 + $0x84] sm:$0xf]
      %v1805 = vld [vmem:[%s167 + $0x88] sm:$0xf]
      %v1806 = vld [vmem:[%s167 + $0x8c] sm:$0xf]
      %v1807 = vld [vmem:[%s167 + $0x90] sm:$0xf]
      %v1808 = vld [vmem:[%s167 + $0x94] sm:$0xf]
      %v1809 = vld [vmem:[%s167 + $0x98] sm:$0xf]
      %v1810 = vld [vmem:[%s167 + $0x9c] sm:$0xf]
      %v1811 = vld [vmem:[%s167 + $0xa0] sm:$0xf]
      %v1812 = vld [vmem:[%s167 + $0xa4] sm:$0xf]
      %s1813 = scalar_lea.vmem %s1, 40
      %v1814 = vld [vmem:[%s1813] sm:$0xf]
      %v1815 = vld [vmem:[%s1813 + $0x4] sm:$0x7]
      %v1848 = vunpack.c.l.b16 %v1781
      %v1849 = vunpack.c.l.b16 %v1782
      %v1850 = vunpack.c.l.b16 %v1783
      %v1851 = vunpack.c.l.b16 %v1784
      %v1852 = vunpack.c.l.b16 %v1785
      %v1853 = vunpack.c.l.b16 %v1786
      %v1854 = vunpack.c.l.b16 %v1787
      %v1855 = vunpack.c.l.b16 %v1788
      %v1856 = vunpack.c.l.b16 %v1789
      %v1857 = vunpack.c.l.b16 %v1790
      %v1858 = vunpack.c.l.b16 %v1791
      %v1859 = vunpack.c.l.b16 %v1792
      %v1860 = vunpack.c.l.b16 %v1793
      %v1861 = vunpack.c.l.b16 %v1794
      %v1862 = vunpack.c.l.b16 %v1795
      %v1863 = vunpack.c.l.b16 %v1796
      %v1864 = vunpack.c.l.b16 %v1797
      %v1865 = vunpack.c.l.b16 %v1798
      %v1866 = vunpack.c.l.b16 %v1799
      %v1867 = vunpack.c.l.b16 %v1800
      %v1868 = vunpack.c.l.b16 %v1801
      %v1869 = vunpack.c.l.b16 %v1802
      %v1870 = vunpack.c.l.b16 %v1803
      %v1871 = vunpack.c.l.b16 %v1804
      %v1872 = vunpack.c.l.b16 %v1805
      %v1873 = vunpack.c.l.b16 %v1806
      %v1874 = vunpack.c.l.b16 %v1807
      %v1875 = vunpack.c.l.b16 %v1808
      %v1876 = vunpack.c.l.b16 %v1809
      %v1877 = vunpack.c.l.b16 %v1810
      %v1878 = vunpack.c.l.b16 %v1811
      %v1879 = vunpack.c.l.b16 %v1812
      %v1880 = vpack.c.b16 %v1849, %v1848
      %v1881 = vpack.c.b16 %v1851, %v1850
      %v1882 = vpack.c.b16 %v1853, %v1852
      %v1883 = vpack.c.b16 %v1855, %v1854
      %v1884 = vpack.c.b16 %v1857, %v1856
      %v1885 = vpack.c.b16 %v1859, %v1858
      %v1886 = vpack.c.b16 %v1861, %v1860
      %v1887 = vpack.c.b16 %v1863, %v1862
      %v1888 = vpack.c.b16 %v1865, %v1864
      %v1889 = vpack.c.b16 %v1867, %v1866
      %v1890 = vpack.c.b16 %v1869, %v1868
      %v1891 = vpack.c.b16 %v1871, %v1870
      %v1892 = vpack.c.b16 %v1873, %v1872
      %v1893 = vpack.c.b16 %v1875, %v1874
      %v1894 = vpack.c.b16 %v1877, %v1876
      %v1895 = vpack.c.b16 %v1879, %v1878
      %v1898 = vunpack.c.l.b16 %v1814
      %v1899 = vunpack.c.l.b16 %v1815
      %v1900 = vpack.c.b16 %v1899, %v1898
      %v1902 = vsel %vm298, %v1880, 0
      %v1905 = vsel %vm298, %v1881, 0
      %v1908 = vsel %vm298, %v1882, 0
      %v1911 = vsel %vm298, %v1883, 0
      %v1914 = vsel %vm298, %v1884, 0
      %v1917 = vsel %vm298, %v1885, 0
      %v1920 = vsel %vm298, %v1886, 0
      %v1923 = vsel %vm298, %v1887, 0
      %v1926 = vsel %vm298, %v1888, 0
      %v1929 = vsel %vm298, %v1889, 0
      %v1932 = vsel %vm298, %v1890, 0
      %v1935 = vsel %vm298, %v1891, 0
      %v1938 = vsel %vm298, %v1892, 0
      %v1941 = vsel %vm298, %v1893, 0
      %v1944 = vsel %vm298, %v1894, 0
      %v1947 = vsel %vm298, %v1895, 0
      %v1950 = vsel %vm347, %v1900, 0
      %1952 = vmatprep.subr.bf16.mxu0 0
      %1953 = vmatpush1.bf16.msra.mxu0 %v1950
      %1954 = vmatprep.subr.bf16.mxu0 0
      %1955 = vmatpush1.bf16.msra.mxu0 0
      %1956 = vmatprep.subr.bf16.mxu0 0
      %1957 = vmatpush1.bf16.msra.mxu0 0
      %1958 = vmatprep.subr.bf16.mxu0 0
      %1959 = vmatpush1.bf16.msra.mxu0 0
      %1960 = vmatprep.subr.bf16.mxu0 0
      %1961 = vmatpush1.bf16.msra.mxu0 0
      %1962 = vmatprep.subr.bf16.mxu0 0
      %1963 = vmatpush1.bf16.msra.mxu0 0
      %1964 = vmatprep.subr.bf16.mxu0 0
      %1965 = vmatpush1.bf16.msra.mxu0 0
      %1966 = vmatprep.subr.bf16.mxu0 0
      %1967 = vmatpush1.bf16.msra.mxu0 0
      %1968 = vmatprep.subr.bf16.mxu0 0
      %1969 = vmatpush1.bf16.msra.mxu0 0
      %1970 = vmatprep.subr.bf16.mxu0 0
      %1971 = vmatpush1.bf16.msra.mxu0 0
      %1972 = vmatprep.subr.bf16.mxu0 0
      %1973 = vmatpush1.bf16.msra.mxu0 0
      %1974 = vmatprep.subr.bf16.mxu0 0
      %1975 = vmatpush1.bf16.msra.mxu0 0
      %1976 = vmatprep.subr.bf16.mxu0 0
      %1977 = vmatpush1.bf16.msra.mxu0 0
      %1978 = vmatprep.subr.bf16.mxu0 0
      %1979 = vmatpush1.bf16.msra.mxu0 0
      %1980 = vmatprep.subr.bf16.mxu0 0
      %1981 = vmatpush1.bf16.msra.mxu0 0
      %1982 = vmatprep.subr.bf16.mxu0 0
      %1983 = vmatpush1.bf16.msra.mxu0 0
      %1984 = vmatprep.mubr.bf16.mxu0 0
      %1985 = vmatmul.mubr.bf16.gmra.mrb[0].mxu0 %v1902
      %v1986 = vpop.f32.mrb[0].mxu0
      %v1987 = vadd.f32 0.0, %v1986
      %v1988 = vpop.f32.mrb[0].mxu0
      %v1989 = vpop.f32.mrb[0].mxu0
      %v1990 = vadd.f32 0.0, %v1989
      %v1991 = vpop.f32.mrb[0].mxu0
      %1992 = vmatprep.mubr.bf16.mxu0 0
      %1993 = vmatmul.mubr.bf16.gmra.mrb[0].mxu0 %v1905
      %v1994 = vpop.f32.mrb[0].mxu0
      %v1995 = vadd.f32 0.0, %v1994
      %v1996 = vpop.f32.mrb[0].mxu0
      %v1997 = vpop.f32.mrb[0].mxu0
      %v1998 = vadd.f32 0.0, %v1997
      %v1999 = vpop.f32.mrb[0].mxu0
      %2000 = vmatprep.mubr.bf16.mxu0 0
      %2001 = vmatmul.mubr.bf16.gmra.mrb[0].mxu0 %v1908
      %v2002 = vpop.f32.mrb[0].mxu0
      %v2003 = vadd.f32 0.0, %v2002
      %v2004 = vpop.f32.mrb[0].mxu0
      %v2005 = vpop.f32.mrb[0].mxu0
      %v2006 = vadd.f32 0.0, %v2005
      %v2007 = vpop.f32.mrb[0].mxu0
      %2008 = vmatprep.mubr.bf16.mxu0 0
      %2009 = vmatmul.mubr.bf16.gmra.mrb[0].mxu0 %v1911
      %v2010 = vpop.f32.mrb[0].mxu0
      %v2011 = vadd.f32 0.0, %v2010
      %v2012 = vpop.f32.mrb[0].mxu0
      %v2013 = vpop.f32.mrb[0].mxu0
      %v2014 = vadd.f32 0.0, %v2013
      %v2015 = vpop.f32.mrb[0].mxu0
      %2016 = vmatprep.mubr.bf16.mxu0 0
      %2017 = vmatmul.mubr.bf16.gmra.mrb[0].mxu0 %v1914
      %v2018 = vpop.f32.mrb[0].mxu0
      %v2019 = vadd.f32 0.0, %v2018
      %v2020 = vpop.f32.mrb[0].mxu0
      %v2021 = vpop.f32.mrb[0].mxu0
      %v2022 = vadd.f32 0.0, %v2021
      %v2023 = vpop.f32.mrb[0].mxu0
      %2024 = vmatprep.mubr.bf16.mxu0 0
      %2025 = vmatmul.mubr.bf16.gmra.mrb[0].mxu0 %v1917
      %v2026 = vpop.f32.mrb[0].mxu0
      %v2027 = vadd.f32 0.0, %v2026
      %v2028 = vpop.f32.mrb[0].mxu0
      %v2029 = vpop.f32.mrb[0].mxu0
      %v2030 = vadd.f32 0.0, %v2029
      %v2031 = vpop.f32.mrb[0].mxu0
      %2032 = vmatprep.mubr.bf16.mxu0 0
      %2033 = vmatmul.mubr.bf16.gmra.mrb[0].mxu0 %v1920
      %v2034 = vpop.f32.mrb[0].mxu0
      %v2035 = vadd.f32 0.0, %v2034
      %v2036 = vpop.f32.mrb[0].mxu0
      %v2037 = vpop.f32.mrb[0].mxu0
      %v2038 = vadd.f32 0.0, %v2037
      %v2039 = vpop.f32.mrb[0].mxu0
      %2040 = vmatprep.mubr.bf16.mxu0 0
      %2041 = vmatmul.mubr.bf16.gmra.mrb[0].mxu0 %v1923
      %v2042 = vpop.f32.mrb[0].mxu0
      %v2043 = vadd.f32 0.0, %v2042
      %v2044 = vpop.f32.mrb[0].mxu0
      %v2045 = vpop.f32.mrb[0].mxu0
      %v2046 = vadd.f32 0.0, %v2045
      %v2047 = vpop.f32.mrb[0].mxu0
      %2048 = vmatprep.mubr.bf16.mxu0 0
      %2049 = vmatmul.mubr.bf16.gmra.mrb[0].mxu0 %v1926
      %v2050 = vpop.f32.mrb[0].mxu0
      %v2051 = vadd.f32 0.0, %v2050
      %v2052 = vpop.f32.mrb[0].mxu0
      %v2053 = vpop.f32.mrb[0].mxu0
      %v2054 = vadd.f32 0.0, %v2053
      %v2055 = vpop.f32.mrb[0].mxu0
      %2056 = vmatprep.mubr.bf16.mxu0 0
      %2057 = vmatmul.mubr.bf16.gmra.mrb[0].mxu0 %v1929
      %v2058 = vpop.f32.mrb[0].mxu0
      %v2059 = vadd.f32 0.0, %v2058
      %v2060 = vpop.f32.mrb[0].mxu0
      %v2061 = vpop.f32.mrb[0].mxu0
      %v2062 = vadd.f32 0.0, %v2061
      %v2063 = vpop.f32.mrb[0].mxu0
      %2064 = vmatprep.mubr.bf16.mxu0 0
      %2065 = vmatmul.mubr.bf16.gmra.mrb[0].mxu0 %v1932
      %v2066 = vpop.f32.mrb[0].mxu0
      %v2067 = vadd.f32 0.0, %v2066
      %v2068 = vpop.f32.mrb[0].mxu0
      %v2069 = vpop.f32.mrb[0].mxu0
      %v2070 = vadd.f32 0.0, %v2069
      %v2071 = vpop.f32.mrb[0].mxu0
      %2072 = vmatprep.mubr.bf16.mxu0 0
      %2073 = vmatmul.mubr.bf16.gmra.mrb[0].mxu0 %v1935
      %v2074 = vpop.f32.mrb[0].mxu0
      %v2075 = vadd.f32 0.0, %v2074
      %v2076 = vpop.f32.mrb[0].mxu0
      %v2077 = vpop.f32.mrb[0].mxu0
      %v2078 = vadd.f32 0.0, %v2077
      %v2079 = vpop.f32.mrb[0].mxu0
      %2080 = vmatprep.mubr.bf16.mxu0 0
      %2081 = vmatmul.mubr.bf16.gmra.mrb[0].mxu0 %v1938
      %v2082 = vpop.f32.mrb[0].mxu0
      %v2083 = vadd.f32 0.0, %v2082
      %v2084 = vpop.f32.mrb[0].mxu0
      %v2085 = vpop.f32.mrb[0].mxu0
      %v2086 = vadd.f32 0.0, %v2085
      %v2087 = vpop.f32.mrb[0].mxu0
      %2088 = vmatprep.mubr.bf16.mxu0 0
      %2089 = vmatmul.mubr.bf16.gmra.mrb[0].mxu0 %v1941
      %v2090 = vpop.f32.mrb[0].mxu0
      %v2091 = vadd.f32 0.0, %v2090
      %v2092 = vpop.f32.mrb[0].mxu0
      %v2093 = vpop.f32.mrb[0].mxu0
      %v2094 = vadd.f32 0.0, %v2093
      %v2095 = vpop.f32.mrb[0].mxu0
      %2096 = vmatprep.mubr.bf16.mxu0 0
      %2097 = vmatmul.mubr.bf16.gmra.mrb[0].mxu0 %v1944
      %v2098 = vpop.f32.mrb[0].mxu0
      %v2099 = vadd.f32 0.0, %v2098
      %v2100 = vpop.f32.mrb[0].mxu0
      %v2101 = vpop.f32.mrb[0].mxu0
      %v2102 = vadd.f32 0.0, %v2101
      %v2103 = vpop.f32.mrb[0].mxu0
      %2104 = vmatprep.mubr.bf16.mxu0 0
      %2105 = vmatmul.mubr.bf16.gmra.mrb[0].mxu0 %v1947
      %v2106 = vpop.f32.mrb[0].mxu0
      %v2107 = vadd.f32 0.0, %v2106
      %v2108 = vpop.f32.mrb[0].mxu0
      %v2109 = vpop.f32.mrb[0].mxu0
      %v2110 = vadd.f32 0.0, %v2109
      %v2111 = vpop.f32.mrb[0].mxu0
      %2112 = vdwg.mxu0
      %v2113 = vadd.f32 %v1749, %v1987
      %v2114 = vadd.f32 %v1750, %v1990
      %v2115 = vadd.f32 %v1751, %v1995
      %v2116 = vadd.f32 %v1752, %v1998
      %v2117 = vadd.f32 %v1753, %v2003
      %v2118 = vadd.f32 %v1754, %v2006
      %v2119 = vadd.f32 %v1755, %v2011
      %v2120 = vadd.f32 %v1756, %v2014
      %v2121 = vadd.f32 %v1757, %v2019
      %v2122 = vadd.f32 %v1758, %v2022
      %v2123 = vadd.f32 %v1759, %v2027
      %v2124 = vadd.f32 %v1760, %v2030
      %v2125 = vadd.f32 %v1761, %v2035
      %v2126 = vadd.f32 %v1762, %v2038
      %v2127 = vadd.f32 %v1763, %v2043
      %v2128 = vadd.f32 %v1764, %v2046
      %v2129 = vadd.f32 %v1765, %v2051
      %v2130 = vadd.f32 %v1766, %v2054
      %v2131 = vadd.f32 %v1767, %v2059
      %v2132 = vadd.f32 %v1768, %v2062
      %v2133 = vadd.f32 %v1769, %v2067
      %v2134 = vadd.f32 %v1770, %v2070
      %v2135 = vadd.f32 %v1771, %v2075
      %v2136 = vadd.f32 %v1772, %v2078
      %v2137 = vadd.f32 %v1773, %v2083
      %v2138 = vadd.f32 %v1774, %v2086
      %v2139 = vadd.f32 %v1775, %v2091
      %v2140 = vadd.f32 %v1776, %v2094
      %v2141 = vadd.f32 %v1777, %v2099
      %v2142 = vadd.f32 %v1778, %v2102
      %v2143 = vadd.f32 %v1779, %v2107
      %v2144 = vadd.f32 %v1780, %v2110
      %v2145 = vld [vmem:[%s167 + $0x30] sm:$0xf]
      %v2146 = vld [vmem:[%s167 + $0x34] sm:$0xf]
      %v2147 = vld [vmem:[%s167 + $0x38] sm:$0xf]
      %v2148 = vld [vmem:[%s167 + $0x3c] sm:$0xf]
      %v2149 = vld [vmem:[%s167 + $0x40] sm:$0xf]
      %v2150 = vld [vmem:[%s167 + $0x44] sm:$0xf]
      %v2151 = vld [vmem:[%s167 + $0x48] sm:$0xf]
      %v2152 = vld [vmem:[%s167 + $0x4c] sm:$0xf]
      %v2153 = vld [vmem:[%s167 + $0x50] sm:$0xf]
      %v2154 = vld [vmem:[%s167 + $0x54] sm:$0xf]
      %v2155 = vld [vmem:[%s167 + $0x58] sm:$0xf]
      %v2156 = vld [vmem:[%s167 + $0x5c] sm:$0xf]
      %v2157 = vld [vmem:[%s167 + $0x60] sm:$0xf]
      %v2158 = vld [vmem:[%s167 + $0x64] sm:$0xf]
      %v2159 = vld [vmem:[%s167 + $0x68] sm:$0xf]
      %v2160 = vld [vmem:[%s167 + $0x6c] sm:$0xf]
      %v2161 = vld [vmem:[%s167 + $0x70] sm:$0xf]
      %v2162 = vld [vmem:[%s167 + $0x74] sm:$0xf]
      %v2163 = vld [vmem:[%s167 + $0x78] sm:$0xf]
      %v2164 = vld [vmem:[%s167 + $0x7c] sm:$0xf]
      %v2165 = vld [vmem:[%s167 + $0x80] sm:$0xf]
      %v2166 = vld [vmem:[%s167 + $0x84] sm:$0xf]
      %v2167 = vld [vmem:[%s167 + $0x88] sm:$0xf]
      %v2168 = vld [vmem:[%s167 + $0x8c] sm:$0xf]
      %v2169 = vld [vmem:[%s167 + $0x90] sm:$0xf]
      %v2170 = vld [vmem:[%s167 + $0x94] sm:$0xf]
      %v2171 = vld [vmem:[%s167 + $0x98] sm:$0xf]
      %v2172 = vld [vmem:[%s167 + $0x9c] sm:$0xf]
      %v2173 = vld [vmem:[%s167 + $0xa0] sm:$0xf]
      %v2174 = vld [vmem:[%s167 + $0xa4] sm:$0xf]
      %v2175 = vld [vmem:[%s167 + $0xa8] sm:$0xf]
      %v2176 = vld [vmem:[%s167 + $0xac] sm:$0xf]
      %s2177 = scalar_lea.vmem %s1, 48
      %v2178 = vld [vmem:[%s2177] sm:$0xf]
      %v2179 = vld [vmem:[%s2177 + $0x4] sm:$0x7]
      %v2212 = vunpack.c.l.b16 %v2145
      %v2213 = vunpack.c.l.b16 %v2146
      %v2214 = vunpack.c.l.b16 %v2147
      %v2215 = vunpack.c.l.b16 %v2148
      %v2216 = vunpack.c.l.b16 %v2149
      %v2217 = vunpack.c.l.b16 %v2150
      %v2218 = vunpack.c.l.b16 %v2151
      %v2219 = vunpack.c.l.b16 %v2152
      %v2220 = vunpack.c.l.b16 %v2153
      %v2221 = vunpack.c.l.b16 %v2154
      %v2222 = vunpack.c.l.b16 %v2155
      %v2223 = vunpack.c.l.b16 %v2156
      %v2224 = vunpack.c.l.b16 %v2157
      %v2225 = vunpack.c.l.b16 %v2158
      %v2226 = vunpack.c.l.b16 %v2159
      %v2227 = vunpack.c.l.b16 %v2160
      %v2228 = vunpack.c.l.b16 %v2161
      %v2229 = vunpack.c.l.b16 %v2162
      %v2230 = vunpack.c.l.b16 %v2163
      %v2231 = vunpack.c.l.b16 %v2164
      %v2232 = vunpack.c.l.b16 %v2165
      %v2233 = vunpack.c.l.b16 %v2166
      %v2234 = vunpack.c.l.b16 %v2167
      %v2235 = vunpack.c.l.b16 %v2168
      %v2236 = vunpack.c.l.b16 %v2169
      %v2237 = vunpack.c.l.b16 %v2170
      %v2238 = vunpack.c.l.b16 %v2171
      %v2239 = vunpack.c.l.b16 %v2172
      %v2240 = vunpack.c.l.b16 %v2173
      %v2241 = vunpack.c.l.b16 %v2174
      %v2242 = vunpack.c.l.b16 %v2175
      %v2243 = vunpack.c.l.b16 %v2176
      %v2244 = vpack.c.b16 %v2213, %v2212
      %v2245 = vpack.c.b16 %v2215, %v2214
      %v2246 = vpack.c.b16 %v2217, %v2216
      %v2247 = vpack.c.b16 %v2219, %v2218
      %v2248 = vpack.c.b16 %v2221, %v2220
      %v2249 = vpack.c.b16 %v2223, %v2222
      %v2250 = vpack.c.b16 %v2225, %v2224
      %v2251 = vpack.c.b16 %v2227, %v2226
      %v2252 = vpack.c.b16 %v2229, %v2228
      %v2253 = vpack.c.b16 %v2231, %v2230
      %v2254 = vpack.c.b16 %v2233, %v2232
      %v2255 = vpack.c.b16 %v2235, %v2234
      %v2256 = vpack.c.b16 %v2237, %v2236
      %v2257 = vpack.c.b16 %v2239, %v2238
      %v2258 = vpack.c.b16 %v2241, %v2240
      %v2259 = vpack.c.b16 %v2243, %v2242
      %v2262 = vunpack.c.l.b16 %v2178
      %v2263 = vunpack.c.l.b16 %v2179
      %v2264 = vpack.c.b16 %v2263, %v2262
      %v2266 = vsel %vm298, %v2244, 0
      %v2269 = vsel %vm298, %v2245, 0
      %v2272 = vsel %vm298, %v2246, 0
      %v2275 = vsel %vm298, %v2247, 0
      %v2278 = vsel %vm298, %v2248, 0
      %v2281 = vsel %vm298, %v2249, 0
      %v2284 = vsel %vm298, %v2250, 0
      %v2287 = vsel %vm298, %v2251, 0
      %v2290 = vsel %vm298, %v2252, 0
      %v2293 = vsel %vm298, %v2253, 0
      %v2296 = vsel %vm298, %v2254, 0
      %v2299 = vsel %vm298, %v2255, 0
      %v2302 = vsel %vm298, %v2256, 0
      %v2305 = vsel %vm298, %v2257, 0
      %v2308 = vsel %vm298, %v2258, 0
      %v2311 = vsel %vm298, %v2259, 0
      %v2314 = vsel %vm347, %v2264, 0
      %2316 = vmatprep.subr.bf16.mxu0 0
      %2317 = vmatpush1.bf16.msra.mxu0 %v2314
      %2318 = vmatprep.subr.bf16.mxu0 0
      %2319 = vmatpush1.bf16.msra.mxu0 0
      %2320 = vmatprep.subr.bf16.mxu0 0
      %2321 = vmatpush1.bf16.msra.mxu0 0
      %2322 = vmatprep.subr.bf16.mxu0 0
      %2323 = vmatpush1.bf16.msra.mxu0 0
      %2324 = vmatprep.subr.bf16.mxu0 0
      %2325 = vmatpush1.bf16.msra.mxu0 0
      %2326 = vmatprep.subr.bf16.mxu0 0
      %2327 = vmatpush1.bf16.msra.mxu0 0
      %2328 = vmatprep.subr.bf16.mxu0 0
      %2329 = vmatpush1.bf16.msra.mxu0 0
      %2330 = vmatprep.subr.bf16.mxu0 0
      %2331 = vmatpush1.bf16.msra.mxu0 0
      %2332 = vmatprep.subr.bf16.mxu0 0
      %2333 = vmatpush1.bf16.msra.mxu0 0
      %2334 = vmatprep.subr.bf16.mxu0 0
      %2335 = vmatpush1.bf16.msra.mxu0 0
      %2336 = vmatprep.subr.bf16.mxu0 0
      %2337 = vmatpush1.bf16.msra.mxu0 0
      %2338 = vmatprep.subr.bf16.mxu0 0
      %2339 = vmatpush1.bf16.msra.mxu0 0
      %2340 = vmatprep.subr.bf16.mxu0 0
      %2341 = vmatpush1.bf16.msra.mxu0 0
      %2342 = vmatprep.subr.bf16.mxu0 0
      %2343 = vmatpush1.bf16.msra.mxu0 0
      %2344 = vmatprep.subr.bf16.mxu0 0
      %2345 = vmatpush1.bf16.msra.mxu0 0
      %2346 = vmatprep.subr.bf16.mxu0 0
      %2347 = vmatpush1.bf16.msra.mxu0 0
      %2348 = vmatprep.mubr.bf16.mxu0 0
      %2349 = vmatmul.mubr.bf16.gmra.mrb[0].mxu0 %v2266
      %v2350 = vpop.f32.mrb[0].mxu0
      %v2351 = vadd.f32 0.0, %v2350
      %v2352 = vpop.f32.mrb[0].mxu0
      %v2353 = vpop.f32.mrb[0].mxu0
      %v2354 = vadd.f32 0.0, %v2353
      %v2355 = vpop.f32.mrb[0].mxu0
      %2356 = vmatprep.mubr.bf16.mxu0 0
      %2357 = vmatmul.mubr.bf16.gmra.mrb[0].mxu0 %v2269
      %v2358 = vpop.f32.mrb[0].mxu0
      %v2359 = vadd.f32 0.0, %v2358
      %v2360 = vpop.f32.mrb[0].mxu0
      %v2361 = vpop.f32.mrb[0].mxu0
      %v2362 = vadd.f32 0.0, %v2361
      %v2363 = vpop.f32.mrb[0].mxu0
      %2364 = vmatprep.mubr.bf16.mxu0 0
      %2365 = vmatmul.mubr.bf16.gmra.mrb[0].mxu0 %v2272
      %v2366 = vpop.f32.mrb[0].mxu0
      %v2367 = vadd.f32 0.0, %v2366
      %v2368 = vpop.f32.mrb[0].mxu0
      %v2369 = vpop.f32.mrb[0].mxu0
      %v2370 = vadd.f32 0.0, %v2369
      %v2371 = vpop.f32.mrb[0].mxu0
      %2372 = vmatprep.mubr.bf16.mxu0 0
      %2373 = vmatmul.mubr.bf16.gmra.mrb[0].mxu0 %v2275
      %v2374 = vpop.f32.mrb[0].mxu0
      %v2375 = vadd.f32 0.0, %v2374
      %v2376 = vpop.f32.mrb[0].mxu0
      %v2377 = vpop.f32.mrb[0].mxu0
      %v2378 = vadd.f32 0.0, %v2377
      %v2379 = vpop.f32.mrb[0].mxu0
      %2380 = vmatprep.mubr.bf16.mxu0 0
      %2381 = vmatmul.mubr.bf16.gmra.mrb[0].mxu0 %v2278
      %v2382 = vpop.f32.mrb[0].mxu0
      %v2383 = vadd.f32 0.0, %v2382
      %v2384 = vpop.f32.mrb[0].mxu0
      %v2385 = vpop.f32.mrb[0].mxu0
      %v2386 = vadd.f32 0.0, %v2385
      %v2387 = vpop.f32.mrb[0].mxu0
      %2388 = vmatprep.mubr.bf16.mxu0 0
      %2389 = vmatmul.mubr.bf16.gmra.mrb[0].mxu0 %v2281
      %v2390 = vpop.f32.mrb[0].mxu0
      %v2391 = vadd.f32 0.0, %v2390
      %v2392 = vpop.f32.mrb[0].mxu0
      %v2393 = vpop.f32.mrb[0].mxu0
      %v2394 = vadd.f32 0.0, %v2393
      %v2395 = vpop.f32.mrb[0].mxu0
      %2396 = vmatprep.mubr.bf16.mxu0 0
      %2397 = vmatmul.mubr.bf16.gmra.mrb[0].mxu0 %v2284
      %v2398 = vpop.f32.mrb[0].mxu0
      %v2399 = vadd.f32 0.0, %v2398
      %v2400 = vpop.f32.mrb[0].mxu0
      %v2401 = vpop.f32.mrb[0].mxu0
      %v2402 = vadd.f32 0.0, %v2401
      %v2403 = vpop.f32.mrb[0].mxu0
      %2404 = vmatprep.mubr.bf16.mxu0 0
      %2405 = vmatmul.mubr.bf16.gmra.mrb[0].mxu0 %v2287
      %v2406 = vpop.f32.mrb[0].mxu0
      %v2407 = vadd.f32 0.0, %v2406
      %v2408 = vpop.f32.mrb[0].mxu0
      %v2409 = vpop.f32.mrb[0].mxu0
      %v2410 = vadd.f32 0.0, %v2409
      %v2411 = vpop.f32.mrb[0].mxu0
      %2412 = vmatprep.mubr.bf16.mxu0 0
      %2413 = vmatmul.mubr.bf16.gmra.mrb[0].mxu0 %v2290
      %v2414 = vpop.f32.mrb[0].mxu0
      %v2415 = vadd.f32 0.0, %v2414
      %v2416 = vpop.f32.mrb[0].mxu0
      %v2417 = vpop.f32.mrb[0].mxu0
      %v2418 = vadd.f32 0.0, %v2417
      %v2419 = vpop.f32.mrb[0].mxu0
      %2420 = vmatprep.mubr.bf16.mxu0 0
      %2421 = vmatmul.mubr.bf16.gmra.mrb[0].mxu0 %v2293
      %v2422 = vpop.f32.mrb[0].mxu0
      %v2423 = vadd.f32 0.0, %v2422
      %v2424 = vpop.f32.mrb[0].mxu0
      %v2425 = vpop.f32.mrb[0].mxu0
      %v2426 = vadd.f32 0.0, %v2425
      %v2427 = vpop.f32.mrb[0].mxu0
      %2428 = vmatprep.mubr.bf16.mxu0 0
      %2429 = vmatmul.mubr.bf16.gmra.mrb[0].mxu0 %v2296
      %v2430 = vpop.f32.mrb[0].mxu0
      %v2431 = vadd.f32 0.0, %v2430
      %v2432 = vpop.f32.mrb[0].mxu0
      %v2433 = vpop.f32.mrb[0].mxu0
      %v2434 = vadd.f32 0.0, %v2433
      %v2435 = vpop.f32.mrb[0].mxu0
      %2436 = vmatprep.mubr.bf16.mxu0 0
      %2437 = vmatmul.mubr.bf16.gmra.mrb[0].mxu0 %v2299
      %v2438 = vpop.f32.mrb[0].mxu0
      %v2439 = vadd.f32 0.0, %v2438
      %v2440 = vpop.f32.mrb[0].mxu0
      %v2441 = vpop.f32.mrb[0].mxu0
      %v2442 = vadd.f32 0.0, %v2441
      %v2443 = vpop.f32.mrb[0].mxu0
      %2444 = vmatprep.mubr.bf16.mxu0 0
      %2445 = vmatmul.mubr.bf16.gmra.mrb[0].mxu0 %v2302
      %v2446 = vpop.f32.mrb[0].mxu0
      %v2447 = vadd.f32 0.0, %v2446
      %v2448 = vpop.f32.mrb[0].mxu0
      %v2449 = vpop.f32.mrb[0].mxu0
      %v2450 = vadd.f32 0.0, %v2449
      %v2451 = vpop.f32.mrb[0].mxu0
      %2452 = vmatprep.mubr.bf16.mxu0 0
      %2453 = vmatmul.mubr.bf16.gmra.mrb[0].mxu0 %v2305
      %v2454 = vpop.f32.mrb[0].mxu0
      %v2455 = vadd.f32 0.0, %v2454
      %v2456 = vpop.f32.mrb[0].mxu0
      %v2457 = vpop.f32.mrb[0].mxu0
      %v2458 = vadd.f32 0.0, %v2457
      %v2459 = vpop.f32.mrb[0].mxu0
      %2460 = vmatprep.mubr.bf16.mxu0 0
      %2461 = vmatmul.mubr.bf16.gmra.mrb[0].mxu0 %v2308
      %v2462 = vpop.f32.mrb[0].mxu0
      %v2463 = vadd.f32 0.0, %v2462
      %v2464 = vpop.f32.mrb[0].mxu0
      %v2465 = vpop.f32.mrb[0].mxu0
      %v2466 = vadd.f32 0.0, %v2465
      %v2467 = vpop.f32.mrb[0].mxu0
      %2468 = vmatprep.mubr.bf16.mxu0 0
      %2469 = vmatmul.mubr.bf16.gmra.mrb[0].mxu0 %v2311
      %v2470 = vpop.f32.mrb[0].mxu0
      %v2471 = vadd.f32 0.0, %v2470
      %v2472 = vpop.f32.mrb[0].mxu0
      %v2473 = vpop.f32.mrb[0].mxu0
      %v2474 = vadd.f32 0.0, %v2473
      %v2475 = vpop.f32.mrb[0].mxu0
      %2476 = vdwg.mxu0
      %v2477 = vadd.f32 %v2113, %v2351
      %v2478 = vadd.f32 %v2114, %v2354
      %v2479 = vadd.f32 %v2115, %v2359
      %v2480 = vadd.f32 %v2116, %v2362
      %v2481 = vadd.f32 %v2117, %v2367
      %v2482 = vadd.f32 %v2118, %v2370
      %v2483 = vadd.f32 %v2119, %v2375
      %v2484 = vadd.f32 %v2120, %v2378
      %v2485 = vadd.f32 %v2121, %v2383
      %v2486 = vadd.f32 %v2122, %v2386
      %v2487 = vadd.f32 %v2123, %v2391
      %v2488 = vadd.f32 %v2124, %v2394
      %v2489 = vadd.f32 %v2125, %v2399
      %v2490 = vadd.f32 %v2126, %v2402
      %v2491 = vadd.f32 %v2127, %v2407
      %v2492 = vadd.f32 %v2128, %v2410
      %v2493 = vadd.f32 %v2129, %v2415
      %v2494 = vadd.f32 %v2130, %v2418
      %v2495 = vadd.f32 %v2131, %v2423
      %v2496 = vadd.f32 %v2132, %v2426
      %v2497 = vadd.f32 %v2133, %v2431
      %v2498 = vadd.f32 %v2134, %v2434
      %v2499 = vadd.f32 %v2135, %v2439
      %v2500 = vadd.f32 %v2136, %v2442
      %v2501 = vadd.f32 %v2137, %v2447
      %v2502 = vadd.f32 %v2138, %v2450
      %v2503 = vadd.f32 %v2139, %v2455
      %v2504 = vadd.f32 %v2140, %v2458
      %v2505 = vadd.f32 %v2141, %v2463
      %v2506 = vadd.f32 %v2142, %v2466
      %v2507 = vadd.f32 %v2143, %v2471
      %v2508 = vadd.f32 %v2144, %v2474
      %v2509 = vld [vmem:[#allocation2] sm:$0x1]
      %v2511 = vlaneseq
      %v2512 = vshrl.u32 %v2511, 7
      %v2513 = vsub.s32 0, %v2512
      %v2514 = vrot.slane %v2509, %v2513
      %v2516 = vadd.f32 %v2477, %v2514
      %v2517 = vadd.f32 %v2478, %v2514
      %v2518 = vadd.f32 %v2479, %v2514
      %v2519 = vadd.f32 %v2480, %v2514
      %v2520 = vadd.f32 %v2481, %v2514
      %v2521 = vadd.f32 %v2482, %v2514
      %v2522 = vadd.f32 %v2483, %v2514
      %v2523 = vadd.f32 %v2484, %v2514
      %v2524 = vadd.f32 %v2485, %v2514
      %v2525 = vadd.f32 %v2486, %v2514
      %v2526 = vadd.f32 %v2487, %v2514
      %v2527 = vadd.f32 %v2488, %v2514
      %v2528 = vadd.f32 %v2489, %v2514
      %v2529 = vadd.f32 %v2490, %v2514
      %v2530 = vadd.f32 %v2491, %v2514
      %v2531 = vadd.f32 %v2492, %v2514
      %v2532 = vadd.f32 %v2493, %v2514
      %v2533 = vadd.f32 %v2494, %v2514
      %v2534 = vadd.f32 %v2495, %v2514
      %v2535 = vadd.f32 %v2496, %v2514
      %v2536 = vadd.f32 %v2497, %v2514
      %v2537 = vadd.f32 %v2498, %v2514
      %v2538 = vadd.f32 %v2499, %v2514
      %v2539 = vadd.f32 %v2500, %v2514
      %v2540 = vadd.f32 %v2501, %v2514
      %v2541 = vadd.f32 %v2502, %v2514
      %v2542 = vadd.f32 %v2503, %v2514
      %v2543 = vadd.f32 %v2504, %v2514
      %v2544 = vadd.f32 %v2505, %v2514
      %v2545 = vadd.f32 %v2506, %v2514
      %v2546 = vadd.f32 %v2507, %v2514
      %v2547 = vadd.f32 %v2508, %v2514
      %v2548 = vxor.u32 %v2516, 2147483648
      %v2549 = vxor.u32 %v2517, 2147483648
      %v2550 = vxor.u32 %v2518, 2147483648
      %v2551 = vxor.u32 %v2519, 2147483648
      %v2552 = vxor.u32 %v2520, 2147483648
      %v2553 = vxor.u32 %v2521, 2147483648
      %v2554 = vxor.u32 %v2522, 2147483648
      %v2555 = vxor.u32 %v2523, 2147483648
      %v2556 = vxor.u32 %v2524, 2147483648
      %v2557 = vxor.u32 %v2525, 2147483648
      %v2558 = vxor.u32 %v2526, 2147483648
      %v2559 = vxor.u32 %v2527, 2147483648
      %v2560 = vxor.u32 %v2528, 2147483648
      %v2561 = vxor.u32 %v2529, 2147483648
      %v2562 = vxor.u32 %v2530, 2147483648
      %v2563 = vxor.u32 %v2531, 2147483648
      %v2564 = vxor.u32 %v2532, 2147483648
      %v2565 = vxor.u32 %v2533, 2147483648
      %v2566 = vxor.u32 %v2534, 2147483648
      %v2567 = vxor.u32 %v2535, 2147483648
      %v2568 = vxor.u32 %v2536, 2147483648
      %v2569 = vxor.u32 %v2537, 2147483648
      %v2570 = vxor.u32 %v2538, 2147483648
      %v2571 = vxor.u32 %v2539, 2147483648
      %v2572 = vxor.u32 %v2540, 2147483648
      %v2573 = vxor.u32 %v2541, 2147483648
      %v2574 = vxor.u32 %v2542, 2147483648
      %v2575 = vxor.u32 %v2543, 2147483648
      %v2576 = vxor.u32 %v2544, 2147483648
      %v2577 = vxor.u32 %v2545, 2147483648
      %v2578 = vxor.u32 %v2546, 2147483648
      %v2579 = vxor.u32 %v2547, 2147483648
      %v2580 = vmul.f32 %v2548, 1.442695
      %v2581 = vpow.pop %v2580
      %v2582 = vmul.f32 %v2549, 1.442695
      %v2583 = vpow.pop %v2582
      %v2584 = vmul.f32 %v2550, 1.442695
      %v2585 = vpow.pop %v2584
      %v2586 = vmul.f32 %v2551, 1.442695
      %v2587 = vpow.pop %v2586
      %v2588 = vmul.f32 %v2552, 1.442695
      %v2589 = vpow.pop %v2588
      %v2590 = vmul.f32 %v2553, 1.442695
      %v2591 = vpow.pop %v2590
      %v2592 = vmul.f32 %v2554, 1.442695
      %v2593 = vpow.pop %v2592
      %v2594 = vmul.f32 %v2555, 1.442695
      %v2595 = vpow.pop %v2594
      %v2596 = vmul.f32 %v2556, 1.442695
      %v2597 = vpow.pop %v2596
      %v2598 = vmul.f32 %v2557, 1.442695
      %v2599 = vpow.pop %v2598
      %v2600 = vmul.f32 %v2558, 1.442695
      %v2601 = vpow.pop %v2600
      %v2602 = vmul.f32 %v2559, 1.442695
      %v2603 = vpow.pop %v2602
      %v2604 = vmul.f32 %v2560, 1.442695
      %v2605 = vpow.pop %v2604
      %v2606 = vmul.f32 %v2561, 1.442695
      %v2607 = vpow.pop %v2606
      %v2608 = vmul.f32 %v2562, 1.442695
      %v2609 = vpow.pop %v2608
      %v2610 = vmul.f32 %v2563, 1.442695
      %v2611 = vpow.pop %v2610
      %v2612 = vmul.f32 %v2564, 1.442695
      %v2613 = vpow.pop %v2612
      %v2614 = vmul.f32 %v2565, 1.442695
      %v2615 = vpow.pop %v2614
      %v2616 = vmul.f32 %v2566, 1.442695
      %v2617 = vpow.pop %v2616
      %v2618 = vmul.f32 %v2567, 1.442695
      %v2619 = vpow.pop %v2618
      %v2620 = vmul.f32 %v2568, 1.442695
      %v2621 = vpow.pop %v2620
      %v2622 = vmul.f32 %v2569, 1.442695
      %v2623 = vpow.pop %v2622
      %v2624 = vmul.f32 %v2570, 1.442695
      %v2625 = vpow.pop %v2624
      %v2626 = vmul.f32 %v2571, 1.442695
      %v2627 = vpow.pop %v2626
      %v2628 = vmul.f32 %v2572, 1.442695
      %v2629 = vpow.pop %v2628
      %v2630 = vmul.f32 %v2573, 1.442695
      %v2631 = vpow.pop %v2630
      %v2632 = vmul.f32 %v2574, 1.442695
      %v2633 = vpow.pop %v2632
      %v2634 = vmul.f32 %v2575, 1.442695
      %v2635 = vpow.pop %v2634
      %v2636 = vmul.f32 %v2576, 1.442695
      %v2637 = vpow.pop %v2636
      %v2638 = vmul.f32 %v2577, 1.442695
      %v2639 = vpow.pop %v2638
      %v2640 = vmul.f32 %v2578, 1.442695
      %v2641 = vpow.pop %v2640
      %v2642 = vmul.f32 %v2579, 1.442695
      %v2643 = vpow.pop %v2642
      %v2644 = vadd.f32 %v2581, 1.0
      %v2645 = vadd.f32 %v2583, 1.0
      %v2646 = vadd.f32 %v2585, 1.0
      %v2647 = vadd.f32 %v2587, 1.0
      %v2648 = vadd.f32 %v2589, 1.0
      %v2649 = vadd.f32 %v2591, 1.0
      %v2650 = vadd.f32 %v2593, 1.0
      %v2651 = vadd.f32 %v2595, 1.0
      %v2652 = vadd.f32 %v2597, 1.0
      %v2653 = vadd.f32 %v2599, 1.0
      %v2654 = vadd.f32 %v2601, 1.0
      %v2655 = vadd.f32 %v2603, 1.0
      %v2656 = vadd.f32 %v2605, 1.0
      %v2657 = vadd.f32 %v2607, 1.0
      %v2658 = vadd.f32 %v2609, 1.0
      %v2659 = vadd.f32 %v2611, 1.0
      %v2660 = vadd.f32 %v2613, 1.0
      %v2661 = vadd.f32 %v2615, 1.0
      %v2662 = vadd.f32 %v2617, 1.0
      %v2663 = vadd.f32 %v2619, 1.0
      %v2664 = vadd.f32 %v2621, 1.0
      %v2665 = vadd.f32 %v2623, 1.0
      %v2666 = vadd.f32 %v2625, 1.0
      %v2667 = vadd.f32 %v2627, 1.0
      %v2668 = vadd.f32 %v2629, 1.0
      %v2669 = vadd.f32 %v2631, 1.0
      %v2670 = vadd.f32 %v2633, 1.0
      %v2671 = vadd.f32 %v2635, 1.0
      %v2672 = vadd.f32 %v2637, 1.0
      %v2673 = vadd.f32 %v2639, 1.0
      %v2674 = vadd.f32 %v2641, 1.0
      %v2675 = vadd.f32 %v2643, 1.0
      %v2676 = vrcp.pop %v2644
      %v2677 = vmul.f32 1.0, %v2676
      %v2678 = vrcp.pop %v2645
      %v2679 = vmul.f32 1.0, %v2678
      %v2680 = vrcp.pop %v2646
      %v2681 = vmul.f32 1.0, %v2680
      %v2682 = vrcp.pop %v2647
      %v2683 = vmul.f32 1.0, %v2682
      %v2684 = vrcp.pop %v2648
      %v2685 = vmul.f32 1.0, %v2684
      %v2686 = vrcp.pop %v2649
      %v2687 = vmul.f32 1.0, %v2686
      %v2688 = vrcp.pop %v2650
      %v2689 = vmul.f32 1.0, %v2688
      %v2690 = vrcp.pop %v2651
      %v2691 = vmul.f32 1.0, %v2690
      %v2692 = vrcp.pop %v2652
      %v2693 = vmul.f32 1.0, %v2692
      %v2694 = vrcp.pop %v2653
      %v2695 = vmul.f32 1.0, %v2694
      %v2696 = vrcp.pop %v2654
      %v2697 = vmul.f32 1.0, %v2696
      %v2698 = vrcp.pop %v2655
      %v2699 = vmul.f32 1.0, %v2698
      %v2700 = vrcp.pop %v2656
      %v2701 = vmul.f32 1.0, %v2700
      %v2702 = vrcp.pop %v2657
      %v2703 = vmul.f32 1.0, %v2702
      %v2704 = vrcp.pop %v2658
      %v2705 = vmul.f32 1.0, %v2704
      %v2706 = vrcp.pop %v2659
      %v2707 = vmul.f32 1.0, %v2706
      %v2708 = vrcp.pop %v2660
      %v2709 = vmul.f32 1.0, %v2708
      %v2710 = vrcp.pop %v2661
      %v2711 = vmul.f32 1.0, %v2710
      %v2712 = vrcp.pop %v2662
      %v2713 = vmul.f32 1.0, %v2712
      %v2714 = vrcp.pop %v2663
      %v2715 = vmul.f32 1.0, %v2714
      %v2716 = vrcp.pop %v2664
      %v2717 = vmul.f32 1.0, %v2716
      %v2718 = vrcp.pop %v2665
      %v2719 = vmul.f32 1.0, %v2718
      %v2720 = vrcp.pop %v2666
      %v2721 = vmul.f32 1.0, %v2720
      %v2722 = vrcp.pop %v2667
      %v2723 = vmul.f32 1.0, %v2722
      %v2724 = vrcp.pop %v2668
      %v2725 = vmul.f32 1.0, %v2724
      %v2726 = vrcp.pop %v2669
      %v2727 = vmul.f32 1.0, %v2726
      %v2728 = vrcp.pop %v2670
      %v2729 = vmul.f32 1.0, %v2728
      %v2730 = vrcp.pop %v2671
      %v2731 = vmul.f32 1.0, %v2730
      %v2732 = vrcp.pop %v2672
      %v2733 = vmul.f32 1.0, %v2732
      %v2734 = vrcp.pop %v2673
      %v2735 = vmul.f32 1.0, %v2734
      %v2736 = vrcp.pop %v2674
      %v2737 = vmul.f32 1.0, %v2736
      %v2738 = vrcp.pop %v2675
      %v2739 = vmul.f32 1.0, %v2738
      %vm2740 = vcmask 7168
      %2741 = vst.msk [vmem:[%s172] sm:$0xff] %vm2740, %v2677
      %2742 = vst.msk [vmem:[%s172 + $0x8] sm:$0xff] %vm2740, %v2679
      %2743 = vst.msk [vmem:[%s172 + $0x10] sm:$0xff] %vm2740, %v2681
      %2744 = vst.msk [vmem:[%s172 + $0x18] sm:$0xff] %vm2740, %v2683
      %2745 = vst.msk [vmem:[%s172 + $0x20] sm:$0xff] %vm2740, %v2685
      %2746 = vst.msk [vmem:[%s172 + $0x28] sm:$0xff] %vm2740, %v2687
      %2747 = vst.msk [vmem:[%s172 + $0x30] sm:$0xff] %vm2740, %v2689
      %2748 = vst.msk [vmem:[%s172 + $0x38] sm:$0xff] %vm2740, %v2691
      %2749 = vst.msk [vmem:[%s172 + $0x40] sm:$0xff] %vm2740, %v2693
      %2750 = vst.msk [vmem:[%s172 + $0x48] sm:$0xff] %vm2740, %v2695
      %2751 = vst.msk [vmem:[%s172 + $0x50] sm:$0xff] %vm2740, %v2697
      %2752 = vst.msk [vmem:[%s172 + $0x58] sm:$0xff] %vm2740, %v2699
      %2753 = vst.msk [vmem:[%s172 + $0x60] sm:$0xff] %vm2740, %v2701
      %2754 = vst.msk [vmem:[%s172 + $0x68] sm:$0xff] %vm2740, %v2703
      %2755 = vst.msk [vmem:[%s172 + $0x70] sm:$0xff] %vm2740, %v2705
      %2756 = vst.msk [vmem:[%s172 + $0x78] sm:$0xff] %vm2740, %v2707
      %2757 = vst.msk [vmem:[%s172 + $0x80] sm:$0xff] %vm2740, %v2709
      %2758 = vst.msk [vmem:[%s172 + $0x88] sm:$0xff] %vm2740, %v2711
      %2759 = vst.msk [vmem:[%s172 + $0x90] sm:$0xff] %vm2740, %v2713
      %2760 = vst.msk [vmem:[%s172 + $0x98] sm:$0xff] %vm2740, %v2715
      %2761 = vst.msk [vmem:[%s172 + $0xa0] sm:$0xff] %vm2740, %v2717
      %2762 = vst.msk [vmem:[%s172 + $0xa8] sm:$0xff] %vm2740, %v2719
      %2763 = vst.msk [vmem:[%s172 + $0xb0] sm:$0xff] %vm2740, %v2721
      %2764 = vst.msk [vmem:[%s172 + $0xb8] sm:$0xff] %vm2740, %v2723
      %2765 = vst.msk [vmem:[%s172 + $0xc0] sm:$0xff] %vm2740, %v2725
      %2766 = vst.msk [vmem:[%s172 + $0xc8] sm:$0xff] %vm2740, %v2727
      %2767 = vst.msk [vmem:[%s172 + $0xd0] sm:$0xff] %vm2740, %v2729
      %2768 = vst.msk [vmem:[%s172 + $0xd8] sm:$0xff] %vm2740, %v2731
      %2769 = vst.msk [vmem:[%s172 + $0xe0] sm:$0xff] %vm2740, %v2733
      %2770 = vst.msk [vmem:[%s172 + $0xe8] sm:$0xff] %vm2740, %v2735
      %2771 = vst.msk [vmem:[%s172 + $0xf0] sm:$0xff] %vm2740, %v2737
      %2772 = vst.msk [vmem:[%s172 + $0xf8] sm:$0xff] %vm2740, %v2739
      %p2773 = scmp.lt.s32.totalorder %s16, 1
      %s2774 = scalar_select %p2773, %s16, 1
      %s2775 = smul.addr %s2774, 32
      %s2776 = smul.addr %s2775, 8
      %s2777 = scalar_lea.vmem %s3, %s2776
      // Predicated region
      $region33: #{_lambda_.13} parent=31 // pred_check
        %p2778 = pneg %p102
      $region34: #{_lambda_.13} parent=31 // pred_check_branch
        %2780 = sbr.rel (%p2778) target = $region36
      $region35: #{_lambda_.13} parent=31 // pred_region
        _
      $region36: #{_lambda_.13} parent=31 // pred_fallthru
        _
    $region32: #{_lambda_.13} parent=5 // pred_fallthru
      _
    %p2781 = scmp.le.s32.totalorder 2, %s11
    // Predicated region
    $region37: #{_lambda_.13} parent=5 // pred_check
      %p2782 = pneg %p2781
    $region38: #{_lambda_.13} parent=5 // pred_check_branch
      %2784 = sbr.rel (%p2782) target = $region40
    $region39: #{_lambda_.13} parent=5 // pred_region
      %s2785 = ssub.s32 %s11, 2
      // Predicated region
      $region41: #{_lambda_.13} parent=39 // pred_check
        %p2786 = pneg %p108
      $region42: #{_lambda_.13} parent=39 // pred_check_branch
        %2788 = sbr.rel (%p2786) target = $region44
      $region43: #{_lambda_.13} parent=39 // pred_region
        %p2789 = scmp.lt.s32.totalorder %s17, 1
        %s2790 = scalar_select %p2789, %s17, 1
        %s2791 = smul.addr %s2790, 32
        %s2792 = smul.addr %s2791, 8
        %s2793 = scalar_lea.vmem %s3, %s2792
      $region44: #{_lambda_.13} parent=39 // pred_fallthru
        _
    $region40: #{_lambda_.13} parent=5 // pred_fallthru
      _
  $region6: #{_lambda_.13} parent=0 // loop_footer
    %s15 = sadd.s32 1, %s11
  $region7: #{_lambda_.13} parent=0 // loop_footer_branch
    %10 = sbr.rel target = $region3
  $region8: #{_lambda_.13} parent=0 // loop_exit
    _

</llo_original>
